<compile_context>
chip_gen: v6e
topology: v6e:2x2x1
jax: 0.10.0
libtpu: 0.0.40
codegen_flags: <defaults>
</compile_context>

<pallas_src>
import math
import functools

import jax
import jax.numpy as jnp
from jax import lax
from jax.experimental import pallas as pl
from jax.experimental.pallas import tpu as pltpu


# ----------------- Kernel 1: RMSNorm + fused QKV projection + RoPE -----------------

def qkv_rope_kernel(x_ref, w_ref, anorm_ref, cos_ref, sin_ref,
                    q_ref, kt_ref, vt_ref,
                    *, n_heads, n_kv_heads, head_dim, eps):
    D = n_heads * head_dim
    Dkv = n_kv_heads * head_dim
    hd = head_dim

    x = x_ref[0]                                                  # (ts, D) f32
    ms = jnp.mean(x * x, axis=-1, keepdims=True)
    x_n = (x * lax.rsqrt(ms + eps) * anorm_ref[...]).astype(jnp.bfloat16)

    # One fused bf16 MXU projection (f32 accumulation):
    # columns = [q_deint | k_deint | v | q_halfswap | k_halfswap]
    proj = jnp.dot(x_n, w_ref[...], preferred_element_type=jnp.float32)

    qk = proj[:, :D + Dkv]                     # (ts, D+Dkv)
    v = proj[:, D + Dkv:D + 2 * Dkv]           # (ts, Dkv)
    qk_p = proj[:, D + 2 * Dkv:]               # (ts, D+Dkv) rotate-half partner

    # RoPE: pure full-width elementwise math (sign folded into the sin table).
    rot = qk * cos_ref[...] + qk_p * sin_ref[...]

    q_rot = rot[:, :D]                         # (ts, D)
    k_rot = rot[:, D:]                         # (ts, Dkv)

    # K / V stored feature-major (Dkv, ts): lane-dense along seq, one full
    # unmasked store each (no repeat_kv, no 64-lane padding).
    kt_ref[0] = jnp.transpose(k_rot).astype(jnp.bfloat16)
    vt_ref[0] = jnp.transpose(v).astype(jnp.bfloat16)

    # Q stays head-major (H, ts, hd); one 64-lane store per head (known
    # trade-off: keeps kernel-2's batched dot in the canonical form).
    for h in range(n_heads):
        q_ref[0, h] = q_rot[:, h * hd:(h + 1) * hd].astype(jnp.bfloat16)


# --------- Kernel 2: flash attention (GQA-folded) + wo + residual + SwiGLU FFN ---------

def attn_ffn_kernel(x_ref, q_ref, kt_ref, vt_ref, wo_ref, fnorm_ref,
                    w13_ref, w2_ref, o_ref,
                    m_sc, l_sc, acc_sc,
                    *, n_heads, n_kv_heads, head_dim, tq, tk, hidden, eps):
    qi = pl.program_id(1)
    kv = pl.program_id(2)
    hd = head_dim
    n_rep = n_heads // n_kv_heads
    M = n_rep * tq
    neg = jnp.float32(-1e30)

    @pl.when(kv == 0)
    def _init():
        m_sc[...] = jnp.full(m_sc.shape, neg, jnp.float32)
        l_sc[...] = jnp.zeros(l_sc.shape, jnp.float32)
        acc_sc[...] = jnp.zeros(acc_sc.shape, jnp.float32)

    def flash_update(masked):
        # GQA without materializing repeat_kv: the n_rep query heads of each
        # kv group share that group's K/V by folding them into M.
        q = q_ref[0].reshape(n_kv_heads, M, hd)        # (Hkv, M, hd)  bf16
        kt = kt_ref[0].reshape(n_kv_heads, hd, tk)     # (Hkv, hd, tk) bf16
        vt = vt_ref[0].reshape(n_kv_heads, hd, tk)     # (Hkv, hd, tk) bf16

        # scale already folded into wq on the host
        s = lax.dot_general(q, kt, (((2,), (1,)), ((0,), (0,))),
                            preferred_element_type=jnp.float32)       # (Hkv, M, tk)
        if masked:
            # diagonal tile only: 2-D mask broadcast over kv groups
            row = lax.broadcasted_iota(jnp.int32, (n_rep, tq, tk), 1).reshape(M, tk)
            col = lax.broadcasted_iota(jnp.int32, (M, tk), 1)
            s = jnp.where((col <= row)[None], s, neg)

        m_prev = m_sc[...]
        m_new = jnp.maximum(m_prev, jnp.max(s, axis=-1, keepdims=True))
        alpha = jnp.exp(m_prev - m_new)
        p = jnp.exp(s - m_new)
        l_sc[...] = alpha * l_sc[...] + jnp.sum(p, axis=-1, keepdims=True)
        pv = lax.dot_general(p.astype(jnp.bfloat16), vt,
                             (((2,), (2,)), ((0,), (0,))),
                             preferred_element_type=jnp.float32)      # (Hkv, M, hd)
        acc_sc[...] = alpha * acc_sc[...] + pv
        m_sc[...] = m_new

    @pl.when(kv < qi)                     # strictly-lower tiles: no mask needed
    def _off_diag():
        flash_update(masked=False)

    @pl.when(kv == qi)                    # diagonal tile = last causal tile
    def _diag_and_epilogue():
        flash_update(masked=True)

        inv_l = pl.reciprocal(l_sc[...], approx=True)                 # (Hkv, M, 1)
        out_h = acc_sc[...] * inv_l                                   # (Hkv, M, hd) f32

        x_res = x_ref[0]                                              # (tq, D) f32

        # wo projection straight from the flash accumulator: per-head dots
        # accumulated in f32 (no head->lane scatter, no scratch buffer).
        attn = None
        for g in range(n_kv_heads):
            for r in range(n_rep):
                h = g * n_rep + r
                piece = out_h[g, r * tq:(r + 1) * tq, :].astype(jnp.bfloat16)
                contrib = jnp.dot(piece, wo_ref[h * hd:(h + 1) * hd, :],
                                  preferred_element_type=jnp.float32)
                attn = contrib if attn is None else attn + contrib
        h_res = x_res + attn

        # FFN pre-norm + SwiGLU (w1|w3 fused into one dot).
        ms = jnp.mean(h_res * h_res, axis=-1, keepdims=True)
        h_n = (h_res * lax.rsqrt(ms + eps) * fnorm_ref[...]).astype(jnp.bfloat16)
        g13 = jnp.dot(h_n, w13_ref[...], preferred_element_type=jnp.float32)
        a = g13[:, :hidden]
        b = g13[:, hidden:]
        gated = (a * jax.nn.sigmoid(a) * b).astype(jnp.bfloat16)
        ff = jnp.dot(gated, w2_ref[...], preferred_element_type=jnp.float32)

        o_ref[0] = h_res + ff


# ------------------------------- host helpers --------------------------------------

def _deinterleave_perm(n_heads, head_dim):
    """Per-head column permutation: interleaved (re, im) pairs -> [re half | im half]."""
    hd2 = head_dim // 2
    idx = []
    for h in range(n_heads):
        base = h * head_dim
        idx += [base + 2 * i for i in range(hd2)]
        idx += [base + 2 * i + 1 for i in range(hd2)]
    return jnp.asarray(idx, dtype=jnp.int32)


def _halfswap_perm(n_heads, head_dim):
    """Per-head column permutation swapping the two halves (rotate-half partner)."""
    hd2 = head_dim // 2
    idx = []
    for h in range(n_heads):
        base = h * head_dim
        idx += [base + hd2 + i for i in range(hd2)]
        idx += [base + i for i in range(hd2)]
    return jnp.asarray(idx, dtype=jnp.int32)


def _rope_tables(seq_len, head_dim, theta=10000.0):
    hd2 = head_dim // 2
    freqs = 1.0 / theta ** (jnp.arange(0, head_dim, 2, dtype=jnp.float32)[:hd2] / head_dim)
    t = jnp.arange(seq_len, dtype=jnp.float32)
    ang = jnp.outer(t, freqs)                                   # (S, hd/2)
    return jnp.cos(ang), jnp.sin(ang)


def _vmem_limit_bytes():
    # Generation-aware: ~3/4 of physical VMEM (v5e/v6e 128 MiB, v7x 64 MiB/TC).
    try:
        cap = int(pltpu.get_tpu_info().vmem_capacity_bytes)
    except Exception:
        cap = 64 * 1024 * 1024
    return max(32 * 1024 * 1024, cap * 3 // 4)


def transformer_block(x, params, *, n_heads, n_kv_heads, head_dim, eps,
                      seq_tile=256, attn_tile=128):
    B, S, D = x.shape
    (wq, wk, wv, wo, anorm, fnorm, w1, w2, w3) = params
    Dkv = n_kv_heads * head_dim
    hidden = w1.shape[1]
    hd = head_dim
    n_rep = n_heads // n_kv_heads
    assert D == n_heads * head_dim and head_dim % 2 == 0

    ts = seq_tile if S % seq_tile == 0 else S
    n_s = S // ts
    tq = attn_tile if S % attn_tile == 0 else S
    tk = tq
    n_q = S // tq
    M = n_rep * tq

    cos, sin = _rope_tables(S, head_dim)

    # Host-side weight prep:
    #  * fold 1/sqrt(head_dim) into wq
    #  * de-interleave wq/wk output columns per head so RoPE is elementwise
    #  * half-swapped wq/wk copies supply the rotate-half partner via the MXU
    #  * fuse everything into one bf16 (D, 2D+3Dkv) matrix, and w1|w3 into one
    scale = 1.0 / math.sqrt(head_dim)
    wq_d = (wq * scale)[:, _deinterleave_perm(n_heads, hd)]
    wk_d = wk[:, _deinterleave_perm(n_kv_heads, hd)]
    wq_s = wq_d[:, _halfswap_perm(n_heads, hd)]
    wk_s = wk_d[:, _halfswap_perm(n_kv_heads, hd)]
    w_all = jnp.concatenate([wq_d, wk_d, wv, wq_s, wk_s], axis=1).astype(jnp.bfloat16)
    W = w_all.shape[1]                                          # 2D + 3Dkv

    # Full-width, sign-folded cos/sin tables over the q|k columns.
    cos_h = jnp.concatenate([cos, cos], axis=1)                 # (S, hd)
    sin_h = jnp.concatenate([-sin, sin], axis=1)                # (S, hd)
    cos_qk = jnp.concatenate(
        [jnp.tile(cos_h, (1, n_heads)), jnp.tile(cos_h, (1, n_kv_heads))], axis=1)
    sin_qk = jnp.concatenate(
        [jnp.tile(sin_h, (1, n_heads)), jnp.tile(sin_h, (1, n_kv_heads))], axis=1)

    wo_b = wo.astype(jnp.bfloat16)
    w13_b = jnp.concatenate([w1, w3], axis=1).astype(jnp.bfloat16)
    w2_b = w2.astype(jnp.bfloat16)

    vmem_limit = _vmem_limit_bytes()

    # ---- Kernel 1: RMSNorm + fused QKV + RoPE ----
    k1 = functools.partial(qkv_rope_kernel, n_heads=n_heads,
                           n_kv_heads=n_kv_heads, head_dim=head_dim, eps=eps)
    q_all, kt_all, vt_all = pl.pallas_call(
        k1,
        out_shape=(
            jax.ShapeDtypeStruct((B, n_heads, S, hd), jnp.bfloat16),   # q, head-major
            jax.ShapeDtypeStruct((B, Dkv, S), jnp.bfloat16),           # k^T, lane-dense
            jax.ShapeDtypeStruct((B, Dkv, S), jnp.bfloat16),           # v^T, lane-dense
        ),
        grid_spec=pltpu.PrefetchScalarGridSpec(
            num_scalar_prefetch=0,
            grid=(n_s, B),   # seq-tile outer so cos/sin blocks are fetched once per tile
            in_specs=[
                pl.BlockSpec((1, ts, D), lambda s, b: (b, s, 0)),        # x
                pl.BlockSpec((D, W), lambda s, b: (0, 0)),               # fused weights
                pl.BlockSpec((1, D), lambda s, b: (0, 0)),               # attention_norm
                pl.BlockSpec((ts, D + Dkv), lambda s, b: (s, 0)),        # cos table
                pl.BlockSpec((ts, D + Dkv), lambda s, b: (s, 0)),        # sin table
            ],
            out_specs=[
                pl.BlockSpec((1, n_heads, ts, hd), lambda s, b: (b, 0, s, 0)),
                pl.BlockSpec((1, Dkv, ts), lambda s, b: (b, 0, s)),
                pl.BlockSpec((1, Dkv, ts), lambda s, b: (b, 0, s)),
            ],
        ),
        compiler_params=pltpu.CompilerParams(
            dimension_semantics=("parallel", "parallel"),
            vmem_limit_bytes=vmem_limit),
    )(x, w_all, anorm.reshape(1, D), cos_qk, sin_qk)

    # ---- Kernel 2: flash attention + wo + residual + SwiGLU FFN ----
    k2 = functools.partial(attn_ffn_kernel, n_heads=n_heads,
                           n_kv_heads=n_kv_heads, head_dim=head_dim,
                           tq=tq, tk=tk, hidden=hidden, eps=eps)
    out = pl.pallas_call(
        k2,
        out_shape=jax.ShapeDtypeStruct((B, S, D), jnp.float32),
        grid_spec=pltpu.PrefetchScalarGridSpec(
            num_scalar_prefetch=0,
            grid=(B, n_q, n_q),
            in_specs=[
                pl.BlockSpec((1, tq, D), lambda b, qi, kv: (b, qi, 0)),             # residual x
                pl.BlockSpec((1, n_heads, tq, hd), lambda b, qi, kv: (b, 0, qi, 0)),
                # clamp to the causal range: skipped upper-triangle steps re-use
                # the previous block and issue no DMA
                pl.BlockSpec((1, Dkv, tk), lambda b, qi, kv: (b, 0, jnp.minimum(kv, qi))),
                pl.BlockSpec((1, Dkv, tk), lambda b, qi, kv: (b, 0, jnp.minimum(kv, qi))),
                pl.BlockSpec((D, D), lambda b, qi, kv: (0, 0)),                      # wo
                pl.BlockSpec((1, D), lambda b, qi, kv: (0, 0)),                      # ff_norm
                pl.BlockSpec((D, 2 * hidden), lambda b, qi, kv: (0, 0)),             # w1|w3
                pl.BlockSpec((hidden, D), lambda b, qi, kv: (0, 0)),                 # w2
            ],
            out_specs=pl.BlockSpec((1, tq, D), lambda b, qi, kv: (b, qi, 0)),
            scratch_shapes=[
                pltpu.VMEM((n_kv_heads, M, 1), jnp.float32),    # running max
                pltpu.VMEM((n_kv_heads, M, 1), jnp.float32),    # running denom
                pltpu.VMEM((n_kv_heads, M, hd), jnp.float32),   # output accumulator
            ],
        ),
        compiler_params=pltpu.CompilerParams(
            dimension_semantics=("parallel", "parallel", "arbitrary"),
            vmem_limit_bytes=vmem_limit),
    )(x, q_all, kt_all, vt_all, wo_b, fnorm.reshape(1, D), w13_b, w2_b)

    return out


# --------------------- pure-JAX reference (torch semantics) -------------------------

def reference_block(x, params, *, n_heads, n_kv_heads, head_dim, eps):
    B, S, D = x.shape
    (wq, wk, wv, wo, anorm, fnorm, w1, w2, w3) = params
    n_rep = n_heads // n_kv_heads

    def rmsnorm(v, w):
        return v * jax.lax.rsqrt(jnp.mean(v * v, -1, keepdims=True) + eps) * w

    x_n = rmsnorm(x, anorm)
    xq = (x_n @ wq).reshape(B, S, n_heads, head_dim)
    xk = (x_n @ wk).reshape(B, S, n_kv_heads, head_dim)
    xv = (x_n @ wv).reshape(B, S, n_kv_heads, head_dim)

    cos, sin = _rope_tables(S, head_dim)
    cos = cos[None, :, None, :]
    sin = sin[None, :, None, :]

    def rope(v):
        vr = v.reshape(*v.shape[:-1], -1, 2)
        a, b = vr[..., 0], vr[..., 1]
        return jnp.stack([a * cos - b * sin, a * sin + b * cos], axis=-1).reshape(v.shape)

    xq, xk = rope(xq), rope(xk)
    keys = jnp.repeat(xk, n_rep, axis=2)
    vals = jnp.repeat(xv, n_rep, axis=2)

    q = xq.transpose(0, 2, 1, 3)
    k = keys.transpose(0, 2, 1, 3)
    v = vals.transpose(0, 2, 1, 3)
    scores = jnp.einsum("bhqd,bhkd->bhqk", q, k) / math.sqrt(head_dim)
    mask = jnp.where(jnp.arange(S)[:, None] >= jnp.arange(S)[None, :], 0.0, -jnp.inf)
    scores = scores + mask[None, None]
    p = jax.nn.softmax(scores, axis=-1)
    out = jnp.einsum("bhqk,bhkd->bhqd", p, v)
    out = out.transpose(0, 2, 1, 3).reshape(B, S, D)
    h = x + out @ wo

    h_n = rmsnorm(h, fnorm)
    a = h_n @ w1
    ff = (a * jax.nn.sigmoid(a) * (h_n @ w3)) @ w2
    return h + ff


# -------------------------------------- main ----------------------------------------

if __name__ == "__main__":
    # ModelArgs-consistent config: dim=512, n_heads=8, n_kv_heads=4,
    # multiple_of=256, max_seq_len=256; batch kept small (2) for a quick test.
    B, S, D = 2, 256, 512
    n_heads, n_kv_heads = 8, 4
    head_dim = D // n_heads          # 64
    Dkv = n_kv_heads * head_dim      # 256
    multiple_of = 256
    eps = 1e-5
    hidden = int(2 * (4 * D) / 3)
    hidden = multiple_of * ((hidden + multiple_of - 1) // multiple_of)   # 1536

    key = jax.random.PRNGKey(0)
    ks = jax.random.split(key, 10)
    scale = 0.02
    x = jax.random.normal(ks[0], (B, S, D), jnp.float32)
    wq = scale * jax.random.normal(ks[1], (D, D), jnp.float32)
    wk = scale * jax.random.normal(ks[2], (D, Dkv), jnp.float32)
    wv = scale * jax.random.normal(ks[3], (D, Dkv), jnp.float32)
    wo = scale * jax.random.normal(ks[4], (D, D), jnp.float32)
    anorm = jnp.ones((D,), jnp.float32) + 0.01 * jax.random.normal(ks[5], (D,), jnp.float32)
    fnorm = jnp.ones((D,), jnp.float32) + 0.01 * jax.random.normal(ks[6], (D,), jnp.float32)
    w1 = scale * jax.random.normal(ks[7], (D, hidden), jnp.float32)
    w2 = scale * jax.random.normal(ks[8], (hidden, D), jnp.float32)
    w3 = scale * jax.random.normal(ks[9], (D, hidden), jnp.float32)
    params = (wq, wk, wv, wo, anorm, fnorm, w1, w2, w3)

    out = transformer_block(x, params, n_heads=n_heads, n_kv_heads=n_kv_heads,
                            head_dim=head_dim, eps=eps)
    out = jax.block_until_ready(out)

    ref = jax.block_until_ready(
        reference_block(x, params, n_heads=n_heads, n_kv_heads=n_kv_heads,
                        head_dim=head_dim, eps=eps))

    assert out.shape == (B, S, D) and out.dtype == jnp.float32
    max_diff = float(jnp.max(jnp.abs(out - ref)))
    # bf16 MXU inputs + approx reciprocal -> slightly looser tolerance vs f32 ref.
    assert jnp.allclose(out, ref, atol=5e-2, rtol=5e-2), f"max abs diff {max_diff}"

    print("KERNEL_OK")
</pallas_src>

<mosaic_0001>
module attributes {stable_mosaic.version = 11 : i64} {
  func.func @qkv_rope_kernel(%arg0: i32, %arg1: i32, %arg2: memref<1x256x512xf32, #tpu.memory_space<vmem>>, %arg3: memref<512x1792xbf16, #tpu.memory_space<vmem>>, %arg4: memref<1x512xf32, #tpu.memory_space<vmem>>, %arg5: memref<256x768xf32, #tpu.memory_space<vmem>>, %arg6: memref<256x768xf32, #tpu.memory_space<vmem>>, %arg7: memref<1x8x256x64xbf16, #tpu.memory_space<vmem>>, %arg8: memref<1x256x256xbf16, #tpu.memory_space<vmem>>, %arg9: memref<1x256x256xbf16, #tpu.memory_space<vmem>>) attributes {dimension_semantics = [#tpu.dimension_semantics<parallel>, #tpu.dimension_semantics<parallel>], iteration_bounds = array<i64: 1, 2>, scalar_prefetch = 0 : i64, scratch_operands = 0 : i64, tpu.core_type = #tpu.core_type<tc>, window_params = [{transform_indices = @transform_0, window_bounds = array<i64: 1, 256, 512>}, {pipeline_mode = #tpu.pipeline_mode<synchronous>, transform_indices = @transform_1, window_bounds = array<i64: 512, 1792>}, {pipeline_mode = #tpu.pipeline_mode<synchronous>, transform_indices = @transform_2, window_bounds = array<i64: 1, 512>}, {transform_indices = @transform_3, window_bounds = array<i64: 256, 768>}, {transform_indices = @transform_4, window_bounds = array<i64: 256, 768>}, {transform_indices = @transform_5, window_bounds = array<i64: 1, 8, 256, 64>}, {transform_indices = @transform_6, window_bounds = array<i64: 1, 256, 256>}, {transform_indices = @transform_7, window_bounds = array<i64: 1, 256, 256>}]} {
    %c0 = arith.constant 0 : index
    %c0_0 = arith.constant 0 : index
    %c0_1 = arith.constant 0 : index
    %0 = vector.load %arg2[%c0, %c0_0, %c0_1] : memref<1x256x512xf32, #tpu.memory_space<vmem>>, vector<1x256x512xf32>
    %1 = vector.shape_cast %0 : vector<1x256x512xf32> to vector<256x512xf32>
    %2 = arith.mulf %1, %1 : vector<256x512xf32>
    %cst = arith.constant dense<0.000000e+00> : vector<256xf32>
    %3 = vector.multi_reduction <add>, %2, %cst [1] : vector<256x512xf32> to vector<256xf32>
    %4 = vector.shape_cast %3 : vector<256xf32> to vector<256x1xf32>
    %cst_2 = arith.constant 5.120000e+02 : f32
    %5 = vector.broadcast %cst_2 : f32 to vector<256x1xf32>
    %6 = arith.divf %4, %5 : vector<256x1xf32>
    %cst_3 = arith.constant 9.99999974E-6 : f32
    %7 = vector.broadcast %cst_3 : f32 to vector<256x1xf32>
    %8 = arith.addf %6, %7 : vector<256x1xf32>
    %9 = math.rsqrt %8 : vector<256x1xf32>
    %10 = vector.broadcast %9 : vector<256x1xf32> to vector<256x512xf32>
    %11 = arith.mulf %1, %10 : vector<256x512xf32>
    %c0_4 = arith.constant 0 : index
    %c0_5 = arith.constant 0 : index
    %12 = vector.load %arg4[%c0_4, %c0_5] : memref<1x512xf32, #tpu.memory_space<vmem>>, vector<1x512xf32>
    %13 = vector.broadcast %12 : vector<1x512xf32> to vector<256x512xf32>
    %14 = arith.mulf %11, %13 : vector<256x512xf32>
    %15 = arith.truncf %14 : vector<256x512xf32> to vector<256x512xbf16>
    %c0_6 = arith.constant 0 : index
    %c0_7 = arith.constant 0 : index
    %16 = vector.load %arg3[%c0_6, %c0_7] : memref<512x1792xbf16, #tpu.memory_space<vmem>>, vector<512x1792xbf16>
    %cst_8 = arith.constant dense<0.000000e+00> : vector<256x1792xf32>
    %17 = tpu.matmul %15, %16, %cst_8 {dimension_numbers = #tpu.dot_dimension_numbers<[1], [0], [0], [1], [0, 0, 1, 1], [], []>} : vector<256x512xbf16>, vector<512x1792xbf16>, vector<256x1792xf32> -> vector<256x1792xf32>
    %18 = vector.extract_strided_slice %17 {offsets = [0, 0], sizes = [256, 768], strides = [1, 1]} : vector<256x1792xf32> to vector<256x768xf32>
    %19 = vector.extract_strided_slice %17 {offsets = [0, 768], sizes = [256, 256], strides = [1, 1]} : vector<256x1792xf32> to vector<256x256xf32>
    %20 = vector.extract_strided_slice %17 {offsets = [0, 1024], sizes = [256, 768], strides = [1, 1]} : vector<256x1792xf32> to vector<256x768xf32>
    %c0_9 = arith.constant 0 : index
    %c0_10 = arith.constant 0 : index
    %21 = vector.load %arg5[%c0_9, %c0_10] : memref<256x768xf32, #tpu.memory_space<vmem>>, vector<256x768xf32>
    %22 = arith.mulf %18, %21 : vector<256x768xf32>
    %c0_11 = arith.constant 0 : index
    %c0_12 = arith.constant 0 : index
    %23 = vector.load %arg6[%c0_11, %c0_12] : memref<256x768xf32, #tpu.memory_space<vmem>>, vector<256x768xf32>
    %24 = arith.mulf %20, %23 : vector<256x768xf32>
    %25 = arith.addf %22, %24 : vector<256x768xf32>
    %26 = vector.extract_strided_slice %25 {offsets = [0, 0], sizes = [256, 512], strides = [1, 1]} : vector<256x768xf32> to vector<256x512xf32>
    %27 = vector.extract_strided_slice %25 {offsets = [0, 512], sizes = [256, 256], strides = [1, 1]} : vector<256x768xf32> to vector<256x256xf32>
    %28 = tpu.transpose %27, [1, 0] : vector<256x256xf32> -> vector<256x256xf32>
    %29 = arith.truncf %28 : vector<256x256xf32> to vector<256x256xbf16>
    %c0_13 = arith.constant 0 : index
    %c0_14 = arith.constant 0 : index
    %c0_15 = arith.constant 0 : index
    %30 = vector.load %arg8[%c0_13, %c0_14, %c0_15] : memref<1x256x256xbf16, #tpu.memory_space<vmem>>, vector<1x256x256xbf16>
    %31 = vector.shape_cast %30 : vector<1x256x256xbf16> to vector<256x256xbf16>
    %32 = vector.shape_cast %29 : vector<256x256xbf16> to vector<1x256x256xbf16>
    tpu.vector_store %arg8[%c0_13, %c0_14, %c0_15], %32 {strides = array<i32>} : memref<1x256x256xbf16, #tpu.memory_space<vmem>>, vector<1x256x256xbf16>,
    %33 = tpu.transpose %19, [1, 0] : vector<256x256xf32> -> vector<256x256xf32>
    %34 = arith.truncf %33 : vector<256x256xf32> to vector<256x256xbf16>
    %c0_16 = arith.constant 0 : index
    %c0_17 = arith.constant 0 : index
    %c0_18 = arith.constant 0 : index
    %35 = vector.load %arg9[%c0_16, %c0_17, %c0_18] : memref<1x256x256xbf16, #tpu.memory_space<vmem>>, vector<1x256x256xbf16>
    %36 = vector.shape_cast %35 : vector<1x256x256xbf16> to vector<256x256xbf16>
    %37 = vector.shape_cast %34 : vector<256x256xbf16> to vector<1x256x256xbf16>
    tpu.vector_store %arg9[%c0_16, %c0_17, %c0_18], %37 {strides = array<i32>} : memref<1x256x256xbf16, #tpu.memory_space<vmem>>, vector<1x256x256xbf16>,
    %38 = vector.extract_strided_slice %26 {offsets = [0, 0], sizes = [256, 64], strides = [1, 1]} : vector<256x512xf32> to vector<256x64xf32>
    %39 = arith.truncf %38 : vector<256x64xf32> to vector<256x64xbf16>
    %c0_19 = arith.constant 0 : index
    %c0_20 = arith.constant 0 : index
    %c0_21 = arith.constant 0 : index
    %c0_22 = arith.constant 0 : index
    %40 = vector.load %arg7[%c0_19, %c0_20, %c0_21, %c0_22] : memref<1x8x256x64xbf16, #tpu.memory_space<vmem>>, vector<1x1x256x64xbf16>
    %41 = vector.shape_cast %40 : vector<1x1x256x64xbf16> to vector<256x64xbf16>
    %42 = vector.shape_cast %39 : vector<256x64xbf16> to vector<1x1x256x64xbf16>
    tpu.vector_store %arg7[%c0_19, %c0_20, %c0_21, %c0_22], %42 {strides = array<i32>} : memref<1x8x256x64xbf16, #tpu.memory_space<vmem>>, vector<1x1x256x64xbf16>,
    %43 = vector.extract_strided_slice %26 {offsets = [0, 64], sizes = [256, 64], strides = [1, 1]} : vector<256x512xf32> to vector<256x64xf32>
    %44 = arith.truncf %43 : vector<256x64xf32> to vector<256x64xbf16>
    %c0_23 = arith.constant 0 : index
    %c1 = arith.constant 1 : index
    %c0_24 = arith.constant 0 : index
    %c0_25 = arith.constant 0 : index
    %45 = vector.load %arg7[%c0_23, %c1, %c0_24, %c0_25] : memref<1x8x256x64xbf16, #tpu.memory_space<vmem>>, vector<1x1x256x64xbf16>
    %46 = vector.shape_cast %45 : vector<1x1x256x64xbf16> to vector<256x64xbf16>
    %47 = vector.shape_cast %44 : vector<256x64xbf16> to vector<1x1x256x64xbf16>
    tpu.vector_store %arg7[%c0_23, %c1, %c0_24, %c0_25], %47 {strides = array<i32>} : memref<1x8x256x64xbf16, #tpu.memory_space<vmem>>, vector<1x1x256x64xbf16>,
    %48 = vector.extract_strided_slice %26 {offsets = [0, 128], sizes = [256, 64], strides = [1, 1]} : vector<256x512xf32> to vector<256x64xf32>
    %49 = arith.truncf %48 : vector<256x64xf32> to vector<256x64xbf16>
    %c0_26 = arith.constant 0 : index
    %c2 = arith.constant 2 : index
    %c0_27 = arith.constant 0 : index
    %c0_28 = arith.constant 0 : index
    %50 = vector.load %arg7[%c0_26, %c2, %c0_27, %c0_28] : memref<1x8x256x64xbf16, #tpu.memory_space<vmem>>, vector<1x1x256x64xbf16>
    %51 = vector.shape_cast %50 : vector<1x1x256x64xbf16> to vector<256x64xbf16>
    %52 = vector.shape_cast %49 : vector<256x64xbf16> to vector<1x1x256x64xbf16>
    tpu.vector_store %arg7[%c0_26, %c2, %c0_27, %c0_28], %52 {strides = array<i32>} : memref<1x8x256x64xbf16, #tpu.memory_space<vmem>>, vector<1x1x256x64xbf16>,
    %53 = vector.extract_strided_slice %26 {offsets = [0, 192], sizes = [256, 64], strides = [1, 1]} : vector<256x512xf32> to vector<256x64xf32>
    %54 = arith.truncf %53 : vector<256x64xf32> to vector<256x64xbf16>
    %c0_29 = arith.constant 0 : index
    %c3 = arith.constant 3 : index
    %c0_30 = arith.constant 0 : index
    %c0_31 = arith.constant 0 : index
    %55 = vector.load %arg7[%c0_29, %c3, %c0_30, %c0_31] : memref<1x8x256x64xbf16, #tpu.memory_space<vmem>>, vector<1x1x256x64xbf16>
    %56 = vector.shape_cast %55 : vector<1x1x256x64xbf16> to vector<256x64xbf16>
    %57 = vector.shape_cast %54 : vector<256x64xbf16> to vector<1x1x256x64xbf16>
    tpu.vector_store %arg7[%c0_29, %c3, %c0_30, %c0_31], %57 {strides = array<i32>} : memref<1x8x256x64xbf16, #tpu.memory_space<vmem>>, vector<1x1x256x64xbf16>,
    %58 = vector.extract_strided_slice %26 {offsets = [0, 256], sizes = [256, 64], strides = [1, 1]} : vector<256x512xf32> to vector<256x64xf32>
    %59 = arith.truncf %58 : vector<256x64xf32> to vector<256x64xbf16>
    %c0_32 = arith.constant 0 : index
    %c4 = arith.constant 4 : index
    %c0_33 = arith.constant 0 : index
    %c0_34 = arith.constant 0 : index
    %60 = vector.load %arg7[%c0_32, %c4, %c0_33, %c0_34] : memref<1x8x256x64xbf16, #tpu.memory_space<vmem>>, vector<1x1x256x64xbf16>
    %61 = vector.shape_cast %60 : vector<1x1x256x64xbf16> to vector<256x64xbf16>
    %62 = vector.shape_cast %59 : vector<256x64xbf16> to vector<1x1x256x64xbf16>
    tpu.vector_store %arg7[%c0_32, %c4, %c0_33, %c0_34], %62 {strides = array<i32>} : memref<1x8x256x64xbf16, #tpu.memory_space<vmem>>, vector<1x1x256x64xbf16>,
    %63 = vector.extract_strided_slice %26 {offsets = [0, 320], sizes = [256, 64], strides = [1, 1]} : vector<256x512xf32> to vector<256x64xf32>
    %64 = arith.truncf %63 : vector<256x64xf32> to vector<256x64xbf16>
    %c0_35 = arith.constant 0 : index
    %c5 = arith.constant 5 : index
    %c0_36 = arith.constant 0 : index
    %c0_37 = arith.constant 0 : index
    %65 = vector.load %arg7[%c0_35, %c5, %c0_36, %c0_37] : memref<1x8x256x64xbf16, #tpu.memory_space<vmem>>, vector<1x1x256x64xbf16>
    %66 = vector.shape_cast %65 : vector<1x1x256x64xbf16> to vector<256x64xbf16>
    %67 = vector.shape_cast %64 : vector<256x64xbf16> to vector<1x1x256x64xbf16>
    tpu.vector_store %arg7[%c0_35, %c5, %c0_36, %c0_37], %67 {strides = array<i32>} : memref<1x8x256x64xbf16, #tpu.memory_space<vmem>>, vector<1x1x256x64xbf16>,
    %68 = vector.extract_strided_slice %26 {offsets = [0, 384], sizes = [256, 64], strides = [1, 1]} : vector<256x512xf32> to vector<256x64xf32>
    %69 = arith.truncf %68 : vector<256x64xf32> to vector<256x64xbf16>
    %c0_38 = arith.constant 0 : index
    %c6 = arith.constant 6 : index
    %c0_39 = arith.constant 0 : index
    %c0_40 = arith.constant 0 : index
    %70 = vector.load %arg7[%c0_38, %c6, %c0_39, %c0_40] : memref<1x8x256x64xbf16, #tpu.memory_space<vmem>>, vector<1x1x256x64xbf16>
    %71 = vector.shape_cast %70 : vector<1x1x256x64xbf16> to vector<256x64xbf16>
    %72 = vector.shape_cast %69 : vector<256x64xbf16> to vector<1x1x256x64xbf16>
    tpu.vector_store %arg7[%c0_38, %c6, %c0_39, %c0_40], %72 {strides = array<i32>} : memref<1x8x256x64xbf16, #tpu.memory_space<vmem>>, vector<1x1x256x64xbf16>,
    %73 = vector.extract_strided_slice %26 {offsets = [0, 448], sizes = [256, 64], strides = [1, 1]} : vector<256x512xf32> to vector<256x64xf32>
    %74 = arith.truncf %73 : vector<256x64xf32> to vector<256x64xbf16>
    %c0_41 = arith.constant 0 : index
    %c7 = arith.constant 7 : index
    %c0_42 = arith.constant 0 : index
    %c0_43 = arith.constant 0 : index
    %75 = vector.load %arg7[%c0_41, %c7, %c0_42, %c0_43] : memref<1x8x256x64xbf16, #tpu.memory_space<vmem>>, vector<1x1x256x64xbf16>
    %76 = vector.shape_cast %75 : vector<1x1x256x64xbf16> to vector<256x64xbf16>
    %77 = vector.shape_cast %74 : vector<256x64xbf16> to vector<1x1x256x64xbf16>
    tpu.vector_store %arg7[%c0_41, %c7, %c0_42, %c0_43], %77 {strides = array<i32>} : memref<1x8x256x64xbf16, #tpu.memory_space<vmem>>, vector<1x1x256x64xbf16>,
    return
  }
  func.func @transform_0(%arg0: i32, %arg1: i32) -> (i32, i32, i32) {
    %c0_i32 = arith.constant 0 : i32
    %c0_i32_0 = arith.constant 0 : i32
    return %arg1, %arg0, %c0_i32 : i32, i32, i32
  }
  func.func @transform_1(%arg0: i32, %arg1: i32) -> (i32, i32) {
    %c0_i32 = arith.constant 0 : i32
    %c0_i32_0 = arith.constant 0 : i32
    %c0_i32_1 = arith.constant 0 : i32
    return %c0_i32, %c0_i32_0 : i32, i32
  }
  func.func @transform_2(%arg0: i32, %arg1: i32) -> (i32, i32) {
    %c0_i32 = arith.constant 0 : i32
    %c0_i32_0 = arith.constant 0 : i32
    %c0_i32_1 = arith.constant 0 : i32
    return %c0_i32, %c0_i32_0 : i32, i32
  }
  func.func @transform_3(%arg0: i32, %arg1: i32) -> (i32, i32) {
    %c0_i32 = arith.constant 0 : i32
    %c0_i32_0 = arith.constant 0 : i32
    return %arg0, %c0_i32 : i32, i32
  }
  func.func @transform_4(%arg0: i32, %arg1: i32) -> (i32, i32) {
    %c0_i32 = arith.constant 0 : i32
    %c0_i32_0 = arith.constant 0 : i32
    return %arg0, %c0_i32 : i32, i32
  }
  func.func @transform_5(%arg0: i32, %arg1: i32) -> (i32, i32, i32, i32) {
    %c0_i32 = arith.constant 0 : i32
    %c0_i32_0 = arith.constant 0 : i32
    %c0_i32_1 = arith.constant 0 : i32
    return %arg1, %c0_i32, %arg0, %c0_i32_0 : i32, i32, i32, i32
  }
  func.func @transform_6(%arg0: i32, %arg1: i32) -> (i32, i32, i32) {
    %c0_i32 = arith.constant 0 : i32
    %c0_i32_0 = arith.constant 0 : i32
    return %arg1, %c0_i32, %arg0 : i32, i32, i32
  }
  func.func @transform_7(%arg0: i32, %arg1: i32) -> (i32, i32, i32) {
    %c0_i32 = arith.constant 0 : i32
    %c0_i32_0 = arith.constant 0 : i32
    return %arg1, %c0_i32, %arg0 : i32, i32, i32
  }
}

</mosaic_0001>

<llo_original>
// kernel: tpu_custom_call.1
$region0: #{tpu_custom_call.1}
  #allocation0 [shape = 'u32[]', space=smem, size = 0x4, offset = 0x4, fixed_abs, tag = 'smem constant byte address 0x4 - core index']
  #allocation1 [shape = 'u32[144,128]{1,0:T(1,128)}', space=vmem, size = 0x12000, scoped, tag = 'internal scratch']
  %s0 = inlined_call_operand.hbm [shape: f32[2,256,512], index: 0, kind: input, shape index: {}]
  %s1 = inlined_call_operand.hbm [shape: bf16[512,1792], index: 1, kind: input, shape index: {}]
  %s2 = inlined_call_operand.hbm [shape: f32[1,512], index: 2, kind: input, shape index: {}]
  %s3 = inlined_call_operand.hbm [shape: f32[256,768], index: 3, kind: input, shape index: {}]
  %s4 = inlined_call_operand.hbm [shape: f32[256,768], index: 4, kind: input, shape index: {}]
  %s5 = inlined_call_operand.vmem [shape: bf16[2,8,256,64], index: 5, kind: output, shape index: {0}]
  %s6 = inlined_call_operand.hbm [shape: bf16[2,256,256], index: 6, kind: output, shape index: {1}]
  %s7 = inlined_call_operand.hbm [shape: bf16[2,256,256], index: 7, kind: output, shape index: {2}]
  %8 = xla_tuple %s5, %s6, %s7
  %s9 = sld [smem:[#allocation0]]
  $region89: #{tpu_custom_call.1} parent=0
    _
  %s11 = ssub.s32 1, %s9
  %s12 = scalar_select 0, %s11, %s9
  $region1: #{tpu_custom_call.1} parent=0
    #allocation2 [shape = 'u8[1048576]{0}', space=vmem, size = 0x100000, scoped, tag = 'input window, operand 0']
    #allocation3 [shape = 's32[2]{0}', space=sflag, size = 0x8, scoped, tag = 'scoped memory for tpu_custom_call.1']
    #allocation4 [shape = 's32[2]{0}', space=sflag, size = 0x8, scoped, tag = 'scoped memory for tpu_custom_call.1']
    #allocation5 [shape = 'u8[1835008]{0}', space=vmem, size = 0x1c0000, scoped, tag = 'input window, operand 1, single buffered']
    #allocation6 [shape = 's32[1]{0}', space=sflag, size = 0x4, scoped, tag = 'scoped memory for tpu_custom_call.1']
    #allocation7 [shape = 'u8[2048]{0}', space=vmem, size = 0x800, scoped, tag = 'input window, operand 2, single buffered']
    #allocation8 [shape = 'u8[786432]{0}', space=vmem, size = 0xc0000, scoped, tag = 'input window, operand 3, single buffered']
    #allocation9 [shape = 's32[1]{0}', space=sflag, size = 0x4, scoped, tag = 'scoped memory for tpu_custom_call.1']
    #allocation10 [shape = 'u8[786432]{0}', space=vmem, size = 0xc0000, scoped, tag = 'input window, operand 4, single buffered']
    #allocation11 [shape = 'u8[262144]{0}', space=vmem, size = 0x40000, scoped, tag = 'output window, operand 1']
    #allocation12 [shape = 'u8[262144]{0}', space=vmem, size = 0x40000, scoped, tag = 'output window, operand 2']
    #allocation13 [shape = 's32[2]{0}', space=sflag, size = 0x8, scoped, tag = 'scoped memory for tpu_custom_call.1']
    %13 = vsyncpa [#allocation3], 0
    %s14 = scalar_lea.sflag [#allocation3], 1
    %15 = vsyncpa %s14, 0
    %16 = vsyncpa [#allocation6], 0
    %17 = vsyncpa [#allocation9], 0
    %18 = vsyncpa [#allocation4], 0
    %s19 = scalar_lea.sflag [#allocation4], 1
    %20 = vsyncpa %s19, 0
    %21 = vsyncpa [#allocation13], 0
    %s22 = scalar_lea.sflag [#allocation13], 1
    %23 = vsyncpa %s22, 0
    loop: start=0, step=1, limit=4
    $region2: #{tpu_custom_call.1} parent=1 // loop_pre_header
      _
    $region3: #{tpu_custom_call.1} parent=1 // loop_header
      %s25 = sphi 0, %s29
      %p26 = scmp.ge.s32.totalorder %s25, 4
      %s32 = sphi 0, %s44
      %s33 = sphi 0, %s40
      %s34 = sphi 0, %s32
      %s35 = sphi 0, %s33
      %s36 = sphi 0, %s34
      %s37 = sphi 0, %s35
      %s49 = sphi 0, %s51
      %s52 = sphi 0, %s49
      %s53 = sphi 0, %s52
      %s69 = sphi 0, %s53
      %s73 = sphi 0, %s73
      %s75 = sphi 0, %s73
      %s76 = sphi 0, %s75
      %s90 = sphi 0, %s76
      %s94 = sphi 0, %s94
      %s96 = sphi 0, %s94
      %s97 = sphi 0, %s96
      %s111 = sphi 0, %s97
      %s117 = sphi 0, %s119
      %s120 = sphi 0, %s117
      %s121 = sphi 0, %s120
      %s137 = sphi 0, %s121
      %s143 = sphi 0, %s145
      %s146 = sphi 0, %s143
      %s147 = sphi 0, %s146
      %s163 = sphi 0, %s147
      %s171 = sphi 0, %s173
      %s174 = sphi 0, %s171
      %s175 = sphi 0, %s174
      %s191 = sphi 0, %s175
      %s199 = sphi 0, %s201
      %s202 = sphi 0, %s199
      %s203 = sphi 0, %s202
      %s219 = sphi 0, %s203
      %s227 = sphi 0, %s229
      %s230 = sphi 0, %s227
      %s231 = sphi 0, %s230
      %s247 = sphi 0, %s231
    $region4: #{tpu_custom_call.1} parent=1 // loop_header_branch
      %28 = sbr.rel (%p26) target = $region8
    $region5: #{tpu_custom_call.1} parent=1 // loop_body
      %s30 = ssub.s32 %s25, 1
      %s31 = ssub.s32 %s25, 2
      %s38 = sadd.s32 1, %s33
      %p39 = scmp.ge.s32.totalorder %s38, 2
      %s40 = scalar_select %p39, 0, %s38
      %s41 = sadd.s32 1, %s32
      %s42 = scalar_select %p39, %s41, %s32
      %p43 = scmp.ge.s32.totalorder %s42, 1
      %s44 = scalar_select %p43, 0, %s42
      %s45 = ssub.s32 %s33, %s40
      %s46 = ssub.s32 %s32, %s44
      %s47 = sor.u32 %s45, %s46
      %p48 = scmp.eq.s32.totalorder %s47, 0
      %s50 = sadd.s32 %s49, 1
      %s51 = scalar_select %p48, %s49, %s50
      %p54 = pneg %p48
      %p55 = scmp.eq.s32.totalorder %s25, 1
      %p56 = por %p54, %p55
      %p57 = scmp.ne.s32.totalorder %s49, %s52
      %p58 = scmp.eq.s32.totalorder %s25, 0
      %p59 = por %p57, %p58
      %p60 = scmp.ne.s32.totalorder %s49, %s52
      %p61 = scmp.eq.s32.totalorder %s30, 1
      %p62 = por %p60, %p61
      %p63 = scmp.ne.s32.totalorder %s52, %s53
      %p64 = scmp.eq.s32.totalorder %s30, 0
      %p65 = por %p63, %p64
      %p66 = scmp.ne.s32.totalorder %s52, %s53
      %p67 = scmp.eq.s32.totalorder %s31, 1
      %p68 = por %p66, %p67
      %p70 = scmp.ne.s32.totalorder %s53, %s69
      %p71 = scmp.eq.s32.totalorder %s31, 0
      %p72 = por %p70, %p71
      %s74 = sadd.s32 %s73, 1
      %p77 = scmp.eq.s32.totalorder %s25, 1
      %p78 = scmp.ne.s32.totalorder %s73, %s75
      %p79 = scmp.eq.s32.totalorder %s25, 0
      %p80 = por %p78, %p79
      %p81 = scmp.ne.s32.totalorder %s73, %s75
      %p82 = scmp.eq.s32.totalorder %s30, 1
      %p83 = por %p81, %p82
      %p84 = scmp.ne.s32.totalorder %s75, %s76
      %p85 = scmp.eq.s32.totalorder %s30, 0
      %p86 = por %p84, %p85
      %p87 = scmp.ne.s32.totalorder %s75, %s76
      %p88 = scmp.eq.s32.totalorder %s31, 1
      %p89 = por %p87, %p88
      %p91 = scmp.ne.s32.totalorder %s76, %s90
      %p92 = scmp.eq.s32.totalorder %s31, 0
      %p93 = por %p91, %p92
      %s95 = sadd.s32 %s94, 1
      %p98 = scmp.eq.s32.totalorder %s25, 1
      %p99 = scmp.ne.s32.totalorder %s94, %s96
      %p100 = scmp.eq.s32.totalorder %s25, 0
      %p101 = por %p99, %p100
      %p102 = scmp.ne.s32.totalorder %s94, %s96
      %p103 = scmp.eq.s32.totalorder %s30, 1
      %p104 = por %p102, %p103
      %p105 = scmp.ne.s32.totalorder %s96, %s97
      %p106 = scmp.eq.s32.totalorder %s30, 0
      %p107 = por %p105, %p106
      %p108 = scmp.ne.s32.totalorder %s96, %s97
      %p109 = scmp.eq.s32.totalorder %s31, 1
      %p110 = por %p108, %p109
      %p112 = scmp.ne.s32.totalorder %s97, %s111
      %p113 = scmp.eq.s32.totalorder %s31, 0
      %p114 = por %p112, %p113
      %s115 = ssub.s32 %s32, %s44
      %p116 = scmp.eq.s32.totalorder %s115, 0
      %s118 = sadd.s32 %s117, 1
      %s119 = scalar_select %p116, %s117, %s118
      %p122 = pneg %p116
      %p123 = scmp.eq.s32.totalorder %s25, 1
      %p124 = por %p122, %p123
      %p125 = scmp.ne.s32.totalorder %s117, %s120
      %p126 = scmp.eq.s32.totalorder %s25, 0
      %p127 = por %p125, %p126
      %p128 = scmp.ne.s32.totalorder %s117, %s120
      %p129 = scmp.eq.s32.totalorder %s30, 1
      %p130 = por %p128, %p129
      %p131 = scmp.ne.s32.totalorder %s120, %s121
      %p132 = scmp.eq.s32.totalorder %s30, 0
      %p133 = por %p131, %p132
      %p134 = scmp.ne.s32.totalorder %s120, %s121
      %p135 = scmp.eq.s32.totalorder %s31, 1
      %p136 = por %p134, %p135
      %p138 = scmp.ne.s32.totalorder %s121, %s137
      %p139 = scmp.eq.s32.totalorder %s31, 0
      %p140 = por %p138, %p139
      %s141 = ssub.s32 %s32, %s44
      %p142 = scmp.eq.s32.totalorder %s141, 0
      %s144 = sadd.s32 %s143, 1
      %s145 = scalar_select %p142, %s143, %s144
      %p148 = pneg %p142
      %p149 = scmp.eq.s32.totalorder %s25, 1
      %p150 = por %p148, %p149
      %p151 = scmp.ne.s32.totalorder %s143, %s146
      %p152 = scmp.eq.s32.totalorder %s25, 0
      %p153 = por %p151, %p152
      %p154 = scmp.ne.s32.totalorder %s143, %s146
      %p155 = scmp.eq.s32.totalorder %s30, 1
      %p156 = por %p154, %p155
      %p157 = scmp.ne.s32.totalorder %s146, %s147
      %p158 = scmp.eq.s32.totalorder %s30, 0
      %p159 = por %p157, %p158
      %p160 = scmp.ne.s32.totalorder %s146, %s147
      %p161 = scmp.eq.s32.totalorder %s31, 1
      %p162 = por %p160, %p161
      %p164 = scmp.ne.s32.totalorder %s147, %s163
      %p165 = scmp.eq.s32.totalorder %s31, 0
      %p166 = por %p164, %p165
      %s167 = ssub.s32 %s33, %s40
      %s168 = ssub.s32 %s32, %s44
      %s169 = sor.u32 %s167, %s168
      %p170 = scmp.eq.s32.totalorder %s169, 0
      %s172 = sadd.s32 %s171, 1
      %s173 = scalar_select %p170, %s171, %s172
      %p176 = pneg %p170
      %p177 = scmp.eq.s32.totalorder %s25, 1
      %p178 = por %p176, %p177
      %p179 = scmp.ne.s32.totalorder %s171, %s174
      %p180 = scmp.eq.s32.totalorder %s25, 0
      %p181 = por %p179, %p180
      %p182 = scmp.ne.s32.totalorder %s171, %s174
      %p183 = scmp.eq.s32.totalorder %s30, 1
      %p184 = por %p182, %p183
      %p185 = scmp.ne.s32.totalorder %s174, %s175
      %p186 = scmp.eq.s32.totalorder %s30, 0
      %p187 = por %p185, %p186
      %p188 = scmp.ne.s32.totalorder %s174, %s175
      %p189 = scmp.eq.s32.totalorder %s31, 1
      %p190 = por %p188, %p189
      %p192 = scmp.ne.s32.totalorder %s175, %s191
      %p193 = scmp.eq.s32.totalorder %s31, 0
      %p194 = por %p192, %p193
      %s195 = ssub.s32 %s33, %s40
      %s196 = ssub.s32 %s32, %s44
      %s197 = sor.u32 %s195, %s196
      %p198 = scmp.eq.s32.totalorder %s197, 0
      %s200 = sadd.s32 %s199, 1
      %s201 = scalar_select %p198, %s199, %s200
      %p204 = pneg %p198
      %p205 = scmp.eq.s32.totalorder %s25, 1
      %p206 = por %p204, %p205
      %p207 = scmp.ne.s32.totalorder %s199, %s202
      %p208 = scmp.eq.s32.totalorder %s25, 0
      %p209 = por %p207, %p208
      %p210 = scmp.ne.s32.totalorder %s199, %s202
      %p211 = scmp.eq.s32.totalorder %s30, 1
      %p212 = por %p210, %p211
      %p213 = scmp.ne.s32.totalorder %s202, %s203
      %p214 = scmp.eq.s32.totalorder %s30, 0
      %p215 = por %p213, %p214
      %p216 = scmp.ne.s32.totalorder %s202, %s203
      %p217 = scmp.eq.s32.totalorder %s31, 1
      %p218 = por %p216, %p217
      %p220 = scmp.ne.s32.totalorder %s203, %s219
      %p221 = scmp.eq.s32.totalorder %s31, 0
      %p222 = por %p220, %p221
      %s223 = ssub.s32 %s33, %s40
      %s224 = ssub.s32 %s32, %s44
      %s225 = sor.u32 %s223, %s224
      %p226 = scmp.eq.s32.totalorder %s225, 0
      %s228 = sadd.s32 %s227, 1
      %s229 = scalar_select %p226, %s227, %s228
      %p232 = pneg %p226
      %p233 = scmp.eq.s32.totalorder %s25, 1
      %p234 = por %p232, %p233
      %p235 = scmp.ne.s32.totalorder %s227, %s230
      %p236 = scmp.eq.s32.totalorder %s25, 0
      %p237 = por %p235, %p236
      %p238 = scmp.ne.s32.totalorder %s227, %s230
      %p239 = scmp.eq.s32.totalorder %s30, 1
      %p240 = por %p238, %p239
      %p241 = scmp.ne.s32.totalorder %s230, %s231
      %p242 = scmp.eq.s32.totalorder %s30, 0
      %p243 = por %p241, %p242
      %p244 = scmp.ne.s32.totalorder %s230, %s231
      %p245 = scmp.eq.s32.totalorder %s31, 1
      %p246 = por %p244, %p245
      %p248 = scmp.ne.s32.totalorder %s231, %s247
      %p249 = scmp.eq.s32.totalorder %s31, 0
      %p250 = por %p248, %p249
      %p251 = scmp.le.s32.totalorder 1, %s25
      %p252 = scmp.lt.s32.totalorder %s25, 3
      %p253 = pnand %p251, %p252
      %p254 = pneg %p253
      // Predicated region
      $region9: #{tpu_custom_call.1} parent=5 // pred_check
        _
      $region10: #{tpu_custom_call.1} parent=5 // pred_check_branch
        %256 = sbr.rel (%p253) target = $region12
      $region11: #{tpu_custom_call.1} parent=5 // pred_region
        %s257 = ssub.s32 %s25, 1
        // Predicated region
        $region13: #{tpu_custom_call.1} parent=11 // pred_check
          %p258 = pneg %p86
        $region14: #{tpu_custom_call.1} parent=11 // pred_check_branch
          %260 = sbr.rel (%p258) target = $region16
        $region15: #{tpu_custom_call.1} parent=11 // pred_region
          %s262 = ssub.s32 57344, 57344
          %263 = vsyncadd [#allocation6], %s262
          %s264 = sshll.u32 [#allocation5], 4
          %s265 = int_to_ptr.vmem [resolvable:$true] %s264
          %270 = dma.hbm_to_vmem [thread:$0]  %s1, 57344, %s265, [#allocation6], 896, 896, 56
        $region16: #{tpu_custom_call.1} parent=11 // pred_fallthru
          _
        // Predicated region
        $region17: #{tpu_custom_call.1} parent=11 // pred_check
          %p271 = pneg %p107
        $region18: #{tpu_custom_call.1} parent=11 // pred_check_branch
          %273 = sbr.rel (%p271) target = $region20
        $region19: #{tpu_custom_call.1} parent=11 // pred_region
          %s275 = ssub.s32 64, 64
          %276 = vsyncadd [#allocation6], %s275
          %s278 = sshll.u32 [#allocation7], 4
          %s279 = int_to_ptr.vmem [resolvable:$true] %s278
          %281 = dma.hbm_to_vmem [thread:$0]  %s2, 64, %s279, [#allocation6]
        $region20: #{tpu_custom_call.1} parent=11 // pred_fallthru
          _
        // Predicated region
        $region21: #{tpu_custom_call.1} parent=11 // pred_check
          %p282 = pneg %p133
        $region22: #{tpu_custom_call.1} parent=11 // pred_check_branch
          %284 = sbr.rel (%p282) target = $region24
        $region23: #{tpu_custom_call.1} parent=11 // pred_region
          %s285 = smul.u32 32, %s34
          %s287 = ssub.s32 24576, 24576
          %288 = vsyncadd [#allocation9], %s287
          %s289 = smul.addr %s285, 6
          %s290 = smul.addr %s289, 128
          %s291 = scalar_lea.hbm %s3, %s290
          %s292 = sshll.u32 [#allocation8], 4
          %s293 = int_to_ptr.vmem [resolvable:$true] %s292
          %298 = dma.hbm_to_vmem [thread:$0]  %s291, 24576, %s293, [#allocation9], 768, 768, 48
        $region24: #{tpu_custom_call.1} parent=11 // pred_fallthru
          _
        // Predicated region
        $region25: #{tpu_custom_call.1} parent=11 // pred_check
          %p299 = pneg %p159
        $region26: #{tpu_custom_call.1} parent=11 // pred_check_branch
          %301 = sbr.rel (%p299) target = $region28
        $region27: #{tpu_custom_call.1} parent=11 // pred_region
          %s302 = smul.u32 32, %s34
          %s304 = ssub.s32 24576, 24576
          %305 = vsyncadd [#allocation9], %s304
          %s306 = smul.addr %s302, 6
          %s307 = smul.addr %s306, 128
          %s308 = scalar_lea.hbm %s4, %s307
          %s309 = sshll.u32 [#allocation10], 4
          %s310 = int_to_ptr.vmem [resolvable:$true] %s309
          %315 = dma.hbm_to_vmem [thread:$0]  %s308, 24576, %s310, [#allocation9], 768, 768, 48
        $region28: #{tpu_custom_call.1} parent=11 // pred_fallthru
          _
      $region12: #{tpu_custom_call.1} parent=5 // pred_fallthru
        _
      %p316 = scmp.lt.s32.totalorder %s25, 2
      // Predicated region
      $region29: #{tpu_custom_call.1} parent=5 // pred_check
        %p317 = pneg %p316
      $region30: #{tpu_custom_call.1} parent=5 // pred_check_branch
        %319 = sbr.rel (%p317) target = $region32
      $region31: #{tpu_custom_call.1} parent=5 // pred_region
        // Predicated region
        $region33: #{tpu_custom_call.1} parent=31 // pred_check
          %p320 = pneg %p59
        $region34: #{tpu_custom_call.1} parent=31 // pred_check_branch
          %322 = sbr.rel (%p320) target = $region36
        $region35: #{tpu_custom_call.1} parent=31 // pred_region
          %s323 = sand.u32 %s49, 1
          %s324 = scalar_lea.sflag [#allocation3], %s323
          %s325 = sand.u32 %s49, 1
          %s326 = smul.addr %s325, 1024
          %s327 = scalar_lea.vmem [#allocation2], %s326
          %s328 = smul.u32 32, %s32
          %s330 = ssub.s32 16384, 16384
          %331 = vsyncadd %s324, %s330
          %s332 = smul.addr %s328, 4
          %s333 = smul.addr %s33, 128
          %s334 = sadd.s32 %s332, %s333
          %s335 = smul.addr %s334, 128
          %s336 = scalar_lea.hbm %s0, %s335
          %s337 = sshll.u32 %s327, 4
          %s338 = int_to_ptr.vmem [resolvable:$true] %s337
          %343 = dma.hbm_to_vmem [thread:$0]  %s336, 16384, %s338, %s324, 512, 512, 32
        $region36: #{tpu_custom_call.1} parent=31 // pred_fallthru
          _
      $region32: #{tpu_custom_call.1} parent=5 // pred_fallthru
        _
      %p344 = scmp.le.s32.totalorder 1, %s25
      %p345 = scmp.lt.s32.totalorder %s25, 3
      %p346 = pnand %p344, %p345
      %p347 = pneg %p346
      // Predicated region
      $region37: #{tpu_custom_call.1} parent=5 // pred_check
        _
      $region38: #{tpu_custom_call.1} parent=5 // pred_check_branch
        %349 = sbr.rel (%p346) target = $region40
      $region39: #{tpu_custom_call.1} parent=5 // pred_region
        %s350 = ssub.s32 %s25, 1
        %s351 = sand.u32 %s52, 1
        %s352 = scalar_lea.sflag [#allocation3], %s351
        %s353 = sand.u32 %s52, 1
        %s354 = smul.addr %s353, 1024
        %s355 = scalar_lea.vmem [#allocation2], %s354
        // Predicated region
        $region41: #{tpu_custom_call.1} parent=39 // pred_check
          %p356 = pneg %p65
        $region42: #{tpu_custom_call.1} parent=39 // pred_check_branch
          %358 = sbr.rel (%p356) target = $region44
        $region43: #{tpu_custom_call.1} parent=39 // pred_region
          %359 = dma.done %s352, 16384
        $region44: #{tpu_custom_call.1} parent=39 // pred_fallthru
          _
        // Predicated region
        $region45: #{tpu_custom_call.1} parent=39 // pred_check
          %p360 = pneg %p86
        $region46: #{tpu_custom_call.1} parent=39 // pred_check_branch
          %362 = sbr.rel (%p360) target = $region48
        $region47: #{tpu_custom_call.1} parent=39 // pred_region
          %363 = dma.done [#allocation6], 57344
        $region48: #{tpu_custom_call.1} parent=39 // pred_fallthru
          _
        // Predicated region
        $region49: #{tpu_custom_call.1} parent=39 // pred_check
          %p364 = pneg %p107
        $region50: #{tpu_custom_call.1} parent=39 // pred_check_branch
          %366 = sbr.rel (%p364) target = $region52
        $region51: #{tpu_custom_call.1} parent=39 // pred_region
          %367 = dma.done [#allocation6], 64
        $region52: #{tpu_custom_call.1} parent=39 // pred_fallthru
          _
        // Predicated region
        $region53: #{tpu_custom_call.1} parent=39 // pred_check
          %p368 = pneg %p133
        $region54: #{tpu_custom_call.1} parent=39 // pred_check_branch
          %370 = sbr.rel (%p368) target = $region56
        $region55: #{tpu_custom_call.1} parent=39 // pred_region
          %371 = dma.done [#allocation9], 24576
        $region56: #{tpu_custom_call.1} parent=39 // pred_fallthru
          _
        // Predicated region
        $region57: #{tpu_custom_call.1} parent=39 // pred_check
          %p372 = pneg %p159
        $region58: #{tpu_custom_call.1} parent=39 // pred_check_branch
          %374 = sbr.rel (%p372) target = $region60
        $region59: #{tpu_custom_call.1} parent=39 // pred_region
          %375 = dma.done [#allocation9], 24576
        $region60: #{tpu_custom_call.1} parent=39 // pred_fallthru
          _
        %s376 = sand.u32 %s52, 1
        %s377 = scalar_lea.sflag [#allocation3], %s376
        %s378 = sand.u32 %s52, 1
        %s379 = smul.addr %s378, 1024
        %s380 = scalar_lea.vmem [#allocation2], %s379
        %p381 = pneg %p65
        %p382 = pneg %p62
        %p383 = pneg %p86
        %p384 = pneg %p83
        %p385 = pneg %p107
        %p386 = pneg %p104
        %p387 = pneg %p133
        %p388 = pneg %p130
        %p389 = pneg %p159
        %p390 = pneg %p156
        %p391 = pneg %p187
        %p392 = pneg %p184
        %s393 = smul.u32 32, %s34
        %p394 = scmp.lt.s32.totalorder %s35, 1
        %s395 = scalar_select %p394, %s35, 1
        %p396 = scmp.lt.s32.totalorder %s393, 31
        %s397 = scalar_select %p396, %s393, 31
        %s398 = smul.addr %s395, 256
        %s399 = sadd.s32 %s397, %s398
        %s400 = smul.addr %s399, 4
        %s401 = scalar_lea.vmem %s5, %s400
        %p402 = pneg %p215
        %p403 = pneg %p212
        %s404 = sand.u32 %s202, 1
        %s405 = scalar_lea.sflag [#allocation4], %s404
        %s406 = sand.u32 %s202, 1
        %s407 = smul.addr %s406, 256
        %s408 = scalar_lea.vmem [#allocation11], %s407
        %p409 = pneg %p243
        %p410 = pneg %p240
        %s411 = sand.u32 %s230, 1
        %s412 = scalar_lea.sflag [#allocation13], %s411
        %s413 = sand.u32 %s230, 1
        %s414 = smul.addr %s413, 256
        %s415 = scalar_lea.vmem [#allocation12], %s414
        %s416 = smul.u32 32, %s34
        %s417 = smul.u32 32, %s34
        %s418 = smul.u32 32, %s34
        %s419 = smul.u32 32, %s34
        %p420 = scmp.lt.s32.totalorder %s35, 1
        %s421 = scalar_select %p420, %s35, 1
        %p422 = scmp.lt.s32.totalorder %s419, 31
        %s423 = scalar_select %p422, %s419, 31
        %s424 = smul.addr %s421, 256
        %s425 = sadd.s32 %s423, %s424
        %s426 = smul.addr %s425, 4
        %s427 = scalar_lea.vmem %s5, %s426
        %s428 = smul.u32 32, %s34
        %s429 = smul.u32 2, %s34
        %s430 = smul.u32 2, %s34
        %v431 = vld [vmem:[%s355] sm:$0xff]
        %v432 = vld [vmem:[%s355 + $0x8] sm:$0xff]
        %v433 = vld [vmem:[%s355 + $0x10] sm:$0xff]
        %v434 = vld [vmem:[%s355 + $0x18] sm:$0xff]
        %v435 = vld [vmem:[%s355 + $0x20] sm:$0xff]
        %v436 = vld [vmem:[%s355 + $0x28] sm:$0xff]
        %v437 = vld [vmem:[%s355 + $0x30] sm:$0xff]
        %v438 = vld [vmem:[%s355 + $0x38] sm:$0xff]
        %v439 = vld [vmem:[%s355 + $0x40] sm:$0xff]
        %v440 = vld [vmem:[%s355 + $0x48] sm:$0xff]
        %v441 = vld [vmem:[%s355 + $0x50] sm:$0xff]
        %v442 = vld [vmem:[%s355 + $0x58] sm:$0xff]
        %v443 = vld [vmem:[%s355 + $0x60] sm:$0xff]
        %v444 = vld [vmem:[%s355 + $0x68] sm:$0xff]
        %v445 = vld [vmem:[%s355 + $0x70] sm:$0xff]
        %v446 = vld [vmem:[%s355 + $0x78] sm:$0xff]
        %v447 = vld [vmem:[%s355 + $0x80] sm:$0xff]
        %v448 = vld [vmem:[%s355 + $0x88] sm:$0xff]
        %v449 = vld [vmem:[%s355 + $0x90] sm:$0xff]
        %v450 = vld [vmem:[%s355 + $0x98] sm:$0xff]
        %v451 = vld [vmem:[%s355 + $0xa0] sm:$0xff]
        %v452 = vld [vmem:[%s355 + $0xa8] sm:$0xff]
        %v453 = vld [vmem:[%s355 + $0xb0] sm:$0xff]
        %v454 = vld [vmem:[%s355 + $0xb8] sm:$0xff]
        %v455 = vld [vmem:[%s355 + $0xc0] sm:$0xff]
        %v456 = vld [vmem:[%s355 + $0xc8] sm:$0xff]
        %v457 = vld [vmem:[%s355 + $0xd0] sm:$0xff]
        %v458 = vld [vmem:[%s355 + $0xd8] sm:$0xff]
        %v459 = vld [vmem:[%s355 + $0xe0] sm:$0xff]
        %v460 = vld [vmem:[%s355 + $0xe8] sm:$0xff]
        %v461 = vld [vmem:[%s355 + $0xf0] sm:$0xff]
        %v462 = vld [vmem:[%s355 + $0xf8] sm:$0xff]
        %v463 = vld [vmem:[%s355 + $0x100] sm:$0xff]
        %v464 = vld [vmem:[%s355 + $0x108] sm:$0xff]
        %v465 = vld [vmem:[%s355 + $0x110] sm:$0xff]
        %v466 = vld [vmem:[%s355 + $0x118] sm:$0xff]
        %v467 = vld [vmem:[%s355 + $0x120] sm:$0xff]
        %v468 = vld [vmem:[%s355 + $0x128] sm:$0xff]
        %v469 = vld [vmem:[%s355 + $0x130] sm:$0xff]
        %v470 = vld [vmem:[%s355 + $0x138] sm:$0xff]
        %v471 = vld [vmem:[%s355 + $0x140] sm:$0xff]
        %v472 = vld [vmem:[%s355 + $0x148] sm:$0xff]
        %v473 = vld [vmem:[%s355 + $0x150] sm:$0xff]
        %v474 = vld [vmem:[%s355 + $0x158] sm:$0xff]
        %v475 = vld [vmem:[%s355 + $0x160] sm:$0xff]
        %v476 = vld [vmem:[%s355 + $0x168] sm:$0xff]
        %v477 = vld [vmem:[%s355 + $0x170] sm:$0xff]
        %v478 = vld [vmem:[%s355 + $0x178] sm:$0xff]
        %v479 = vld [vmem:[%s355 + $0x180] sm:$0xff]
        %v480 = vld [vmem:[%s355 + $0x188] sm:$0xff]
        %v481 = vld [vmem:[%s355 + $0x190] sm:$0xff]
        %v482 = vld [vmem:[%s355 + $0x198] sm:$0xff]
        %v483 = vld [vmem:[%s355 + $0x1a0] sm:$0xff]
        %v484 = vld [vmem:[%s355 + $0x1a8] sm:$0xff]
        %v485 = vld [vmem:[%s355 + $0x1b0] sm:$0xff]
        %v486 = vld [vmem:[%s355 + $0x1b8] sm:$0xff]
        %v487 = vld [vmem:[%s355 + $0x1c0] sm:$0xff]
        %v488 = vld [vmem:[%s355 + $0x1c8] sm:$0xff]
        %v489 = vld [vmem:[%s355 + $0x1d0] sm:$0xff]
        %v490 = vld [vmem:[%s355 + $0x1d8] sm:$0xff]
        %v491 = vld [vmem:[%s355 + $0x1e0] sm:$0xff]
        %v492 = vld [vmem:[%s355 + $0x1e8] sm:$0xff]
        %v493 = vld [vmem:[%s355 + $0x1f0] sm:$0xff]
        %v494 = vld [vmem:[%s355 + $0x1f8] sm:$0xff]
        %v495 = vld [vmem:[%s355 + $0x200] sm:$0xff]
        %v496 = vld [vmem:[%s355 + $0x208] sm:$0xff]
        %v497 = vld [vmem:[%s355 + $0x210] sm:$0xff]
        %v498 = vld [vmem:[%s355 + $0x218] sm:$0xff]
        %v499 = vld [vmem:[%s355 + $0x220] sm:$0xff]
        %v500 = vld [vmem:[%s355 + $0x228] sm:$0xff]
        %v501 = vld [vmem:[%s355 + $0x230] sm:$0xff]
        %v502 = vld [vmem:[%s355 + $0x238] sm:$0xff]
        %v503 = vld [vmem:[%s355 + $0x240] sm:$0xff]
        %v504 = vld [vmem:[%s355 + $0x248] sm:$0xff]
        %v505 = vld [vmem:[%s355 + $0x250] sm:$0xff]
        %v506 = vld [vmem:[%s355 + $0x258] sm:$0xff]
        %v507 = vld [vmem:[%s355 + $0x260] sm:$0xff]
        %v508 = vld [vmem:[%s355 + $0x268] sm:$0xff]
        %v509 = vld [vmem:[%s355 + $0x270] sm:$0xff]
        %v510 = vld [vmem:[%s355 + $0x278] sm:$0xff]
        %v511 = vld [vmem:[%s355 + $0x280] sm:$0xff]
        %v512 = vld [vmem:[%s355 + $0x288] sm:$0xff]
        %v513 = vld [vmem:[%s355 + $0x290] sm:$0xff]
        %v514 = vld [vmem:[%s355 + $0x298] sm:$0xff]
        %v515 = vld [vmem:[%s355 + $0x2a0] sm:$0xff]
        %v516 = vld [vmem:[%s355 + $0x2a8] sm:$0xff]
        %v517 = vld [vmem:[%s355 + $0x2b0] sm:$0xff]
        %v518 = vld [vmem:[%s355 + $0x2b8] sm:$0xff]
        %v519 = vld [vmem:[%s355 + $0x2c0] sm:$0xff]
        %v520 = vld [vmem:[%s355 + $0x2c8] sm:$0xff]
        %v521 = vld [vmem:[%s355 + $0x2d0] sm:$0xff]
        %v522 = vld [vmem:[%s355 + $0x2d8] sm:$0xff]
        %v523 = vld [vmem:[%s355 + $0x2e0] sm:$0xff]
        %v524 = vld [vmem:[%s355 + $0x2e8] sm:$0xff]
        %v525 = vld [vmem:[%s355 + $0x2f0] sm:$0xff]
        %v526 = vld [vmem:[%s355 + $0x2f8] sm:$0xff]
        %v527 = vld [vmem:[%s355 + $0x300] sm:$0xff]
        %v528 = vld [vmem:[%s355 + $0x308] sm:$0xff]
        %v529 = vld [vmem:[%s355 + $0x310] sm:$0xff]
        %v530 = vld [vmem:[%s355 + $0x318] sm:$0xff]
        %v531 = vld [vmem:[%s355 + $0x320] sm:$0xff]
        %v532 = vld [vmem:[%s355 + $0x328] sm:$0xff]
        %v533 = vld [vmem:[%s355 + $0x330] sm:$0xff]
        %v534 = vld [vmem:[%s355 + $0x338] sm:$0xff]
        %v535 = vld [vmem:[%s355 + $0x340] sm:$0xff]
        %v536 = vld [vmem:[%s355 + $0x348] sm:$0xff]
        %v537 = vld [vmem:[%s355 + $0x350] sm:$0xff]
        %v538 = vld [vmem:[%s355 + $0x358] sm:$0xff]
        %v539 = vld [vmem:[%s355 + $0x360] sm:$0xff]
        %v540 = vld [vmem:[%s355 + $0x368] sm:$0xff]
        %v541 = vld [vmem:[%s355 + $0x370] sm:$0xff]
        %v542 = vld [vmem:[%s355 + $0x378] sm:$0xff]
        %v543 = vld [vmem:[%s355 + $0x380] sm:$0xff]
        %v544 = vld [vmem:[%s355 + $0x388] sm:$0xff]
        %v545 = vld [vmem:[%s355 + $0x390] sm:$0xff]
        %v546 = vld [vmem:[%s355 + $0x398] sm:$0xff]
        %v547 = vld [vmem:[%s355 + $0x3a0] sm:$0xff]
        %v548 = vld [vmem:[%s355 + $0x3a8] sm:$0xff]
        %v549 = vld [vmem:[%s355 + $0x3b0] sm:$0xff]
        %v550 = vld [vmem:[%s355 + $0x3b8] sm:$0xff]
        %v551 = vld [vmem:[%s355 + $0x3c0] sm:$0xff]
        %v552 = vld [vmem:[%s355 + $0x3c8] sm:$0xff]
        %v553 = vld [vmem:[%s355 + $0x3d0] sm:$0xff]
        %v554 = vld [vmem:[%s355 + $0x3d8] sm:$0xff]
        %v555 = vld [vmem:[%s355 + $0x3e0] sm:$0xff]
        %v556 = vld [vmem:[%s355 + $0x3e8] sm:$0xff]
        %v557 = vld [vmem:[%s355 + $0x3f0] sm:$0xff]
        %v558 = vld [vmem:[%s355 + $0x3f8] sm:$0xff]
        %v559 = vmul.f32 %v431, %v431
        %v560 = vmul.f32 %v432, %v432
        %v561 = vmul.f32 %v433, %v433
        %v562 = vmul.f32 %v434, %v434
        %v563 = vmul.f32 %v435, %v435
        %v564 = vmul.f32 %v436, %v436
        %v565 = vmul.f32 %v437, %v437
        %v566 = vmul.f32 %v438, %v438
        %v567 = vmul.f32 %v439, %v439
        %v568 = vmul.f32 %v440, %v440
        %v569 = vmul.f32 %v441, %v441
        %v570 = vmul.f32 %v442, %v442
        %v571 = vmul.f32 %v443, %v443
        %v572 = vmul.f32 %v444, %v444
        %v573 = vmul.f32 %v445, %v445
        %v574 = vmul.f32 %v446, %v446
        %v575 = vmul.f32 %v447, %v447
        %v576 = vmul.f32 %v448, %v448
        %v577 = vmul.f32 %v449, %v449
        %v578 = vmul.f32 %v450, %v450
        %v579 = vmul.f32 %v451, %v451
        %v580 = vmul.f32 %v452, %v452
        %v581 = vmul.f32 %v453, %v453
        %v582 = vmul.f32 %v454, %v454
        %v583 = vmul.f32 %v455, %v455
        %v584 = vmul.f32 %v456, %v456
        %v585 = vmul.f32 %v457, %v457
        %v586 = vmul.f32 %v458, %v458
        %v587 = vmul.f32 %v459, %v459
        %v588 = vmul.f32 %v460, %v460
        %v589 = vmul.f32 %v461, %v461
        %v590 = vmul.f32 %v462, %v462
        %v591 = vmul.f32 %v463, %v463
        %v592 = vmul.f32 %v464, %v464
        %v593 = vmul.f32 %v465, %v465
        %v594 = vmul.f32 %v466, %v466
        %v595 = vmul.f32 %v467, %v467
        %v596 = vmul.f32 %v468, %v468
        %v597 = vmul.f32 %v469, %v469
        %v598 = vmul.f32 %v470, %v470
        %v599 = vmul.f32 %v471, %v471
        %v600 = vmul.f32 %v472, %v472
        %v601 = vmul.f32 %v473, %v473
        %v602 = vmul.f32 %v474, %v474
        %v603 = vmul.f32 %v475, %v475
        %v604 = vmul.f32 %v476, %v476
        %v605 = vmul.f32 %v477, %v477
        %v606 = vmul.f32 %v478, %v478
        %v607 = vmul.f32 %v479, %v479
        %v608 = vmul.f32 %v480, %v480
        %v609 = vmul.f32 %v481, %v481
        %v610 = vmul.f32 %v482, %v482
        %v611 = vmul.f32 %v483, %v483
        %v612 = vmul.f32 %v484, %v484
        %v613 = vmul.f32 %v485, %v485
        %v614 = vmul.f32 %v486, %v486
        %v615 = vmul.f32 %v487, %v487
        %v616 = vmul.f32 %v488, %v488
        %v617 = vmul.f32 %v489, %v489
        %v618 = vmul.f32 %v490, %v490
        %v619 = vmul.f32 %v491, %v491
        %v620 = vmul.f32 %v492, %v492
        %v621 = vmul.f32 %v493, %v493
        %v622 = vmul.f32 %v494, %v494
        %v623 = vmul.f32 %v495, %v495
        %v624 = vmul.f32 %v496, %v496
        %v625 = vmul.f32 %v497, %v497
        %v626 = vmul.f32 %v498, %v498
        %v627 = vmul.f32 %v499, %v499
        %v628 = vmul.f32 %v500, %v500
        %v629 = vmul.f32 %v501, %v501
        %v630 = vmul.f32 %v502, %v502
        %v631 = vmul.f32 %v503, %v503
        %v632 = vmul.f32 %v504, %v504
        %v633 = vmul.f32 %v505, %v505
        %v634 = vmul.f32 %v506, %v506
        %v635 = vmul.f32 %v507, %v507
        %v636 = vmul.f32 %v508, %v508
        %v637 = vmul.f32 %v509, %v509
        %v638 = vmul.f32 %v510, %v510
        %v639 = vmul.f32 %v511, %v511
        %v640 = vmul.f32 %v512, %v512
        %v641 = vmul.f32 %v513, %v513
        %v642 = vmul.f32 %v514, %v514
        %v643 = vmul.f32 %v515, %v515
        %v644 = vmul.f32 %v516, %v516
        %v645 = vmul.f32 %v517, %v517
        %v646 = vmul.f32 %v518, %v518
        %v647 = vmul.f32 %v519, %v519
        %v648 = vmul.f32 %v520, %v520
        %v649 = vmul.f32 %v521, %v521
        %v650 = vmul.f32 %v522, %v522
        %v651 = vmul.f32 %v523, %v523
        %v652 = vmul.f32 %v524, %v524
        %v653 = vmul.f32 %v525, %v525
        %v654 = vmul.f32 %v526, %v526
        %v655 = vmul.f32 %v527, %v527
        %v656 = vmul.f32 %v528, %v528
        %v657 = vmul.f32 %v529, %v529
        %v658 = vmul.f32 %v530, %v530
        %v659 = vmul.f32 %v531, %v531
        %v660 = vmul.f32 %v532, %v532
        %v661 = vmul.f32 %v533, %v533
        %v662 = vmul.f32 %v534, %v534
        %v663 = vmul.f32 %v535, %v535
        %v664 = vmul.f32 %v536, %v536
        %v665 = vmul.f32 %v537, %v537
        %v666 = vmul.f32 %v538, %v538
        %v667 = vmul.f32 %v539, %v539
        %v668 = vmul.f32 %v540, %v540
        %v669 = vmul.f32 %v541, %v541
        %v670 = vmul.f32 %v542, %v542
        %v671 = vmul.f32 %v543, %v543
        %v672 = vmul.f32 %v544, %v544
        %v673 = vmul.f32 %v545, %v545
        %v674 = vmul.f32 %v546, %v546
        %v675 = vmul.f32 %v547, %v547
        %v676 = vmul.f32 %v548, %v548
        %v677 = vmul.f32 %v549, %v549
        %v678 = vmul.f32 %v550, %v550
        %v679 = vmul.f32 %v551, %v551
        %v680 = vmul.f32 %v552, %v552
        %v681 = vmul.f32 %v553, %v553
        %v682 = vmul.f32 %v554, %v554
        %v683 = vmul.f32 %v555, %v555
        %v684 = vmul.f32 %v556, %v556
        %v685 = vmul.f32 %v557, %v557
        %v686 = vmul.f32 %v558, %v558
        %v687 = vadd.f32 %v559, %v560
        %v688 = vadd.f32 %v687, %v561
        %v689 = vadd.f32 %v688, %v562
        %690 = vadd.xlane.f32.xlu0 %v689
        %v691 = vpop.xlane.xlu0 %690
        %v692 = vadd.f32 %v563, %v564
        %v693 = vadd.f32 %v692, %v565
        %v694 = vadd.f32 %v693, %v566
        %695 = vadd.xlane.f32.xlu0 %v694
        %v696 = vpop.xlane.xlu0 %695
        %v697 = vadd.f32 %v567, %v568
        %v698 = vadd.f32 %v697, %v569
        %v699 = vadd.f32 %v698, %v570
        %700 = vadd.xlane.f32.xlu0 %v699
        %v701 = vpop.xlane.xlu0 %700
        %v702 = vadd.f32 %v571, %v572
        %v703 = vadd.f32 %v702, %v573
        %v704 = vadd.f32 %v703, %v574
        %705 = vadd.xlane.f32.xlu0 %v704
        %v706 = vpop.xlane.xlu0 %705
        %v707 = vadd.f32 %v575, %v576
        %v708 = vadd.f32 %v707, %v577
        %v709 = vadd.f32 %v708, %v578
        %710 = vadd.xlane.f32.xlu0 %v709
        %v711 = vpop.xlane.xlu0 %710
        %v712 = vadd.f32 %v579, %v580
        %v713 = vadd.f32 %v712, %v581
        %v714 = vadd.f32 %v713, %v582
        %715 = vadd.xlane.f32.xlu0 %v714
        %v716 = vpop.xlane.xlu0 %715
        %v717 = vadd.f32 %v583, %v584
        %v718 = vadd.f32 %v717, %v585
        %v719 = vadd.f32 %v718, %v586
        %720 = vadd.xlane.f32.xlu0 %v719
        %v721 = vpop.xlane.xlu0 %720
        %v722 = vadd.f32 %v587, %v588
        %v723 = vadd.f32 %v722, %v589
        %v724 = vadd.f32 %v723, %v590
        %725 = vadd.xlane.f32.xlu0 %v724
        %v726 = vpop.xlane.xlu0 %725
        %v727 = vadd.f32 %v591, %v592
        %v728 = vadd.f32 %v727, %v593
        %v729 = vadd.f32 %v728, %v594
        %730 = vadd.xlane.f32.xlu0 %v729
        %v731 = vpop.xlane.xlu0 %730
        %v732 = vadd.f32 %v595, %v596
        %v733 = vadd.f32 %v732, %v597
        %v734 = vadd.f32 %v733, %v598
        %735 = vadd.xlane.f32.xlu0 %v734
        %v736 = vpop.xlane.xlu0 %735
        %v737 = vadd.f32 %v599, %v600
        %v738 = vadd.f32 %v737, %v601
        %v739 = vadd.f32 %v738, %v602
        %740 = vadd.xlane.f32.xlu0 %v739
        %v741 = vpop.xlane.xlu0 %740
        %v742 = vadd.f32 %v603, %v604
        %v743 = vadd.f32 %v742, %v605
        %v744 = vadd.f32 %v743, %v606
        %745 = vadd.xlane.f32.xlu0 %v744
        %v746 = vpop.xlane.xlu0 %745
        %v747 = vadd.f32 %v607, %v608
        %v748 = vadd.f32 %v747, %v609
        %v749 = vadd.f32 %v748, %v610
        %750 = vadd.xlane.f32.xlu0 %v749
        %v751 = vpop.xlane.xlu0 %750
        %v752 = vadd.f32 %v611, %v612
        %v753 = vadd.f32 %v752, %v613
        %v754 = vadd.f32 %v753, %v614
        %755 = vadd.xlane.f32.xlu0 %v754
        %v756 = vpop.xlane.xlu0 %755
        %v757 = vadd.f32 %v615, %v616
        %v758 = vadd.f32 %v757, %v617
        %v759 = vadd.f32 %v758, %v618
        %760 = vadd.xlane.f32.xlu0 %v759
        %v761 = vpop.xlane.xlu0 %760
        %v762 = vadd.f32 %v619, %v620
        %v763 = vadd.f32 %v762, %v621
        %v764 = vadd.f32 %v763, %v622
        %765 = vadd.xlane.f32.xlu0 %v764
        %v766 = vpop.xlane.xlu0 %765
        %v767 = vadd.f32 %v623, %v624
        %v768 = vadd.f32 %v767, %v625
        %v769 = vadd.f32 %v768, %v626
        %770 = vadd.xlane.f32.xlu0 %v769
        %v771 = vpop.xlane.xlu0 %770
        %v772 = vadd.f32 %v627, %v628
        %v773 = vadd.f32 %v772, %v629
        %v774 = vadd.f32 %v773, %v630
        %775 = vadd.xlane.f32.xlu0 %v774
        %v776 = vpop.xlane.xlu0 %775
        %v777 = vadd.f32 %v631, %v632
        %v778 = vadd.f32 %v777, %v633
        %v779 = vadd.f32 %v778, %v634
        %780 = vadd.xlane.f32.xlu0 %v779
        %v781 = vpop.xlane.xlu0 %780
        %v782 = vadd.f32 %v635, %v636
        %v783 = vadd.f32 %v782, %v637
        %v784 = vadd.f32 %v783, %v638
        %785 = vadd.xlane.f32.xlu0 %v784
        %v786 = vpop.xlane.xlu0 %785
        %v787 = vadd.f32 %v639, %v640
        %v788 = vadd.f32 %v787, %v641
        %v789 = vadd.f32 %v788, %v642
        %790 = vadd.xlane.f32.xlu0 %v789
        %v791 = vpop.xlane.xlu0 %790
        %v792 = vadd.f32 %v643, %v644
        %v793 = vadd.f32 %v792, %v645
        %v794 = vadd.f32 %v793, %v646
        %795 = vadd.xlane.f32.xlu0 %v794
        %v796 = vpop.xlane.xlu0 %795
        %v797 = vadd.f32 %v647, %v648
        %v798 = vadd.f32 %v797, %v649
        %v799 = vadd.f32 %v798, %v650
        %800 = vadd.xlane.f32.xlu0 %v799
        %v801 = vpop.xlane.xlu0 %800
        %v802 = vadd.f32 %v651, %v652
        %v803 = vadd.f32 %v802, %v653
        %v804 = vadd.f32 %v803, %v654
        %805 = vadd.xlane.f32.xlu0 %v804
        %v806 = vpop.xlane.xlu0 %805
        %v807 = vadd.f32 %v655, %v656
        %v808 = vadd.f32 %v807, %v657
        %v809 = vadd.f32 %v808, %v658
        %810 = vadd.xlane.f32.xlu0 %v809
        %v811 = vpop.xlane.xlu0 %810
        %v812 = vadd.f32 %v659, %v660
        %v813 = vadd.f32 %v812, %v661
        %v814 = vadd.f32 %v813, %v662
        %815 = vadd.xlane.f32.xlu0 %v814
        %v816 = vpop.xlane.xlu0 %815
        %v817 = vadd.f32 %v663, %v664
        %v818 = vadd.f32 %v817, %v665
        %v819 = vadd.f32 %v818, %v666
        %820 = vadd.xlane.f32.xlu0 %v819
        %v821 = vpop.xlane.xlu0 %820
        %v822 = vadd.f32 %v667, %v668
        %v823 = vadd.f32 %v822, %v669
        %v824 = vadd.f32 %v823, %v670
        %825 = vadd.xlane.f32.xlu0 %v824
        %v826 = vpop.xlane.xlu0 %825
        %v827 = vadd.f32 %v671, %v672
        %v828 = vadd.f32 %v827, %v673
        %v829 = vadd.f32 %v828, %v674
        %830 = vadd.xlane.f32.xlu0 %v829
        %v831 = vpop.xlane.xlu0 %830
        %v832 = vadd.f32 %v675, %v676
        %v833 = vadd.f32 %v832, %v677
        %v834 = vadd.f32 %v833, %v678
        %835 = vadd.xlane.f32.xlu0 %v834
        %v836 = vpop.xlane.xlu0 %835
        %v837 = vadd.f32 %v679, %v680
        %v838 = vadd.f32 %v837, %v681
        %v839 = vadd.f32 %v838, %v682
        %840 = vadd.xlane.f32.xlu0 %v839
        %v841 = vpop.xlane.xlu0 %840
        %v842 = vadd.f32 %v683, %v684
        %v843 = vadd.f32 %v842, %v685
        %v844 = vadd.f32 %v843, %v686
        %845 = vadd.xlane.f32.xlu0 %v844
        %v846 = vpop.xlane.xlu0 %845
        %v847 = vrcp.pop 512.0
        %v848 = vmul.f32 %v691, %v847
        %v849 = vmul.f32 %v696, %v847
        %v850 = vmul.f32 %v701, %v847
        %v851 = vmul.f32 %v706, %v847
        %v852 = vmul.f32 %v711, %v847
        %v853 = vmul.f32 %v716, %v847
        %v854 = vmul.f32 %v721, %v847
        %v855 = vmul.f32 %v726, %v847
        %v856 = vmul.f32 %v731, %v847
        %v857 = vmul.f32 %v736, %v847
        %v858 = vmul.f32 %v741, %v847
        %v859 = vmul.f32 %v746, %v847
        %v860 = vmul.f32 %v751, %v847
        %v861 = vmul.f32 %v756, %v847
        %v862 = vmul.f32 %v761, %v847
        %v863 = vmul.f32 %v766, %v847
        %v864 = vmul.f32 %v771, %v847
        %v865 = vmul.f32 %v776, %v847
        %v866 = vmul.f32 %v781, %v847
        %v867 = vmul.f32 %v786, %v847
        %v868 = vmul.f32 %v791, %v847
        %v869 = vmul.f32 %v796, %v847
        %v870 = vmul.f32 %v801, %v847
        %v871 = vmul.f32 %v806, %v847
        %v872 = vmul.f32 %v811, %v847
        %v873 = vmul.f32 %v816, %v847
        %v874 = vmul.f32 %v821, %v847
        %v875 = vmul.f32 %v826, %v847
        %v876 = vmul.f32 %v831, %v847
        %v877 = vmul.f32 %v836, %v847
        %v878 = vmul.f32 %v841, %v847
        %v879 = vmul.f32 %v846, %v847
        %v880 = vadd.f32 %v848, 1e-05
        %v881 = vadd.f32 %v849, 1e-05
        %v882 = vadd.f32 %v850, 1e-05
        %v883 = vadd.f32 %v851, 1e-05
        %v884 = vadd.f32 %v852, 1e-05
        %v885 = vadd.f32 %v853, 1e-05
        %v886 = vadd.f32 %v854, 1e-05
        %v887 = vadd.f32 %v855, 1e-05
        %v888 = vadd.f32 %v856, 1e-05
        %v889 = vadd.f32 %v857, 1e-05
        %v890 = vadd.f32 %v858, 1e-05
        %v891 = vadd.f32 %v859, 1e-05
        %v892 = vadd.f32 %v860, 1e-05
        %v893 = vadd.f32 %v861, 1e-05
        %v894 = vadd.f32 %v862, 1e-05
        %v895 = vadd.f32 %v863, 1e-05
        %v896 = vadd.f32 %v864, 1e-05
        %v897 = vadd.f32 %v865, 1e-05
        %v898 = vadd.f32 %v866, 1e-05
        %v899 = vadd.f32 %v867, 1e-05
        %v900 = vadd.f32 %v868, 1e-05
        %v901 = vadd.f32 %v869, 1e-05
        %v902 = vadd.f32 %v870, 1e-05
        %v903 = vadd.f32 %v871, 1e-05
        %v904 = vadd.f32 %v872, 1e-05
        %v905 = vadd.f32 %v873, 1e-05
        %v906 = vadd.f32 %v874, 1e-05
        %v907 = vadd.f32 %v875, 1e-05
        %v908 = vadd.f32 %v876, 1e-05
        %v909 = vadd.f32 %v877, 1e-05
        %v910 = vadd.f32 %v878, 1e-05
        %v911 = vadd.f32 %v879, 1e-05
        %v912 = vrsqrt.pop %v880
        %v913 = vrsqrt.pop %v881
        %v914 = vrsqrt.pop %v882
        %v915 = vrsqrt.pop %v883
        %v916 = vrsqrt.pop %v884
        %v917 = vrsqrt.pop %v885
        %v918 = vrsqrt.pop %v886
        %v919 = vrsqrt.pop %v887
        %v920 = vrsqrt.pop %v888
        %v921 = vrsqrt.pop %v889
        %v922 = vrsqrt.pop %v890
        %v923 = vrsqrt.pop %v891
        %v924 = vrsqrt.pop %v892
        %v925 = vrsqrt.pop %v893
        %v926 = vrsqrt.pop %v894
        %v927 = vrsqrt.pop %v895
        %v928 = vrsqrt.pop %v896
        %v929 = vrsqrt.pop %v897
        %v930 = vrsqrt.pop %v898
        %v931 = vrsqrt.pop %v899
        %v932 = vrsqrt.pop %v900
        %v933 = vrsqrt.pop %v901
        %v934 = vrsqrt.pop %v902
        %v935 = vrsqrt.pop %v903
        %v936 = vrsqrt.pop %v904
        %v937 = vrsqrt.pop %v905
        %v938 = vrsqrt.pop %v906
        %v939 = vrsqrt.pop %v907
        %v940 = vrsqrt.pop %v908
        %v941 = vrsqrt.pop %v909
        %v942 = vrsqrt.pop %v910
        %v943 = vrsqrt.pop %v911
        %v944 = vmul.f32 %v431, %v912
        %v945 = vmul.f32 %v432, %v912
        %v946 = vmul.f32 %v433, %v912
        %v947 = vmul.f32 %v434, %v912
        %v948 = vmul.f32 %v435, %v913
        %v949 = vmul.f32 %v436, %v913
        %v950 = vmul.f32 %v437, %v913
        %v951 = vmul.f32 %v438, %v913
        %v952 = vmul.f32 %v439, %v914
        %v953 = vmul.f32 %v440, %v914
        %v954 = vmul.f32 %v441, %v914
        %v955 = vmul.f32 %v442, %v914
        %v956 = vmul.f32 %v443, %v915
        %v957 = vmul.f32 %v444, %v915
        %v958 = vmul.f32 %v445, %v915
        %v959 = vmul.f32 %v446, %v915
        %v960 = vmul.f32 %v447, %v916
        %v961 = vmul.f32 %v448, %v916
        %v962 = vmul.f32 %v449, %v916
        %v963 = vmul.f32 %v450, %v916
        %v964 = vmul.f32 %v451, %v917
        %v965 = vmul.f32 %v452, %v917
        %v966 = vmul.f32 %v453, %v917
        %v967 = vmul.f32 %v454, %v917
        %v968 = vmul.f32 %v455, %v918
        %v969 = vmul.f32 %v456, %v918
        %v970 = vmul.f32 %v457, %v918
        %v971 = vmul.f32 %v458, %v918
        %v972 = vmul.f32 %v459, %v919
        %v973 = vmul.f32 %v460, %v919
        %v974 = vmul.f32 %v461, %v919
        %v975 = vmul.f32 %v462, %v919
        %v976 = vmul.f32 %v463, %v920
        %v977 = vmul.f32 %v464, %v920
        %v978 = vmul.f32 %v465, %v920
        %v979 = vmul.f32 %v466, %v920
        %v980 = vmul.f32 %v467, %v921
        %v981 = vmul.f32 %v468, %v921
        %v982 = vmul.f32 %v469, %v921
        %v983 = vmul.f32 %v470, %v921
        %v984 = vmul.f32 %v471, %v922
        %v985 = vmul.f32 %v472, %v922
        %v986 = vmul.f32 %v473, %v922
        %v987 = vmul.f32 %v474, %v922
        %v988 = vmul.f32 %v475, %v923
        %v989 = vmul.f32 %v476, %v923
        %v990 = vmul.f32 %v477, %v923
        %v991 = vmul.f32 %v478, %v923
        %v992 = vmul.f32 %v479, %v924
        %v993 = vmul.f32 %v480, %v924
        %v994 = vmul.f32 %v481, %v924
        %v995 = vmul.f32 %v482, %v924
        %v996 = vmul.f32 %v483, %v925
        %v997 = vmul.f32 %v484, %v925
        %v998 = vmul.f32 %v485, %v925
        %v999 = vmul.f32 %v486, %v925
        %v1000 = vmul.f32 %v487, %v926
        %v1001 = vmul.f32 %v488, %v926
        %v1002 = vmul.f32 %v489, %v926
        %v1003 = vmul.f32 %v490, %v926
        %v1004 = vmul.f32 %v491, %v927
        %v1005 = vmul.f32 %v492, %v927
        %v1006 = vmul.f32 %v493, %v927
        %v1007 = vmul.f32 %v494, %v927
        %v1008 = vmul.f32 %v495, %v928
        %v1009 = vmul.f32 %v496, %v928
        %v1010 = vmul.f32 %v497, %v928
        %v1011 = vmul.f32 %v498, %v928
        %v1012 = vmul.f32 %v499, %v929
        %v1013 = vmul.f32 %v500, %v929
        %v1014 = vmul.f32 %v501, %v929
        %v1015 = vmul.f32 %v502, %v929
        %v1016 = vmul.f32 %v503, %v930
        %v1017 = vmul.f32 %v504, %v930
        %v1018 = vmul.f32 %v505, %v930
        %v1019 = vmul.f32 %v506, %v930
        %v1020 = vmul.f32 %v507, %v931
        %v1021 = vmul.f32 %v508, %v931
        %v1022 = vmul.f32 %v509, %v931
        %v1023 = vmul.f32 %v510, %v931
        %v1024 = vmul.f32 %v511, %v932
        %v1025 = vmul.f32 %v512, %v932
        %v1026 = vmul.f32 %v513, %v932
        %v1027 = vmul.f32 %v514, %v932
        %v1028 = vmul.f32 %v515, %v933
        %v1029 = vmul.f32 %v516, %v933
        %v1030 = vmul.f32 %v517, %v933
        %v1031 = vmul.f32 %v518, %v933
        %v1032 = vmul.f32 %v519, %v934
        %v1033 = vmul.f32 %v520, %v934
        %v1034 = vmul.f32 %v521, %v934
        %v1035 = vmul.f32 %v522, %v934
        %v1036 = vmul.f32 %v523, %v935
        %v1037 = vmul.f32 %v524, %v935
        %v1038 = vmul.f32 %v525, %v935
        %v1039 = vmul.f32 %v526, %v935
        %v1040 = vmul.f32 %v527, %v936
        %v1041 = vmul.f32 %v528, %v936
        %v1042 = vmul.f32 %v529, %v936
        %v1043 = vmul.f32 %v530, %v936
        %v1044 = vmul.f32 %v531, %v937
        %v1045 = vmul.f32 %v532, %v937
        %v1046 = vmul.f32 %v533, %v937
        %v1047 = vmul.f32 %v534, %v937
        %v1048 = vmul.f32 %v535, %v938
        %v1049 = vmul.f32 %v536, %v938
        %v1050 = vmul.f32 %v537, %v938
        %v1051 = vmul.f32 %v538, %v938
        %v1052 = vmul.f32 %v539, %v939
        %v1053 = vmul.f32 %v540, %v939
        %v1054 = vmul.f32 %v541, %v939
        %v1055 = vmul.f32 %v542, %v939
        %v1056 = vmul.f32 %v543, %v940
        %v1057 = vmul.f32 %v544, %v940
        %v1058 = vmul.f32 %v545, %v940
        %v1059 = vmul.f32 %v546, %v940
        %v1060 = vmul.f32 %v547, %v941
        %v1061 = vmul.f32 %v548, %v941
        %v1062 = vmul.f32 %v549, %v941
        %v1063 = vmul.f32 %v550, %v941
        %v1064 = vmul.f32 %v551, %v942
        %v1065 = vmul.f32 %v552, %v942
        %v1066 = vmul.f32 %v553, %v942
        %v1067 = vmul.f32 %v554, %v942
        %v1068 = vmul.f32 %v555, %v943
        %v1069 = vmul.f32 %v556, %v943
        %v1070 = vmul.f32 %v557, %v943
        %v1071 = vmul.f32 %v558, %v943
        %v1072 = vld [vmem:[#allocation7] sm:$0xf]
        %v1074 = vlaneseq
        %v1075 = vshrl.u32 %v1074, 7
        %v1076 = vsub.s32 0, %v1075
        %v1077 = vrot.slane %v1072, %v1076
        %v1078 = vlaneseq
        %v1079 = vshrl.u32 %v1078, 7
        %v1080 = vsub.s32 1, %v1079
        %v1081 = vrot.slane %v1072, %v1080
        %v1082 = vlaneseq
        %v1083 = vshrl.u32 %v1082, 7
        %v1084 = vsub.s32 2, %v1083
        %v1085 = vrot.slane %v1072, %v1084
        %v1086 = vlaneseq
        %v1087 = vshrl.u32 %v1086, 7
        %v1088 = vsub.s32 3, %v1087
        %v1089 = vrot.slane %v1072, %v1088
        %v1094 = vmul.f32 %v944, %v1077
        %v1095 = vmul.f32 %v945, %v1081
        %v1096 = vmul.f32 %v946, %v1085
        %v1097 = vmul.f32 %v947, %v1089
        %v1098 = vmul.f32 %v948, %v1077
        %v1099 = vmul.f32 %v949, %v1081
        %v1100 = vmul.f32 %v950, %v1085
        %v1101 = vmul.f32 %v951, %v1089
        %v1102 = vmul.f32 %v952, %v1077
        %v1103 = vmul.f32 %v953, %v1081
        %v1104 = vmul.f32 %v954, %v1085
        %v1105 = vmul.f32 %v955, %v1089
        %v1106 = vmul.f32 %v956, %v1077
        %v1107 = vmul.f32 %v957, %v1081
        %v1108 = vmul.f32 %v958, %v1085
        %v1109 = vmul.f32 %v959, %v1089
        %v1110 = vmul.f32 %v960, %v1077
        %v1111 = vmul.f32 %v961, %v1081
        %v1112 = vmul.f32 %v962, %v1085
        %v1113 = vmul.f32 %v963, %v1089
        %v1114 = vmul.f32 %v964, %v1077
        %v1115 = vmul.f32 %v965, %v1081
        %v1116 = vmul.f32 %v966, %v1085
        %v1117 = vmul.f32 %v967, %v1089
        %v1118 = vmul.f32 %v968, %v1077
        %v1119 = vmul.f32 %v969, %v1081
        %v1120 = vmul.f32 %v970, %v1085
        %v1121 = vmul.f32 %v971, %v1089
        %v1122 = vmul.f32 %v972, %v1077
        %v1123 = vmul.f32 %v973, %v1081
        %v1124 = vmul.f32 %v974, %v1085
        %v1125 = vmul.f32 %v975, %v1089
        %v1126 = vmul.f32 %v976, %v1077
        %v1127 = vmul.f32 %v977, %v1081
        %v1128 = vmul.f32 %v978, %v1085
        %v1129 = vmul.f32 %v979, %v1089
        %v1130 = vmul.f32 %v980, %v1077
        %v1131 = vmul.f32 %v981, %v1081
        %v1132 = vmul.f32 %v982, %v1085
        %v1133 = vmul.f32 %v983, %v1089
        %v1134 = vmul.f32 %v984, %v1077
        %v1135 = vmul.f32 %v985, %v1081
        %v1136 = vmul.f32 %v986, %v1085
        %v1137 = vmul.f32 %v987, %v1089
        %v1138 = vmul.f32 %v988, %v1077
        %v1139 = vmul.f32 %v989, %v1081
        %v1140 = vmul.f32 %v990, %v1085
        %v1141 = vmul.f32 %v991, %v1089
        %v1142 = vmul.f32 %v992, %v1077
        %v1143 = vmul.f32 %v993, %v1081
        %v1144 = vmul.f32 %v994, %v1085
        %v1145 = vmul.f32 %v995, %v1089
        %v1146 = vmul.f32 %v996, %v1077
        %v1147 = vmul.f32 %v997, %v1081
        %v1148 = vmul.f32 %v998, %v1085
        %v1149 = vmul.f32 %v999, %v1089
        %v1150 = vmul.f32 %v1000, %v1077
        %v1151 = vmul.f32 %v1001, %v1081
        %v1152 = vmul.f32 %v1002, %v1085
        %v1153 = vmul.f32 %v1003, %v1089
        %v1154 = vmul.f32 %v1004, %v1077
        %v1155 = vmul.f32 %v1005, %v1081
        %v1156 = vmul.f32 %v1006, %v1085
        %v1157 = vmul.f32 %v1007, %v1089
        %v1158 = vmul.f32 %v1008, %v1077
        %v1159 = vmul.f32 %v1009, %v1081
        %v1160 = vmul.f32 %v1010, %v1085
        %v1161 = vmul.f32 %v1011, %v1089
        %v1162 = vmul.f32 %v1012, %v1077
        %v1163 = vmul.f32 %v1013, %v1081
        %v1164 = vmul.f32 %v1014, %v1085
        %v1165 = vmul.f32 %v1015, %v1089
        %v1166 = vmul.f32 %v1016, %v1077
        %v1167 = vmul.f32 %v1017, %v1081
        %v1168 = vmul.f32 %v1018, %v1085
        %v1169 = vmul.f32 %v1019, %v1089
        %v1170 = vmul.f32 %v1020, %v1077
        %v1171 = vmul.f32 %v1021, %v1081
        %v1172 = vmul.f32 %v1022, %v1085
        %v1173 = vmul.f32 %v1023, %v1089
        %v1174 = vmul.f32 %v1024, %v1077
        %v1175 = vmul.f32 %v1025, %v1081
        %v1176 = vmul.f32 %v1026, %v1085
        %v1177 = vmul.f32 %v1027, %v1089
        %v1178 = vmul.f32 %v1028, %v1077
        %v1179 = vmul.f32 %v1029, %v1081
        %v1180 = vmul.f32 %v1030, %v1085
        %v1181 = vmul.f32 %v1031, %v1089
        %v1182 = vmul.f32 %v1032, %v1077
        %v1183 = vmul.f32 %v1033, %v1081
        %v1184 = vmul.f32 %v1034, %v1085
        %v1185 = vmul.f32 %v1035, %v1089
        %v1186 = vmul.f32 %v1036, %v1077
        %v1187 = vmul.f32 %v1037, %v1081
        %v1188 = vmul.f32 %v1038, %v1085
        %v1189 = vmul.f32 %v1039, %v1089
        %v1190 = vmul.f32 %v1040, %v1077
        %v1191 = vmul.f32 %v1041, %v1081
        %v1192 = vmul.f32 %v1042, %v1085
        %v1193 = vmul.f32 %v1043, %v1089
        %v1194 = vmul.f32 %v1044, %v1077
        %v1195 = vmul.f32 %v1045, %v1081
        %v1196 = vmul.f32 %v1046, %v1085
        %v1197 = vmul.f32 %v1047, %v1089
        %v1198 = vmul.f32 %v1048, %v1077
        %v1199 = vmul.f32 %v1049, %v1081
        %v1200 = vmul.f32 %v1050, %v1085
        %v1201 = vmul.f32 %v1051, %v1089
        %v1202 = vmul.f32 %v1052, %v1077
        %v1203 = vmul.f32 %v1053, %v1081
        %v1204 = vmul.f32 %v1054, %v1085
        %v1205 = vmul.f32 %v1055, %v1089
        %v1206 = vmul.f32 %v1056, %v1077
        %v1207 = vmul.f32 %v1057, %v1081
        %v1208 = vmul.f32 %v1058, %v1085
        %v1209 = vmul.f32 %v1059, %v1089
        %v1210 = vmul.f32 %v1060, %v1077
        %v1211 = vmul.f32 %v1061, %v1081
        %v1212 = vmul.f32 %v1062, %v1085
        %v1213 = vmul.f32 %v1063, %v1089
        %v1214 = vmul.f32 %v1064, %v1077
        %v1215 = vmul.f32 %v1065, %v1081
        %v1216 = vmul.f32 %v1066, %v1085
        %v1217 = vmul.f32 %v1067, %v1089
        %v1218 = vmul.f32 %v1068, %v1077
        %v1219 = vmul.f32 %v1069, %v1081
        %v1220 = vmul.f32 %v1070, %v1085
        %v1221 = vmul.f32 %v1071, %v1089
        %v1222 = vpack.c.bf16 %v1098, %v1094
        %v1223 = vpack.c.bf16 %v1099, %v1095
        %v1224 = vpack.c.bf16 %v1100, %v1096
        %v1225 = vpack.c.bf16 %v1101, %v1097
        %v1226 = vpack.c.bf16 %v1106, %v1102
        %v1227 = vpack.c.bf16 %v1107, %v1103
        %v1228 = vpack.c.bf16 %v1108, %v1104
        %v1229 = vpack.c.bf16 %v1109, %v1105
        %v1230 = vpack.c.bf16 %v1114, %v1110
        %v1231 = vpack.c.bf16 %v1115, %v1111
        %v1232 = vpack.c.bf16 %v1116, %v1112
        %v1233 = vpack.c.bf16 %v1117, %v1113
        %v1234 = vpack.c.bf16 %v1122, %v1118
        %v1235 = vpack.c.bf16 %v1123, %v1119
        %v1236 = vpack.c.bf16 %v1124, %v1120
        %v1237 = vpack.c.bf16 %v1125, %v1121
        %v1238 = vpack.c.bf16 %v1130, %v1126
        %v1239 = vpack.c.bf16 %v1131, %v1127
        %v1240 = vpack.c.bf16 %v1132, %v1128
        %v1241 = vpack.c.bf16 %v1133, %v1129
        %v1242 = vpack.c.bf16 %v1138, %v1134
        %v1243 = vpack.c.bf16 %v1139, %v1135
        %v1244 = vpack.c.bf16 %v1140, %v1136
        %v1245 = vpack.c.bf16 %v1141, %v1137
        %v1246 = vpack.c.bf16 %v1146, %v1142
        %v1247 = vpack.c.bf16 %v1147, %v1143
        %v1248 = vpack.c.bf16 %v1148, %v1144
        %v1249 = vpack.c.bf16 %v1149, %v1145
        %v1250 = vpack.c.bf16 %v1154, %v1150
        %v1251 = vpack.c.bf16 %v1155, %v1151
        %v1252 = vpack.c.bf16 %v1156, %v1152
        %v1253 = vpack.c.bf16 %v1157, %v1153
        %v1254 = vpack.c.bf16 %v1162, %v1158
        %v1255 = vpack.c.bf16 %v1163, %v1159
        %v1256 = vpack.c.bf16 %v1164, %v1160
        %v1257 = vpack.c.bf16 %v1165, %v1161
        %v1258 = vpack.c.bf16 %v1170, %v1166
        %v1259 = vpack.c.bf16 %v1171, %v1167
        %v1260 = vpack.c.bf16 %v1172, %v1168
        %v1261 = vpack.c.bf16 %v1173, %v1169
        %v1262 = vpack.c.bf16 %v1178, %v1174
        %v1263 = vpack.c.bf16 %v1179, %v1175
        %v1264 = vpack.c.bf16 %v1180, %v1176
        %v1265 = vpack.c.bf16 %v1181, %v1177
        %v1266 = vpack.c.bf16 %v1186, %v1182
        %v1267 = vpack.c.bf16 %v1187, %v1183
        %v1268 = vpack.c.bf16 %v1188, %v1184
        %v1269 = vpack.c.bf16 %v1189, %v1185
        %v1270 = vpack.c.bf16 %v1194, %v1190
        %v1271 = vpack.c.bf16 %v1195, %v1191
        %v1272 = vpack.c.bf16 %v1196, %v1192
        %v1273 = vpack.c.bf16 %v1197, %v1193
        %v1274 = vpack.c.bf16 %v1202, %v1198
        %v1275 = vpack.c.bf16 %v1203, %v1199
        %v1276 = vpack.c.bf16 %v1204, %v1200
        %v1277 = vpack.c.bf16 %v1205, %v1201
        %v1278 = vpack.c.bf16 %v1210, %v1206
        %v1279 = vpack.c.bf16 %v1211, %v1207
        %v1280 = vpack.c.bf16 %v1212, %v1208
        %v1281 = vpack.c.bf16 %v1213, %v1209
        %v1282 = vpack.c.bf16 %v1218, %v1214
        %v1283 = vpack.c.bf16 %v1219, %v1215
        %v1284 = vpack.c.bf16 %v1220, %v1216
        %v1285 = vpack.c.bf16 %v1221, %v1217
        %v1286 = vld [vmem:[#allocation5] sm:$0xff]
        %v1287 = vld [vmem:[#allocation5 + $0x8] sm:$0xff]
        %v1288 = vld [vmem:[#allocation5 + $0x10] sm:$0xff]
        %v1289 = vld [vmem:[#allocation5 + $0x18] sm:$0xff]
        %v1290 = vld [vmem:[#allocation5 + $0x20] sm:$0xff]
        %v1291 = vld [vmem:[#allocation5 + $0x28] sm:$0xff]
        %v1292 = vld [vmem:[#allocation5 + $0x30] sm:$0xff]
        %v1293 = vld [vmem:[#allocation5 + $0x38] sm:$0xff]
        %v1294 = vld [vmem:[#allocation5 + $0x40] sm:$0xff]
        %v1295 = vld [vmem:[#allocation5 + $0x48] sm:$0xff]
        %v1296 = vld [vmem:[#allocation5 + $0x50] sm:$0xff]
        %v1297 = vld [vmem:[#allocation5 + $0x58] sm:$0xff]
        %v1298 = vld [vmem:[#allocation5 + $0x60] sm:$0xff]
        %v1299 = vld [vmem:[#allocation5 + $0x68] sm:$0xff]
        %v1300 = vld [vmem:[#allocation5 + $0x70] sm:$0xff]
        %v1301 = vld [vmem:[#allocation5 + $0x78] sm:$0xff]
        %v1302 = vld [vmem:[#allocation5 + $0x80] sm:$0xff]
        %v1303 = vld [vmem:[#allocation5 + $0x88] sm:$0xff]
        %v1304 = vld [vmem:[#allocation5 + $0x90] sm:$0xff]
        %v1305 = vld [vmem:[#allocation5 + $0x98] sm:$0xff]
        %v1306 = vld [vmem:[#allocation5 + $0xa0] sm:$0xff]
        %v1307 = vld [vmem:[#allocation5 + $0xa8] sm:$0xff]
        %v1308 = vld [vmem:[#allocation5 + $0xb0] sm:$0xff]
        %v1309 = vld [vmem:[#allocation5 + $0xb8] sm:$0xff]
        %v1310 = vld [vmem:[#allocation5 + $0xc0] sm:$0xff]
        %v1311 = vld [vmem:[#allocation5 + $0xc8] sm:$0xff]
        %v1312 = vld [vmem:[#allocation5 + $0xd0] sm:$0xff]
        %v1313 = vld [vmem:[#allocation5 + $0xd8] sm:$0xff]
        %v1314 = vld [vmem:[#allocation5 + $0xe0] sm:$0xff]
        %v1315 = vld [vmem:[#allocation5 + $0xe8] sm:$0xff]
        %v1316 = vld [vmem:[#allocation5 + $0xf0] sm:$0xff]
        %v1317 = vld [vmem:[#allocation5 + $0xf8] sm:$0xff]
        %v1318 = vld [vmem:[#allocation5 + $0x100] sm:$0xff]
        %v1319 = vld [vmem:[#allocation5 + $0x108] sm:$0xff]
        %v1320 = vld [vmem:[#allocation5 + $0x110] sm:$0xff]
        %v1321 = vld [vmem:[#allocation5 + $0x118] sm:$0xff]
        %v1322 = vld [vmem:[#allocation5 + $0x120] sm:$0xff]
        %v1323 = vld [vmem:[#allocation5 + $0x128] sm:$0xff]
        %v1324 = vld [vmem:[#allocation5 + $0x130] sm:$0xff]
        %v1325 = vld [vmem:[#allocation5 + $0x138] sm:$0xff]
        %v1326 = vld [vmem:[#allocation5 + $0x140] sm:$0xff]
        %v1327 = vld [vmem:[#allocation5 + $0x148] sm:$0xff]
        %v1328 = vld [vmem:[#allocation5 + $0x150] sm:$0xff]
        %v1329 = vld [vmem:[#allocation5 + $0x158] sm:$0xff]
        %v1330 = vld [vmem:[#allocation5 + $0x160] sm:$0xff]
        %v1331 = vld [vmem:[#allocation5 + $0x168] sm:$0xff]
        %v1332 = vld [vmem:[#allocation5 + $0x170] sm:$0xff]
        %v1333 = vld [vmem:[#allocation5 + $0x178] sm:$0xff]
        %v1334 = vld [vmem:[#allocation5 + $0x180] sm:$0xff]
        %v1335 = vld [vmem:[#allocation5 + $0x188] sm:$0xff]
        %v1336 = vld [vmem:[#allocation5 + $0x190] sm:$0xff]
        %v1337 = vld [vmem:[#allocation5 + $0x198] sm:$0xff]
        %v1338 = vld [vmem:[#allocation5 + $0x1a0] sm:$0xff]
        %v1339 = vld [vmem:[#allocation5 + $0x1a8] sm:$0xff]
        %v1340 = vld [vmem:[#allocation5 + $0x1b0] sm:$0xff]
        %v1341 = vld [vmem:[#allocation5 + $0x1b8] sm:$0xff]
        %v1342 = vld [vmem:[#allocation5 + $0x1c0] sm:$0xff]
        %v1343 = vld [vmem:[#allocation5 + $0x1c8] sm:$0xff]
        %v1344 = vld [vmem:[#allocation5 + $0x1d0] sm:$0xff]
        %v1345 = vld [vmem:[#allocation5 + $0x1d8] sm:$0xff]
        %v1346 = vld [vmem:[#allocation5 + $0x1e0] sm:$0xff]
        %v1347 = vld [vmem:[#allocation5 + $0x1e8] sm:$0xff]
        %v1348 = vld [vmem:[#allocation5 + $0x1f0] sm:$0xff]
        %v1349 = vld [vmem:[#allocation5 + $0x1f8] sm:$0xff]
        %v1350 = vld [vmem:[#allocation5 + $0x200] sm:$0xff]
        %v1351 = vld [vmem:[#allocation5 + $0x208] sm:$0xff]
        %v1352 = vld [vmem:[#allocation5 + $0x210] sm:$0xff]
        %v1353 = vld [vmem:[#allocation5 + $0x218] sm:$0xff]
        %v1354 = vld [vmem:[#allocation5 + $0x220] sm:$0xff]
        %v1355 = vld [vmem:[#allocation5 + $0x228] sm:$0xff]
        %v1356 = vld [vmem:[#allocation5 + $0x230] sm:$0xff]
        %v1357 = vld [vmem:[#allocation5 + $0x238] sm:$0xff]
        %v1358 = vld [vmem:[#allocation5 + $0x240] sm:$0xff]
        %v1359 = vld [vmem:[#allocation5 + $0x248] sm:$0xff]
        %v1360 = vld [vmem:[#allocation5 + $0x250] sm:$0xff]
        %v1361 = vld [vmem:[#allocation5 + $0x258] sm:$0xff]
        %v1362 = vld [vmem:[#allocation5 + $0x260] sm:$0xff]
        %v1363 = vld [vmem:[#allocation5 + $0x268] sm:$0xff]
        %v1364 = vld [vmem:[#allocation5 + $0x270] sm:$0xff]
        %v1365 = vld [vmem:[#allocation5 + $0x278] sm:$0xff]
        %v1366 = vld [vmem:[#allocation5 + $0x280] sm:$0xff]
        %v1367 = vld [vmem:[#allocation5 + $0x288] sm:$0xff]
        %v1368 = vld [vmem:[#allocation5 + $0x290] sm:$0xff]
        %v1369 = vld [vmem:[#allocation5 + $0x298] sm:$0xff]
        %v1370 = vld [vmem:[#allocation5 + $0x2a0] sm:$0xff]
        %v1371 = vld [vmem:[#allocation5 + $0x2a8] sm:$0xff]
        %v1372 = vld [vmem:[#allocation5 + $0x2b0] sm:$0xff]
        %v1373 = vld [vmem:[#allocation5 + $0x2b8] sm:$0xff]
        %v1374 = vld [vmem:[#allocation5 + $0x2c0] sm:$0xff]
        %v1375 = vld [vmem:[#allocation5 + $0x2c8] sm:$0xff]
        %v1376 = vld [vmem:[#allocation5 + $0x2d0] sm:$0xff]
        %v1377 = vld [vmem:[#allocation5 + $0x2d8] sm:$0xff]
        %v1378 = vld [vmem:[#allocation5 + $0x2e0] sm:$0xff]
        %v1379 = vld [vmem:[#allocation5 + $0x2e8] sm:$0xff]
        %v1380 = vld [vmem:[#allocation5 + $0x2f0] sm:$0xff]
        %v1381 = vld [vmem:[#allocation5 + $0x2f8] sm:$0xff]
        %v1382 = vld [vmem:[#allocation5 + $0x300] sm:$0xff]
        %v1383 = vld [vmem:[#allocation5 + $0x308] sm:$0xff]
        %v1384 = vld [vmem:[#allocation5 + $0x310] sm:$0xff]
        %v1385 = vld [vmem:[#allocation5 + $0x318] sm:$0xff]
        %v1386 = vld [vmem:[#allocation5 + $0x320] sm:$0xff]
        %v1387 = vld [vmem:[#allocation5 + $0x328] sm:$0xff]
        %v1388 = vld [vmem:[#allocation5 + $0x330] sm:$0xff]
        %v1389 = vld [vmem:[#allocation5 + $0x338] sm:$0xff]
        %v1390 = vld [vmem:[#allocation5 + $0x340] sm:$0xff]
        %v1391 = vld [vmem:[#allocation5 + $0x348] sm:$0xff]
        %v1392 = vld [vmem:[#allocation5 + $0x350] sm:$0xff]
        %v1393 = vld [vmem:[#allocation5 + $0x358] sm:$0xff]
        %v1394 = vld [vmem:[#allocation5 + $0x360] sm:$0xff]
        %v1395 = vld [vmem:[#allocation5 + $0x368] sm:$0xff]
        %v1396 = vld [vmem:[#allocation5 + $0x370] sm:$0xff]
        %v1397 = vld [vmem:[#allocation5 + $0x378] sm:$0xff]
        %v1398 = vld [vmem:[#allocation5 + $0x380] sm:$0xff]
        %v1399 = vld [vmem:[#allocation5 + $0x388] sm:$0xff]
        %v1400 = vld [vmem:[#allocation5 + $0x390] sm:$0xff]
        %v1401 = vld [vmem:[#allocation5 + $0x398] sm:$0xff]
        %v1402 = vld [vmem:[#allocation5 + $0x3a0] sm:$0xff]
        %v1403 = vld [vmem:[#allocation5 + $0x3a8] sm:$0xff]
        %v1404 = vld [vmem:[#allocation5 + $0x3b0] sm:$0xff]
        %v1405 = vld [vmem:[#allocation5 + $0x3b8] sm:$0xff]
        %v1406 = vld [vmem:[#allocation5 + $0x3c0] sm:$0xff]
        %v1407 = vld [vmem:[#allocation5 + $0x3c8] sm:$0xff]
        %v1408 = vld [vmem:[#allocation5 + $0x3d0] sm:$0xff]
        %v1409 = vld [vmem:[#allocation5 + $0x3d8] sm:$0xff]
        %v1410 = vld [vmem:[#allocation5 + $0x3e0] sm:$0xff]
        %v1411 = vld [vmem:[#allocation5 + $0x3e8] sm:$0xff]
        %v1412 = vld [vmem:[#allocation5 + $0x3f0] sm:$0xff]
        %v1413 = vld [vmem:[#allocation5 + $0x3f8] sm:$0xff]
        %v1414 = vld [vmem:[#allocation5 + $0x400] sm:$0xff]
        %v1415 = vld [vmem:[#allocation5 + $0x408] sm:$0xff]
        %v1416 = vld [vmem:[#allocation5 + $0x410] sm:$0xff]
        %v1417 = vld [vmem:[#allocation5 + $0x418] sm:$0xff]
        %v1418 = vld [vmem:[#allocation5 + $0x420] sm:$0xff]
        %v1419 = vld [vmem:[#allocation5 + $0x428] sm:$0xff]
        %v1420 = vld [vmem:[#allocation5 + $0x430] sm:$0xff]
        %v1421 = vld [vmem:[#allocation5 + $0x438] sm:$0xff]
        %v1422 = vld [vmem:[#allocation5 + $0x440] sm:$0xff]
        %v1423 = vld [vmem:[#allocation5 + $0x448] sm:$0xff]
        %v1424 = vld [vmem:[#allocation5 + $0x450] sm:$0xff]
        %v1425 = vld [vmem:[#allocation5 + $0x458] sm:$0xff]
        %v1426 = vld [vmem:[#allocation5 + $0x460] sm:$0xff]
        %v1427 = vld [vmem:[#allocation5 + $0x468] sm:$0xff]
        %v1428 = vld [vmem:[#allocation5 + $0x470] sm:$0xff]
        %v1429 = vld [vmem:[#allocation5 + $0x478] sm:$0xff]
        %v1430 = vld [vmem:[#allocation5 + $0x480] sm:$0xff]
        %v1431 = vld [vmem:[#allocation5 + $0x488] sm:$0xff]
        %v1432 = vld [vmem:[#allocation5 + $0x490] sm:$0xff]
        %v1433 = vld [vmem:[#allocation5 + $0x498] sm:$0xff]
        %v1434 = vld [vmem:[#allocation5 + $0x4a0] sm:$0xff]
        %v1435 = vld [vmem:[#allocation5 + $0x4a8] sm:$0xff]
        %v1436 = vld [vmem:[#allocation5 + $0x4b0] sm:$0xff]
        %v1437 = vld [vmem:[#allocation5 + $0x4b8] sm:$0xff]
        %v1438 = vld [vmem:[#allocation5 + $0x4c0] sm:$0xff]
        %v1439 = vld [vmem:[#allocation5 + $0x4c8] sm:$0xff]
        %v1440 = vld [vmem:[#allocation5 + $0x4d0] sm:$0xff]
        %v1441 = vld [vmem:[#allocation5 + $0x4d8] sm:$0xff]
        %v1442 = vld [vmem:[#allocation5 + $0x4e0] sm:$0xff]
        %v1443 = vld [vmem:[#allocation5 + $0x4e8] sm:$0xff]
        %v1444 = vld [vmem:[#allocation5 + $0x4f0] sm:$0xff]
        %v1445 = vld [vmem:[#allocation5 + $0x4f8] sm:$0xff]
        %v1446 = vld [vmem:[#allocation5 + $0x500] sm:$0xff]
        %v1447 = vld [vmem:[#allocation5 + $0x508] sm:$0xff]
        %v1448 = vld [vmem:[#allocation5 + $0x510] sm:$0xff]
        %v1449 = vld [vmem:[#allocation5 + $0x518] sm:$0xff]
        %v1450 = vld [vmem:[#allocation5 + $0x520] sm:$0xff]
        %v1451 = vld [vmem:[#allocation5 + $0x528] sm:$0xff]
        %v1452 = vld [vmem:[#allocation5 + $0x530] sm:$0xff]
        %v1453 = vld [vmem:[#allocation5 + $0x538] sm:$0xff]
        %v1454 = vld [vmem:[#allocation5 + $0x540] sm:$0xff]
        %v1455 = vld [vmem:[#allocation5 + $0x548] sm:$0xff]
        %v1456 = vld [vmem:[#allocation5 + $0x550] sm:$0xff]
        %v1457 = vld [vmem:[#allocation5 + $0x558] sm:$0xff]
        %v1458 = vld [vmem:[#allocation5 + $0x560] sm:$0xff]
        %v1459 = vld [vmem:[#allocation5 + $0x568] sm:$0xff]
        %v1460 = vld [vmem:[#allocation5 + $0x570] sm:$0xff]
        %v1461 = vld [vmem:[#allocation5 + $0x578] sm:$0xff]
        %v1462 = vld [vmem:[#allocation5 + $0x580] sm:$0xff]
        %v1463 = vld [vmem:[#allocation5 + $0x588] sm:$0xff]
        %v1464 = vld [vmem:[#allocation5 + $0x590] sm:$0xff]
        %v1465 = vld [vmem:[#allocation5 + $0x598] sm:$0xff]
        %v1466 = vld [vmem:[#allocation5 + $0x5a0] sm:$0xff]
        %v1467 = vld [vmem:[#allocation5 + $0x5a8] sm:$0xff]
        %v1468 = vld [vmem:[#allocation5 + $0x5b0] sm:$0xff]
        %v1469 = vld [vmem:[#allocation5 + $0x5b8] sm:$0xff]
        %v1470 = vld [vmem:[#allocation5 + $0x5c0] sm:$0xff]
        %v1471 = vld [vmem:[#allocation5 + $0x5c8] sm:$0xff]
        %v1472 = vld [vmem:[#allocation5 + $0x5d0] sm:$0xff]
        %v1473 = vld [vmem:[#allocation5 + $0x5d8] sm:$0xff]
        %v1474 = vld [vmem:[#allocation5 + $0x5e0] sm:$0xff]
        %v1475 = vld [vmem:[#allocation5 + $0x5e8] sm:$0xff]
        %v1476 = vld [vmem:[#allocation5 + $0x5f0] sm:$0xff]
        %v1477 = vld [vmem:[#allocation5 + $0x5f8] sm:$0xff]
        %v1478 = vld [vmem:[#allocation5 + $0x600] sm:$0xff]
        %v1479 = vld [vmem:[#allocation5 + $0x608] sm:$0xff]
        %v1480 = vld [vmem:[#allocation5 + $0x610] sm:$0xff]
        %v1481 = vld [vmem:[#allocation5 + $0x618] sm:$0xff]
        %v1482 = vld [vmem:[#allocation5 + $0x620] sm:$0xff]
        %v1483 = vld [vmem:[#allocation5 + $0x628] sm:$0xff]
        %v1484 = vld [vmem:[#allocation5 + $0x630] sm:$0xff]
        %v1485 = vld [vmem:[#allocation5 + $0x638] sm:$0xff]
        %v1486 = vld [vmem:[#allocation5 + $0x640] sm:$0xff]
        %v1487 = vld [vmem:[#allocation5 + $0x648] sm:$0xff]
        %v1488 = vld [vmem:[#allocation5 + $0x650] sm:$0xff]
        %v1489 = vld [vmem:[#allocation5 + $0x658] sm:$0xff]
        %v1490 = vld [vmem:[#allocation5 + $0x660] sm:$0xff]
        %v1491 = vld [vmem:[#allocation5 + $0x668] sm:$0xff]
        %v1492 = vld [vmem:[#allocation5 + $0x670] sm:$0xff]
        %v1493 = vld [vmem:[#allocation5 + $0x678] sm:$0xff]
        %v1494 = vld [vmem:[#allocation5 + $0x680] sm:$0xff]
        %v1495 = vld [vmem:[#allocation5 + $0x688] sm:$0xff]
        %v1496 = vld [vmem:[#allocation5 + $0x690] sm:$0xff]
        %v1497 = vld [vmem:[#allocation5 + $0x698] sm:$0xff]
        %v1498 = vld [vmem:[#allocation5 + $0x6a0] sm:$0xff]
        %v1499 = vld [vmem:[#allocation5 + $0x6a8] sm:$0xff]
        %v1500 = vld [vmem:[#allocation5 + $0x6b0] sm:$0xff]
        %v1501 = vld [vmem:[#allocation5 + $0x6b8] sm:$0xff]
        %v1502 = vld [vmem:[#allocation5 + $0x6c0] sm:$0xff]
        %v1503 = vld [vmem:[#allocation5 + $0x6c8] sm:$0xff]
        %v1504 = vld [vmem:[#allocation5 + $0x6d0] sm:$0xff]
        %v1505 = vld [vmem:[#allocation5 + $0x6d8] sm:$0xff]
        %v1506 = vld [vmem:[#allocation5 + $0x6e0] sm:$0xff]
        %v1507 = vld [vmem:[#allocation5 + $0x6e8] sm:$0xff]
        %v1508 = vld [vmem:[#allocation5 + $0x6f0] sm:$0xff]
        %v1509 = vld [vmem:[#allocation5 + $0x6f8] sm:$0xff]
        %v1510 = vld [vmem:[#allocation5 + $0x700] sm:$0xff]
        %v1511 = vld [vmem:[#allocation5 + $0x708] sm:$0xff]
        %v1512 = vld [vmem:[#allocation5 + $0x710] sm:$0xff]
        %v1513 = vld [vmem:[#allocation5 + $0x718] sm:$0xff]
        %v1514 = vld [vmem:[#allocation5 + $0x720] sm:$0xff]
        %v1515 = vld [vmem:[#allocation5 + $0x728] sm:$0xff]
        %v1516 = vld [vmem:[#allocation5 + $0x730] sm:$0xff]
        %v1517 = vld [vmem:[#allocation5 + $0x738] sm:$0xff]
        %v1518 = vld [vmem:[#allocation5 + $0x740] sm:$0xff]
        %v1519 = vld [vmem:[#allocation5 + $0x748] sm:$0xff]
        %v1520 = vld [vmem:[#allocation5 + $0x750] sm:$0xff]
        %v1521 = vld [vmem:[#allocation5 + $0x758] sm:$0xff]
        %v1522 = vld [vmem:[#allocation5 + $0x760] sm:$0xff]
        %v1523 = vld [vmem:[#allocation5 + $0x768] sm:$0xff]
        %v1524 = vld [vmem:[#allocation5 + $0x770] sm:$0xff]
        %v1525 = vld [vmem:[#allocation5 + $0x778] sm:$0xff]
        %v1526 = vld [vmem:[#allocation5 + $0x780] sm:$0xff]
        %v1527 = vld [vmem:[#allocation5 + $0x788] sm:$0xff]
        %v1528 = vld [vmem:[#allocation5 + $0x790] sm:$0xff]
        %v1529 = vld [vmem:[#allocation5 + $0x798] sm:$0xff]
        %v1530 = vld [vmem:[#allocation5 + $0x7a0] sm:$0xff]
        %v1531 = vld [vmem:[#allocation5 + $0x7a8] sm:$0xff]
        %v1532 = vld [vmem:[#allocation5 + $0x7b0] sm:$0xff]
        %v1533 = vld [vmem:[#allocation5 + $0x7b8] sm:$0xff]
        %v1534 = vld [vmem:[#allocation5 + $0x7c0] sm:$0xff]
        %v1535 = vld [vmem:[#allocation5 + $0x7c8] sm:$0xff]
        %v1536 = vld [vmem:[#allocation5 + $0x7d0] sm:$0xff]
        %v1537 = vld [vmem:[#allocation5 + $0x7d8] sm:$0xff]
        %v1538 = vld [vmem:[#allocation5 + $0x7e0] sm:$0xff]
        %v1539 = vld [vmem:[#allocation5 + $0x7e8] sm:$0xff]
        %v1540 = vld [vmem:[#allocation5 + $0x7f0] sm:$0xff]
        %v1541 = vld [vmem:[#allocation5 + $0x7f8] sm:$0xff]
        %v1542 = vld [vmem:[#allocation5 + $0x800] sm:$0xff]
        %v1543 = vld [vmem:[#allocation5 + $0x808] sm:$0xff]
        %v1544 = vld [vmem:[#allocation5 + $0x810] sm:$0xff]
        %v1545 = vld [vmem:[#allocation5 + $0x818] sm:$0xff]
        %v1546 = vld [vmem:[#allocation5 + $0x820] sm:$0xff]
        %v1547 = vld [vmem:[#allocation5 + $0x828] sm:$0xff]
        %v1548 = vld [vmem:[#allocation5 + $0x830] sm:$0xff]
        %v1549 = vld [vmem:[#allocation5 + $0x838] sm:$0xff]
        %v1550 = vld [vmem:[#allocation5 + $0x840] sm:$0xff]
        %v1551 = vld [vmem:[#allocation5 + $0x848] sm:$0xff]
        %v1552 = vld [vmem:[#allocation5 + $0x850] sm:$0xff]
        %v1553 = vld [vmem:[#allocation5 + $0x858] sm:$0xff]
        %v1554 = vld [vmem:[#allocation5 + $0x860] sm:$0xff]
        %v1555 = vld [vmem:[#allocation5 + $0x868] sm:$0xff]
        %v1556 = vld [vmem:[#allocation5 + $0x870] sm:$0xff]
        %v1557 = vld [vmem:[#allocation5 + $0x878] sm:$0xff]
        %v1558 = vld [vmem:[#allocation5 + $0x880] sm:$0xff]
        %v1559 = vld [vmem:[#allocation5 + $0x888] sm:$0xff]
        %v1560 = vld [vmem:[#allocation5 + $0x890] sm:$0xff]
        %v1561 = vld [vmem:[#allocation5 + $0x898] sm:$0xff]
        %v1562 = vld [vmem:[#allocation5 + $0x8a0] sm:$0xff]
        %v1563 = vld [vmem:[#allocation5 + $0x8a8] sm:$0xff]
        %v1564 = vld [vmem:[#allocation5 + $0x8b0] sm:$0xff]
        %v1565 = vld [vmem:[#allocation5 + $0x8b8] sm:$0xff]
        %v1566 = vld [vmem:[#allocation5 + $0x8c0] sm:$0xff]
        %v1567 = vld [vmem:[#allocation5 + $0x8c8] sm:$0xff]
        %v1568 = vld [vmem:[#allocation5 + $0x8d0] sm:$0xff]
        %v1569 = vld [vmem:[#allocation5 + $0x8d8] sm:$0xff]
        %v1570 = vld [vmem:[#allocation5 + $0x8e0] sm:$0xff]
        %v1571 = vld [vmem:[#allocation5 + $0x8e8] sm:$0xff]
        %v1572 = vld [vmem:[#allocation5 + $0x8f0] sm:$0xff]
        %v1573 = vld [vmem:[#allocation5 + $0x8f8] sm:$0xff]
        %v1574 = vld [vmem:[#allocation5 + $0x900] sm:$0xff]
        %v1575 = vld [vmem:[#allocation5 + $0x908] sm:$0xff]
        %v1576 = vld [vmem:[#allocation5 + $0x910] sm:$0xff]
        %v1577 = vld [vmem:[#allocation5 + $0x918] sm:$0xff]
        %v1578 = vld [vmem:[#allocation5 + $0x920] sm:$0xff]
        %v1579 = vld [vmem:[#allocation5 + $0x928] sm:$0xff]
        %v1580 = vld [vmem:[#allocation5 + $0x930] sm:$0xff]
        %v1581 = vld [vmem:[#allocation5 + $0x938] sm:$0xff]
        %v1582 = vld [vmem:[#allocation5 + $0x940] sm:$0xff]
        %v1583 = vld [vmem:[#allocation5 + $0x948] sm:$0xff]
        %v1584 = vld [vmem:[#allocation5 + $0x950] sm:$0xff]
        %v1585 = vld [vmem:[#allocation5 + $0x958] sm:$0xff]
        %v1586 = vld [vmem:[#allocation5 + $0x960] sm:$0xff]
        %v1587 = vld [vmem:[#allocation5 + $0x968] sm:$0xff]
        %v1588 = vld [vmem:[#allocation5 + $0x970] sm:$0xff]
        %v1589 = vld [vmem:[#allocation5 + $0x978] sm:$0xff]
        %v1590 = vld [vmem:[#allocation5 + $0x980] sm:$0xff]
        %v1591 = vld [vmem:[#allocation5 + $0x988] sm:$0xff]
        %v1592 = vld [vmem:[#allocation5 + $0x990] sm:$0xff]
        %v1593 = vld [vmem:[#allocation5 + $0x998] sm:$0xff]
        %v1594 = vld [vmem:[#allocation5 + $0x9a0] sm:$0xff]
        %v1595 = vld [vmem:[#allocation5 + $0x9a8] sm:$0xff]
        %v1596 = vld [vmem:[#allocation5 + $0x9b0] sm:$0xff]
        %v1597 = vld [vmem:[#allocation5 + $0x9b8] sm:$0xff]
        %v1598 = vld [vmem:[#allocation5 + $0x9c0] sm:$0xff]
        %v1599 = vld [vmem:[#allocation5 + $0x9c8] sm:$0xff]
        %v1600 = vld [vmem:[#allocation5 + $0x9d0] sm:$0xff]
        %v1601 = vld [vmem:[#allocation5 + $0x9d8] sm:$0xff]
        %v1602 = vld [vmem:[#allocation5 + $0x9e0] sm:$0xff]
        %v1603 = vld [vmem:[#allocation5 + $0x9e8] sm:$0xff]
        %v1604 = vld [vmem:[#allocation5 + $0x9f0] sm:$0xff]
        %v1605 = vld [vmem:[#allocation5 + $0x9f8] sm:$0xff]
        %v1606 = vld [vmem:[#allocation5 + $0xa00] sm:$0xff]
        %v1607 = vld [vmem:[#allocation5 + $0xa08] sm:$0xff]
        %v1608 = vld [vmem:[#allocation5 + $0xa10] sm:$0xff]
        %v1609 = vld [vmem:[#allocation5 + $0xa18] sm:$0xff]
        %v1610 = vld [vmem:[#allocation5 + $0xa20] sm:$0xff]
        %v1611 = vld [vmem:[#allocation5 + $0xa28] sm:$0xff]
        %v1612 = vld [vmem:[#allocation5 + $0xa30] sm:$0xff]
        %v1613 = vld [vmem:[#allocation5 + $0xa38] sm:$0xff]
        %v1614 = vld [vmem:[#allocation5 + $0xa40] sm:$0xff]
        %v1615 = vld [vmem:[#allocation5 + $0xa48] sm:$0xff]
        %v1616 = vld [vmem:[#allocation5 + $0xa50] sm:$0xff]
        %v1617 = vld [vmem:[#allocation5 + $0xa58] sm:$0xff]
        %v1618 = vld [vmem:[#allocation5 + $0xa60] sm:$0xff]
        %v1619 = vld [vmem:[#allocation5 + $0xa68] sm:$0xff]
        %v1620 = vld [vmem:[#allocation5 + $0xa70] sm:$0xff]
        %v1621 = vld [vmem:[#allocation5 + $0xa78] sm:$0xff]
        %v1622 = vld [vmem:[#allocation5 + $0xa80] sm:$0xff]
        %v1623 = vld [vmem:[#allocation5 + $0xa88] sm:$0xff]
        %v1624 = vld [vmem:[#allocation5 + $0xa90] sm:$0xff]
        %v1625 = vld [vmem:[#allocation5 + $0xa98] sm:$0xff]
        %v1626 = vld [vmem:[#allocation5 + $0xaa0] sm:$0xff]
        %v1627 = vld [vmem:[#allocation5 + $0xaa8] sm:$0xff]
        %v1628 = vld [vmem:[#allocation5 + $0xab0] sm:$0xff]
        %v1629 = vld [vmem:[#allocation5 + $0xab8] sm:$0xff]
        %v1630 = vld [vmem:[#allocation5 + $0xac0] sm:$0xff]
        %v1631 = vld [vmem:[#allocation5 + $0xac8] sm:$0xff]
        %v1632 = vld [vmem:[#allocation5 + $0xad0] sm:$0xff]
        %v1633 = vld [vmem:[#allocation5 + $0xad8] sm:$0xff]
        %v1634 = vld [vmem:[#allocation5 + $0xae0] sm:$0xff]
        %v1635 = vld [vmem:[#allocation5 + $0xae8] sm:$0xff]
        %v1636 = vld [vmem:[#allocation5 + $0xaf0] sm:$0xff]
        %v1637 = vld [vmem:[#allocation5 + $0xaf8] sm:$0xff]
        %v1638 = vld [vmem:[#allocation5 + $0xb00] sm:$0xff]
        %v1639 = vld [vmem:[#allocation5 + $0xb08] sm:$0xff]
        %v1640 = vld [vmem:[#allocation5 + $0xb10] sm:$0xff]
        %v1641 = vld [vmem:[#allocation5 + $0xb18] sm:$0xff]
        %v1642 = vld [vmem:[#allocation5 + $0xb20] sm:$0xff]
        %v1643 = vld [vmem:[#allocation5 + $0xb28] sm:$0xff]
        %v1644 = vld [vmem:[#allocation5 + $0xb30] sm:$0xff]
        %v1645 = vld [vmem:[#allocation5 + $0xb38] sm:$0xff]
        %v1646 = vld [vmem:[#allocation5 + $0xb40] sm:$0xff]
        %v1647 = vld [vmem:[#allocation5 + $0xb48] sm:$0xff]
        %v1648 = vld [vmem:[#allocation5 + $0xb50] sm:$0xff]
        %v1649 = vld [vmem:[#allocation5 + $0xb58] sm:$0xff]
        %v1650 = vld [vmem:[#allocation5 + $0xb60] sm:$0xff]
        %v1651 = vld [vmem:[#allocation5 + $0xb68] sm:$0xff]
        %v1652 = vld [vmem:[#allocation5 + $0xb70] sm:$0xff]
        %v1653 = vld [vmem:[#allocation5 + $0xb78] sm:$0xff]
        %v1654 = vld [vmem:[#allocation5 + $0xb80] sm:$0xff]
        %v1655 = vld [vmem:[#allocation5 + $0xb88] sm:$0xff]
        %v1656 = vld [vmem:[#allocation5 + $0xb90] sm:$0xff]
        %v1657 = vld [vmem:[#allocation5 + $0xb98] sm:$0xff]
        %v1658 = vld [vmem:[#allocation5 + $0xba0] sm:$0xff]
        %v1659 = vld [vmem:[#allocation5 + $0xba8] sm:$0xff]
        %v1660 = vld [vmem:[#allocation5 + $0xbb0] sm:$0xff]
        %v1661 = vld [vmem:[#allocation5 + $0xbb8] sm:$0xff]
        %v1662 = vld [vmem:[#allocation5 + $0xbc0] sm:$0xff]
        %v1663 = vld [vmem:[#allocation5 + $0xbc8] sm:$0xff]
        %v1664 = vld [vmem:[#allocation5 + $0xbd0] sm:$0xff]
        %v1665 = vld [vmem:[#allocation5 + $0xbd8] sm:$0xff]
        %v1666 = vld [vmem:[#allocation5 + $0xbe0] sm:$0xff]
        %v1667 = vld [vmem:[#allocation5 + $0xbe8] sm:$0xff]
        %v1668 = vld [vmem:[#allocation5 + $0xbf0] sm:$0xff]
        %v1669 = vld [vmem:[#allocation5 + $0xbf8] sm:$0xff]
        %v1670 = vld [vmem:[#allocation5 + $0xc00] sm:$0xff]
        %v1671 = vld [vmem:[#allocation5 + $0xc08] sm:$0xff]
        %v1672 = vld [vmem:[#allocation5 + $0xc10] sm:$0xff]
        %v1673 = vld [vmem:[#allocation5 + $0xc18] sm:$0xff]
        %v1674 = vld [vmem:[#allocation5 + $0xc20] sm:$0xff]
        %v1675 = vld [vmem:[#allocation5 + $0xc28] sm:$0xff]
        %v1676 = vld [vmem:[#allocation5 + $0xc30] sm:$0xff]
        %v1677 = vld [vmem:[#allocation5 + $0xc38] sm:$0xff]
        %v1678 = vld [vmem:[#allocation5 + $0xc40] sm:$0xff]
        %v1679 = vld [vmem:[#allocation5 + $0xc48] sm:$0xff]
        %v1680 = vld [vmem:[#allocation5 + $0xc50] sm:$0xff]
        %v1681 = vld [vmem:[#allocation5 + $0xc58] sm:$0xff]
        %v1682 = vld [vmem:[#allocation5 + $0xc60] sm:$0xff]
        %v1683 = vld [vmem:[#allocation5 + $0xc68] sm:$0xff]
        %v1684 = vld [vmem:[#allocation5 + $0xc70] sm:$0xff]
        %v1685 = vld [vmem:[#allocation5 + $0xc78] sm:$0xff]
        %v1686 = vld [vmem:[#allocation5 + $0xc80] sm:$0xff]
        %v1687 = vld [vmem:[#allocation5 + $0xc88] sm:$0xff]
        %v1688 = vld [vmem:[#allocation5 + $0xc90] sm:$0xff]
        %v1689 = vld [vmem:[#allocation5 + $0xc98] sm:$0xff]
        %v1690 = vld [vmem:[#allocation5 + $0xca0] sm:$0xff]
        %v1691 = vld [vmem:[#allocation5 + $0xca8] sm:$0xff]
        %v1692 = vld [vmem:[#allocation5 + $0xcb0] sm:$0xff]
        %v1693 = vld [vmem:[#allocation5 + $0xcb8] sm:$0xff]
        %v1694 = vld [vmem:[#allocation5 + $0xcc0] sm:$0xff]
        %v1695 = vld [vmem:[#allocation5 + $0xcc8] sm:$0xff]
        %v1696 = vld [vmem:[#allocation5 + $0xcd0] sm:$0xff]
        %v1697 = vld [vmem:[#allocation5 + $0xcd8] sm:$0xff]
        %v1698 = vld [vmem:[#allocation5 + $0xce0] sm:$0xff]
        %v1699 = vld [vmem:[#allocation5 + $0xce8] sm:$0xff]
        %v1700 = vld [vmem:[#allocation5 + $0xcf0] sm:$0xff]
        %v1701 = vld [vmem:[#allocation5 + $0xcf8] sm:$0xff]
        %v1702 = vld [vmem:[#allocation5 + $0xd00] sm:$0xff]
        %v1703 = vld [vmem:[#allocation5 + $0xd08] sm:$0xff]
        %v1704 = vld [vmem:[#allocation5 + $0xd10] sm:$0xff]
        %v1705 = vld [vmem:[#allocation5 + $0xd18] sm:$0xff]
        %v1706 = vld [vmem:[#allocation5 + $0xd20] sm:$0xff]
        %v1707 = vld [vmem:[#allocation5 + $0xd28] sm:$0xff]
        %v1708 = vld [vmem:[#allocation5 + $0xd30] sm:$0xff]
        %v1709 = vld [vmem:[#allocation5 + $0xd38] sm:$0xff]
        %v1710 = vld [vmem:[#allocation5 + $0xd40] sm:$0xff]
        %v1711 = vld [vmem:[#allocation5 + $0xd48] sm:$0xff]
        %v1712 = vld [vmem:[#allocation5 + $0xd50] sm:$0xff]
        %v1713 = vld [vmem:[#allocation5 + $0xd58] sm:$0xff]
        %v1714 = vld [vmem:[#allocation5 + $0xd60] sm:$0xff]
        %v1715 = vld [vmem:[#allocation5 + $0xd68] sm:$0xff]
        %v1716 = vld [vmem:[#allocation5 + $0xd70] sm:$0xff]
        %v1717 = vld [vmem:[#allocation5 + $0xd78] sm:$0xff]
        %v1718 = vld [vmem:[#allocation5 + $0xd80] sm:$0xff]
        %v1719 = vld [vmem:[#allocation5 + $0xd88] sm:$0xff]
        %v1720 = vld [vmem:[#allocation5 + $0xd90] sm:$0xff]
        %v1721 = vld [vmem:[#allocation5 + $0xd98] sm:$0xff]
        %v1722 = vld [vmem:[#allocation5 + $0xda0] sm:$0xff]
        %v1723 = vld [vmem:[#allocation5 + $0xda8] sm:$0xff]
        %v1724 = vld [vmem:[#allocation5 + $0xdb0] sm:$0xff]
        %v1725 = vld [vmem:[#allocation5 + $0xdb8] sm:$0xff]
        %v1726 = vld [vmem:[#allocation5 + $0xdc0] sm:$0xff]
        %v1727 = vld [vmem:[#allocation5 + $0xdc8] sm:$0xff]
        %v1728 = vld [vmem:[#allocation5 + $0xdd0] sm:$0xff]
        %v1729 = vld [vmem:[#allocation5 + $0xdd8] sm:$0xff]
        %v1730 = vld [vmem:[#allocation5 + $0xde0] sm:$0xff]
        %v1731 = vld [vmem:[#allocation5 + $0xde8] sm:$0xff]
        %v1732 = vld [vmem:[#allocation5 + $0xdf0] sm:$0xff]
        %v1733 = vld [vmem:[#allocation5 + $0xdf8] sm:$0xff]
        %v2182 = vunpack.c.l.b16 %v1286
        %v2183 = vunpack.c.h.b16 %v1286
        %v2184 = vunpack.c.l.b16 %v1287
        %v2185 = vunpack.c.h.b16 %v1287
        %v2186 = vunpack.c.l.b16 %v1288
        %v2187 = vunpack.c.h.b16 %v1288
        %v2188 = vunpack.c.l.b16 %v1289
        %v2189 = vunpack.c.h.b16 %v1289
        %v2190 = vunpack.c.l.b16 %v1290
        %v2191 = vunpack.c.h.b16 %v1290
        %v2192 = vunpack.c.l.b16 %v1291
        %v2193 = vunpack.c.h.b16 %v1291
        %v2194 = vunpack.c.l.b16 %v1292
        %v2195 = vunpack.c.h.b16 %v1292
        %v2196 = vunpack.c.l.b16 %v1293
        %v2197 = vunpack.c.h.b16 %v1293
        %v2198 = vunpack.c.l.b16 %v1294
        %v2199 = vunpack.c.h.b16 %v1294
        %v2200 = vunpack.c.l.b16 %v1295
        %v2201 = vunpack.c.h.b16 %v1295
        %v2202 = vunpack.c.l.b16 %v1296
        %v2203 = vunpack.c.h.b16 %v1296
        %v2204 = vunpack.c.l.b16 %v1297
        %v2205 = vunpack.c.h.b16 %v1297
        %v2206 = vunpack.c.l.b16 %v1298
        %v2207 = vunpack.c.h.b16 %v1298
        %v2208 = vunpack.c.l.b16 %v1299
        %v2209 = vunpack.c.h.b16 %v1299
        %v2210 = vunpack.c.l.b16 %v1300
        %v2211 = vunpack.c.h.b16 %v1300
        %v2212 = vunpack.c.l.b16 %v1301
        %v2213 = vunpack.c.h.b16 %v1301
        %v2214 = vunpack.c.l.b16 %v1302
        %v2215 = vunpack.c.h.b16 %v1302
        %v2216 = vunpack.c.l.b16 %v1303
        %v2217 = vunpack.c.h.b16 %v1303
        %v2218 = vunpack.c.l.b16 %v1304
        %v2219 = vunpack.c.h.b16 %v1304
        %v2220 = vunpack.c.l.b16 %v1305
        %v2221 = vunpack.c.h.b16 %v1305
        %v2222 = vunpack.c.l.b16 %v1306
        %v2223 = vunpack.c.h.b16 %v1306
        %v2224 = vunpack.c.l.b16 %v1307
        %v2225 = vunpack.c.h.b16 %v1307
        %v2226 = vunpack.c.l.b16 %v1308
        %v2227 = vunpack.c.h.b16 %v1308
        %v2228 = vunpack.c.l.b16 %v1309
        %v2229 = vunpack.c.h.b16 %v1309
        %v2230 = vunpack.c.l.b16 %v1310
        %v2231 = vunpack.c.h.b16 %v1310
        %v2232 = vunpack.c.l.b16 %v1311
        %v2233 = vunpack.c.h.b16 %v1311
        %v2234 = vunpack.c.l.b16 %v1312
        %v2235 = vunpack.c.h.b16 %v1312
        %v2236 = vunpack.c.l.b16 %v1313
        %v2237 = vunpack.c.h.b16 %v1313
        %v2238 = vunpack.c.l.b16 %v1314
        %v2239 = vunpack.c.h.b16 %v1314
        %v2240 = vunpack.c.l.b16 %v1315
        %v2241 = vunpack.c.h.b16 %v1315
        %v2242 = vunpack.c.l.b16 %v1316
        %v2243 = vunpack.c.h.b16 %v1316
        %v2244 = vunpack.c.l.b16 %v1317
        %v2245 = vunpack.c.h.b16 %v1317
        %v2246 = vunpack.c.l.b16 %v1318
        %v2247 = vunpack.c.h.b16 %v1318
        %v2248 = vunpack.c.l.b16 %v1319
        %v2249 = vunpack.c.h.b16 %v1319
        %v2250 = vunpack.c.l.b16 %v1320
        %v2251 = vunpack.c.h.b16 %v1320
        %v2252 = vunpack.c.l.b16 %v1321
        %v2253 = vunpack.c.h.b16 %v1321
        %v2254 = vunpack.c.l.b16 %v1322
        %v2255 = vunpack.c.h.b16 %v1322
        %v2256 = vunpack.c.l.b16 %v1323
        %v2257 = vunpack.c.h.b16 %v1323
        %v2258 = vunpack.c.l.b16 %v1324
        %v2259 = vunpack.c.h.b16 %v1324
        %v2260 = vunpack.c.l.b16 %v1325
        %v2261 = vunpack.c.h.b16 %v1325
        %v2262 = vunpack.c.l.b16 %v1326
        %v2263 = vunpack.c.h.b16 %v1326
        %v2264 = vunpack.c.l.b16 %v1327
        %v2265 = vunpack.c.h.b16 %v1327
        %v2266 = vunpack.c.l.b16 %v1328
        %v2267 = vunpack.c.h.b16 %v1328
        %v2268 = vunpack.c.l.b16 %v1329
        %v2269 = vunpack.c.h.b16 %v1329
        %v2270 = vunpack.c.l.b16 %v1330
        %v2271 = vunpack.c.h.b16 %v1330
        %v2272 = vunpack.c.l.b16 %v1331
        %v2273 = vunpack.c.h.b16 %v1331
        %v2274 = vunpack.c.l.b16 %v1332
        %v2275 = vunpack.c.h.b16 %v1332
        %v2276 = vunpack.c.l.b16 %v1333
        %v2277 = vunpack.c.h.b16 %v1333
        %v2278 = vunpack.c.l.b16 %v1334
        %v2279 = vunpack.c.h.b16 %v1334
        %v2280 = vunpack.c.l.b16 %v1335
        %v2281 = vunpack.c.h.b16 %v1335
        %v2282 = vunpack.c.l.b16 %v1336
        %v2283 = vunpack.c.h.b16 %v1336
        %v2284 = vunpack.c.l.b16 %v1337
        %v2285 = vunpack.c.h.b16 %v1337
        %v2286 = vunpack.c.l.b16 %v1338
        %v2287 = vunpack.c.h.b16 %v1338
        %v2288 = vunpack.c.l.b16 %v1339
        %v2289 = vunpack.c.h.b16 %v1339
        %v2290 = vunpack.c.l.b16 %v1340
        %v2291 = vunpack.c.h.b16 %v1340
        %v2292 = vunpack.c.l.b16 %v1341
        %v2293 = vunpack.c.h.b16 %v1341
        %v2294 = vunpack.c.l.b16 %v1342
        %v2295 = vunpack.c.h.b16 %v1342
        %v2296 = vunpack.c.l.b16 %v1343
        %v2297 = vunpack.c.h.b16 %v1343
        %v2298 = vunpack.c.l.b16 %v1344
        %v2299 = vunpack.c.h.b16 %v1344
        %v2300 = vunpack.c.l.b16 %v1345
        %v2301 = vunpack.c.h.b16 %v1345
        %v2302 = vunpack.c.l.b16 %v1346
        %v2303 = vunpack.c.h.b16 %v1346
        %v2304 = vunpack.c.l.b16 %v1347
        %v2305 = vunpack.c.h.b16 %v1347
        %v2306 = vunpack.c.l.b16 %v1348
        %v2307 = vunpack.c.h.b16 %v1348
        %v2308 = vunpack.c.l.b16 %v1349
        %v2309 = vunpack.c.h.b16 %v1349
        %v2310 = vunpack.c.l.b16 %v1350
        %v2311 = vunpack.c.h.b16 %v1350
        %v2312 = vunpack.c.l.b16 %v1351
        %v2313 = vunpack.c.h.b16 %v1351
        %v2314 = vunpack.c.l.b16 %v1352
        %v2315 = vunpack.c.h.b16 %v1352
        %v2316 = vunpack.c.l.b16 %v1353
        %v2317 = vunpack.c.h.b16 %v1353
        %v2318 = vunpack.c.l.b16 %v1354
        %v2319 = vunpack.c.h.b16 %v1354
        %v2320 = vunpack.c.l.b16 %v1355
        %v2321 = vunpack.c.h.b16 %v1355
        %v2322 = vunpack.c.l.b16 %v1356
        %v2323 = vunpack.c.h.b16 %v1356
        %v2324 = vunpack.c.l.b16 %v1357
        %v2325 = vunpack.c.h.b16 %v1357
        %v2326 = vunpack.c.l.b16 %v1358
        %v2327 = vunpack.c.h.b16 %v1358
        %v2328 = vunpack.c.l.b16 %v1359
        %v2329 = vunpack.c.h.b16 %v1359
        %v2330 = vunpack.c.l.b16 %v1360
        %v2331 = vunpack.c.h.b16 %v1360
        %v2332 = vunpack.c.l.b16 %v1361
        %v2333 = vunpack.c.h.b16 %v1361
        %v2334 = vunpack.c.l.b16 %v1362
        %v2335 = vunpack.c.h.b16 %v1362
        %v2336 = vunpack.c.l.b16 %v1363
        %v2337 = vunpack.c.h.b16 %v1363
        %v2338 = vunpack.c.l.b16 %v1364
        %v2339 = vunpack.c.h.b16 %v1364
        %v2340 = vunpack.c.l.b16 %v1365
        %v2341 = vunpack.c.h.b16 %v1365
        %v2342 = vunpack.c.l.b16 %v1366
        %v2343 = vunpack.c.h.b16 %v1366
        %v2344 = vunpack.c.l.b16 %v1367
        %v2345 = vunpack.c.h.b16 %v1367
        %v2346 = vunpack.c.l.b16 %v1368
        %v2347 = vunpack.c.h.b16 %v1368
        %v2348 = vunpack.c.l.b16 %v1369
        %v2349 = vunpack.c.h.b16 %v1369
        %v2350 = vunpack.c.l.b16 %v1370
        %v2351 = vunpack.c.h.b16 %v1370
        %v2352 = vunpack.c.l.b16 %v1371
        %v2353 = vunpack.c.h.b16 %v1371
        %v2354 = vunpack.c.l.b16 %v1372
        %v2355 = vunpack.c.h.b16 %v1372
        %v2356 = vunpack.c.l.b16 %v1373
        %v2357 = vunpack.c.h.b16 %v1373
        %v2358 = vunpack.c.l.b16 %v1374
        %v2359 = vunpack.c.h.b16 %v1374
        %v2360 = vunpack.c.l.b16 %v1375
        %v2361 = vunpack.c.h.b16 %v1375
        %v2362 = vunpack.c.l.b16 %v1376
        %v2363 = vunpack.c.h.b16 %v1376
        %v2364 = vunpack.c.l.b16 %v1377
        %v2365 = vunpack.c.h.b16 %v1377
        %v2366 = vunpack.c.l.b16 %v1378
        %v2367 = vunpack.c.h.b16 %v1378
        %v2368 = vunpack.c.l.b16 %v1379
        %v2369 = vunpack.c.h.b16 %v1379
        %v2370 = vunpack.c.l.b16 %v1380
        %v2371 = vunpack.c.h.b16 %v1380
        %v2372 = vunpack.c.l.b16 %v1381
        %v2373 = vunpack.c.h.b16 %v1381
        %v2374 = vunpack.c.l.b16 %v1382
        %v2375 = vunpack.c.h.b16 %v1382
        %v2376 = vunpack.c.l.b16 %v1383
        %v2377 = vunpack.c.h.b16 %v1383
        %v2378 = vunpack.c.l.b16 %v1384
        %v2379 = vunpack.c.h.b16 %v1384
        %v2380 = vunpack.c.l.b16 %v1385
        %v2381 = vunpack.c.h.b16 %v1385
        %v2382 = vunpack.c.l.b16 %v1386
        %v2383 = vunpack.c.h.b16 %v1386
        %v2384 = vunpack.c.l.b16 %v1387
        %v2385 = vunpack.c.h.b16 %v1387
        %v2386 = vunpack.c.l.b16 %v1388
        %v2387 = vunpack.c.h.b16 %v1388
        %v2388 = vunpack.c.l.b16 %v1389
        %v2389 = vunpack.c.h.b16 %v1389
        %v2390 = vunpack.c.l.b16 %v1390
        %v2391 = vunpack.c.h.b16 %v1390
        %v2392 = vunpack.c.l.b16 %v1391
        %v2393 = vunpack.c.h.b16 %v1391
        %v2394 = vunpack.c.l.b16 %v1392
        %v2395 = vunpack.c.h.b16 %v1392
        %v2396 = vunpack.c.l.b16 %v1393
        %v2397 = vunpack.c.h.b16 %v1393
        %v2398 = vunpack.c.l.b16 %v1394
        %v2399 = vunpack.c.h.b16 %v1394
        %v2400 = vunpack.c.l.b16 %v1395
        %v2401 = vunpack.c.h.b16 %v1395
        %v2402 = vunpack.c.l.b16 %v1396
        %v2403 = vunpack.c.h.b16 %v1396
        %v2404 = vunpack.c.l.b16 %v1397
        %v2405 = vunpack.c.h.b16 %v1397
        %v2406 = vunpack.c.l.b16 %v1398
        %v2407 = vunpack.c.h.b16 %v1398
        %v2408 = vunpack.c.l.b16 %v1399
        %v2409 = vunpack.c.h.b16 %v1399
        %v2410 = vunpack.c.l.b16 %v1400
        %v2411 = vunpack.c.h.b16 %v1400
        %v2412 = vunpack.c.l.b16 %v1401
        %v2413 = vunpack.c.h.b16 %v1401
        %v2414 = vunpack.c.l.b16 %v1402
        %v2415 = vunpack.c.h.b16 %v1402
        %v2416 = vunpack.c.l.b16 %v1403
        %v2417 = vunpack.c.h.b16 %v1403
        %v2418 = vunpack.c.l.b16 %v1404
        %v2419 = vunpack.c.h.b16 %v1404
        %v2420 = vunpack.c.l.b16 %v1405
        %v2421 = vunpack.c.h.b16 %v1405
        %v2422 = vunpack.c.l.b16 %v1406
        %v2423 = vunpack.c.h.b16 %v1406
        %v2424 = vunpack.c.l.b16 %v1407
        %v2425 = vunpack.c.h.b16 %v1407
        %v2426 = vunpack.c.l.b16 %v1408
        %v2427 = vunpack.c.h.b16 %v1408
        %v2428 = vunpack.c.l.b16 %v1409
        %v2429 = vunpack.c.h.b16 %v1409
        %v2430 = vunpack.c.l.b16 %v1410
        %v2431 = vunpack.c.h.b16 %v1410
        %v2432 = vunpack.c.l.b16 %v1411
        %v2433 = vunpack.c.h.b16 %v1411
        %v2434 = vunpack.c.l.b16 %v1412
        %v2435 = vunpack.c.h.b16 %v1412
        %v2436 = vunpack.c.l.b16 %v1413
        %v2437 = vunpack.c.h.b16 %v1413
        %v2438 = vunpack.c.l.b16 %v1414
        %v2439 = vunpack.c.h.b16 %v1414
        %v2440 = vunpack.c.l.b16 %v1415
        %v2441 = vunpack.c.h.b16 %v1415
        %v2442 = vunpack.c.l.b16 %v1416
        %v2443 = vunpack.c.h.b16 %v1416
        %v2444 = vunpack.c.l.b16 %v1417
        %v2445 = vunpack.c.h.b16 %v1417
        %v2446 = vunpack.c.l.b16 %v1418
        %v2447 = vunpack.c.h.b16 %v1418
        %v2448 = vunpack.c.l.b16 %v1419
        %v2449 = vunpack.c.h.b16 %v1419
        %v2450 = vunpack.c.l.b16 %v1420
        %v2451 = vunpack.c.h.b16 %v1420
        %v2452 = vunpack.c.l.b16 %v1421
        %v2453 = vunpack.c.h.b16 %v1421
        %v2454 = vunpack.c.l.b16 %v1422
        %v2455 = vunpack.c.h.b16 %v1422
        %v2456 = vunpack.c.l.b16 %v1423
        %v2457 = vunpack.c.h.b16 %v1423
        %v2458 = vunpack.c.l.b16 %v1424
        %v2459 = vunpack.c.h.b16 %v1424
        %v2460 = vunpack.c.l.b16 %v1425
        %v2461 = vunpack.c.h.b16 %v1425
        %v2462 = vunpack.c.l.b16 %v1426
        %v2463 = vunpack.c.h.b16 %v1426
        %v2464 = vunpack.c.l.b16 %v1427
        %v2465 = vunpack.c.h.b16 %v1427
        %v2466 = vunpack.c.l.b16 %v1428
        %v2467 = vunpack.c.h.b16 %v1428
        %v2468 = vunpack.c.l.b16 %v1429
        %v2469 = vunpack.c.h.b16 %v1429
        %v2470 = vunpack.c.l.b16 %v1430
        %v2471 = vunpack.c.h.b16 %v1430
        %v2472 = vunpack.c.l.b16 %v1431
        %v2473 = vunpack.c.h.b16 %v1431
        %v2474 = vunpack.c.l.b16 %v1432
        %v2475 = vunpack.c.h.b16 %v1432
        %v2476 = vunpack.c.l.b16 %v1433
        %v2477 = vunpack.c.h.b16 %v1433
        %v2478 = vunpack.c.l.b16 %v1434
        %v2479 = vunpack.c.h.b16 %v1434
        %v2480 = vunpack.c.l.b16 %v1435
        %v2481 = vunpack.c.h.b16 %v1435
        %v2482 = vunpack.c.l.b16 %v1436
        %v2483 = vunpack.c.h.b16 %v1436
        %v2484 = vunpack.c.l.b16 %v1437
        %v2485 = vunpack.c.h.b16 %v1437
        %v2486 = vunpack.c.l.b16 %v1438
        %v2487 = vunpack.c.h.b16 %v1438
        %v2488 = vunpack.c.l.b16 %v1439
        %v2489 = vunpack.c.h.b16 %v1439
        %v2490 = vunpack.c.l.b16 %v1440
        %v2491 = vunpack.c.h.b16 %v1440
        %v2492 = vunpack.c.l.b16 %v1441
        %v2493 = vunpack.c.h.b16 %v1441
        %v2494 = vunpack.c.l.b16 %v1442
        %v2495 = vunpack.c.h.b16 %v1442
        %v2496 = vunpack.c.l.b16 %v1443
        %v2497 = vunpack.c.h.b16 %v1443
        %v2498 = vunpack.c.l.b16 %v1444
        %v2499 = vunpack.c.h.b16 %v1444
        %v2500 = vunpack.c.l.b16 %v1445
        %v2501 = vunpack.c.h.b16 %v1445
        %v2502 = vunpack.c.l.b16 %v1446
        %v2503 = vunpack.c.h.b16 %v1446
        %v2504 = vunpack.c.l.b16 %v1447
        %v2505 = vunpack.c.h.b16 %v1447
        %v2506 = vunpack.c.l.b16 %v1448
        %v2507 = vunpack.c.h.b16 %v1448
        %v2508 = vunpack.c.l.b16 %v1449
        %v2509 = vunpack.c.h.b16 %v1449
        %v2510 = vunpack.c.l.b16 %v1450
        %v2511 = vunpack.c.h.b16 %v1450
        %v2512 = vunpack.c.l.b16 %v1451
        %v2513 = vunpack.c.h.b16 %v1451
        %v2514 = vunpack.c.l.b16 %v1452
        %v2515 = vunpack.c.h.b16 %v1452
        %v2516 = vunpack.c.l.b16 %v1453
        %v2517 = vunpack.c.h.b16 %v1453
        %v2518 = vunpack.c.l.b16 %v1454
        %v2519 = vunpack.c.h.b16 %v1454
        %v2520 = vunpack.c.l.b16 %v1455
        %v2521 = vunpack.c.h.b16 %v1455
        %v2522 = vunpack.c.l.b16 %v1456
        %v2523 = vunpack.c.h.b16 %v1456
        %v2524 = vunpack.c.l.b16 %v1457
        %v2525 = vunpack.c.h.b16 %v1457
        %v2526 = vunpack.c.l.b16 %v1458
        %v2527 = vunpack.c.h.b16 %v1458
        %v2528 = vunpack.c.l.b16 %v1459
        %v2529 = vunpack.c.h.b16 %v1459
        %v2530 = vunpack.c.l.b16 %v1460
        %v2531 = vunpack.c.h.b16 %v1460
        %v2532 = vunpack.c.l.b16 %v1461
        %v2533 = vunpack.c.h.b16 %v1461
        %v2534 = vunpack.c.l.b16 %v1462
        %v2535 = vunpack.c.h.b16 %v1462
        %v2536 = vunpack.c.l.b16 %v1463
        %v2537 = vunpack.c.h.b16 %v1463
        %v2538 = vunpack.c.l.b16 %v1464
        %v2539 = vunpack.c.h.b16 %v1464
        %v2540 = vunpack.c.l.b16 %v1465
        %v2541 = vunpack.c.h.b16 %v1465
        %v2542 = vunpack.c.l.b16 %v1466
        %v2543 = vunpack.c.h.b16 %v1466
        %v2544 = vunpack.c.l.b16 %v1467
        %v2545 = vunpack.c.h.b16 %v1467
        %v2546 = vunpack.c.l.b16 %v1468
        %v2547 = vunpack.c.h.b16 %v1468
        %v2548 = vunpack.c.l.b16 %v1469
        %v2549 = vunpack.c.h.b16 %v1469
        %v2550 = vunpack.c.l.b16 %v1470
        %v2551 = vunpack.c.h.b16 %v1470
        %v2552 = vunpack.c.l.b16 %v1471
        %v2553 = vunpack.c.h.b16 %v1471
        %v2554 = vunpack.c.l.b16 %v1472
        %v2555 = vunpack.c.h.b16 %v1472
        %v2556 = vunpack.c.l.b16 %v1473
        %v2557 = vunpack.c.h.b16 %v1473
        %v2558 = vunpack.c.l.b16 %v1474
        %v2559 = vunpack.c.h.b16 %v1474
        %v2560 = vunpack.c.l.b16 %v1475
        %v2561 = vunpack.c.h.b16 %v1475
        %v2562 = vunpack.c.l.b16 %v1476
        %v2563 = vunpack.c.h.b16 %v1476
        %v2564 = vunpack.c.l.b16 %v1477
        %v2565 = vunpack.c.h.b16 %v1477
        %v2566 = vunpack.c.l.b16 %v1478
        %v2567 = vunpack.c.h.b16 %v1478
        %v2568 = vunpack.c.l.b16 %v1479
        %v2569 = vunpack.c.h.b16 %v1479
        %v2570 = vunpack.c.l.b16 %v1480
        %v2571 = vunpack.c.h.b16 %v1480
        %v2572 = vunpack.c.l.b16 %v1481
        %v2573 = vunpack.c.h.b16 %v1481
        %v2574 = vunpack.c.l.b16 %v1482
        %v2575 = vunpack.c.h.b16 %v1482
        %v2576 = vunpack.c.l.b16 %v1483
        %v2577 = vunpack.c.h.b16 %v1483
        %v2578 = vunpack.c.l.b16 %v1484
        %v2579 = vunpack.c.h.b16 %v1484
        %v2580 = vunpack.c.l.b16 %v1485
        %v2581 = vunpack.c.h.b16 %v1485
        %v2582 = vunpack.c.l.b16 %v1486
        %v2583 = vunpack.c.h.b16 %v1486
        %v2584 = vunpack.c.l.b16 %v1487
        %v2585 = vunpack.c.h.b16 %v1487
        %v2586 = vunpack.c.l.b16 %v1488
        %v2587 = vunpack.c.h.b16 %v1488
        %v2588 = vunpack.c.l.b16 %v1489
        %v2589 = vunpack.c.h.b16 %v1489
        %v2590 = vunpack.c.l.b16 %v1490
        %v2591 = vunpack.c.h.b16 %v1490
        %v2592 = vunpack.c.l.b16 %v1491
        %v2593 = vunpack.c.h.b16 %v1491
        %v2594 = vunpack.c.l.b16 %v1492
        %v2595 = vunpack.c.h.b16 %v1492
        %v2596 = vunpack.c.l.b16 %v1493
        %v2597 = vunpack.c.h.b16 %v1493
        %v2598 = vunpack.c.l.b16 %v1494
        %v2599 = vunpack.c.h.b16 %v1494
        %v2600 = vunpack.c.l.b16 %v1495
        %v2601 = vunpack.c.h.b16 %v1495
        %v2602 = vunpack.c.l.b16 %v1496
        %v2603 = vunpack.c.h.b16 %v1496
        %v2604 = vunpack.c.l.b16 %v1497
        %v2605 = vunpack.c.h.b16 %v1497
        %v2606 = vunpack.c.l.b16 %v1498
        %v2607 = vunpack.c.h.b16 %v1498
        %v2608 = vunpack.c.l.b16 %v1499
        %v2609 = vunpack.c.h.b16 %v1499
        %v2610 = vunpack.c.l.b16 %v1500
        %v2611 = vunpack.c.h.b16 %v1500
        %v2612 = vunpack.c.l.b16 %v1501
        %v2613 = vunpack.c.h.b16 %v1501
        %v2614 = vunpack.c.l.b16 %v1502
        %v2615 = vunpack.c.h.b16 %v1502
        %v2616 = vunpack.c.l.b16 %v1503
        %v2617 = vunpack.c.h.b16 %v1503
        %v2618 = vunpack.c.l.b16 %v1504
        %v2619 = vunpack.c.h.b16 %v1504
        %v2620 = vunpack.c.l.b16 %v1505
        %v2621 = vunpack.c.h.b16 %v1505
        %v2622 = vunpack.c.l.b16 %v1506
        %v2623 = vunpack.c.h.b16 %v1506
        %v2624 = vunpack.c.l.b16 %v1507
        %v2625 = vunpack.c.h.b16 %v1507
        %v2626 = vunpack.c.l.b16 %v1508
        %v2627 = vunpack.c.h.b16 %v1508
        %v2628 = vunpack.c.l.b16 %v1509
        %v2629 = vunpack.c.h.b16 %v1509
        %v2630 = vunpack.c.l.b16 %v1510
        %v2631 = vunpack.c.h.b16 %v1510
        %v2632 = vunpack.c.l.b16 %v1511
        %v2633 = vunpack.c.h.b16 %v1511
        %v2634 = vunpack.c.l.b16 %v1512
        %v2635 = vunpack.c.h.b16 %v1512
        %v2636 = vunpack.c.l.b16 %v1513
        %v2637 = vunpack.c.h.b16 %v1513
        %v2638 = vunpack.c.l.b16 %v1514
        %v2639 = vunpack.c.h.b16 %v1514
        %v2640 = vunpack.c.l.b16 %v1515
        %v2641 = vunpack.c.h.b16 %v1515
        %v2642 = vunpack.c.l.b16 %v1516
        %v2643 = vunpack.c.h.b16 %v1516
        %v2644 = vunpack.c.l.b16 %v1517
        %v2645 = vunpack.c.h.b16 %v1517
        %v2646 = vunpack.c.l.b16 %v1518
        %v2647 = vunpack.c.h.b16 %v1518
        %v2648 = vunpack.c.l.b16 %v1519
        %v2649 = vunpack.c.h.b16 %v1519
        %v2650 = vunpack.c.l.b16 %v1520
        %v2651 = vunpack.c.h.b16 %v1520
        %v2652 = vunpack.c.l.b16 %v1521
        %v2653 = vunpack.c.h.b16 %v1521
        %v2654 = vunpack.c.l.b16 %v1522
        %v2655 = vunpack.c.h.b16 %v1522
        %v2656 = vunpack.c.l.b16 %v1523
        %v2657 = vunpack.c.h.b16 %v1523
        %v2658 = vunpack.c.l.b16 %v1524
        %v2659 = vunpack.c.h.b16 %v1524
        %v2660 = vunpack.c.l.b16 %v1525
        %v2661 = vunpack.c.h.b16 %v1525
        %v2662 = vunpack.c.l.b16 %v1526
        %v2663 = vunpack.c.h.b16 %v1526
        %v2664 = vunpack.c.l.b16 %v1527
        %v2665 = vunpack.c.h.b16 %v1527
        %v2666 = vunpack.c.l.b16 %v1528
        %v2667 = vunpack.c.h.b16 %v1528
        %v2668 = vunpack.c.l.b16 %v1529
        %v2669 = vunpack.c.h.b16 %v1529
        %v2670 = vunpack.c.l.b16 %v1530
        %v2671 = vunpack.c.h.b16 %v1530
        %v2672 = vunpack.c.l.b16 %v1531
        %v2673 = vunpack.c.h.b16 %v1531
        %v2674 = vunpack.c.l.b16 %v1532
        %v2675 = vunpack.c.h.b16 %v1532
        %v2676 = vunpack.c.l.b16 %v1533
        %v2677 = vunpack.c.h.b16 %v1533
        %v2678 = vunpack.c.l.b16 %v1534
        %v2679 = vunpack.c.h.b16 %v1534
        %v2680 = vunpack.c.l.b16 %v1535
        %v2681 = vunpack.c.h.b16 %v1535
        %v2682 = vunpack.c.l.b16 %v1536
        %v2683 = vunpack.c.h.b16 %v1536
        %v2684 = vunpack.c.l.b16 %v1537
        %v2685 = vunpack.c.h.b16 %v1537
        %v2686 = vunpack.c.l.b16 %v1538
        %v2687 = vunpack.c.h.b16 %v1538
        %v2688 = vunpack.c.l.b16 %v1539
        %v2689 = vunpack.c.h.b16 %v1539
        %v2690 = vunpack.c.l.b16 %v1540
        %v2691 = vunpack.c.h.b16 %v1540
        %v2692 = vunpack.c.l.b16 %v1541
        %v2693 = vunpack.c.h.b16 %v1541
        %v2694 = vunpack.c.l.b16 %v1542
        %v2695 = vunpack.c.h.b16 %v1542
        %v2696 = vunpack.c.l.b16 %v1543
        %v2697 = vunpack.c.h.b16 %v1543
        %v2698 = vunpack.c.l.b16 %v1544
        %v2699 = vunpack.c.h.b16 %v1544
        %v2700 = vunpack.c.l.b16 %v1545
        %v2701 = vunpack.c.h.b16 %v1545
        %v2702 = vunpack.c.l.b16 %v1546
        %v2703 = vunpack.c.h.b16 %v1546
        %v2704 = vunpack.c.l.b16 %v1547
        %v2705 = vunpack.c.h.b16 %v1547
        %v2706 = vunpack.c.l.b16 %v1548
        %v2707 = vunpack.c.h.b16 %v1548
        %v2708 = vunpack.c.l.b16 %v1549
        %v2709 = vunpack.c.h.b16 %v1549
        %v2710 = vunpack.c.l.b16 %v1550
        %v2711 = vunpack.c.h.b16 %v1550
        %v2712 = vunpack.c.l.b16 %v1551
        %v2713 = vunpack.c.h.b16 %v1551
        %v2714 = vunpack.c.l.b16 %v1552
        %v2715 = vunpack.c.h.b16 %v1552
        %v2716 = vunpack.c.l.b16 %v1553
        %v2717 = vunpack.c.h.b16 %v1553
        %v2718 = vunpack.c.l.b16 %v1554
        %v2719 = vunpack.c.h.b16 %v1554
        %v2720 = vunpack.c.l.b16 %v1555
        %v2721 = vunpack.c.h.b16 %v1555
        %v2722 = vunpack.c.l.b16 %v1556
        %v2723 = vunpack.c.h.b16 %v1556
        %v2724 = vunpack.c.l.b16 %v1557
        %v2725 = vunpack.c.h.b16 %v1557
        %v2726 = vunpack.c.l.b16 %v1558
        %v2727 = vunpack.c.h.b16 %v1558
        %v2728 = vunpack.c.l.b16 %v1559
        %v2729 = vunpack.c.h.b16 %v1559
        %v2730 = vunpack.c.l.b16 %v1560
        %v2731 = vunpack.c.h.b16 %v1560
        %v2732 = vunpack.c.l.b16 %v1561
        %v2733 = vunpack.c.h.b16 %v1561
        %v2734 = vunpack.c.l.b16 %v1562
        %v2735 = vunpack.c.h.b16 %v1562
        %v2736 = vunpack.c.l.b16 %v1563
        %v2737 = vunpack.c.h.b16 %v1563
        %v2738 = vunpack.c.l.b16 %v1564
        %v2739 = vunpack.c.h.b16 %v1564
        %v2740 = vunpack.c.l.b16 %v1565
        %v2741 = vunpack.c.h.b16 %v1565
        %v2742 = vunpack.c.l.b16 %v1566
        %v2743 = vunpack.c.h.b16 %v1566
        %v2744 = vunpack.c.l.b16 %v1567
        %v2745 = vunpack.c.h.b16 %v1567
        %v2746 = vunpack.c.l.b16 %v1568
        %v2747 = vunpack.c.h.b16 %v1568
        %v2748 = vunpack.c.l.b16 %v1569
        %v2749 = vunpack.c.h.b16 %v1569
        %v2750 = vunpack.c.l.b16 %v1570
        %v2751 = vunpack.c.h.b16 %v1570
        %v2752 = vunpack.c.l.b16 %v1571
        %v2753 = vunpack.c.h.b16 %v1571
        %v2754 = vunpack.c.l.b16 %v1572
        %v2755 = vunpack.c.h.b16 %v1572
        %v2756 = vunpack.c.l.b16 %v1573
        %v2757 = vunpack.c.h.b16 %v1573
        %v2758 = vunpack.c.l.b16 %v1574
        %v2759 = vunpack.c.h.b16 %v1574
        %v2760 = vunpack.c.l.b16 %v1575
        %v2761 = vunpack.c.h.b16 %v1575
        %v2762 = vunpack.c.l.b16 %v1576
        %v2763 = vunpack.c.h.b16 %v1576
        %v2764 = vunpack.c.l.b16 %v1577
        %v2765 = vunpack.c.h.b16 %v1577
        %v2766 = vunpack.c.l.b16 %v1578
        %v2767 = vunpack.c.h.b16 %v1578
        %v2768 = vunpack.c.l.b16 %v1579
        %v2769 = vunpack.c.h.b16 %v1579
        %v2770 = vunpack.c.l.b16 %v1580
        %v2771 = vunpack.c.h.b16 %v1580
        %v2772 = vunpack.c.l.b16 %v1581
        %v2773 = vunpack.c.h.b16 %v1581
        %v2774 = vunpack.c.l.b16 %v1582
        %v2775 = vunpack.c.h.b16 %v1582
        %v2776 = vunpack.c.l.b16 %v1583
        %v2777 = vunpack.c.h.b16 %v1583
        %v2778 = vunpack.c.l.b16 %v1584
        %v2779 = vunpack.c.h.b16 %v1584
        %v2780 = vunpack.c.l.b16 %v1585
        %v2781 = vunpack.c.h.b16 %v1585
        %v2782 = vunpack.c.l.b16 %v1586
        %v2783 = vunpack.c.h.b16 %v1586
        %v2784 = vunpack.c.l.b16 %v1587
        %v2785 = vunpack.c.h.b16 %v1587
        %v2786 = vunpack.c.l.b16 %v1588
        %v2787 = vunpack.c.h.b16 %v1588
        %v2788 = vunpack.c.l.b16 %v1589
        %v2789 = vunpack.c.h.b16 %v1589
        %v2790 = vunpack.c.l.b16 %v1590
        %v2791 = vunpack.c.h.b16 %v1590
        %v2792 = vunpack.c.l.b16 %v1591
        %v2793 = vunpack.c.h.b16 %v1591
        %v2794 = vunpack.c.l.b16 %v1592
        %v2795 = vunpack.c.h.b16 %v1592
        %v2796 = vunpack.c.l.b16 %v1593
        %v2797 = vunpack.c.h.b16 %v1593
        %v2798 = vunpack.c.l.b16 %v1594
        %v2799 = vunpack.c.h.b16 %v1594
        %v2800 = vunpack.c.l.b16 %v1595
        %v2801 = vunpack.c.h.b16 %v1595
        %v2802 = vunpack.c.l.b16 %v1596
        %v2803 = vunpack.c.h.b16 %v1596
        %v2804 = vunpack.c.l.b16 %v1597
        %v2805 = vunpack.c.h.b16 %v1597
        %v2806 = vunpack.c.l.b16 %v1598
        %v2807 = vunpack.c.h.b16 %v1598
        %v2808 = vunpack.c.l.b16 %v1599
        %v2809 = vunpack.c.h.b16 %v1599
        %v2810 = vunpack.c.l.b16 %v1600
        %v2811 = vunpack.c.h.b16 %v1600
        %v2812 = vunpack.c.l.b16 %v1601
        %v2813 = vunpack.c.h.b16 %v1601
        %v2814 = vunpack.c.l.b16 %v1602
        %v2815 = vunpack.c.h.b16 %v1602
        %v2816 = vunpack.c.l.b16 %v1603
        %v2817 = vunpack.c.h.b16 %v1603
        %v2818 = vunpack.c.l.b16 %v1604
        %v2819 = vunpack.c.h.b16 %v1604
        %v2820 = vunpack.c.l.b16 %v1605
        %v2821 = vunpack.c.h.b16 %v1605
        %v2822 = vunpack.c.l.b16 %v1606
        %v2823 = vunpack.c.h.b16 %v1606
        %v2824 = vunpack.c.l.b16 %v1607
        %v2825 = vunpack.c.h.b16 %v1607
        %v2826 = vunpack.c.l.b16 %v1608
        %v2827 = vunpack.c.h.b16 %v1608
        %v2828 = vunpack.c.l.b16 %v1609
        %v2829 = vunpack.c.h.b16 %v1609
        %v2830 = vunpack.c.l.b16 %v1610
        %v2831 = vunpack.c.h.b16 %v1610
        %v2832 = vunpack.c.l.b16 %v1611
        %v2833 = vunpack.c.h.b16 %v1611
        %v2834 = vunpack.c.l.b16 %v1612
        %v2835 = vunpack.c.h.b16 %v1612
        %v2836 = vunpack.c.l.b16 %v1613
        %v2837 = vunpack.c.h.b16 %v1613
        %v2838 = vunpack.c.l.b16 %v1614
        %v2839 = vunpack.c.h.b16 %v1614
        %v2840 = vunpack.c.l.b16 %v1615
        %v2841 = vunpack.c.h.b16 %v1615
        %v2842 = vunpack.c.l.b16 %v1616
        %v2843 = vunpack.c.h.b16 %v1616
        %v2844 = vunpack.c.l.b16 %v1617
        %v2845 = vunpack.c.h.b16 %v1617
        %v2846 = vunpack.c.l.b16 %v1618
        %v2847 = vunpack.c.h.b16 %v1618
        %v2848 = vunpack.c.l.b16 %v1619
        %v2849 = vunpack.c.h.b16 %v1619
        %v2850 = vunpack.c.l.b16 %v1620
        %v2851 = vunpack.c.h.b16 %v1620
        %v2852 = vunpack.c.l.b16 %v1621
        %v2853 = vunpack.c.h.b16 %v1621
        %v2854 = vunpack.c.l.b16 %v1622
        %v2855 = vunpack.c.h.b16 %v1622
        %v2856 = vunpack.c.l.b16 %v1623
        %v2857 = vunpack.c.h.b16 %v1623
        %v2858 = vunpack.c.l.b16 %v1624
        %v2859 = vunpack.c.h.b16 %v1624
        %v2860 = vunpack.c.l.b16 %v1625
        %v2861 = vunpack.c.h.b16 %v1625
        %v2862 = vunpack.c.l.b16 %v1626
        %v2863 = vunpack.c.h.b16 %v1626
        %v2864 = vunpack.c.l.b16 %v1627
        %v2865 = vunpack.c.h.b16 %v1627
        %v2866 = vunpack.c.l.b16 %v1628
        %v2867 = vunpack.c.h.b16 %v1628
        %v2868 = vunpack.c.l.b16 %v1629
        %v2869 = vunpack.c.h.b16 %v1629
        %v2870 = vunpack.c.l.b16 %v1630
        %v2871 = vunpack.c.h.b16 %v1630
        %v2872 = vunpack.c.l.b16 %v1631
        %v2873 = vunpack.c.h.b16 %v1631
        %v2874 = vunpack.c.l.b16 %v1632
        %v2875 = vunpack.c.h.b16 %v1632
        %v2876 = vunpack.c.l.b16 %v1633
        %v2877 = vunpack.c.h.b16 %v1633
        %v2878 = vunpack.c.l.b16 %v1634
        %v2879 = vunpack.c.h.b16 %v1634
        %v2880 = vunpack.c.l.b16 %v1635
        %v2881 = vunpack.c.h.b16 %v1635
        %v2882 = vunpack.c.l.b16 %v1636
        %v2883 = vunpack.c.h.b16 %v1636
        %v2884 = vunpack.c.l.b16 %v1637
        %v2885 = vunpack.c.h.b16 %v1637
        %v2886 = vunpack.c.l.b16 %v1638
        %v2887 = vunpack.c.h.b16 %v1638
        %v2888 = vunpack.c.l.b16 %v1639
        %v2889 = vunpack.c.h.b16 %v1639
        %v2890 = vunpack.c.l.b16 %v1640
        %v2891 = vunpack.c.h.b16 %v1640
        %v2892 = vunpack.c.l.b16 %v1641
        %v2893 = vunpack.c.h.b16 %v1641
        %v2894 = vunpack.c.l.b16 %v1642
        %v2895 = vunpack.c.h.b16 %v1642
        %v2896 = vunpack.c.l.b16 %v1643
        %v2897 = vunpack.c.h.b16 %v1643
        %v2898 = vunpack.c.l.b16 %v1644
        %v2899 = vunpack.c.h.b16 %v1644
        %v2900 = vunpack.c.l.b16 %v1645
        %v2901 = vunpack.c.h.b16 %v1645
        %v2902 = vunpack.c.l.b16 %v1646
        %v2903 = vunpack.c.h.b16 %v1646
        %v2904 = vunpack.c.l.b16 %v1647
        %v2905 = vunpack.c.h.b16 %v1647
        %v2906 = vunpack.c.l.b16 %v1648
        %v2907 = vunpack.c.h.b16 %v1648
        %v2908 = vunpack.c.l.b16 %v1649
        %v2909 = vunpack.c.h.b16 %v1649
        %v2910 = vunpack.c.l.b16 %v1650
        %v2911 = vunpack.c.h.b16 %v1650
        %v2912 = vunpack.c.l.b16 %v1651
        %v2913 = vunpack.c.h.b16 %v1651
        %v2914 = vunpack.c.l.b16 %v1652
        %v2915 = vunpack.c.h.b16 %v1652
        %v2916 = vunpack.c.l.b16 %v1653
        %v2917 = vunpack.c.h.b16 %v1653
        %v2918 = vunpack.c.l.b16 %v1654
        %v2919 = vunpack.c.h.b16 %v1654
        %v2920 = vunpack.c.l.b16 %v1655
        %v2921 = vunpack.c.h.b16 %v1655
        %v2922 = vunpack.c.l.b16 %v1656
        %v2923 = vunpack.c.h.b16 %v1656
        %v2924 = vunpack.c.l.b16 %v1657
        %v2925 = vunpack.c.h.b16 %v1657
        %v2926 = vunpack.c.l.b16 %v1658
        %v2927 = vunpack.c.h.b16 %v1658
        %v2928 = vunpack.c.l.b16 %v1659
        %v2929 = vunpack.c.h.b16 %v1659
        %v2930 = vunpack.c.l.b16 %v1660
        %v2931 = vunpack.c.h.b16 %v1660
        %v2932 = vunpack.c.l.b16 %v1661
        %v2933 = vunpack.c.h.b16 %v1661
        %v2934 = vunpack.c.l.b16 %v1662
        %v2935 = vunpack.c.h.b16 %v1662
        %v2936 = vunpack.c.l.b16 %v1663
        %v2937 = vunpack.c.h.b16 %v1663
        %v2938 = vunpack.c.l.b16 %v1664
        %v2939 = vunpack.c.h.b16 %v1664
        %v2940 = vunpack.c.l.b16 %v1665
        %v2941 = vunpack.c.h.b16 %v1665
        %v2942 = vunpack.c.l.b16 %v1666
        %v2943 = vunpack.c.h.b16 %v1666
        %v2944 = vunpack.c.l.b16 %v1667
        %v2945 = vunpack.c.h.b16 %v1667
        %v2946 = vunpack.c.l.b16 %v1668
        %v2947 = vunpack.c.h.b16 %v1668
        %v2948 = vunpack.c.l.b16 %v1669
        %v2949 = vunpack.c.h.b16 %v1669
        %v2950 = vunpack.c.l.b16 %v1670
        %v2951 = vunpack.c.h.b16 %v1670
        %v2952 = vunpack.c.l.b16 %v1671
        %v2953 = vunpack.c.h.b16 %v1671
        %v2954 = vunpack.c.l.b16 %v1672
        %v2955 = vunpack.c.h.b16 %v1672
        %v2956 = vunpack.c.l.b16 %v1673
        %v2957 = vunpack.c.h.b16 %v1673
        %v2958 = vunpack.c.l.b16 %v1674
        %v2959 = vunpack.c.h.b16 %v1674
        %v2960 = vunpack.c.l.b16 %v1675
        %v2961 = vunpack.c.h.b16 %v1675
        %v2962 = vunpack.c.l.b16 %v1676
        %v2963 = vunpack.c.h.b16 %v1676
        %v2964 = vunpack.c.l.b16 %v1677
        %v2965 = vunpack.c.h.b16 %v1677
        %v2966 = vunpack.c.l.b16 %v1678
        %v2967 = vunpack.c.h.b16 %v1678
        %v2968 = vunpack.c.l.b16 %v1679
        %v2969 = vunpack.c.h.b16 %v1679
        %v2970 = vunpack.c.l.b16 %v1680
        %v2971 = vunpack.c.h.b16 %v1680
        %v2972 = vunpack.c.l.b16 %v1681
        %v2973 = vunpack.c.h.b16 %v1681
        %v2974 = vunpack.c.l.b16 %v1682
        %v2975 = vunpack.c.h.b16 %v1682
        %v2976 = vunpack.c.l.b16 %v1683
        %v2977 = vunpack.c.h.b16 %v1683
        %v2978 = vunpack.c.l.b16 %v1684
        %v2979 = vunpack.c.h.b16 %v1684
        %v2980 = vunpack.c.l.b16 %v1685
        %v2981 = vunpack.c.h.b16 %v1685
        %v2982 = vunpack.c.l.b16 %v1686
        %v2983 = vunpack.c.h.b16 %v1686
        %v2984 = vunpack.c.l.b16 %v1687
        %v2985 = vunpack.c.h.b16 %v1687
        %v2986 = vunpack.c.l.b16 %v1688
        %v2987 = vunpack.c.h.b16 %v1688
        %v2988 = vunpack.c.l.b16 %v1689
        %v2989 = vunpack.c.h.b16 %v1689
        %v2990 = vunpack.c.l.b16 %v1690
        %v2991 = vunpack.c.h.b16 %v1690
        %v2992 = vunpack.c.l.b16 %v1691
        %v2993 = vunpack.c.h.b16 %v1691
        %v2994 = vunpack.c.l.b16 %v1692
        %v2995 = vunpack.c.h.b16 %v1692
        %v2996 = vunpack.c.l.b16 %v1693
        %v2997 = vunpack.c.h.b16 %v1693
        %v2998 = vunpack.c.l.b16 %v1694
        %v2999 = vunpack.c.h.b16 %v1694
        %v3000 = vunpack.c.l.b16 %v1695
        %v3001 = vunpack.c.h.b16 %v1695
        %v3002 = vunpack.c.l.b16 %v1696
        %v3003 = vunpack.c.h.b16 %v1696
        %v3004 = vunpack.c.l.b16 %v1697
        %v3005 = vunpack.c.h.b16 %v1697
        %v3006 = vunpack.c.l.b16 %v1698
        %v3007 = vunpack.c.h.b16 %v1698
        %v3008 = vunpack.c.l.b16 %v1699
        %v3009 = vunpack.c.h.b16 %v1699
        %v3010 = vunpack.c.l.b16 %v1700
        %v3011 = vunpack.c.h.b16 %v1700
        %v3012 = vunpack.c.l.b16 %v1701
        %v3013 = vunpack.c.h.b16 %v1701
        %v3014 = vunpack.c.l.b16 %v1702
        %v3015 = vunpack.c.h.b16 %v1702
        %v3016 = vunpack.c.l.b16 %v1703
        %v3017 = vunpack.c.h.b16 %v1703
        %v3018 = vunpack.c.l.b16 %v1704
        %v3019 = vunpack.c.h.b16 %v1704
        %v3020 = vunpack.c.l.b16 %v1705
        %v3021 = vunpack.c.h.b16 %v1705
        %v3022 = vunpack.c.l.b16 %v1706
        %v3023 = vunpack.c.h.b16 %v1706
        %v3024 = vunpack.c.l.b16 %v1707
        %v3025 = vunpack.c.h.b16 %v1707
        %v3026 = vunpack.c.l.b16 %v1708
        %v3027 = vunpack.c.h.b16 %v1708
        %v3028 = vunpack.c.l.b16 %v1709
        %v3029 = vunpack.c.h.b16 %v1709
        %v3030 = vunpack.c.l.b16 %v1710
        %v3031 = vunpack.c.h.b16 %v1710
        %v3032 = vunpack.c.l.b16 %v1711
        %v3033 = vunpack.c.h.b16 %v1711
        %v3034 = vunpack.c.l.b16 %v1712
        %v3035 = vunpack.c.h.b16 %v1712
        %v3036 = vunpack.c.l.b16 %v1713
        %v3037 = vunpack.c.h.b16 %v1713
        %v3038 = vunpack.c.l.b16 %v1714
        %v3039 = vunpack.c.h.b16 %v1714
        %v3040 = vunpack.c.l.b16 %v1715
        %v3041 = vunpack.c.h.b16 %v1715
        %v3042 = vunpack.c.l.b16 %v1716
        %v3043 = vunpack.c.h.b16 %v1716
        %v3044 = vunpack.c.l.b16 %v1717
        %v3045 = vunpack.c.h.b16 %v1717
        %v3046 = vunpack.c.l.b16 %v1718
        %v3047 = vunpack.c.h.b16 %v1718
        %v3048 = vunpack.c.l.b16 %v1719
        %v3049 = vunpack.c.h.b16 %v1719
        %v3050 = vunpack.c.l.b16 %v1720
        %v3051 = vunpack.c.h.b16 %v1720
        %v3052 = vunpack.c.l.b16 %v1721
        %v3053 = vunpack.c.h.b16 %v1721
        %v3054 = vunpack.c.l.b16 %v1722
        %v3055 = vunpack.c.h.b16 %v1722
        %v3056 = vunpack.c.l.b16 %v1723
        %v3057 = vunpack.c.h.b16 %v1723
        %v3058 = vunpack.c.l.b16 %v1724
        %v3059 = vunpack.c.h.b16 %v1724
        %v3060 = vunpack.c.l.b16 %v1725
        %v3061 = vunpack.c.h.b16 %v1725
        %v3062 = vunpack.c.l.b16 %v1726
        %v3063 = vunpack.c.h.b16 %v1726
        %v3064 = vunpack.c.l.b16 %v1727
        %v3065 = vunpack.c.h.b16 %v1727
        %v3066 = vunpack.c.l.b16 %v1728
        %v3067 = vunpack.c.h.b16 %v1728
        %v3068 = vunpack.c.l.b16 %v1729
        %v3069 = vunpack.c.h.b16 %v1729
        %v3070 = vunpack.c.l.b16 %v1730
        %v3071 = vunpack.c.h.b16 %v1730
        %v3072 = vunpack.c.l.b16 %v1731
        %v3073 = vunpack.c.h.b16 %v1731
        %v3074 = vunpack.c.l.b16 %v1732
        %v3075 = vunpack.c.h.b16 %v1732
        %v3076 = vunpack.c.l.b16 %v1733
        %v3077 = vunpack.c.h.b16 %v1733
        %v3078 = vpack.c.b16 %v2196, %v2182
        %v3079 = vpack.c.b16 %v2197, %v2183
        %v3080 = vpack.c.b16 %v2198, %v2184
        %v3081 = vpack.c.b16 %v2199, %v2185
        %v3082 = vpack.c.b16 %v2200, %v2186
        %v3083 = vpack.c.b16 %v2201, %v2187
        %v3084 = vpack.c.b16 %v2202, %v2188
        %v3085 = vpack.c.b16 %v2203, %v2189
        %v3086 = vpack.c.b16 %v2204, %v2190
        %v3087 = vpack.c.b16 %v2205, %v2191
        %v3088 = vpack.c.b16 %v2206, %v2192
        %v3089 = vpack.c.b16 %v2207, %v2193
        %v3090 = vpack.c.b16 %v2208, %v2194
        %v3091 = vpack.c.b16 %v2209, %v2195
        %v3092 = vpack.c.b16 %v2224, %v2210
        %v3093 = vpack.c.b16 %v2225, %v2211
        %v3094 = vpack.c.b16 %v2226, %v2212
        %v3095 = vpack.c.b16 %v2227, %v2213
        %v3096 = vpack.c.b16 %v2228, %v2214
        %v3097 = vpack.c.b16 %v2229, %v2215
        %v3098 = vpack.c.b16 %v2230, %v2216
        %v3099 = vpack.c.b16 %v2231, %v2217
        %v3100 = vpack.c.b16 %v2232, %v2218
        %v3101 = vpack.c.b16 %v2233, %v2219
        %v3102 = vpack.c.b16 %v2234, %v2220
        %v3103 = vpack.c.b16 %v2235, %v2221
        %v3104 = vpack.c.b16 %v2236, %v2222
        %v3105 = vpack.c.b16 %v2237, %v2223
        %v3106 = vpack.c.b16 %v2252, %v2238
        %v3107 = vpack.c.b16 %v2253, %v2239
        %v3108 = vpack.c.b16 %v2254, %v2240
        %v3109 = vpack.c.b16 %v2255, %v2241
        %v3110 = vpack.c.b16 %v2256, %v2242
        %v3111 = vpack.c.b16 %v2257, %v2243
        %v3112 = vpack.c.b16 %v2258, %v2244
        %v3113 = vpack.c.b16 %v2259, %v2245
        %v3114 = vpack.c.b16 %v2260, %v2246
        %v3115 = vpack.c.b16 %v2261, %v2247
        %v3116 = vpack.c.b16 %v2262, %v2248
        %v3117 = vpack.c.b16 %v2263, %v2249
        %v3118 = vpack.c.b16 %v2264, %v2250
        %v3119 = vpack.c.b16 %v2265, %v2251
        %v3120 = vpack.c.b16 %v2280, %v2266
        %v3121 = vpack.c.b16 %v2281, %v2267
        %v3122 = vpack.c.b16 %v2282, %v2268
        %v3123 = vpack.c.b16 %v2283, %v2269
        %v3124 = vpack.c.b16 %v2284, %v2270
        %v3125 = vpack.c.b16 %v2285, %v2271
        %v3126 = vpack.c.b16 %v2286, %v2272
        %v3127 = vpack.c.b16 %v2287, %v2273
        %v3128 = vpack.c.b16 %v2288, %v2274
        %v3129 = vpack.c.b16 %v2289, %v2275
        %v3130 = vpack.c.b16 %v2290, %v2276
        %v3131 = vpack.c.b16 %v2291, %v2277
        %v3132 = vpack.c.b16 %v2292, %v2278
        %v3133 = vpack.c.b16 %v2293, %v2279
        %v3134 = vpack.c.b16 %v2308, %v2294
        %v3135 = vpack.c.b16 %v2309, %v2295
        %v3136 = vpack.c.b16 %v2310, %v2296
        %v3137 = vpack.c.b16 %v2311, %v2297
        %v3138 = vpack.c.b16 %v2312, %v2298
        %v3139 = vpack.c.b16 %v2313, %v2299
        %v3140 = vpack.c.b16 %v2314, %v2300
        %v3141 = vpack.c.b16 %v2315, %v2301
        %v3142 = vpack.c.b16 %v2316, %v2302
        %v3143 = vpack.c.b16 %v2317, %v2303
        %v3144 = vpack.c.b16 %v2318, %v2304
        %v3145 = vpack.c.b16 %v2319, %v2305
        %v3146 = vpack.c.b16 %v2320, %v2306
        %v3147 = vpack.c.b16 %v2321, %v2307
        %v3148 = vpack.c.b16 %v2336, %v2322
        %v3149 = vpack.c.b16 %v2337, %v2323
        %v3150 = vpack.c.b16 %v2338, %v2324
        %v3151 = vpack.c.b16 %v2339, %v2325
        %v3152 = vpack.c.b16 %v2340, %v2326
        %v3153 = vpack.c.b16 %v2341, %v2327
        %v3154 = vpack.c.b16 %v2342, %v2328
        %v3155 = vpack.c.b16 %v2343, %v2329
        %v3156 = vpack.c.b16 %v2344, %v2330
        %v3157 = vpack.c.b16 %v2345, %v2331
        %v3158 = vpack.c.b16 %v2346, %v2332
        %v3159 = vpack.c.b16 %v2347, %v2333
        %v3160 = vpack.c.b16 %v2348, %v2334
        %v3161 = vpack.c.b16 %v2349, %v2335
        %v3162 = vpack.c.b16 %v2364, %v2350
        %v3163 = vpack.c.b16 %v2365, %v2351
        %v3164 = vpack.c.b16 %v2366, %v2352
        %v3165 = vpack.c.b16 %v2367, %v2353
        %v3166 = vpack.c.b16 %v2368, %v2354
        %v3167 = vpack.c.b16 %v2369, %v2355
        %v3168 = vpack.c.b16 %v2370, %v2356
        %v3169 = vpack.c.b16 %v2371, %v2357
        %v3170 = vpack.c.b16 %v2372, %v2358
        %v3171 = vpack.c.b16 %v2373, %v2359
        %v3172 = vpack.c.b16 %v2374, %v2360
        %v3173 = vpack.c.b16 %v2375, %v2361
        %v3174 = vpack.c.b16 %v2376, %v2362
        %v3175 = vpack.c.b16 %v2377, %v2363
        %v3176 = vpack.c.b16 %v2392, %v2378
        %v3177 = vpack.c.b16 %v2393, %v2379
        %v3178 = vpack.c.b16 %v2394, %v2380
        %v3179 = vpack.c.b16 %v2395, %v2381
        %v3180 = vpack.c.b16 %v2396, %v2382
        %v3181 = vpack.c.b16 %v2397, %v2383
        %v3182 = vpack.c.b16 %v2398, %v2384
        %v3183 = vpack.c.b16 %v2399, %v2385
        %v3184 = vpack.c.b16 %v2400, %v2386
        %v3185 = vpack.c.b16 %v2401, %v2387
        %v3186 = vpack.c.b16 %v2402, %v2388
        %v3187 = vpack.c.b16 %v2403, %v2389
        %v3188 = vpack.c.b16 %v2404, %v2390
        %v3189 = vpack.c.b16 %v2405, %v2391
        %v3190 = vpack.c.b16 %v2420, %v2406
        %v3191 = vpack.c.b16 %v2421, %v2407
        %v3192 = vpack.c.b16 %v2422, %v2408
        %v3193 = vpack.c.b16 %v2423, %v2409
        %v3194 = vpack.c.b16 %v2424, %v2410
        %v3195 = vpack.c.b16 %v2425, %v2411
        %v3196 = vpack.c.b16 %v2426, %v2412
        %v3197 = vpack.c.b16 %v2427, %v2413
        %v3198 = vpack.c.b16 %v2428, %v2414
        %v3199 = vpack.c.b16 %v2429, %v2415
        %v3200 = vpack.c.b16 %v2430, %v2416
        %v3201 = vpack.c.b16 %v2431, %v2417
        %v3202 = vpack.c.b16 %v2432, %v2418
        %v3203 = vpack.c.b16 %v2433, %v2419
        %v3204 = vpack.c.b16 %v2448, %v2434
        %v3205 = vpack.c.b16 %v2449, %v2435
        %v3206 = vpack.c.b16 %v2450, %v2436
        %v3207 = vpack.c.b16 %v2451, %v2437
        %v3208 = vpack.c.b16 %v2452, %v2438
        %v3209 = vpack.c.b16 %v2453, %v2439
        %v3210 = vpack.c.b16 %v2454, %v2440
        %v3211 = vpack.c.b16 %v2455, %v2441
        %v3212 = vpack.c.b16 %v2456, %v2442
        %v3213 = vpack.c.b16 %v2457, %v2443
        %v3214 = vpack.c.b16 %v2458, %v2444
        %v3215 = vpack.c.b16 %v2459, %v2445
        %v3216 = vpack.c.b16 %v2460, %v2446
        %v3217 = vpack.c.b16 %v2461, %v2447
        %v3218 = vpack.c.b16 %v2476, %v2462
        %v3219 = vpack.c.b16 %v2477, %v2463
        %v3220 = vpack.c.b16 %v2478, %v2464
        %v3221 = vpack.c.b16 %v2479, %v2465
        %v3222 = vpack.c.b16 %v2480, %v2466
        %v3223 = vpack.c.b16 %v2481, %v2467
        %v3224 = vpack.c.b16 %v2482, %v2468
        %v3225 = vpack.c.b16 %v2483, %v2469
        %v3226 = vpack.c.b16 %v2484, %v2470
        %v3227 = vpack.c.b16 %v2485, %v2471
        %v3228 = vpack.c.b16 %v2486, %v2472
        %v3229 = vpack.c.b16 %v2487, %v2473
        %v3230 = vpack.c.b16 %v2488, %v2474
        %v3231 = vpack.c.b16 %v2489, %v2475
        %v3232 = vpack.c.b16 %v2504, %v2490
        %v3233 = vpack.c.b16 %v2505, %v2491
        %v3234 = vpack.c.b16 %v2506, %v2492
        %v3235 = vpack.c.b16 %v2507, %v2493
        %v3236 = vpack.c.b16 %v2508, %v2494
        %v3237 = vpack.c.b16 %v2509, %v2495
        %v3238 = vpack.c.b16 %v2510, %v2496
        %v3239 = vpack.c.b16 %v2511, %v2497
        %v3240 = vpack.c.b16 %v2512, %v2498
        %v3241 = vpack.c.b16 %v2513, %v2499
        %v3242 = vpack.c.b16 %v2514, %v2500
        %v3243 = vpack.c.b16 %v2515, %v2501
        %v3244 = vpack.c.b16 %v2516, %v2502
        %v3245 = vpack.c.b16 %v2517, %v2503
        %v3246 = vpack.c.b16 %v2532, %v2518
        %v3247 = vpack.c.b16 %v2533, %v2519
        %v3248 = vpack.c.b16 %v2534, %v2520
        %v3249 = vpack.c.b16 %v2535, %v2521
        %v3250 = vpack.c.b16 %v2536, %v2522
        %v3251 = vpack.c.b16 %v2537, %v2523
        %v3252 = vpack.c.b16 %v2538, %v2524
        %v3253 = vpack.c.b16 %v2539, %v2525
        %v3254 = vpack.c.b16 %v2540, %v2526
        %v3255 = vpack.c.b16 %v2541, %v2527
        %v3256 = vpack.c.b16 %v2542, %v2528
        %v3257 = vpack.c.b16 %v2543, %v2529
        %v3258 = vpack.c.b16 %v2544, %v2530
        %v3259 = vpack.c.b16 %v2545, %v2531
        %v3260 = vpack.c.b16 %v2560, %v2546
        %v3261 = vpack.c.b16 %v2561, %v2547
        %v3262 = vpack.c.b16 %v2562, %v2548
        %v3263 = vpack.c.b16 %v2563, %v2549
        %v3264 = vpack.c.b16 %v2564, %v2550
        %v3265 = vpack.c.b16 %v2565, %v2551
        %v3266 = vpack.c.b16 %v2566, %v2552
        %v3267 = vpack.c.b16 %v2567, %v2553
        %v3268 = vpack.c.b16 %v2568, %v2554
        %v3269 = vpack.c.b16 %v2569, %v2555
        %v3270 = vpack.c.b16 %v2570, %v2556
        %v3271 = vpack.c.b16 %v2571, %v2557
        %v3272 = vpack.c.b16 %v2572, %v2558
        %v3273 = vpack.c.b16 %v2573, %v2559
        %v3274 = vpack.c.b16 %v2588, %v2574
        %v3275 = vpack.c.b16 %v2589, %v2575
        %v3276 = vpack.c.b16 %v2590, %v2576
        %v3277 = vpack.c.b16 %v2591, %v2577
        %v3278 = vpack.c.b16 %v2592, %v2578
        %v3279 = vpack.c.b16 %v2593, %v2579
        %v3280 = vpack.c.b16 %v2594, %v2580
        %v3281 = vpack.c.b16 %v2595, %v2581
        %v3282 = vpack.c.b16 %v2596, %v2582
        %v3283 = vpack.c.b16 %v2597, %v2583
        %v3284 = vpack.c.b16 %v2598, %v2584
        %v3285 = vpack.c.b16 %v2599, %v2585
        %v3286 = vpack.c.b16 %v2600, %v2586
        %v3287 = vpack.c.b16 %v2601, %v2587
        %v3288 = vpack.c.b16 %v2616, %v2602
        %v3289 = vpack.c.b16 %v2617, %v2603
        %v3290 = vpack.c.b16 %v2618, %v2604
        %v3291 = vpack.c.b16 %v2619, %v2605
        %v3292 = vpack.c.b16 %v2620, %v2606
        %v3293 = vpack.c.b16 %v2621, %v2607
        %v3294 = vpack.c.b16 %v2622, %v2608
        %v3295 = vpack.c.b16 %v2623, %v2609
        %v3296 = vpack.c.b16 %v2624, %v2610
        %v3297 = vpack.c.b16 %v2625, %v2611
        %v3298 = vpack.c.b16 %v2626, %v2612
        %v3299 = vpack.c.b16 %v2627, %v2613
        %v3300 = vpack.c.b16 %v2628, %v2614
        %v3301 = vpack.c.b16 %v2629, %v2615
        %v3302 = vpack.c.b16 %v2644, %v2630
        %v3303 = vpack.c.b16 %v2645, %v2631
        %v3304 = vpack.c.b16 %v2646, %v2632
        %v3305 = vpack.c.b16 %v2647, %v2633
        %v3306 = vpack.c.b16 %v2648, %v2634
        %v3307 = vpack.c.b16 %v2649, %v2635
        %v3308 = vpack.c.b16 %v2650, %v2636
        %v3309 = vpack.c.b16 %v2651, %v2637
        %v3310 = vpack.c.b16 %v2652, %v2638
        %v3311 = vpack.c.b16 %v2653, %v2639
        %v3312 = vpack.c.b16 %v2654, %v2640
        %v3313 = vpack.c.b16 %v2655, %v2641
        %v3314 = vpack.c.b16 %v2656, %v2642
        %v3315 = vpack.c.b16 %v2657, %v2643
        %v3316 = vpack.c.b16 %v2672, %v2658
        %v3317 = vpack.c.b16 %v2673, %v2659
        %v3318 = vpack.c.b16 %v2674, %v2660
        %v3319 = vpack.c.b16 %v2675, %v2661
        %v3320 = vpack.c.b16 %v2676, %v2662
        %v3321 = vpack.c.b16 %v2677, %v2663
        %v3322 = vpack.c.b16 %v2678, %v2664
        %v3323 = vpack.c.b16 %v2679, %v2665
        %v3324 = vpack.c.b16 %v2680, %v2666
        %v3325 = vpack.c.b16 %v2681, %v2667
        %v3326 = vpack.c.b16 %v2682, %v2668
        %v3327 = vpack.c.b16 %v2683, %v2669
        %v3328 = vpack.c.b16 %v2684, %v2670
        %v3329 = vpack.c.b16 %v2685, %v2671
        %v3330 = vpack.c.b16 %v2700, %v2686
        %v3331 = vpack.c.b16 %v2701, %v2687
        %v3332 = vpack.c.b16 %v2702, %v2688
        %v3333 = vpack.c.b16 %v2703, %v2689
        %v3334 = vpack.c.b16 %v2704, %v2690
        %v3335 = vpack.c.b16 %v2705, %v2691
        %v3336 = vpack.c.b16 %v2706, %v2692
        %v3337 = vpack.c.b16 %v2707, %v2693
        %v3338 = vpack.c.b16 %v2708, %v2694
        %v3339 = vpack.c.b16 %v2709, %v2695
        %v3340 = vpack.c.b16 %v2710, %v2696
        %v3341 = vpack.c.b16 %v2711, %v2697
        %v3342 = vpack.c.b16 %v2712, %v2698
        %v3343 = vpack.c.b16 %v2713, %v2699
        %v3344 = vpack.c.b16 %v2728, %v2714
        %v3345 = vpack.c.b16 %v2729, %v2715
        %v3346 = vpack.c.b16 %v2730, %v2716
        %v3347 = vpack.c.b16 %v2731, %v2717
        %v3348 = vpack.c.b16 %v2732, %v2718
        %v3349 = vpack.c.b16 %v2733, %v2719
        %v3350 = vpack.c.b16 %v2734, %v2720
        %v3351 = vpack.c.b16 %v2735, %v2721
        %v3352 = vpack.c.b16 %v2736, %v2722
        %v3353 = vpack.c.b16 %v2737, %v2723
        %v3354 = vpack.c.b16 %v2738, %v2724
        %v3355 = vpack.c.b16 %v2739, %v2725
        %v3356 = vpack.c.b16 %v2740, %v2726
        %v3357 = vpack.c.b16 %v2741, %v2727
        %v3358 = vpack.c.b16 %v2756, %v2742
        %v3359 = vpack.c.b16 %v2757, %v2743
        %v3360 = vpack.c.b16 %v2758, %v2744
        %v3361 = vpack.c.b16 %v2759, %v2745
        %v3362 = vpack.c.b16 %v2760, %v2746
        %v3363 = vpack.c.b16 %v2761, %v2747
        %v3364 = vpack.c.b16 %v2762, %v2748
        %v3365 = vpack.c.b16 %v2763, %v2749
        %v3366 = vpack.c.b16 %v2764, %v2750
        %v3367 = vpack.c.b16 %v2765, %v2751
        %v3368 = vpack.c.b16 %v2766, %v2752
        %v3369 = vpack.c.b16 %v2767, %v2753
        %v3370 = vpack.c.b16 %v2768, %v2754
        %v3371 = vpack.c.b16 %v2769, %v2755
        %v3372 = vpack.c.b16 %v2784, %v2770
        %v3373 = vpack.c.b16 %v2785, %v2771
        %v3374 = vpack.c.b16 %v2786, %v2772
        %v3375 = vpack.c.b16 %v2787, %v2773
        %v3376 = vpack.c.b16 %v2788, %v2774
        %v3377 = vpack.c.b16 %v2789, %v2775
        %v3378 = vpack.c.b16 %v2790, %v2776
        %v3379 = vpack.c.b16 %v2791, %v2777
        %v3380 = vpack.c.b16 %v2792, %v2778
        %v3381 = vpack.c.b16 %v2793, %v2779
        %v3382 = vpack.c.b16 %v2794, %v2780
        %v3383 = vpack.c.b16 %v2795, %v2781
        %v3384 = vpack.c.b16 %v2796, %v2782
        %v3385 = vpack.c.b16 %v2797, %v2783
        %v3386 = vpack.c.b16 %v2812, %v2798
        %v3387 = vpack.c.b16 %v2813, %v2799
        %v3388 = vpack.c.b16 %v2814, %v2800
        %v3389 = vpack.c.b16 %v2815, %v2801
        %v3390 = vpack.c.b16 %v2816, %v2802
        %v3391 = vpack.c.b16 %v2817, %v2803
        %v3392 = vpack.c.b16 %v2818, %v2804
        %v3393 = vpack.c.b16 %v2819, %v2805
        %v3394 = vpack.c.b16 %v2820, %v2806
        %v3395 = vpack.c.b16 %v2821, %v2807
        %v3396 = vpack.c.b16 %v2822, %v2808
        %v3397 = vpack.c.b16 %v2823, %v2809
        %v3398 = vpack.c.b16 %v2824, %v2810
        %v3399 = vpack.c.b16 %v2825, %v2811
        %v3400 = vpack.c.b16 %v2840, %v2826
        %v3401 = vpack.c.b16 %v2841, %v2827
        %v3402 = vpack.c.b16 %v2842, %v2828
        %v3403 = vpack.c.b16 %v2843, %v2829
        %v3404 = vpack.c.b16 %v2844, %v2830
        %v3405 = vpack.c.b16 %v2845, %v2831
        %v3406 = vpack.c.b16 %v2846, %v2832
        %v3407 = vpack.c.b16 %v2847, %v2833
        %v3408 = vpack.c.b16 %v2848, %v2834
        %v3409 = vpack.c.b16 %v2849, %v2835
        %v3410 = vpack.c.b16 %v2850, %v2836
        %v3411 = vpack.c.b16 %v2851, %v2837
        %v3412 = vpack.c.b16 %v2852, %v2838
        %v3413 = vpack.c.b16 %v2853, %v2839
        %v3414 = vpack.c.b16 %v2868, %v2854
        %v3415 = vpack.c.b16 %v2869, %v2855
        %v3416 = vpack.c.b16 %v2870, %v2856
        %v3417 = vpack.c.b16 %v2871, %v2857
        %v3418 = vpack.c.b16 %v2872, %v2858
        %v3419 = vpack.c.b16 %v2873, %v2859
        %v3420 = vpack.c.b16 %v2874, %v2860
        %v3421 = vpack.c.b16 %v2875, %v2861
        %v3422 = vpack.c.b16 %v2876, %v2862
        %v3423 = vpack.c.b16 %v2877, %v2863
        %v3424 = vpack.c.b16 %v2878, %v2864
        %v3425 = vpack.c.b16 %v2879, %v2865
        %v3426 = vpack.c.b16 %v2880, %v2866
        %v3427 = vpack.c.b16 %v2881, %v2867
        %v3428 = vpack.c.b16 %v2896, %v2882
        %v3429 = vpack.c.b16 %v2897, %v2883
        %v3430 = vpack.c.b16 %v2898, %v2884
        %v3431 = vpack.c.b16 %v2899, %v2885
        %v3432 = vpack.c.b16 %v2900, %v2886
        %v3433 = vpack.c.b16 %v2901, %v2887
        %v3434 = vpack.c.b16 %v2902, %v2888
        %v3435 = vpack.c.b16 %v2903, %v2889
        %v3436 = vpack.c.b16 %v2904, %v2890
        %v3437 = vpack.c.b16 %v2905, %v2891
        %v3438 = vpack.c.b16 %v2906, %v2892
        %v3439 = vpack.c.b16 %v2907, %v2893
        %v3440 = vpack.c.b16 %v2908, %v2894
        %v3441 = vpack.c.b16 %v2909, %v2895
        %v3442 = vpack.c.b16 %v2924, %v2910
        %v3443 = vpack.c.b16 %v2925, %v2911
        %v3444 = vpack.c.b16 %v2926, %v2912
        %v3445 = vpack.c.b16 %v2927, %v2913
        %v3446 = vpack.c.b16 %v2928, %v2914
        %v3447 = vpack.c.b16 %v2929, %v2915
        %v3448 = vpack.c.b16 %v2930, %v2916
        %v3449 = vpack.c.b16 %v2931, %v2917
        %v3450 = vpack.c.b16 %v2932, %v2918
        %v3451 = vpack.c.b16 %v2933, %v2919
        %v3452 = vpack.c.b16 %v2934, %v2920
        %v3453 = vpack.c.b16 %v2935, %v2921
        %v3454 = vpack.c.b16 %v2936, %v2922
        %v3455 = vpack.c.b16 %v2937, %v2923
        %v3456 = vpack.c.b16 %v2952, %v2938
        %v3457 = vpack.c.b16 %v2953, %v2939
        %v3458 = vpack.c.b16 %v2954, %v2940
        %v3459 = vpack.c.b16 %v2955, %v2941
        %v3460 = vpack.c.b16 %v2956, %v2942
        %v3461 = vpack.c.b16 %v2957, %v2943
        %v3462 = vpack.c.b16 %v2958, %v2944
        %v3463 = vpack.c.b16 %v2959, %v2945
        %v3464 = vpack.c.b16 %v2960, %v2946
        %v3465 = vpack.c.b16 %v2961, %v2947
        %v3466 = vpack.c.b16 %v2962, %v2948
        %v3467 = vpack.c.b16 %v2963, %v2949
        %v3468 = vpack.c.b16 %v2964, %v2950
        %v3469 = vpack.c.b16 %v2965, %v2951
        %v3470 = vpack.c.b16 %v2980, %v2966
        %v3471 = vpack.c.b16 %v2981, %v2967
        %v3472 = vpack.c.b16 %v2982, %v2968
        %v3473 = vpack.c.b16 %v2983, %v2969
        %v3474 = vpack.c.b16 %v2984, %v2970
        %v3475 = vpack.c.b16 %v2985, %v2971
        %v3476 = vpack.c.b16 %v2986, %v2972
        %v3477 = vpack.c.b16 %v2987, %v2973
        %v3478 = vpack.c.b16 %v2988, %v2974
        %v3479 = vpack.c.b16 %v2989, %v2975
        %v3480 = vpack.c.b16 %v2990, %v2976
        %v3481 = vpack.c.b16 %v2991, %v2977
        %v3482 = vpack.c.b16 %v2992, %v2978
        %v3483 = vpack.c.b16 %v2993, %v2979
        %v3484 = vpack.c.b16 %v3008, %v2994
        %v3485 = vpack.c.b16 %v3009, %v2995
        %v3486 = vpack.c.b16 %v3010, %v2996
        %v3487 = vpack.c.b16 %v3011, %v2997
        %v3488 = vpack.c.b16 %v3012, %v2998
        %v3489 = vpack.c.b16 %v3013, %v2999
        %v3490 = vpack.c.b16 %v3014, %v3000
        %v3491 = vpack.c.b16 %v3015, %v3001
        %v3492 = vpack.c.b16 %v3016, %v3002
        %v3493 = vpack.c.b16 %v3017, %v3003
        %v3494 = vpack.c.b16 %v3018, %v3004
        %v3495 = vpack.c.b16 %v3019, %v3005
        %v3496 = vpack.c.b16 %v3020, %v3006
        %v3497 = vpack.c.b16 %v3021, %v3007
        %v3498 = vpack.c.b16 %v3036, %v3022
        %v3499 = vpack.c.b16 %v3037, %v3023
        %v3500 = vpack.c.b16 %v3038, %v3024
        %v3501 = vpack.c.b16 %v3039, %v3025
        %v3502 = vpack.c.b16 %v3040, %v3026
        %v3503 = vpack.c.b16 %v3041, %v3027
        %v3504 = vpack.c.b16 %v3042, %v3028
        %v3505 = vpack.c.b16 %v3043, %v3029
        %v3506 = vpack.c.b16 %v3044, %v3030
        %v3507 = vpack.c.b16 %v3045, %v3031
        %v3508 = vpack.c.b16 %v3046, %v3032
        %v3509 = vpack.c.b16 %v3047, %v3033
        %v3510 = vpack.c.b16 %v3048, %v3034
        %v3511 = vpack.c.b16 %v3049, %v3035
        %v3512 = vpack.c.b16 %v3064, %v3050
        %v3513 = vpack.c.b16 %v3065, %v3051
        %v3514 = vpack.c.b16 %v3066, %v3052
        %v3515 = vpack.c.b16 %v3067, %v3053
        %v3516 = vpack.c.b16 %v3068, %v3054
        %v3517 = vpack.c.b16 %v3069, %v3055
        %v3518 = vpack.c.b16 %v3070, %v3056
        %v3519 = vpack.c.b16 %v3071, %v3057
        %v3520 = vpack.c.b16 %v3072, %v3058
        %v3521 = vpack.c.b16 %v3073, %v3059
        %v3522 = vpack.c.b16 %v3074, %v3060
        %v3523 = vpack.c.b16 %v3075, %v3061
        %v3524 = vpack.c.b16 %v3076, %v3062
        %v3525 = vpack.c.b16 %v3077, %v3063
        %3974 = vmatprep.subr.bf16.mxu0 %v3177
        %3975 = vmatpush1.bf16.msra.mxu0 %v3176
        %3976 = vmatprep.subr.bf16.mxu0 %v3163
        %3977 = vmatpush1.bf16.msra.mxu0 %v3162
        %3978 = vmatprep.subr.bf16.mxu0 %v3149
        %3979 = vmatpush1.bf16.msra.mxu0 %v3148
        %3980 = vmatprep.subr.bf16.mxu0 %v3135
        %3981 = vmatpush1.bf16.msra.mxu0 %v3134
        %3982 = vmatprep.subr.bf16.mxu0 %v3121
        %3983 = vmatpush1.bf16.msra.mxu0 %v3120
        %3984 = vmatprep.subr.bf16.mxu0 %v3107
        %3985 = vmatpush1.bf16.msra.mxu0 %v3106
        %3986 = vmatprep.subr.bf16.mxu0 %v3093
        %3987 = vmatpush1.bf16.msra.mxu0 %v3092
        %3988 = vmatprep.subr.bf16.mxu0 %v3079
        %3989 = vmatpush1.bf16.msra.mxu0 %v3078
        %3990 = vmatprep.subr.bf16.mxu0 %v3289
        %3991 = vmatpush2.bf16.msra.mxu0 %v3288
        %3992 = vmatprep.subr.bf16.mxu0 %v3275
        %3993 = vmatpush2.bf16.msra.mxu0 %v3274
        %3994 = vmatprep.subr.bf16.mxu0 %v3261
        %3995 = vmatpush2.bf16.msra.mxu0 %v3260
        %3996 = vmatprep.subr.bf16.mxu0 %v3247
        %3997 = vmatpush2.bf16.msra.mxu0 %v3246
        %3998 = vmatprep.subr.bf16.mxu0 %v3233
        %3999 = vmatpush2.bf16.msra.mxu0 %v3232
        %4000 = vmatprep.subr.bf16.mxu0 %v3219
        %4001 = vmatpush2.bf16.msra.mxu0 %v3218
        %4002 = vmatprep.subr.bf16.mxu0 %v3205
        %4003 = vmatpush2.bf16.msra.mxu0 %v3204
        %4004 = vmatprep.subr.bf16.mxu0 %v3191
        %4005 = vmatpush2.bf16.msra.mxu0 %v3190
        %4006 = vmatprep.mubr.bf16.mxu0 %v1223
        %4007 = vmatmul.mubr.bf16.gmra.mxu0 %v1222
        %v4008 = vpop.f32.mrf.mxu0
        %v4009 = vadd.f32 0.0, %v4008
        %v4010 = vpop.f32.mrf.mxu0
        %v4011 = vadd.f32 0.0, %v4010
        %v4012 = vpop.f32.mrf.mxu0
        %v4013 = vadd.f32 0.0, %v4012
        %v4014 = vpop.f32.mrf.mxu0
        %v4015 = vadd.f32 0.0, %v4014
        %4016 = vmatprep.mubr.bf16.mxu0 %v1227
        %4017 = vmatmul.mubr.bf16.gmra.mxu0 %v1226
        %v4018 = vpop.f32.mrf.mxu0
        %v4019 = vadd.f32 0.0, %v4018
        %v4020 = vpop.f32.mrf.mxu0
        %v4021 = vadd.f32 0.0, %v4020
        %v4022 = vpop.f32.mrf.mxu0
        %v4023 = vadd.f32 0.0, %v4022
        %v4024 = vpop.f32.mrf.mxu0
        %v4025 = vadd.f32 0.0, %v4024
        %4026 = vmatprep.mubr.bf16.mxu0 %v1231
        %4027 = vmatmul.mubr.bf16.gmra.mxu0 %v1230
        %v4028 = vpop.f32.mrf.mxu0
        %v4029 = vadd.f32 0.0, %v4028
        %v4030 = vpop.f32.mrf.mxu0
        %v4031 = vadd.f32 0.0, %v4030
        %v4032 = vpop.f32.mrf.mxu0
        %v4033 = vadd.f32 0.0, %v4032
        %v4034 = vpop.f32.mrf.mxu0
        %v4035 = vadd.f32 0.0, %v4034
        %4036 = vmatprep.mubr.bf16.mxu0 %v1235
        %4037 = vmatmul.mubr.bf16.gmra.mxu0 %v1234
        %v4038 = vpop.f32.mrf.mxu0
        %v4039 = vadd.f32 0.0, %v4038
        %v4040 = vpop.f32.mrf.mxu0
        %v4041 = vadd.f32 0.0, %v4040
        %v4042 = vpop.f32.mrf.mxu0
        %v4043 = vadd.f32 0.0, %v4042
        %v4044 = vpop.f32.mrf.mxu0
        %v4045 = vadd.f32 0.0, %v4044
        %4046 = vmatprep.mubr.bf16.mxu0 %v1239
        %4047 = vmatmul.mubr.bf16.gmra.mxu0 %v1238
        %v4048 = vpop.f32.mrf.mxu0
        %v4049 = vadd.f32 0.0, %v4048
        %v4050 = vpop.f32.mrf.mxu0
        %v4051 = vadd.f32 0.0, %v4050
        %v4052 = vpop.f32.mrf.mxu0
        %v4053 = vadd.f32 0.0, %v4052
        %v4054 = vpop.f32.mrf.mxu0
        %v4055 = vadd.f32 0.0, %v4054
        %4056 = vmatprep.mubr.bf16.mxu0 %v1243
        %4057 = vmatmul.mubr.bf16.gmra.mxu0 %v1242
        %v4058 = vpop.f32.mrf.mxu0
        %v4059 = vadd.f32 0.0, %v4058
        %v4060 = vpop.f32.mrf.mxu0
        %v4061 = vadd.f32 0.0, %v4060
        %v4062 = vpop.f32.mrf.mxu0
        %v4063 = vadd.f32 0.0, %v4062
        %v4064 = vpop.f32.mrf.mxu0
        %v4065 = vadd.f32 0.0, %v4064
        %4066 = vmatprep.mubr.bf16.mxu0 %v1247
        %4067 = vmatmul.mubr.bf16.gmra.mxu0 %v1246
        %v4068 = vpop.f32.mrf.mxu0
        %v4069 = vadd.f32 0.0, %v4068
        %v4070 = vpop.f32.mrf.mxu0
        %v4071 = vadd.f32 0.0, %v4070
        %v4072 = vpop.f32.mrf.mxu0
        %v4073 = vadd.f32 0.0, %v4072
        %v4074 = vpop.f32.mrf.mxu0
        %v4075 = vadd.f32 0.0, %v4074
        %4076 = vmatprep.mubr.bf16.mxu0 %v1251
        %4077 = vmatmul.mubr.bf16.gmra.mxu0 %v1250
        %v4078 = vpop.f32.mrf.mxu0
        %v4079 = vadd.f32 0.0, %v4078
        %v4080 = vpop.f32.mrf.mxu0
        %v4081 = vadd.f32 0.0, %v4080
        %v4082 = vpop.f32.mrf.mxu0
        %v4083 = vadd.f32 0.0, %v4082
        %v4084 = vpop.f32.mrf.mxu0
        %v4085 = vadd.f32 0.0, %v4084
        %4086 = vmatprep.mubr.bf16.mxu0 %v1255
        %4087 = vmatmul.mubr.bf16.gmra.mxu0 %v1254
        %v4088 = vpop.f32.mrf.mxu0
        %v4089 = vadd.f32 0.0, %v4088
        %v4090 = vpop.f32.mrf.mxu0
        %v4091 = vadd.f32 0.0, %v4090
        %v4092 = vpop.f32.mrf.mxu0
        %v4093 = vadd.f32 0.0, %v4092
        %v4094 = vpop.f32.mrf.mxu0
        %v4095 = vadd.f32 0.0, %v4094
        %4096 = vmatprep.mubr.bf16.mxu0 %v1259
        %4097 = vmatmul.mubr.bf16.gmra.mxu0 %v1258
        %v4098 = vpop.f32.mrf.mxu0
        %v4099 = vadd.f32 0.0, %v4098
        %v4100 = vpop.f32.mrf.mxu0
        %v4101 = vadd.f32 0.0, %v4100
        %v4102 = vpop.f32.mrf.mxu0
        %v4103 = vadd.f32 0.0, %v4102
        %v4104 = vpop.f32.mrf.mxu0
        %v4105 = vadd.f32 0.0, %v4104
        %4106 = vmatprep.mubr.bf16.mxu0 %v1263
        %4107 = vmatmul.mubr.bf16.gmra.mxu0 %v1262
        %v4108 = vpop.f32.mrf.mxu0
        %v4109 = vadd.f32 0.0, %v4108
        %v4110 = vpop.f32.mrf.mxu0
        %v4111 = vadd.f32 0.0, %v4110
        %v4112 = vpop.f32.mrf.mxu0
        %v4113 = vadd.f32 0.0, %v4112
        %v4114 = vpop.f32.mrf.mxu0
        %v4115 = vadd.f32 0.0, %v4114
        %4116 = vmatprep.mubr.bf16.mxu0 %v1267
        %4117 = vmatmul.mubr.bf16.gmra.mxu0 %v1266
        %v4118 = vpop.f32.mrf.mxu0
        %v4119 = vadd.f32 0.0, %v4118
        %v4120 = vpop.f32.mrf.mxu0
        %v4121 = vadd.f32 0.0, %v4120
        %v4122 = vpop.f32.mrf.mxu0
        %v4123 = vadd.f32 0.0, %v4122
        %v4124 = vpop.f32.mrf.mxu0
        %v4125 = vadd.f32 0.0, %v4124
        %4126 = vmatprep.mubr.bf16.mxu0 %v1271
        %4127 = vmatmul.mubr.bf16.gmra.mxu0 %v1270
        %v4128 = vpop.f32.mrf.mxu0
        %v4129 = vadd.f32 0.0, %v4128
        %v4130 = vpop.f32.mrf.mxu0
        %v4131 = vadd.f32 0.0, %v4130
        %v4132 = vpop.f32.mrf.mxu0
        %v4133 = vadd.f32 0.0, %v4132
        %v4134 = vpop.f32.mrf.mxu0
        %v4135 = vadd.f32 0.0, %v4134
        %4136 = vmatprep.mubr.bf16.mxu0 %v1275
        %4137 = vmatmul.mubr.bf16.gmra.mxu0 %v1274
        %v4138 = vpop.f32.mrf.mxu0
        %v4139 = vadd.f32 0.0, %v4138
        %v4140 = vpop.f32.mrf.mxu0
        %v4141 = vadd.f32 0.0, %v4140
        %v4142 = vpop.f32.mrf.mxu0
        %v4143 = vadd.f32 0.0, %v4142
        %v4144 = vpop.f32.mrf.mxu0
        %v4145 = vadd.f32 0.0, %v4144
        %4146 = vmatprep.mubr.bf16.mxu0 %v1279
        %4147 = vmatmul.mubr.bf16.gmra.mxu0 %v1278
        %v4148 = vpop.f32.mrf.mxu0
        %v4149 = vadd.f32 0.0, %v4148
        %v4150 = vpop.f32.mrf.mxu0
        %v4151 = vadd.f32 0.0, %v4150
        %v4152 = vpop.f32.mrf.mxu0
        %v4153 = vadd.f32 0.0, %v4152
        %v4154 = vpop.f32.mrf.mxu0
        %v4155 = vadd.f32 0.0, %v4154
        %4156 = vmatprep.mubr.bf16.mxu0 %v1283
        %4157 = vmatmul.mubr.bf16.gmra.mxu0 %v1282
        %v4158 = vpop.f32.mrf.mxu0
        %v4159 = vadd.f32 0.0, %v4158
        %v4160 = vpop.f32.mrf.mxu0
        %v4161 = vadd.f32 0.0, %v4160
        %v4162 = vpop.f32.mrf.mxu0
        %v4163 = vadd.f32 0.0, %v4162
        %v4164 = vpop.f32.mrf.mxu0
        %v4165 = vadd.f32 0.0, %v4164
        %4166 = vdwg.mxu0
        %4167 = vmatprep.subr.bf16.mxu0 %v3401
        %4168 = vmatpush1.bf16.msra.mxu0 %v3400
        %4169 = vmatprep.subr.bf16.mxu0 %v3387
        %4170 = vmatpush1.bf16.msra.mxu0 %v3386
        %4171 = vmatprep.subr.bf16.mxu0 %v3373
        %4172 = vmatpush1.bf16.msra.mxu0 %v3372
        %4173 = vmatprep.subr.bf16.mxu0 %v3359
        %4174 = vmatpush1.bf16.msra.mxu0 %v3358
        %4175 = vmatprep.subr.bf16.mxu0 %v3345
        %4176 = vmatpush1.bf16.msra.mxu0 %v3344
        %4177 = vmatprep.subr.bf16.mxu0 %v3331
        %4178 = vmatpush1.bf16.msra.mxu0 %v3330
        %4179 = vmatprep.subr.bf16.mxu0 %v3317
        %4180 = vmatpush1.bf16.msra.mxu0 %v3316
        %4181 = vmatprep.subr.bf16.mxu0 %v3303
        %4182 = vmatpush1.bf16.msra.mxu0 %v3302
        %4183 = vmatprep.subr.bf16.mxu0 %v3513
        %4184 = vmatpush2.bf16.msra.mxu0 %v3512
        %4185 = vmatprep.subr.bf16.mxu0 %v3499
        %4186 = vmatpush2.bf16.msra.mxu0 %v3498
        %4187 = vmatprep.subr.bf16.mxu0 %v3485
        %4188 = vmatpush2.bf16.msra.mxu0 %v3484
        %4189 = vmatprep.subr.bf16.mxu0 %v3471
        %4190 = vmatpush2.bf16.msra.mxu0 %v3470
        %4191 = vmatprep.subr.bf16.mxu0 %v3457
        %4192 = vmatpush2.bf16.msra.mxu0 %v3456
        %4193 = vmatprep.subr.bf16.mxu0 %v3443
        %4194 = vmatpush2.bf16.msra.mxu0 %v3442
        %4195 = vmatprep.subr.bf16.mxu0 %v3429
        %4196 = vmatpush2.bf16.msra.mxu0 %v3428
        %4197 = vmatprep.subr.bf16.mxu0 %v3415
        %4198 = vmatpush2.bf16.msra.mxu0 %v3414
        %4199 = vmatprep.mubr.bf16.mxu0 %v1225
        %4200 = vmatmul.mubr.bf16.gmra.mxu0 %v1224
        %v4201 = vpop.f32.mrf.mxu0
        %v4202 = vadd.f32 %v4009, %v4201
        %v4203 = vpop.f32.mrf.mxu0
        %v4204 = vadd.f32 %v4011, %v4203
        %v4205 = vpop.f32.mrf.mxu0
        %v4206 = vadd.f32 %v4013, %v4205
        %v4207 = vpop.f32.mrf.mxu0
        %v4208 = vadd.f32 %v4015, %v4207
        %4209 = vmatprep.mubr.bf16.mxu0 %v1229
        %4210 = vmatmul.mubr.bf16.gmra.mxu0 %v1228
        %v4211 = vpop.f32.mrf.mxu0
        %v4212 = vadd.f32 %v4019, %v4211
        %v4213 = vpop.f32.mrf.mxu0
        %v4214 = vadd.f32 %v4021, %v4213
        %v4215 = vpop.f32.mrf.mxu0
        %v4216 = vadd.f32 %v4023, %v4215
        %v4217 = vpop.f32.mrf.mxu0
        %v4218 = vadd.f32 %v4025, %v4217
        %4219 = vmatprep.mubr.bf16.mxu0 %v1233
        %4220 = vmatmul.mubr.bf16.gmra.mxu0 %v1232
        %v4221 = vpop.f32.mrf.mxu0
        %v4222 = vadd.f32 %v4029, %v4221
        %v4223 = vpop.f32.mrf.mxu0
        %v4224 = vadd.f32 %v4031, %v4223
        %v4225 = vpop.f32.mrf.mxu0
        %v4226 = vadd.f32 %v4033, %v4225
        %v4227 = vpop.f32.mrf.mxu0
        %v4228 = vadd.f32 %v4035, %v4227
        %4229 = vmatprep.mubr.bf16.mxu0 %v1237
        %4230 = vmatmul.mubr.bf16.gmra.mxu0 %v1236
        %v4231 = vpop.f32.mrf.mxu0
        %v4232 = vadd.f32 %v4039, %v4231
        %v4233 = vpop.f32.mrf.mxu0
        %v4234 = vadd.f32 %v4041, %v4233
        %v4235 = vpop.f32.mrf.mxu0
        %v4236 = vadd.f32 %v4043, %v4235
        %v4237 = vpop.f32.mrf.mxu0
        %v4238 = vadd.f32 %v4045, %v4237
        %4239 = vmatprep.mubr.bf16.mxu0 %v1241
        %4240 = vmatmul.mubr.bf16.gmra.mxu0 %v1240
        %v4241 = vpop.f32.mrf.mxu0
        %v4242 = vadd.f32 %v4049, %v4241
        %v4243 = vpop.f32.mrf.mxu0
        %v4244 = vadd.f32 %v4051, %v4243
        %v4245 = vpop.f32.mrf.mxu0
        %v4246 = vadd.f32 %v4053, %v4245
        %v4247 = vpop.f32.mrf.mxu0
        %v4248 = vadd.f32 %v4055, %v4247
        %4249 = vmatprep.mubr.bf16.mxu0 %v1245
        %4250 = vmatmul.mubr.bf16.gmra.mxu0 %v1244
        %v4251 = vpop.f32.mrf.mxu0
        %v4252 = vadd.f32 %v4059, %v4251
        %v4253 = vpop.f32.mrf.mxu0
        %v4254 = vadd.f32 %v4061, %v4253
        %v4255 = vpop.f32.mrf.mxu0
        %v4256 = vadd.f32 %v4063, %v4255
        %v4257 = vpop.f32.mrf.mxu0
        %v4258 = vadd.f32 %v4065, %v4257
        %4259 = vmatprep.mubr.bf16.mxu0 %v1249
        %4260 = vmatmul.mubr.bf16.gmra.mxu0 %v1248
        %v4261 = vpop.f32.mrf.mxu0
        %v4262 = vadd.f32 %v4069, %v4261
        %v4263 = vpop.f32.mrf.mxu0
        %v4264 = vadd.f32 %v4071, %v4263
        %v4265 = vpop.f32.mrf.mxu0
        %v4266 = vadd.f32 %v4073, %v4265
        %v4267 = vpop.f32.mrf.mxu0
        %v4268 = vadd.f32 %v4075, %v4267
        %4269 = vmatprep.mubr.bf16.mxu0 %v1253
        %4270 = vmatmul.mubr.bf16.gmra.mxu0 %v1252
        %v4271 = vpop.f32.mrf.mxu0
        %v4272 = vadd.f32 %v4079, %v4271
        %v4273 = vpop.f32.mrf.mxu0
        %v4274 = vadd.f32 %v4081, %v4273
        %v4275 = vpop.f32.mrf.mxu0
        %v4276 = vadd.f32 %v4083, %v4275
        %v4277 = vpop.f32.mrf.mxu0
        %v4278 = vadd.f32 %v4085, %v4277
        %4279 = vmatprep.mubr.bf16.mxu0 %v1257
        %4280 = vmatmul.mubr.bf16.gmra.mxu0 %v1256
        %v4281 = vpop.f32.mrf.mxu0
        %v4282 = vadd.f32 %v4089, %v4281
        %v4283 = vpop.f32.mrf.mxu0
        %v4284 = vadd.f32 %v4091, %v4283
        %v4285 = vpop.f32.mrf.mxu0
        %v4286 = vadd.f32 %v4093, %v4285
        %v4287 = vpop.f32.mrf.mxu0
        %v4288 = vadd.f32 %v4095, %v4287
        %4289 = vmatprep.mubr.bf16.mxu0 %v1261
        %4290 = vmatmul.mubr.bf16.gmra.mxu0 %v1260
        %v4291 = vpop.f32.mrf.mxu0
        %v4292 = vadd.f32 %v4099, %v4291
        %v4293 = vpop.f32.mrf.mxu0
        %v4294 = vadd.f32 %v4101, %v4293
        %v4295 = vpop.f32.mrf.mxu0
        %v4296 = vadd.f32 %v4103, %v4295
        %v4297 = vpop.f32.mrf.mxu0
        %v4298 = vadd.f32 %v4105, %v4297
        %4299 = vmatprep.mubr.bf16.mxu0 %v1265
        %4300 = vmatmul.mubr.bf16.gmra.mxu0 %v1264
        %v4301 = vpop.f32.mrf.mxu0
        %v4302 = vadd.f32 %v4109, %v4301
        %v4303 = vpop.f32.mrf.mxu0
        %v4304 = vadd.f32 %v4111, %v4303
        %v4305 = vpop.f32.mrf.mxu0
        %v4306 = vadd.f32 %v4113, %v4305
        %v4307 = vpop.f32.mrf.mxu0
        %v4308 = vadd.f32 %v4115, %v4307
        %4309 = vmatprep.mubr.bf16.mxu0 %v1269
        %4310 = vmatmul.mubr.bf16.gmra.mxu0 %v1268
        %v4311 = vpop.f32.mrf.mxu0
        %v4312 = vadd.f32 %v4119, %v4311
        %v4313 = vpop.f32.mrf.mxu0
        %v4314 = vadd.f32 %v4121, %v4313
        %v4315 = vpop.f32.mrf.mxu0
        %v4316 = vadd.f32 %v4123, %v4315
        %v4317 = vpop.f32.mrf.mxu0
        %v4318 = vadd.f32 %v4125, %v4317
        %4319 = vmatprep.mubr.bf16.mxu0 %v1273
        %4320 = vmatmul.mubr.bf16.gmra.mxu0 %v1272
        %v4321 = vpop.f32.mrf.mxu0
        %v4322 = vadd.f32 %v4129, %v4321
        %v4323 = vpop.f32.mrf.mxu0
        %v4324 = vadd.f32 %v4131, %v4323
        %v4325 = vpop.f32.mrf.mxu0
        %v4326 = vadd.f32 %v4133, %v4325
        %v4327 = vpop.f32.mrf.mxu0
        %v4328 = vadd.f32 %v4135, %v4327
        %4329 = vmatprep.mubr.bf16.mxu0 %v1277
        %4330 = vmatmul.mubr.bf16.gmra.mxu0 %v1276
        %v4331 = vpop.f32.mrf.mxu0
        %v4332 = vadd.f32 %v4139, %v4331
        %v4333 = vpop.f32.mrf.mxu0
        %v4334 = vadd.f32 %v4141, %v4333
        %v4335 = vpop.f32.mrf.mxu0
        %v4336 = vadd.f32 %v4143, %v4335
        %v4337 = vpop.f32.mrf.mxu0
        %v4338 = vadd.f32 %v4145, %v4337
        %4339 = vmatprep.mubr.bf16.mxu0 %v1281
        %4340 = vmatmul.mubr.bf16.gmra.mxu0 %v1280
        %v4341 = vpop.f32.mrf.mxu0
        %v4342 = vadd.f32 %v4149, %v4341
        %v4343 = vpop.f32.mrf.mxu0
        %v4344 = vadd.f32 %v4151, %v4343
        %v4345 = vpop.f32.mrf.mxu0
        %v4346 = vadd.f32 %v4153, %v4345
        %v4347 = vpop.f32.mrf.mxu0
        %v4348 = vadd.f32 %v4155, %v4347
        %4349 = vmatprep.mubr.bf16.mxu0 %v1285
        %4350 = vmatmul.mubr.bf16.gmra.mxu0 %v1284
        %v4351 = vpop.f32.mrf.mxu0
        %v4352 = vadd.f32 %v4159, %v4351
        %v4353 = vpop.f32.mrf.mxu0
        %v4354 = vadd.f32 %v4161, %v4353
        %v4355 = vpop.f32.mrf.mxu0
        %v4356 = vadd.f32 %v4163, %v4355
        %v4357 = vpop.f32.mrf.mxu0
        %v4358 = vadd.f32 %v4165, %v4357
        %4359 = vdwg.mxu0
        %4360 = vmatprep.subr.bf16.mxu0 %v3179
        %4361 = vmatpush1.bf16.msra.mxu0 %v3178
        %4362 = vmatprep.subr.bf16.mxu0 %v3165
        %4363 = vmatpush1.bf16.msra.mxu0 %v3164
        %4364 = vmatprep.subr.bf16.mxu0 %v3151
        %4365 = vmatpush1.bf16.msra.mxu0 %v3150
        %4366 = vmatprep.subr.bf16.mxu0 %v3137
        %4367 = vmatpush1.bf16.msra.mxu0 %v3136
        %4368 = vmatprep.subr.bf16.mxu0 %v3123
        %4369 = vmatpush1.bf16.msra.mxu0 %v3122
        %4370 = vmatprep.subr.bf16.mxu0 %v3109
        %4371 = vmatpush1.bf16.msra.mxu0 %v3108
        %4372 = vmatprep.subr.bf16.mxu0 %v3095
        %4373 = vmatpush1.bf16.msra.mxu0 %v3094
        %4374 = vmatprep.subr.bf16.mxu0 %v3081
        %4375 = vmatpush1.bf16.msra.mxu0 %v3080
        %4376 = vmatprep.subr.bf16.mxu0 %v3291
        %4377 = vmatpush2.bf16.msra.mxu0 %v3290
        %4378 = vmatprep.subr.bf16.mxu0 %v3277
        %4379 = vmatpush2.bf16.msra.mxu0 %v3276
        %4380 = vmatprep.subr.bf16.mxu0 %v3263
        %4381 = vmatpush2.bf16.msra.mxu0 %v3262
        %4382 = vmatprep.subr.bf16.mxu0 %v3249
        %4383 = vmatpush2.bf16.msra.mxu0 %v3248
        %4384 = vmatprep.subr.bf16.mxu0 %v3235
        %4385 = vmatpush2.bf16.msra.mxu0 %v3234
        %4386 = vmatprep.subr.bf16.mxu0 %v3221
        %4387 = vmatpush2.bf16.msra.mxu0 %v3220
        %4388 = vmatprep.subr.bf16.mxu0 %v3207
        %4389 = vmatpush2.bf16.msra.mxu0 %v3206
        %4390 = vmatprep.subr.bf16.mxu0 %v3193
        %4391 = vmatpush2.bf16.msra.mxu0 %v3192
        %4392 = vmatprep.mubr.bf16.mxu0 %v1223
        %4393 = vmatmul.mubr.bf16.gmra.mxu0 %v1222
        %v4394 = vpop.f32.mrf.mxu0
        %v4395 = vadd.f32 0.0, %v4394
        %v4396 = vpop.f32.mrf.mxu0
        %v4397 = vadd.f32 0.0, %v4396
        %v4398 = vpop.f32.mrf.mxu0
        %v4399 = vadd.f32 0.0, %v4398
        %v4400 = vpop.f32.mrf.mxu0
        %v4401 = vadd.f32 0.0, %v4400
        %4402 = vmatprep.mubr.bf16.mxu0 %v1227
        %4403 = vmatmul.mubr.bf16.gmra.mxu0 %v1226
        %v4404 = vpop.f32.mrf.mxu0
        %v4405 = vadd.f32 0.0, %v4404
        %v4406 = vpop.f32.mrf.mxu0
        %v4407 = vadd.f32 0.0, %v4406
        %v4408 = vpop.f32.mrf.mxu0
        %v4409 = vadd.f32 0.0, %v4408
        %v4410 = vpop.f32.mrf.mxu0
        %v4411 = vadd.f32 0.0, %v4410
        %4412 = vmatprep.mubr.bf16.mxu0 %v1231
        %4413 = vmatmul.mubr.bf16.gmra.mxu0 %v1230
        %v4414 = vpop.f32.mrf.mxu0
        %v4415 = vadd.f32 0.0, %v4414
        %v4416 = vpop.f32.mrf.mxu0
        %v4417 = vadd.f32 0.0, %v4416
        %v4418 = vpop.f32.mrf.mxu0
        %v4419 = vadd.f32 0.0, %v4418
        %v4420 = vpop.f32.mrf.mxu0
        %v4421 = vadd.f32 0.0, %v4420
        %4422 = vmatprep.mubr.bf16.mxu0 %v1235
        %4423 = vmatmul.mubr.bf16.gmra.mxu0 %v1234
        %v4424 = vpop.f32.mrf.mxu0
        %v4425 = vadd.f32 0.0, %v4424
        %v4426 = vpop.f32.mrf.mxu0
        %v4427 = vadd.f32 0.0, %v4426
        %v4428 = vpop.f32.mrf.mxu0
        %v4429 = vadd.f32 0.0, %v4428
        %v4430 = vpop.f32.mrf.mxu0
        %v4431 = vadd.f32 0.0, %v4430
        %4432 = vmatprep.mubr.bf16.mxu0 %v1239
        %4433 = vmatmul.mubr.bf16.gmra.mxu0 %v1238
        %v4434 = vpop.f32.mrf.mxu0
        %v4435 = vadd.f32 0.0, %v4434
        %v4436 = vpop.f32.mrf.mxu0
        %v4437 = vadd.f32 0.0, %v4436
        %v4438 = vpop.f32.mrf.mxu0
        %v4439 = vadd.f32 0.0, %v4438
        %v4440 = vpop.f32.mrf.mxu0
        %v4441 = vadd.f32 0.0, %v4440
        %4442 = vmatprep.mubr.bf16.mxu0 %v1243
        %4443 = vmatmul.mubr.bf16.gmra.mxu0 %v1242
        %v4444 = vpop.f32.mrf.mxu0
        %v4445 = vadd.f32 0.0, %v4444
        %v4446 = vpop.f32.mrf.mxu0
        %v4447 = vadd.f32 0.0, %v4446
        %v4448 = vpop.f32.mrf.mxu0
        %v4449 = vadd.f32 0.0, %v4448
        %v4450 = vpop.f32.mrf.mxu0
        %v4451 = vadd.f32 0.0, %v4450
        %4452 = vmatprep.mubr.bf16.mxu0 %v1247
        %4453 = vmatmul.mubr.bf16.gmra.mxu0 %v1246
        %v4454 = vpop.f32.mrf.mxu0
        %v4455 = vadd.f32 0.0, %v4454
        %v4456 = vpop.f32.mrf.mxu0
        %v4457 = vadd.f32 0.0, %v4456
        %v4458 = vpop.f32.mrf.mxu0
        %v4459 = vadd.f32 0.0, %v4458
        %v4460 = vpop.f32.mrf.mxu0
        %v4461 = vadd.f32 0.0, %v4460
        %4462 = vmatprep.mubr.bf16.mxu0 %v1251
        %4463 = vmatmul.mubr.bf16.gmra.mxu0 %v1250
        %v4464 = vpop.f32.mrf.mxu0
        %v4465 = vadd.f32 0.0, %v4464
        %v4466 = vpop.f32.mrf.mxu0
        %v4467 = vadd.f32 0.0, %v4466
        %v4468 = vpop.f32.mrf.mxu0
        %v4469 = vadd.f32 0.0, %v4468
        %v4470 = vpop.f32.mrf.mxu0
        %v4471 = vadd.f32 0.0, %v4470
        %4472 = vmatprep.mubr.bf16.mxu0 %v1255
        %4473 = vmatmul.mubr.bf16.gmra.mxu0 %v1254
        %v4474 = vpop.f32.mrf.mxu0
        %v4475 = vadd.f32 0.0, %v4474
        %v4476 = vpop.f32.mrf.mxu0
        %v4477 = vadd.f32 0.0, %v4476
        %v4478 = vpop.f32.mrf.mxu0
        %v4479 = vadd.f32 0.0, %v4478
        %v4480 = vpop.f32.mrf.mxu0
        %v4481 = vadd.f32 0.0, %v4480
        %4482 = vmatprep.mubr.bf16.mxu0 %v1259
        %4483 = vmatmul.mubr.bf16.gmra.mxu0 %v1258
        %v4484 = vpop.f32.mrf.mxu0
        %v4485 = vadd.f32 0.0, %v4484
        %v4486 = vpop.f32.mrf.mxu0
        %v4487 = vadd.f32 0.0, %v4486
        %v4488 = vpop.f32.mrf.mxu0
        %v4489 = vadd.f32 0.0, %v4488
        %v4490 = vpop.f32.mrf.mxu0
        %v4491 = vadd.f32 0.0, %v4490
        %4492 = vmatprep.mubr.bf16.mxu0 %v1263
        %4493 = vmatmul.mubr.bf16.gmra.mxu0 %v1262
        %v4494 = vpop.f32.mrf.mxu0
        %v4495 = vadd.f32 0.0, %v4494
        %v4496 = vpop.f32.mrf.mxu0
        %v4497 = vadd.f32 0.0, %v4496
        %v4498 = vpop.f32.mrf.mxu0
        %v4499 = vadd.f32 0.0, %v4498
        %v4500 = vpop.f32.mrf.mxu0
        %v4501 = vadd.f32 0.0, %v4500
        %4502 = vmatprep.mubr.bf16.mxu0 %v1267
        %4503 = vmatmul.mubr.bf16.gmra.mxu0 %v1266
        %v4504 = vpop.f32.mrf.mxu0
        %v4505 = vadd.f32 0.0, %v4504
        %v4506 = vpop.f32.mrf.mxu0
        %v4507 = vadd.f32 0.0, %v4506
        %v4508 = vpop.f32.mrf.mxu0
        %v4509 = vadd.f32 0.0, %v4508
        %v4510 = vpop.f32.mrf.mxu0
        %v4511 = vadd.f32 0.0, %v4510
        %4512 = vmatprep.mubr.bf16.mxu0 %v1271
        %4513 = vmatmul.mubr.bf16.gmra.mxu0 %v1270
        %v4514 = vpop.f32.mrf.mxu0
        %v4515 = vadd.f32 0.0, %v4514
        %v4516 = vpop.f32.mrf.mxu0
        %v4517 = vadd.f32 0.0, %v4516
        %v4518 = vpop.f32.mrf.mxu0
        %v4519 = vadd.f32 0.0, %v4518
        %v4520 = vpop.f32.mrf.mxu0
        %v4521 = vadd.f32 0.0, %v4520
        %4522 = vmatprep.mubr.bf16.mxu0 %v1275
        %4523 = vmatmul.mubr.bf16.gmra.mxu0 %v1274
        %v4524 = vpop.f32.mrf.mxu0
        %v4525 = vadd.f32 0.0, %v4524
        %v4526 = vpop.f32.mrf.mxu0
        %v4527 = vadd.f32 0.0, %v4526
        %v4528 = vpop.f32.mrf.mxu0
        %v4529 = vadd.f32 0.0, %v4528
        %v4530 = vpop.f32.mrf.mxu0
        %v4531 = vadd.f32 0.0, %v4530
        %4532 = vmatprep.mubr.bf16.mxu0 %v1279
        %4533 = vmatmul.mubr.bf16.gmra.mxu0 %v1278
        %v4534 = vpop.f32.mrf.mxu0
        %v4535 = vadd.f32 0.0, %v4534
        %v4536 = vpop.f32.mrf.mxu0
        %v4537 = vadd.f32 0.0, %v4536
        %v4538 = vpop.f32.mrf.mxu0
        %v4539 = vadd.f32 0.0, %v4538
        %v4540 = vpop.f32.mrf.mxu0
        %v4541 = vadd.f32 0.0, %v4540
        %4542 = vmatprep.mubr.bf16.mxu0 %v1283
        %4543 = vmatmul.mubr.bf16.gmra.mxu0 %v1282
        %v4544 = vpop.f32.mrf.mxu0
        %v4545 = vadd.f32 0.0, %v4544
        %v4546 = vpop.f32.mrf.mxu0
        %v4547 = vadd.f32 0.0, %v4546
        %v4548 = vpop.f32.mrf.mxu0
        %v4549 = vadd.f32 0.0, %v4548
        %v4550 = vpop.f32.mrf.mxu0
        %v4551 = vadd.f32 0.0, %v4550
        %4552 = vdwg.mxu0
        %4553 = vmatprep.subr.bf16.mxu0 %v3403
        %4554 = vmatpush1.bf16.msra.mxu0 %v3402
        %4555 = vmatprep.subr.bf16.mxu0 %v3389
        %4556 = vmatpush1.bf16.msra.mxu0 %v3388
        %4557 = vmatprep.subr.bf16.mxu0 %v3375
        %4558 = vmatpush1.bf16.msra.mxu0 %v3374
        %4559 = vmatprep.subr.bf16.mxu0 %v3361
        %4560 = vmatpush1.bf16.msra.mxu0 %v3360
        %4561 = vmatprep.subr.bf16.mxu0 %v3347
        %4562 = vmatpush1.bf16.msra.mxu0 %v3346
        %4563 = vmatprep.subr.bf16.mxu0 %v3333
        %4564 = vmatpush1.bf16.msra.mxu0 %v3332
        %4565 = vmatprep.subr.bf16.mxu0 %v3319
        %4566 = vmatpush1.bf16.msra.mxu0 %v3318
        %4567 = vmatprep.subr.bf16.mxu0 %v3305
        %4568 = vmatpush1.bf16.msra.mxu0 %v3304
        %4569 = vmatprep.subr.bf16.mxu0 %v3515
        %4570 = vmatpush2.bf16.msra.mxu0 %v3514
        %4571 = vmatprep.subr.bf16.mxu0 %v3501
        %4572 = vmatpush2.bf16.msra.mxu0 %v3500
        %4573 = vmatprep.subr.bf16.mxu0 %v3487
        %4574 = vmatpush2.bf16.msra.mxu0 %v3486
        %4575 = vmatprep.subr.bf16.mxu0 %v3473
        %4576 = vmatpush2.bf16.msra.mxu0 %v3472
        %4577 = vmatprep.subr.bf16.mxu0 %v3459
        %4578 = vmatpush2.bf16.msra.mxu0 %v3458
        %4579 = vmatprep.subr.bf16.mxu0 %v3445
        %4580 = vmatpush2.bf16.msra.mxu0 %v3444
        %4581 = vmatprep.subr.bf16.mxu0 %v3431
        %4582 = vmatpush2.bf16.msra.mxu0 %v3430
        %4583 = vmatprep.subr.bf16.mxu0 %v3417
        %4584 = vmatpush2.bf16.msra.mxu0 %v3416
        %4585 = vmatprep.mubr.bf16.mxu0 %v1225
        %4586 = vmatmul.mubr.bf16.gmra.mxu0 %v1224
        %v4587 = vpop.f32.mrf.mxu0
        %v4588 = vadd.f32 %v4395, %v4587
        %v4589 = vpop.f32.mrf.mxu0
        %v4590 = vadd.f32 %v4397, %v4589
        %v4591 = vpop.f32.mrf.mxu0
        %v4592 = vadd.f32 %v4399, %v4591
        %v4593 = vpop.f32.mrf.mxu0
        %v4594 = vadd.f32 %v4401, %v4593
        %4595 = vmatprep.mubr.bf16.mxu0 %v1229
        %4596 = vmatmul.mubr.bf16.gmra.mxu0 %v1228
        %v4597 = vpop.f32.mrf.mxu0
        %v4598 = vadd.f32 %v4405, %v4597
        %v4599 = vpop.f32.mrf.mxu0
        %v4600 = vadd.f32 %v4407, %v4599
        %v4601 = vpop.f32.mrf.mxu0
        %v4602 = vadd.f32 %v4409, %v4601
        %v4603 = vpop.f32.mrf.mxu0
        %v4604 = vadd.f32 %v4411, %v4603
        %4605 = vmatprep.mubr.bf16.mxu0 %v1233
        %4606 = vmatmul.mubr.bf16.gmra.mxu0 %v1232
        %v4607 = vpop.f32.mrf.mxu0
        %v4608 = vadd.f32 %v4415, %v4607
        %v4609 = vpop.f32.mrf.mxu0
        %v4610 = vadd.f32 %v4417, %v4609
        %v4611 = vpop.f32.mrf.mxu0
        %v4612 = vadd.f32 %v4419, %v4611
        %v4613 = vpop.f32.mrf.mxu0
        %v4614 = vadd.f32 %v4421, %v4613
        %4615 = vmatprep.mubr.bf16.mxu0 %v1237
        %4616 = vmatmul.mubr.bf16.gmra.mxu0 %v1236
        %v4617 = vpop.f32.mrf.mxu0
        %v4618 = vadd.f32 %v4425, %v4617
        %v4619 = vpop.f32.mrf.mxu0
        %v4620 = vadd.f32 %v4427, %v4619
        %v4621 = vpop.f32.mrf.mxu0
        %v4622 = vadd.f32 %v4429, %v4621
        %v4623 = vpop.f32.mrf.mxu0
        %v4624 = vadd.f32 %v4431, %v4623
        %4625 = vmatprep.mubr.bf16.mxu0 %v1241
        %4626 = vmatmul.mubr.bf16.gmra.mxu0 %v1240
        %v4627 = vpop.f32.mrf.mxu0
        %v4628 = vadd.f32 %v4435, %v4627
        %v4629 = vpop.f32.mrf.mxu0
        %v4630 = vadd.f32 %v4437, %v4629
        %v4631 = vpop.f32.mrf.mxu0
        %v4632 = vadd.f32 %v4439, %v4631
        %v4633 = vpop.f32.mrf.mxu0
        %v4634 = vadd.f32 %v4441, %v4633
        %4635 = vmatprep.mubr.bf16.mxu0 %v1245
        %4636 = vmatmul.mubr.bf16.gmra.mxu0 %v1244
        %v4637 = vpop.f32.mrf.mxu0
        %v4638 = vadd.f32 %v4445, %v4637
        %v4639 = vpop.f32.mrf.mxu0
        %v4640 = vadd.f32 %v4447, %v4639
        %v4641 = vpop.f32.mrf.mxu0
        %v4642 = vadd.f32 %v4449, %v4641
        %v4643 = vpop.f32.mrf.mxu0
        %v4644 = vadd.f32 %v4451, %v4643
        %4645 = vmatprep.mubr.bf16.mxu0 %v1249
        %4646 = vmatmul.mubr.bf16.gmra.mxu0 %v1248
        %v4647 = vpop.f32.mrf.mxu0
        %v4648 = vadd.f32 %v4455, %v4647
        %v4649 = vpop.f32.mrf.mxu0
        %v4650 = vadd.f32 %v4457, %v4649
        %v4651 = vpop.f32.mrf.mxu0
        %v4652 = vadd.f32 %v4459, %v4651
        %v4653 = vpop.f32.mrf.mxu0
        %v4654 = vadd.f32 %v4461, %v4653
        %4655 = vmatprep.mubr.bf16.mxu0 %v1253
        %4656 = vmatmul.mubr.bf16.gmra.mxu0 %v1252
        %v4657 = vpop.f32.mrf.mxu0
        %v4658 = vadd.f32 %v4465, %v4657
        %v4659 = vpop.f32.mrf.mxu0
        %v4660 = vadd.f32 %v4467, %v4659
        %v4661 = vpop.f32.mrf.mxu0
        %v4662 = vadd.f32 %v4469, %v4661
        %v4663 = vpop.f32.mrf.mxu0
        %v4664 = vadd.f32 %v4471, %v4663
        %4665 = vmatprep.mubr.bf16.mxu0 %v1257
        %4666 = vmatmul.mubr.bf16.gmra.mxu0 %v1256
        %v4667 = vpop.f32.mrf.mxu0
        %v4668 = vadd.f32 %v4475, %v4667
        %v4669 = vpop.f32.mrf.mxu0
        %v4670 = vadd.f32 %v4477, %v4669
        %v4671 = vpop.f32.mrf.mxu0
        %v4672 = vadd.f32 %v4479, %v4671
        %v4673 = vpop.f32.mrf.mxu0
        %v4674 = vadd.f32 %v4481, %v4673
        %4675 = vmatprep.mubr.bf16.mxu0 %v1261
        %4676 = vmatmul.mubr.bf16.gmra.mxu0 %v1260
        %v4677 = vpop.f32.mrf.mxu0
        %v4678 = vadd.f32 %v4485, %v4677
        %v4679 = vpop.f32.mrf.mxu0
        %v4680 = vadd.f32 %v4487, %v4679
        %v4681 = vpop.f32.mrf.mxu0
        %v4682 = vadd.f32 %v4489, %v4681
        %v4683 = vpop.f32.mrf.mxu0
        %v4684 = vadd.f32 %v4491, %v4683
        %4685 = vmatprep.mubr.bf16.mxu0 %v1265
        %4686 = vmatmul.mubr.bf16.gmra.mxu0 %v1264
        %v4687 = vpop.f32.mrf.mxu0
        %v4688 = vadd.f32 %v4495, %v4687
        %v4689 = vpop.f32.mrf.mxu0
        %v4690 = vadd.f32 %v4497, %v4689
        %v4691 = vpop.f32.mrf.mxu0
        %v4692 = vadd.f32 %v4499, %v4691
        %v4693 = vpop.f32.mrf.mxu0
        %v4694 = vadd.f32 %v4501, %v4693
        %4695 = vmatprep.mubr.bf16.mxu0 %v1269
        %4696 = vmatmul.mubr.bf16.gmra.mxu0 %v1268
        %v4697 = vpop.f32.mrf.mxu0
        %v4698 = vadd.f32 %v4505, %v4697
        %v4699 = vpop.f32.mrf.mxu0
        %v4700 = vadd.f32 %v4507, %v4699
        %v4701 = vpop.f32.mrf.mxu0
        %v4702 = vadd.f32 %v4509, %v4701
        %v4703 = vpop.f32.mrf.mxu0
        %v4704 = vadd.f32 %v4511, %v4703
        %4705 = vmatprep.mubr.bf16.mxu0 %v1273
        %4706 = vmatmul.mubr.bf16.gmra.mxu0 %v1272
        %v4707 = vpop.f32.mrf.mxu0
        %v4708 = vadd.f32 %v4515, %v4707
        %v4709 = vpop.f32.mrf.mxu0
        %v4710 = vadd.f32 %v4517, %v4709
        %v4711 = vpop.f32.mrf.mxu0
        %v4712 = vadd.f32 %v4519, %v4711
        %v4713 = vpop.f32.mrf.mxu0
        %v4714 = vadd.f32 %v4521, %v4713
        %4715 = vmatprep.mubr.bf16.mxu0 %v1277
        %4716 = vmatmul.mubr.bf16.gmra.mxu0 %v1276
        %v4717 = vpop.f32.mrf.mxu0
        %v4718 = vadd.f32 %v4525, %v4717
        %v4719 = vpop.f32.mrf.mxu0
        %v4720 = vadd.f32 %v4527, %v4719
        %v4721 = vpop.f32.mrf.mxu0
        %v4722 = vadd.f32 %v4529, %v4721
        %v4723 = vpop.f32.mrf.mxu0
        %v4724 = vadd.f32 %v4531, %v4723
        %4725 = vmatprep.mubr.bf16.mxu0 %v1281
        %4726 = vmatmul.mubr.bf16.gmra.mxu0 %v1280
        %v4727 = vpop.f32.mrf.mxu0
        %v4728 = vadd.f32 %v4535, %v4727
        %v4729 = vpop.f32.mrf.mxu0
        %v4730 = vadd.f32 %v4537, %v4729
        %v4731 = vpop.f32.mrf.mxu0
        %v4732 = vadd.f32 %v4539, %v4731
        %v4733 = vpop.f32.mrf.mxu0
        %v4734 = vadd.f32 %v4541, %v4733
        %4735 = vmatprep.mubr.bf16.mxu0 %v1285
        %4736 = vmatmul.mubr.bf16.gmra.mxu0 %v1284
        %v4737 = vpop.f32.mrf.mxu0
        %v4738 = vadd.f32 %v4545, %v4737
        %v4739 = vpop.f32.mrf.mxu0
        %v4740 = vadd.f32 %v4547, %v4739
        %v4741 = vpop.f32.mrf.mxu0
        %v4742 = vadd.f32 %v4549, %v4741
        %v4743 = vpop.f32.mrf.mxu0
        %v4744 = vadd.f32 %v4551, %v4743
        %4745 = vdwg.mxu0
        %4746 = vmatprep.subr.bf16.mxu0 %v3181
        %4747 = vmatpush1.bf16.msra.mxu0 %v3180
        %4748 = vmatprep.subr.bf16.mxu0 %v3167
        %4749 = vmatpush1.bf16.msra.mxu0 %v3166
        %4750 = vmatprep.subr.bf16.mxu0 %v3153
        %4751 = vmatpush1.bf16.msra.mxu0 %v3152
        %4752 = vmatprep.subr.bf16.mxu0 %v3139
        %4753 = vmatpush1.bf16.msra.mxu0 %v3138
        %4754 = vmatprep.subr.bf16.mxu0 %v3125
        %4755 = vmatpush1.bf16.msra.mxu0 %v3124
        %4756 = vmatprep.subr.bf16.mxu0 %v3111
        %4757 = vmatpush1.bf16.msra.mxu0 %v3110
        %4758 = vmatprep.subr.bf16.mxu0 %v3097
        %4759 = vmatpush1.bf16.msra.mxu0 %v3096
        %4760 = vmatprep.subr.bf16.mxu0 %v3083
        %4761 = vmatpush1.bf16.msra.mxu0 %v3082
        %4762 = vmatprep.subr.bf16.mxu0 %v3293
        %4763 = vmatpush2.bf16.msra.mxu0 %v3292
        %4764 = vmatprep.subr.bf16.mxu0 %v3279
        %4765 = vmatpush2.bf16.msra.mxu0 %v3278
        %4766 = vmatprep.subr.bf16.mxu0 %v3265
        %4767 = vmatpush2.bf16.msra.mxu0 %v3264
        %4768 = vmatprep.subr.bf16.mxu0 %v3251
        %4769 = vmatpush2.bf16.msra.mxu0 %v3250
        %4770 = vmatprep.subr.bf16.mxu0 %v3237
        %4771 = vmatpush2.bf16.msra.mxu0 %v3236
        %4772 = vmatprep.subr.bf16.mxu0 %v3223
        %4773 = vmatpush2.bf16.msra.mxu0 %v3222
        %4774 = vmatprep.subr.bf16.mxu0 %v3209
        %4775 = vmatpush2.bf16.msra.mxu0 %v3208
        %4776 = vmatprep.subr.bf16.mxu0 %v3195
        %4777 = vmatpush2.bf16.msra.mxu0 %v3194
        %4778 = vmatprep.mubr.bf16.mxu0 %v1223
        %4779 = vmatmul.mubr.bf16.gmra.mxu0 %v1222
        %v4780 = vpop.f32.mrf.mxu0
        %v4781 = vadd.f32 0.0, %v4780
        %v4782 = vpop.f32.mrf.mxu0
        %v4783 = vadd.f32 0.0, %v4782
        %v4784 = vpop.f32.mrf.mxu0
        %v4785 = vadd.f32 0.0, %v4784
        %v4786 = vpop.f32.mrf.mxu0
        %v4787 = vadd.f32 0.0, %v4786
        %4788 = vmatprep.mubr.bf16.mxu0 %v1227
        %4789 = vmatmul.mubr.bf16.gmra.mxu0 %v1226
        %v4790 = vpop.f32.mrf.mxu0
        %v4791 = vadd.f32 0.0, %v4790
        %v4792 = vpop.f32.mrf.mxu0
        %v4793 = vadd.f32 0.0, %v4792
        %v4794 = vpop.f32.mrf.mxu0
        %v4795 = vadd.f32 0.0, %v4794
        %v4796 = vpop.f32.mrf.mxu0
        %v4797 = vadd.f32 0.0, %v4796
        %4798 = vmatprep.mubr.bf16.mxu0 %v1231
        %4799 = vmatmul.mubr.bf16.gmra.mxu0 %v1230
        %v4800 = vpop.f32.mrf.mxu0
        %v4801 = vadd.f32 0.0, %v4800
        %v4802 = vpop.f32.mrf.mxu0
        %v4803 = vadd.f32 0.0, %v4802
        %v4804 = vpop.f32.mrf.mxu0
        %v4805 = vadd.f32 0.0, %v4804
        %v4806 = vpop.f32.mrf.mxu0
        %v4807 = vadd.f32 0.0, %v4806
        %4808 = vmatprep.mubr.bf16.mxu0 %v1235
        %4809 = vmatmul.mubr.bf16.gmra.mxu0 %v1234
        %v4810 = vpop.f32.mrf.mxu0
        %v4811 = vadd.f32 0.0, %v4810
        %v4812 = vpop.f32.mrf.mxu0
        %v4813 = vadd.f32 0.0, %v4812
        %v4814 = vpop.f32.mrf.mxu0
        %v4815 = vadd.f32 0.0, %v4814
        %v4816 = vpop.f32.mrf.mxu0
        %v4817 = vadd.f32 0.0, %v4816
        %4818 = vmatprep.mubr.bf16.mxu0 %v1239
        %4819 = vmatmul.mubr.bf16.gmra.mxu0 %v1238
        %v4820 = vpop.f32.mrf.mxu0
        %v4821 = vadd.f32 0.0, %v4820
        %v4822 = vpop.f32.mrf.mxu0
        %v4823 = vadd.f32 0.0, %v4822
        %v4824 = vpop.f32.mrf.mxu0
        %v4825 = vadd.f32 0.0, %v4824
        %v4826 = vpop.f32.mrf.mxu0
        %v4827 = vadd.f32 0.0, %v4826
        %4828 = vmatprep.mubr.bf16.mxu0 %v1243
        %4829 = vmatmul.mubr.bf16.gmra.mxu0 %v1242
        %v4830 = vpop.f32.mrf.mxu0
        %v4831 = vadd.f32 0.0, %v4830
        %v4832 = vpop.f32.mrf.mxu0
        %v4833 = vadd.f32 0.0, %v4832
        %v4834 = vpop.f32.mrf.mxu0
        %v4835 = vadd.f32 0.0, %v4834
        %v4836 = vpop.f32.mrf.mxu0
        %v4837 = vadd.f32 0.0, %v4836
        %4838 = vmatprep.mubr.bf16.mxu0 %v1247
        %4839 = vmatmul.mubr.bf16.gmra.mxu0 %v1246
        %v4840 = vpop.f32.mrf.mxu0
        %v4841 = vadd.f32 0.0, %v4840
        %v4842 = vpop.f32.mrf.mxu0
        %v4843 = vadd.f32 0.0, %v4842
        %v4844 = vpop.f32.mrf.mxu0
        %v4845 = vadd.f32 0.0, %v4844
        %v4846 = vpop.f32.mrf.mxu0
        %v4847 = vadd.f32 0.0, %v4846
        %4848 = vmatprep.mubr.bf16.mxu0 %v1251
        %4849 = vmatmul.mubr.bf16.gmra.mxu0 %v1250
        %v4850 = vpop.f32.mrf.mxu0
        %v4851 = vadd.f32 0.0, %v4850
        %v4852 = vpop.f32.mrf.mxu0
        %v4853 = vadd.f32 0.0, %v4852
        %v4854 = vpop.f32.mrf.mxu0
        %v4855 = vadd.f32 0.0, %v4854
        %v4856 = vpop.f32.mrf.mxu0
        %v4857 = vadd.f32 0.0, %v4856
        %4858 = vmatprep.mubr.bf16.mxu0 %v1255
        %4859 = vmatmul.mubr.bf16.gmra.mxu0 %v1254
        %v4860 = vpop.f32.mrf.mxu0
        %v4861 = vadd.f32 0.0, %v4860
        %v4862 = vpop.f32.mrf.mxu0
        %v4863 = vadd.f32 0.0, %v4862
        %v4864 = vpop.f32.mrf.mxu0
        %v4865 = vadd.f32 0.0, %v4864
        %v4866 = vpop.f32.mrf.mxu0
        %v4867 = vadd.f32 0.0, %v4866
        %4868 = vmatprep.mubr.bf16.mxu0 %v1259
        %4869 = vmatmul.mubr.bf16.gmra.mxu0 %v1258
        %v4870 = vpop.f32.mrf.mxu0
        %v4871 = vadd.f32 0.0, %v4870
        %v4872 = vpop.f32.mrf.mxu0
        %v4873 = vadd.f32 0.0, %v4872
        %v4874 = vpop.f32.mrf.mxu0
        %v4875 = vadd.f32 0.0, %v4874
        %v4876 = vpop.f32.mrf.mxu0
        %v4877 = vadd.f32 0.0, %v4876
        %4878 = vmatprep.mubr.bf16.mxu0 %v1263
        %4879 = vmatmul.mubr.bf16.gmra.mxu0 %v1262
        %v4880 = vpop.f32.mrf.mxu0
        %v4881 = vadd.f32 0.0, %v4880
        %v4882 = vpop.f32.mrf.mxu0
        %v4883 = vadd.f32 0.0, %v4882
        %v4884 = vpop.f32.mrf.mxu0
        %v4885 = vadd.f32 0.0, %v4884
        %v4886 = vpop.f32.mrf.mxu0
        %v4887 = vadd.f32 0.0, %v4886
        %4888 = vmatprep.mubr.bf16.mxu0 %v1267
        %4889 = vmatmul.mubr.bf16.gmra.mxu0 %v1266
        %v4890 = vpop.f32.mrf.mxu0
        %v4891 = vadd.f32 0.0, %v4890
        %v4892 = vpop.f32.mrf.mxu0
        %v4893 = vadd.f32 0.0, %v4892
        %v4894 = vpop.f32.mrf.mxu0
        %v4895 = vadd.f32 0.0, %v4894
        %v4896 = vpop.f32.mrf.mxu0
        %v4897 = vadd.f32 0.0, %v4896
        %4898 = vmatprep.mubr.bf16.mxu0 %v1271
        %4899 = vmatmul.mubr.bf16.gmra.mxu0 %v1270
        %v4900 = vpop.f32.mrf.mxu0
        %v4901 = vadd.f32 0.0, %v4900
        %v4902 = vpop.f32.mrf.mxu0
        %v4903 = vadd.f32 0.0, %v4902
        %v4904 = vpop.f32.mrf.mxu0
        %v4905 = vadd.f32 0.0, %v4904
        %v4906 = vpop.f32.mrf.mxu0
        %v4907 = vadd.f32 0.0, %v4906
        %4908 = vmatprep.mubr.bf16.mxu0 %v1275
        %4909 = vmatmul.mubr.bf16.gmra.mxu0 %v1274
        %v4910 = vpop.f32.mrf.mxu0
        %v4911 = vadd.f32 0.0, %v4910
        %v4912 = vpop.f32.mrf.mxu0
        %v4913 = vadd.f32 0.0, %v4912
        %v4914 = vpop.f32.mrf.mxu0
        %v4915 = vadd.f32 0.0, %v4914
        %v4916 = vpop.f32.mrf.mxu0
        %v4917 = vadd.f32 0.0, %v4916
        %4918 = vmatprep.mubr.bf16.mxu0 %v1279
        %4919 = vmatmul.mubr.bf16.gmra.mxu0 %v1278
        %v4920 = vpop.f32.mrf.mxu0
        %v4921 = vadd.f32 0.0, %v4920
        %v4922 = vpop.f32.mrf.mxu0
        %v4923 = vadd.f32 0.0, %v4922
        %v4924 = vpop.f32.mrf.mxu0
        %v4925 = vadd.f32 0.0, %v4924
        %v4926 = vpop.f32.mrf.mxu0
        %v4927 = vadd.f32 0.0, %v4926
        %4928 = vmatprep.mubr.bf16.mxu0 %v1283
        %4929 = vmatmul.mubr.bf16.gmra.mxu0 %v1282
        %v4930 = vpop.f32.mrf.mxu0
        %v4931 = vadd.f32 0.0, %v4930
        %v4932 = vpop.f32.mrf.mxu0
        %v4933 = vadd.f32 0.0, %v4932
        %v4934 = vpop.f32.mrf.mxu0
        %v4935 = vadd.f32 0.0, %v4934
        %v4936 = vpop.f32.mrf.mxu0
        %v4937 = vadd.f32 0.0, %v4936
        %4938 = vdwg.mxu0
        %4939 = vmatprep.subr.bf16.mxu0 %v3405
        %4940 = vmatpush1.bf16.msra.mxu0 %v3404
        %4941 = vmatprep.subr.bf16.mxu0 %v3391
        %4942 = vmatpush1.bf16.msra.mxu0 %v3390
        %4943 = vmatprep.subr.bf16.mxu0 %v3377
        %4944 = vmatpush1.bf16.msra.mxu0 %v3376
        %4945 = vmatprep.subr.bf16.mxu0 %v3363
        %4946 = vmatpush1.bf16.msra.mxu0 %v3362
        %4947 = vmatprep.subr.bf16.mxu0 %v3349
        %4948 = vmatpush1.bf16.msra.mxu0 %v3348
        %4949 = vmatprep.subr.bf16.mxu0 %v3335
        %4950 = vmatpush1.bf16.msra.mxu0 %v3334
        %4951 = vmatprep.subr.bf16.mxu0 %v3321
        %4952 = vmatpush1.bf16.msra.mxu0 %v3320
        %4953 = vmatprep.subr.bf16.mxu0 %v3307
        %4954 = vmatpush1.bf16.msra.mxu0 %v3306
        %4955 = vmatprep.subr.bf16.mxu0 %v3517
        %4956 = vmatpush2.bf16.msra.mxu0 %v3516
        %4957 = vmatprep.subr.bf16.mxu0 %v3503
        %4958 = vmatpush2.bf16.msra.mxu0 %v3502
        %4959 = vmatprep.subr.bf16.mxu0 %v3489
        %4960 = vmatpush2.bf16.msra.mxu0 %v3488
        %4961 = vmatprep.subr.bf16.mxu0 %v3475
        %4962 = vmatpush2.bf16.msra.mxu0 %v3474
        %4963 = vmatprep.subr.bf16.mxu0 %v3461
        %4964 = vmatpush2.bf16.msra.mxu0 %v3460
        %4965 = vmatprep.subr.bf16.mxu0 %v3447
        %4966 = vmatpush2.bf16.msra.mxu0 %v3446
        %4967 = vmatprep.subr.bf16.mxu0 %v3433
        %4968 = vmatpush2.bf16.msra.mxu0 %v3432
        %4969 = vmatprep.subr.bf16.mxu0 %v3419
        %4970 = vmatpush2.bf16.msra.mxu0 %v3418
        %4971 = vmatprep.mubr.bf16.mxu0 %v1225
        %4972 = vmatmul.mubr.bf16.gmra.mxu0 %v1224
        %v4973 = vpop.f32.mrf.mxu0
        %v4974 = vadd.f32 %v4781, %v4973
        %v4975 = vpop.f32.mrf.mxu0
        %v4976 = vadd.f32 %v4783, %v4975
        %v4977 = vpop.f32.mrf.mxu0
        %v4978 = vadd.f32 %v4785, %v4977
        %v4979 = vpop.f32.mrf.mxu0
        %v4980 = vadd.f32 %v4787, %v4979
        %4981 = vmatprep.mubr.bf16.mxu0 %v1229
        %4982 = vmatmul.mubr.bf16.gmra.mxu0 %v1228
        %v4983 = vpop.f32.mrf.mxu0
        %v4984 = vadd.f32 %v4791, %v4983
        %v4985 = vpop.f32.mrf.mxu0
        %v4986 = vadd.f32 %v4793, %v4985
        %v4987 = vpop.f32.mrf.mxu0
        %v4988 = vadd.f32 %v4795, %v4987
        %v4989 = vpop.f32.mrf.mxu0
        %v4990 = vadd.f32 %v4797, %v4989
        %4991 = vmatprep.mubr.bf16.mxu0 %v1233
        %4992 = vmatmul.mubr.bf16.gmra.mxu0 %v1232
        %v4993 = vpop.f32.mrf.mxu0
        %v4994 = vadd.f32 %v4801, %v4993
        %v4995 = vpop.f32.mrf.mxu0
        %v4996 = vadd.f32 %v4803, %v4995
        %v4997 = vpop.f32.mrf.mxu0
        %v4998 = vadd.f32 %v4805, %v4997
        %v4999 = vpop.f32.mrf.mxu0
        %v5000 = vadd.f32 %v4807, %v4999
        %5001 = vmatprep.mubr.bf16.mxu0 %v1237
        %5002 = vmatmul.mubr.bf16.gmra.mxu0 %v1236
        %v5003 = vpop.f32.mrf.mxu0
        %v5004 = vadd.f32 %v4811, %v5003
        %v5005 = vpop.f32.mrf.mxu0
        %v5006 = vadd.f32 %v4813, %v5005
        %v5007 = vpop.f32.mrf.mxu0
        %v5008 = vadd.f32 %v4815, %v5007
        %v5009 = vpop.f32.mrf.mxu0
        %v5010 = vadd.f32 %v4817, %v5009
        %5011 = vmatprep.mubr.bf16.mxu0 %v1241
        %5012 = vmatmul.mubr.bf16.gmra.mxu0 %v1240
        %v5013 = vpop.f32.mrf.mxu0
        %v5014 = vadd.f32 %v4821, %v5013
        %v5015 = vpop.f32.mrf.mxu0
        %v5016 = vadd.f32 %v4823, %v5015
        %v5017 = vpop.f32.mrf.mxu0
        %v5018 = vadd.f32 %v4825, %v5017
        %v5019 = vpop.f32.mrf.mxu0
        %v5020 = vadd.f32 %v4827, %v5019
        %5021 = vmatprep.mubr.bf16.mxu0 %v1245
        %5022 = vmatmul.mubr.bf16.gmra.mxu0 %v1244
        %v5023 = vpop.f32.mrf.mxu0
        %v5024 = vadd.f32 %v4831, %v5023
        %v5025 = vpop.f32.mrf.mxu0
        %v5026 = vadd.f32 %v4833, %v5025
        %v5027 = vpop.f32.mrf.mxu0
        %v5028 = vadd.f32 %v4835, %v5027
        %v5029 = vpop.f32.mrf.mxu0
        %v5030 = vadd.f32 %v4837, %v5029
        %5031 = vmatprep.mubr.bf16.mxu0 %v1249
        %5032 = vmatmul.mubr.bf16.gmra.mxu0 %v1248
        %v5033 = vpop.f32.mrf.mxu0
        %v5034 = vadd.f32 %v4841, %v5033
        %v5035 = vpop.f32.mrf.mxu0
        %v5036 = vadd.f32 %v4843, %v5035
        %v5037 = vpop.f32.mrf.mxu0
        %v5038 = vadd.f32 %v4845, %v5037
        %v5039 = vpop.f32.mrf.mxu0
        %v5040 = vadd.f32 %v4847, %v5039
        %5041 = vmatprep.mubr.bf16.mxu0 %v1253
        %5042 = vmatmul.mubr.bf16.gmra.mxu0 %v1252
        %v5043 = vpop.f32.mrf.mxu0
        %v5044 = vadd.f32 %v4851, %v5043
        %v5045 = vpop.f32.mrf.mxu0
        %v5046 = vadd.f32 %v4853, %v5045
        %v5047 = vpop.f32.mrf.mxu0
        %v5048 = vadd.f32 %v4855, %v5047
        %v5049 = vpop.f32.mrf.mxu0
        %v5050 = vadd.f32 %v4857, %v5049
        %5051 = vmatprep.mubr.bf16.mxu0 %v1257
        %5052 = vmatmul.mubr.bf16.gmra.mxu0 %v1256
        %v5053 = vpop.f32.mrf.mxu0
        %v5054 = vadd.f32 %v4861, %v5053
        %v5055 = vpop.f32.mrf.mxu0
        %v5056 = vadd.f32 %v4863, %v5055
        %v5057 = vpop.f32.mrf.mxu0
        %v5058 = vadd.f32 %v4865, %v5057
        %v5059 = vpop.f32.mrf.mxu0
        %v5060 = vadd.f32 %v4867, %v5059
        %5061 = vmatprep.mubr.bf16.mxu0 %v1261
        %5062 = vmatmul.mubr.bf16.gmra.mxu0 %v1260
        %v5063 = vpop.f32.mrf.mxu0
        %v5064 = vadd.f32 %v4871, %v5063
        %v5065 = vpop.f32.mrf.mxu0
        %v5066 = vadd.f32 %v4873, %v5065
        %v5067 = vpop.f32.mrf.mxu0
        %v5068 = vadd.f32 %v4875, %v5067
        %v5069 = vpop.f32.mrf.mxu0
        %v5070 = vadd.f32 %v4877, %v5069
        %5071 = vmatprep.mubr.bf16.mxu0 %v1265
        %5072 = vmatmul.mubr.bf16.gmra.mxu0 %v1264
        %v5073 = vpop.f32.mrf.mxu0
        %v5074 = vadd.f32 %v4881, %v5073
        %v5075 = vpop.f32.mrf.mxu0
        %v5076 = vadd.f32 %v4883, %v5075
        %v5077 = vpop.f32.mrf.mxu0
        %v5078 = vadd.f32 %v4885, %v5077
        %v5079 = vpop.f32.mrf.mxu0
        %v5080 = vadd.f32 %v4887, %v5079
        %5081 = vmatprep.mubr.bf16.mxu0 %v1269
        %5082 = vmatmul.mubr.bf16.gmra.mxu0 %v1268
        %v5083 = vpop.f32.mrf.mxu0
        %v5084 = vadd.f32 %v4891, %v5083
        %v5085 = vpop.f32.mrf.mxu0
        %v5086 = vadd.f32 %v4893, %v5085
        %v5087 = vpop.f32.mrf.mxu0
        %v5088 = vadd.f32 %v4895, %v5087
        %v5089 = vpop.f32.mrf.mxu0
        %v5090 = vadd.f32 %v4897, %v5089
        %5091 = vmatprep.mubr.bf16.mxu0 %v1273
        %5092 = vmatmul.mubr.bf16.gmra.mxu0 %v1272
        %v5093 = vpop.f32.mrf.mxu0
        %v5094 = vadd.f32 %v4901, %v5093
        %v5095 = vpop.f32.mrf.mxu0
        %v5096 = vadd.f32 %v4903, %v5095
        %v5097 = vpop.f32.mrf.mxu0
        %v5098 = vadd.f32 %v4905, %v5097
        %v5099 = vpop.f32.mrf.mxu0
        %v5100 = vadd.f32 %v4907, %v5099
        %5101 = vmatprep.mubr.bf16.mxu0 %v1277
        %5102 = vmatmul.mubr.bf16.gmra.mxu0 %v1276
        %v5103 = vpop.f32.mrf.mxu0
        %v5104 = vadd.f32 %v4911, %v5103
        %v5105 = vpop.f32.mrf.mxu0
        %v5106 = vadd.f32 %v4913, %v5105
        %v5107 = vpop.f32.mrf.mxu0
        %v5108 = vadd.f32 %v4915, %v5107
        %v5109 = vpop.f32.mrf.mxu0
        %v5110 = vadd.f32 %v4917, %v5109
        %5111 = vmatprep.mubr.bf16.mxu0 %v1281
        %5112 = vmatmul.mubr.bf16.gmra.mxu0 %v1280
        %v5113 = vpop.f32.mrf.mxu0
        %v5114 = vadd.f32 %v4921, %v5113
        %v5115 = vpop.f32.mrf.mxu0
        %v5116 = vadd.f32 %v4923, %v5115
        %v5117 = vpop.f32.mrf.mxu0
        %v5118 = vadd.f32 %v4925, %v5117
        %v5119 = vpop.f32.mrf.mxu0
        %v5120 = vadd.f32 %v4927, %v5119
        %5121 = vmatprep.mubr.bf16.mxu0 %v1285
        %5122 = vmatmul.mubr.bf16.gmra.mxu0 %v1284
        %v5123 = vpop.f32.mrf.mxu0
        %v5124 = vadd.f32 %v4931, %v5123
        %v5125 = vpop.f32.mrf.mxu0
        %v5126 = vadd.f32 %v4933, %v5125
        %v5127 = vpop.f32.mrf.mxu0
        %v5128 = vadd.f32 %v4935, %v5127
        %v5129 = vpop.f32.mrf.mxu0
        %v5130 = vadd.f32 %v4937, %v5129
        %5131 = vdwg.mxu0
        %5132 = vmatprep.subr.bf16.mxu0 %v3183
        %5133 = vmatpush1.bf16.msra.mxu0 %v3182
        %5134 = vmatprep.subr.bf16.mxu0 %v3169
        %5135 = vmatpush1.bf16.msra.mxu0 %v3168
        %5136 = vmatprep.subr.bf16.mxu0 %v3155
        %5137 = vmatpush1.bf16.msra.mxu0 %v3154
        %5138 = vmatprep.subr.bf16.mxu0 %v3141
        %5139 = vmatpush1.bf16.msra.mxu0 %v3140
        %5140 = vmatprep.subr.bf16.mxu0 %v3127
        %5141 = vmatpush1.bf16.msra.mxu0 %v3126
        %5142 = vmatprep.subr.bf16.mxu0 %v3113
        %5143 = vmatpush1.bf16.msra.mxu0 %v3112
        %5144 = vmatprep.subr.bf16.mxu0 %v3099
        %5145 = vmatpush1.bf16.msra.mxu0 %v3098
        %5146 = vmatprep.subr.bf16.mxu0 %v3085
        %5147 = vmatpush1.bf16.msra.mxu0 %v3084
        %5148 = vmatprep.subr.bf16.mxu0 %v3295
        %5149 = vmatpush2.bf16.msra.mxu0 %v3294
        %5150 = vmatprep.subr.bf16.mxu0 %v3281
        %5151 = vmatpush2.bf16.msra.mxu0 %v3280
        %5152 = vmatprep.subr.bf16.mxu0 %v3267
        %5153 = vmatpush2.bf16.msra.mxu0 %v3266
        %5154 = vmatprep.subr.bf16.mxu0 %v3253
        %5155 = vmatpush2.bf16.msra.mxu0 %v3252
        %5156 = vmatprep.subr.bf16.mxu0 %v3239
        %5157 = vmatpush2.bf16.msra.mxu0 %v3238
        %5158 = vmatprep.subr.bf16.mxu0 %v3225
        %5159 = vmatpush2.bf16.msra.mxu0 %v3224
        %5160 = vmatprep.subr.bf16.mxu0 %v3211
        %5161 = vmatpush2.bf16.msra.mxu0 %v3210
        %5162 = vmatprep.subr.bf16.mxu0 %v3197
        %5163 = vmatpush2.bf16.msra.mxu0 %v3196
        %5164 = vmatprep.mubr.bf16.mxu0 %v1223
        %5165 = vmatmul.mubr.bf16.gmra.mxu0 %v1222
        %v5166 = vpop.f32.mrf.mxu0
        %v5167 = vadd.f32 0.0, %v5166
        %v5168 = vpop.f32.mrf.mxu0
        %v5169 = vadd.f32 0.0, %v5168
        %v5170 = vpop.f32.mrf.mxu0
        %v5171 = vadd.f32 0.0, %v5170
        %v5172 = vpop.f32.mrf.mxu0
        %v5173 = vadd.f32 0.0, %v5172
        %5174 = vmatprep.mubr.bf16.mxu0 %v1227
        %5175 = vmatmul.mubr.bf16.gmra.mxu0 %v1226
        %v5176 = vpop.f32.mrf.mxu0
        %v5177 = vadd.f32 0.0, %v5176
        %v5178 = vpop.f32.mrf.mxu0
        %v5179 = vadd.f32 0.0, %v5178
        %v5180 = vpop.f32.mrf.mxu0
        %v5181 = vadd.f32 0.0, %v5180
        %v5182 = vpop.f32.mrf.mxu0
        %v5183 = vadd.f32 0.0, %v5182
        %5184 = vmatprep.mubr.bf16.mxu0 %v1231
        %5185 = vmatmul.mubr.bf16.gmra.mxu0 %v1230
        %v5186 = vpop.f32.mrf.mxu0
        %v5187 = vadd.f32 0.0, %v5186
        %v5188 = vpop.f32.mrf.mxu0
        %v5189 = vadd.f32 0.0, %v5188
        %v5190 = vpop.f32.mrf.mxu0
        %v5191 = vadd.f32 0.0, %v5190
        %v5192 = vpop.f32.mrf.mxu0
        %v5193 = vadd.f32 0.0, %v5192
        %5194 = vmatprep.mubr.bf16.mxu0 %v1235
        %5195 = vmatmul.mubr.bf16.gmra.mxu0 %v1234
        %v5196 = vpop.f32.mrf.mxu0
        %v5197 = vadd.f32 0.0, %v5196
        %v5198 = vpop.f32.mrf.mxu0
        %v5199 = vadd.f32 0.0, %v5198
        %v5200 = vpop.f32.mrf.mxu0
        %v5201 = vadd.f32 0.0, %v5200
        %v5202 = vpop.f32.mrf.mxu0
        %v5203 = vadd.f32 0.0, %v5202
        %5204 = vmatprep.mubr.bf16.mxu0 %v1239
        %5205 = vmatmul.mubr.bf16.gmra.mxu0 %v1238
        %v5206 = vpop.f32.mrf.mxu0
        %v5207 = vadd.f32 0.0, %v5206
        %v5208 = vpop.f32.mrf.mxu0
        %v5209 = vadd.f32 0.0, %v5208
        %v5210 = vpop.f32.mrf.mxu0
        %v5211 = vadd.f32 0.0, %v5210
        %v5212 = vpop.f32.mrf.mxu0
        %v5213 = vadd.f32 0.0, %v5212
        %5214 = vmatprep.mubr.bf16.mxu0 %v1243
        %5215 = vmatmul.mubr.bf16.gmra.mxu0 %v1242
        %v5216 = vpop.f32.mrf.mxu0
        %v5217 = vadd.f32 0.0, %v5216
        %v5218 = vpop.f32.mrf.mxu0
        %v5219 = vadd.f32 0.0, %v5218
        %v5220 = vpop.f32.mrf.mxu0
        %v5221 = vadd.f32 0.0, %v5220
        %v5222 = vpop.f32.mrf.mxu0
        %v5223 = vadd.f32 0.0, %v5222
        %5224 = vmatprep.mubr.bf16.mxu0 %v1247
        %5225 = vmatmul.mubr.bf16.gmra.mxu0 %v1246
        %v5226 = vpop.f32.mrf.mxu0
        %v5227 = vadd.f32 0.0, %v5226
        %v5228 = vpop.f32.mrf.mxu0
        %v5229 = vadd.f32 0.0, %v5228
        %v5230 = vpop.f32.mrf.mxu0
        %v5231 = vadd.f32 0.0, %v5230
        %v5232 = vpop.f32.mrf.mxu0
        %v5233 = vadd.f32 0.0, %v5232
        %5234 = vmatprep.mubr.bf16.mxu0 %v1251
        %5235 = vmatmul.mubr.bf16.gmra.mxu0 %v1250
        %v5236 = vpop.f32.mrf.mxu0
        %v5237 = vadd.f32 0.0, %v5236
        %v5238 = vpop.f32.mrf.mxu0
        %v5239 = vadd.f32 0.0, %v5238
        %v5240 = vpop.f32.mrf.mxu0
        %v5241 = vadd.f32 0.0, %v5240
        %v5242 = vpop.f32.mrf.mxu0
        %v5243 = vadd.f32 0.0, %v5242
        %5244 = vmatprep.mubr.bf16.mxu0 %v1255
        %5245 = vmatmul.mubr.bf16.gmra.mxu0 %v1254
        %v5246 = vpop.f32.mrf.mxu0
        %v5247 = vadd.f32 0.0, %v5246
        %v5248 = vpop.f32.mrf.mxu0
        %v5249 = vadd.f32 0.0, %v5248
        %v5250 = vpop.f32.mrf.mxu0
        %v5251 = vadd.f32 0.0, %v5250
        %v5252 = vpop.f32.mrf.mxu0
        %v5253 = vadd.f32 0.0, %v5252
        %5254 = vmatprep.mubr.bf16.mxu0 %v1259
        %5255 = vmatmul.mubr.bf16.gmra.mxu0 %v1258
        %v5256 = vpop.f32.mrf.mxu0
        %v5257 = vadd.f32 0.0, %v5256
        %v5258 = vpop.f32.mrf.mxu0
        %v5259 = vadd.f32 0.0, %v5258
        %v5260 = vpop.f32.mrf.mxu0
        %v5261 = vadd.f32 0.0, %v5260
        %v5262 = vpop.f32.mrf.mxu0
        %v5263 = vadd.f32 0.0, %v5262
        %5264 = vmatprep.mubr.bf16.mxu0 %v1263
        %5265 = vmatmul.mubr.bf16.gmra.mxu0 %v1262
        %v5266 = vpop.f32.mrf.mxu0
        %v5267 = vadd.f32 0.0, %v5266
        %v5268 = vpop.f32.mrf.mxu0
        %v5269 = vadd.f32 0.0, %v5268
        %v5270 = vpop.f32.mrf.mxu0
        %v5271 = vadd.f32 0.0, %v5270
        %v5272 = vpop.f32.mrf.mxu0
        %v5273 = vadd.f32 0.0, %v5272
        %5274 = vmatprep.mubr.bf16.mxu0 %v1267
        %5275 = vmatmul.mubr.bf16.gmra.mxu0 %v1266
        %v5276 = vpop.f32.mrf.mxu0
        %v5277 = vadd.f32 0.0, %v5276
        %v5278 = vpop.f32.mrf.mxu0
        %v5279 = vadd.f32 0.0, %v5278
        %v5280 = vpop.f32.mrf.mxu0
        %v5281 = vadd.f32 0.0, %v5280
        %v5282 = vpop.f32.mrf.mxu0
        %v5283 = vadd.f32 0.0, %v5282
        %5284 = vmatprep.mubr.bf16.mxu0 %v1271
        %5285 = vmatmul.mubr.bf16.gmra.mxu0 %v1270
        %v5286 = vpop.f32.mrf.mxu0
        %v5287 = vadd.f32 0.0, %v5286
        %v5288 = vpop.f32.mrf.mxu0
        %v5289 = vadd.f32 0.0, %v5288
        %v5290 = vpop.f32.mrf.mxu0
        %v5291 = vadd.f32 0.0, %v5290
        %v5292 = vpop.f32.mrf.mxu0
        %v5293 = vadd.f32 0.0, %v5292
        %5294 = vmatprep.mubr.bf16.mxu0 %v1275
        %5295 = vmatmul.mubr.bf16.gmra.mxu0 %v1274
        %v5296 = vpop.f32.mrf.mxu0
        %v5297 = vadd.f32 0.0, %v5296
        %v5298 = vpop.f32.mrf.mxu0
        %v5299 = vadd.f32 0.0, %v5298
        %v5300 = vpop.f32.mrf.mxu0
        %v5301 = vadd.f32 0.0, %v5300
        %v5302 = vpop.f32.mrf.mxu0
        %v5303 = vadd.f32 0.0, %v5302
        %5304 = vmatprep.mubr.bf16.mxu0 %v1279
        %5305 = vmatmul.mubr.bf16.gmra.mxu0 %v1278
        %v5306 = vpop.f32.mrf.mxu0
        %v5307 = vadd.f32 0.0, %v5306
        %v5308 = vpop.f32.mrf.mxu0
        %v5309 = vadd.f32 0.0, %v5308
        %v5310 = vpop.f32.mrf.mxu0
        %v5311 = vadd.f32 0.0, %v5310
        %v5312 = vpop.f32.mrf.mxu0
        %v5313 = vadd.f32 0.0, %v5312
        %5314 = vmatprep.mubr.bf16.mxu0 %v1283
        %5315 = vmatmul.mubr.bf16.gmra.mxu0 %v1282
        %v5316 = vpop.f32.mrf.mxu0
        %v5317 = vadd.f32 0.0, %v5316
        %v5318 = vpop.f32.mrf.mxu0
        %v5319 = vadd.f32 0.0, %v5318
        %v5320 = vpop.f32.mrf.mxu0
        %v5321 = vadd.f32 0.0, %v5320
        %v5322 = vpop.f32.mrf.mxu0
        %v5323 = vadd.f32 0.0, %v5322
        %5324 = vdwg.mxu0
        %5325 = vmatprep.subr.bf16.mxu0 %v3407
        %5326 = vmatpush1.bf16.msra.mxu0 %v3406
        %5327 = vmatprep.subr.bf16.mxu0 %v3393
        %5328 = vmatpush1.bf16.msra.mxu0 %v3392
        %5329 = vmatprep.subr.bf16.mxu0 %v3379
        %5330 = vmatpush1.bf16.msra.mxu0 %v3378
        %5331 = vmatprep.subr.bf16.mxu0 %v3365
        %5332 = vmatpush1.bf16.msra.mxu0 %v3364
        %5333 = vmatprep.subr.bf16.mxu0 %v3351
        %5334 = vmatpush1.bf16.msra.mxu0 %v3350
        %5335 = vmatprep.subr.bf16.mxu0 %v3337
        %5336 = vmatpush1.bf16.msra.mxu0 %v3336
        %5337 = vmatprep.subr.bf16.mxu0 %v3323
        %5338 = vmatpush1.bf16.msra.mxu0 %v3322
        %5339 = vmatprep.subr.bf16.mxu0 %v3309
        %5340 = vmatpush1.bf16.msra.mxu0 %v3308
        %5341 = vmatprep.subr.bf16.mxu0 %v3519
        %5342 = vmatpush2.bf16.msra.mxu0 %v3518
        %5343 = vmatprep.subr.bf16.mxu0 %v3505
        %5344 = vmatpush2.bf16.msra.mxu0 %v3504
        %5345 = vmatprep.subr.bf16.mxu0 %v3491
        %5346 = vmatpush2.bf16.msra.mxu0 %v3490
        %5347 = vmatprep.subr.bf16.mxu0 %v3477
        %5348 = vmatpush2.bf16.msra.mxu0 %v3476
        %5349 = vmatprep.subr.bf16.mxu0 %v3463
        %5350 = vmatpush2.bf16.msra.mxu0 %v3462
        %5351 = vmatprep.subr.bf16.mxu0 %v3449
        %5352 = vmatpush2.bf16.msra.mxu0 %v3448
        %5353 = vmatprep.subr.bf16.mxu0 %v3435
        %5354 = vmatpush2.bf16.msra.mxu0 %v3434
        %5355 = vmatprep.subr.bf16.mxu0 %v3421
        %5356 = vmatpush2.bf16.msra.mxu0 %v3420
        %5357 = vmatprep.mubr.bf16.mxu0 %v1225
        %5358 = vmatmul.mubr.bf16.gmra.mxu0 %v1224
        %v5359 = vpop.f32.mrf.mxu0
        %v5360 = vadd.f32 %v5167, %v5359
        %v5361 = vpop.f32.mrf.mxu0
        %v5362 = vadd.f32 %v5169, %v5361
        %v5363 = vpop.f32.mrf.mxu0
        %v5364 = vadd.f32 %v5171, %v5363
        %v5365 = vpop.f32.mrf.mxu0
        %v5366 = vadd.f32 %v5173, %v5365
        %5367 = vmatprep.mubr.bf16.mxu0 %v1229
        %5368 = vmatmul.mubr.bf16.gmra.mxu0 %v1228
        %v5369 = vpop.f32.mrf.mxu0
        %v5370 = vadd.f32 %v5177, %v5369
        %v5371 = vpop.f32.mrf.mxu0
        %v5372 = vadd.f32 %v5179, %v5371
        %v5373 = vpop.f32.mrf.mxu0
        %v5374 = vadd.f32 %v5181, %v5373
        %v5375 = vpop.f32.mrf.mxu0
        %v5376 = vadd.f32 %v5183, %v5375
        %5377 = vmatprep.mubr.bf16.mxu0 %v1233
        %5378 = vmatmul.mubr.bf16.gmra.mxu0 %v1232
        %v5379 = vpop.f32.mrf.mxu0
        %v5380 = vadd.f32 %v5187, %v5379
        %v5381 = vpop.f32.mrf.mxu0
        %v5382 = vadd.f32 %v5189, %v5381
        %v5383 = vpop.f32.mrf.mxu0
        %v5384 = vadd.f32 %v5191, %v5383
        %v5385 = vpop.f32.mrf.mxu0
        %v5386 = vadd.f32 %v5193, %v5385
        %5387 = vmatprep.mubr.bf16.mxu0 %v1237
        %5388 = vmatmul.mubr.bf16.gmra.mxu0 %v1236
        %v5389 = vpop.f32.mrf.mxu0
        %v5390 = vadd.f32 %v5197, %v5389
        %v5391 = vpop.f32.mrf.mxu0
        %v5392 = vadd.f32 %v5199, %v5391
        %v5393 = vpop.f32.mrf.mxu0
        %v5394 = vadd.f32 %v5201, %v5393
        %v5395 = vpop.f32.mrf.mxu0
        %v5396 = vadd.f32 %v5203, %v5395
        %5397 = vmatprep.mubr.bf16.mxu0 %v1241
        %5398 = vmatmul.mubr.bf16.gmra.mxu0 %v1240
        %v5399 = vpop.f32.mrf.mxu0
        %v5400 = vadd.f32 %v5207, %v5399
        %v5401 = vpop.f32.mrf.mxu0
        %v5402 = vadd.f32 %v5209, %v5401
        %v5403 = vpop.f32.mrf.mxu0
        %v5404 = vadd.f32 %v5211, %v5403
        %v5405 = vpop.f32.mrf.mxu0
        %v5406 = vadd.f32 %v5213, %v5405
        %5407 = vmatprep.mubr.bf16.mxu0 %v1245
        %5408 = vmatmul.mubr.bf16.gmra.mxu0 %v1244
        %v5409 = vpop.f32.mrf.mxu0
        %v5410 = vadd.f32 %v5217, %v5409
        %v5411 = vpop.f32.mrf.mxu0
        %v5412 = vadd.f32 %v5219, %v5411
        %v5413 = vpop.f32.mrf.mxu0
        %v5414 = vadd.f32 %v5221, %v5413
        %v5415 = vpop.f32.mrf.mxu0
        %v5416 = vadd.f32 %v5223, %v5415
        %5417 = vmatprep.mubr.bf16.mxu0 %v1249
        %5418 = vmatmul.mubr.bf16.gmra.mxu0 %v1248
        %v5419 = vpop.f32.mrf.mxu0
        %v5420 = vadd.f32 %v5227, %v5419
        %v5421 = vpop.f32.mrf.mxu0
        %v5422 = vadd.f32 %v5229, %v5421
        %v5423 = vpop.f32.mrf.mxu0
        %v5424 = vadd.f32 %v5231, %v5423
        %v5425 = vpop.f32.mrf.mxu0
        %v5426 = vadd.f32 %v5233, %v5425
        %5427 = vmatprep.mubr.bf16.mxu0 %v1253
        %5428 = vmatmul.mubr.bf16.gmra.mxu0 %v1252
        %v5429 = vpop.f32.mrf.mxu0
        %v5430 = vadd.f32 %v5237, %v5429
        %v5431 = vpop.f32.mrf.mxu0
        %v5432 = vadd.f32 %v5239, %v5431
        %v5433 = vpop.f32.mrf.mxu0
        %v5434 = vadd.f32 %v5241, %v5433
        %v5435 = vpop.f32.mrf.mxu0
        %v5436 = vadd.f32 %v5243, %v5435
        %5437 = vmatprep.mubr.bf16.mxu0 %v1257
        %5438 = vmatmul.mubr.bf16.gmra.mxu0 %v1256
        %v5439 = vpop.f32.mrf.mxu0
        %v5440 = vadd.f32 %v5247, %v5439
        %v5441 = vpop.f32.mrf.mxu0
        %v5442 = vadd.f32 %v5249, %v5441
        %v5443 = vpop.f32.mrf.mxu0
        %v5444 = vadd.f32 %v5251, %v5443
        %v5445 = vpop.f32.mrf.mxu0
        %v5446 = vadd.f32 %v5253, %v5445
        %5447 = vmatprep.mubr.bf16.mxu0 %v1261
        %5448 = vmatmul.mubr.bf16.gmra.mxu0 %v1260
        %v5449 = vpop.f32.mrf.mxu0
        %v5450 = vadd.f32 %v5257, %v5449
        %v5451 = vpop.f32.mrf.mxu0
        %v5452 = vadd.f32 %v5259, %v5451
        %v5453 = vpop.f32.mrf.mxu0
        %v5454 = vadd.f32 %v5261, %v5453
        %v5455 = vpop.f32.mrf.mxu0
        %v5456 = vadd.f32 %v5263, %v5455
        %5457 = vmatprep.mubr.bf16.mxu0 %v1265
        %5458 = vmatmul.mubr.bf16.gmra.mxu0 %v1264
        %v5459 = vpop.f32.mrf.mxu0
        %v5460 = vadd.f32 %v5267, %v5459
        %v5461 = vpop.f32.mrf.mxu0
        %v5462 = vadd.f32 %v5269, %v5461
        %v5463 = vpop.f32.mrf.mxu0
        %v5464 = vadd.f32 %v5271, %v5463
        %v5465 = vpop.f32.mrf.mxu0
        %v5466 = vadd.f32 %v5273, %v5465
        %5467 = vmatprep.mubr.bf16.mxu0 %v1269
        %5468 = vmatmul.mubr.bf16.gmra.mxu0 %v1268
        %v5469 = vpop.f32.mrf.mxu0
        %v5470 = vadd.f32 %v5277, %v5469
        %v5471 = vpop.f32.mrf.mxu0
        %v5472 = vadd.f32 %v5279, %v5471
        %v5473 = vpop.f32.mrf.mxu0
        %v5474 = vadd.f32 %v5281, %v5473
        %v5475 = vpop.f32.mrf.mxu0
        %v5476 = vadd.f32 %v5283, %v5475
        %5477 = vmatprep.mubr.bf16.mxu0 %v1273
        %5478 = vmatmul.mubr.bf16.gmra.mxu0 %v1272
        %v5479 = vpop.f32.mrf.mxu0
        %v5480 = vadd.f32 %v5287, %v5479
        %v5481 = vpop.f32.mrf.mxu0
        %v5482 = vadd.f32 %v5289, %v5481
        %v5483 = vpop.f32.mrf.mxu0
        %v5484 = vadd.f32 %v5291, %v5483
        %v5485 = vpop.f32.mrf.mxu0
        %v5486 = vadd.f32 %v5293, %v5485
        %5487 = vmatprep.mubr.bf16.mxu0 %v1277
        %5488 = vmatmul.mubr.bf16.gmra.mxu0 %v1276
        %v5489 = vpop.f32.mrf.mxu0
        %v5490 = vadd.f32 %v5297, %v5489
        %v5491 = vpop.f32.mrf.mxu0
        %v5492 = vadd.f32 %v5299, %v5491
        %v5493 = vpop.f32.mrf.mxu0
        %v5494 = vadd.f32 %v5301, %v5493
        %v5495 = vpop.f32.mrf.mxu0
        %v5496 = vadd.f32 %v5303, %v5495
        %5497 = vmatprep.mubr.bf16.mxu0 %v1281
        %5498 = vmatmul.mubr.bf16.gmra.mxu0 %v1280
        %v5499 = vpop.f32.mrf.mxu0
        %v5500 = vadd.f32 %v5307, %v5499
        %v5501 = vpop.f32.mrf.mxu0
        %v5502 = vadd.f32 %v5309, %v5501
        %v5503 = vpop.f32.mrf.mxu0
        %v5504 = vadd.f32 %v5311, %v5503
        %v5505 = vpop.f32.mrf.mxu0
        %v5506 = vadd.f32 %v5313, %v5505
        %5507 = vmatprep.mubr.bf16.mxu0 %v1285
        %5508 = vmatmul.mubr.bf16.gmra.mxu0 %v1284
        %v5509 = vpop.f32.mrf.mxu0
        %v5510 = vadd.f32 %v5317, %v5509
        %v5511 = vpop.f32.mrf.mxu0
        %v5512 = vadd.f32 %v5319, %v5511
        %v5513 = vpop.f32.mrf.mxu0
        %v5514 = vadd.f32 %v5321, %v5513
        %v5515 = vpop.f32.mrf.mxu0
        %v5516 = vadd.f32 %v5323, %v5515
        %5517 = vdwg.mxu0
        %5518 = vmatprep.subr.bf16.mxu0 %v3185
        %5519 = vmatpush1.bf16.msra.mxu0 %v3184
        %5520 = vmatprep.subr.bf16.mxu0 %v3171
        %5521 = vmatpush1.bf16.msra.mxu0 %v3170
        %5522 = vmatprep.subr.bf16.mxu0 %v3157
        %5523 = vmatpush1.bf16.msra.mxu0 %v3156
        %5524 = vmatprep.subr.bf16.mxu0 %v3143
        %5525 = vmatpush1.bf16.msra.mxu0 %v3142
        %5526 = vmatprep.subr.bf16.mxu0 %v3129
        %5527 = vmatpush1.bf16.msra.mxu0 %v3128
        %5528 = vmatprep.subr.bf16.mxu0 %v3115
        %5529 = vmatpush1.bf16.msra.mxu0 %v3114
        %5530 = vmatprep.subr.bf16.mxu0 %v3101
        %5531 = vmatpush1.bf16.msra.mxu0 %v3100
        %5532 = vmatprep.subr.bf16.mxu0 %v3087
        %5533 = vmatpush1.bf16.msra.mxu0 %v3086
        %5534 = vmatprep.subr.bf16.mxu0 %v3297
        %5535 = vmatpush2.bf16.msra.mxu0 %v3296
        %5536 = vmatprep.subr.bf16.mxu0 %v3283
        %5537 = vmatpush2.bf16.msra.mxu0 %v3282
        %5538 = vmatprep.subr.bf16.mxu0 %v3269
        %5539 = vmatpush2.bf16.msra.mxu0 %v3268
        %5540 = vmatprep.subr.bf16.mxu0 %v3255
        %5541 = vmatpush2.bf16.msra.mxu0 %v3254
        %5542 = vmatprep.subr.bf16.mxu0 %v3241
        %5543 = vmatpush2.bf16.msra.mxu0 %v3240
        %5544 = vmatprep.subr.bf16.mxu0 %v3227
        %5545 = vmatpush2.bf16.msra.mxu0 %v3226
        %5546 = vmatprep.subr.bf16.mxu0 %v3213
        %5547 = vmatpush2.bf16.msra.mxu0 %v3212
        %5548 = vmatprep.subr.bf16.mxu0 %v3199
        %5549 = vmatpush2.bf16.msra.mxu0 %v3198
        %5550 = vmatprep.mubr.bf16.mxu0 %v1223
        %5551 = vmatmul.mubr.bf16.gmra.mxu0 %v1222
        %v5552 = vpop.f32.mrf.mxu0
        %v5553 = vadd.f32 0.0, %v5552
        %v5554 = vpop.f32.mrf.mxu0
        %v5555 = vadd.f32 0.0, %v5554
        %v5556 = vpop.f32.mrf.mxu0
        %v5557 = vadd.f32 0.0, %v5556
        %v5558 = vpop.f32.mrf.mxu0
        %v5559 = vadd.f32 0.0, %v5558
        %5560 = vmatprep.mubr.bf16.mxu0 %v1227
        %5561 = vmatmul.mubr.bf16.gmra.mxu0 %v1226
        %v5562 = vpop.f32.mrf.mxu0
        %v5563 = vadd.f32 0.0, %v5562
        %v5564 = vpop.f32.mrf.mxu0
        %v5565 = vadd.f32 0.0, %v5564
        %v5566 = vpop.f32.mrf.mxu0
        %v5567 = vadd.f32 0.0, %v5566
        %v5568 = vpop.f32.mrf.mxu0
        %v5569 = vadd.f32 0.0, %v5568
        %5570 = vmatprep.mubr.bf16.mxu0 %v1231
        %5571 = vmatmul.mubr.bf16.gmra.mxu0 %v1230
        %v5572 = vpop.f32.mrf.mxu0
        %v5573 = vadd.f32 0.0, %v5572
        %v5574 = vpop.f32.mrf.mxu0
        %v5575 = vadd.f32 0.0, %v5574
        %v5576 = vpop.f32.mrf.mxu0
        %v5577 = vadd.f32 0.0, %v5576
        %v5578 = vpop.f32.mrf.mxu0
        %v5579 = vadd.f32 0.0, %v5578
        %5580 = vmatprep.mubr.bf16.mxu0 %v1235
        %5581 = vmatmul.mubr.bf16.gmra.mxu0 %v1234
        %v5582 = vpop.f32.mrf.mxu0
        %v5583 = vadd.f32 0.0, %v5582
        %v5584 = vpop.f32.mrf.mxu0
        %v5585 = vadd.f32 0.0, %v5584
        %v5586 = vpop.f32.mrf.mxu0
        %v5587 = vadd.f32 0.0, %v5586
        %v5588 = vpop.f32.mrf.mxu0
        %v5589 = vadd.f32 0.0, %v5588
        %5590 = vmatprep.mubr.bf16.mxu0 %v1239
        %5591 = vmatmul.mubr.bf16.gmra.mxu0 %v1238
        %v5592 = vpop.f32.mrf.mxu0
        %v5593 = vadd.f32 0.0, %v5592
        %v5594 = vpop.f32.mrf.mxu0
        %v5595 = vadd.f32 0.0, %v5594
        %v5596 = vpop.f32.mrf.mxu0
        %v5597 = vadd.f32 0.0, %v5596
        %v5598 = vpop.f32.mrf.mxu0
        %v5599 = vadd.f32 0.0, %v5598
        %5600 = vmatprep.mubr.bf16.mxu0 %v1243
        %5601 = vmatmul.mubr.bf16.gmra.mxu0 %v1242
        %v5602 = vpop.f32.mrf.mxu0
        %v5603 = vadd.f32 0.0, %v5602
        %v5604 = vpop.f32.mrf.mxu0
        %v5605 = vadd.f32 0.0, %v5604
        %v5606 = vpop.f32.mrf.mxu0
        %v5607 = vadd.f32 0.0, %v5606
        %v5608 = vpop.f32.mrf.mxu0
        %v5609 = vadd.f32 0.0, %v5608
        %5610 = vmatprep.mubr.bf16.mxu0 %v1247
        %5611 = vmatmul.mubr.bf16.gmra.mxu0 %v1246
        %v5612 = vpop.f32.mrf.mxu0
        %v5613 = vadd.f32 0.0, %v5612
        %v5614 = vpop.f32.mrf.mxu0
        %v5615 = vadd.f32 0.0, %v5614
        %v5616 = vpop.f32.mrf.mxu0
        %v5617 = vadd.f32 0.0, %v5616
        %v5618 = vpop.f32.mrf.mxu0
        %v5619 = vadd.f32 0.0, %v5618
        %5620 = vmatprep.mubr.bf16.mxu0 %v1251
        %5621 = vmatmul.mubr.bf16.gmra.mxu0 %v1250
        %v5622 = vpop.f32.mrf.mxu0
        %v5623 = vadd.f32 0.0, %v5622
        %v5624 = vpop.f32.mrf.mxu0
        %v5625 = vadd.f32 0.0, %v5624
        %v5626 = vpop.f32.mrf.mxu0
        %v5627 = vadd.f32 0.0, %v5626
        %v5628 = vpop.f32.mrf.mxu0
        %v5629 = vadd.f32 0.0, %v5628
        %5630 = vmatprep.mubr.bf16.mxu0 %v1255
        %5631 = vmatmul.mubr.bf16.gmra.mxu0 %v1254
        %v5632 = vpop.f32.mrf.mxu0
        %v5633 = vadd.f32 0.0, %v5632
        %v5634 = vpop.f32.mrf.mxu0
        %v5635 = vadd.f32 0.0, %v5634
        %v5636 = vpop.f32.mrf.mxu0
        %v5637 = vadd.f32 0.0, %v5636
        %v5638 = vpop.f32.mrf.mxu0
        %v5639 = vadd.f32 0.0, %v5638
        %5640 = vmatprep.mubr.bf16.mxu0 %v1259
        %5641 = vmatmul.mubr.bf16.gmra.mxu0 %v1258
        %v5642 = vpop.f32.mrf.mxu0
        %v5643 = vadd.f32 0.0, %v5642
        %v5644 = vpop.f32.mrf.mxu0
        %v5645 = vadd.f32 0.0, %v5644
        %v5646 = vpop.f32.mrf.mxu0
        %v5647 = vadd.f32 0.0, %v5646
        %v5648 = vpop.f32.mrf.mxu0
        %v5649 = vadd.f32 0.0, %v5648
        %5650 = vmatprep.mubr.bf16.mxu0 %v1263
        %5651 = vmatmul.mubr.bf16.gmra.mxu0 %v1262
        %v5652 = vpop.f32.mrf.mxu0
        %v5653 = vadd.f32 0.0, %v5652
        %v5654 = vpop.f32.mrf.mxu0
        %v5655 = vadd.f32 0.0, %v5654
        %v5656 = vpop.f32.mrf.mxu0
        %v5657 = vadd.f32 0.0, %v5656
        %v5658 = vpop.f32.mrf.mxu0
        %v5659 = vadd.f32 0.0, %v5658
        %5660 = vmatprep.mubr.bf16.mxu0 %v1267
        %5661 = vmatmul.mubr.bf16.gmra.mxu0 %v1266
        %v5662 = vpop.f32.mrf.mxu0
        %v5663 = vadd.f32 0.0, %v5662
        %v5664 = vpop.f32.mrf.mxu0
        %v5665 = vadd.f32 0.0, %v5664
        %v5666 = vpop.f32.mrf.mxu0
        %v5667 = vadd.f32 0.0, %v5666
        %v5668 = vpop.f32.mrf.mxu0
        %v5669 = vadd.f32 0.0, %v5668
        %5670 = vmatprep.mubr.bf16.mxu0 %v1271
        %5671 = vmatmul.mubr.bf16.gmra.mxu0 %v1270
        %v5672 = vpop.f32.mrf.mxu0
        %v5673 = vadd.f32 0.0, %v5672
        %v5674 = vpop.f32.mrf.mxu0
        %v5675 = vadd.f32 0.0, %v5674
        %v5676 = vpop.f32.mrf.mxu0
        %v5677 = vadd.f32 0.0, %v5676
        %v5678 = vpop.f32.mrf.mxu0
        %v5679 = vadd.f32 0.0, %v5678
        %5680 = vmatprep.mubr.bf16.mxu0 %v1275
        %5681 = vmatmul.mubr.bf16.gmra.mxu0 %v1274
        %v5682 = vpop.f32.mrf.mxu0
        %v5683 = vadd.f32 0.0, %v5682
        %v5684 = vpop.f32.mrf.mxu0
        %v5685 = vadd.f32 0.0, %v5684
        %v5686 = vpop.f32.mrf.mxu0
        %v5687 = vadd.f32 0.0, %v5686
        %v5688 = vpop.f32.mrf.mxu0
        %v5689 = vadd.f32 0.0, %v5688
        %5690 = vmatprep.mubr.bf16.mxu0 %v1279
        %5691 = vmatmul.mubr.bf16.gmra.mxu0 %v1278
        %v5692 = vpop.f32.mrf.mxu0
        %v5693 = vadd.f32 0.0, %v5692
        %v5694 = vpop.f32.mrf.mxu0
        %v5695 = vadd.f32 0.0, %v5694
        %v5696 = vpop.f32.mrf.mxu0
        %v5697 = vadd.f32 0.0, %v5696
        %v5698 = vpop.f32.mrf.mxu0
        %v5699 = vadd.f32 0.0, %v5698
        %5700 = vmatprep.mubr.bf16.mxu0 %v1283
        %5701 = vmatmul.mubr.bf16.gmra.mxu0 %v1282
        %v5702 = vpop.f32.mrf.mxu0
        %v5703 = vadd.f32 0.0, %v5702
        %v5704 = vpop.f32.mrf.mxu0
        %v5705 = vadd.f32 0.0, %v5704
        %v5706 = vpop.f32.mrf.mxu0
        %v5707 = vadd.f32 0.0, %v5706
        %v5708 = vpop.f32.mrf.mxu0
        %v5709 = vadd.f32 0.0, %v5708
        %5710 = vdwg.mxu0
        %5711 = vmatprep.subr.bf16.mxu0 %v3409
        %5712 = vmatpush1.bf16.msra.mxu0 %v3408
        %5713 = vmatprep.subr.bf16.mxu0 %v3395
        %5714 = vmatpush1.bf16.msra.mxu0 %v3394
        %5715 = vmatprep.subr.bf16.mxu0 %v3381
        %5716 = vmatpush1.bf16.msra.mxu0 %v3380
        %5717 = vmatprep.subr.bf16.mxu0 %v3367
        %5718 = vmatpush1.bf16.msra.mxu0 %v3366
        %5719 = vmatprep.subr.bf16.mxu0 %v3353
        %5720 = vmatpush1.bf16.msra.mxu0 %v3352
        %5721 = vmatprep.subr.bf16.mxu0 %v3339
        %5722 = vmatpush1.bf16.msra.mxu0 %v3338
        %5723 = vmatprep.subr.bf16.mxu0 %v3325
        %5724 = vmatpush1.bf16.msra.mxu0 %v3324
        %5725 = vmatprep.subr.bf16.mxu0 %v3311
        %5726 = vmatpush1.bf16.msra.mxu0 %v3310
        %5727 = vmatprep.subr.bf16.mxu0 %v3521
        %5728 = vmatpush2.bf16.msra.mxu0 %v3520
        %5729 = vmatprep.subr.bf16.mxu0 %v3507
        %5730 = vmatpush2.bf16.msra.mxu0 %v3506
        %5731 = vmatprep.subr.bf16.mxu0 %v3493
        %5732 = vmatpush2.bf16.msra.mxu0 %v3492
        %5733 = vmatprep.subr.bf16.mxu0 %v3479
        %5734 = vmatpush2.bf16.msra.mxu0 %v3478
        %5735 = vmatprep.subr.bf16.mxu0 %v3465
        %5736 = vmatpush2.bf16.msra.mxu0 %v3464
        %5737 = vmatprep.subr.bf16.mxu0 %v3451
        %5738 = vmatpush2.bf16.msra.mxu0 %v3450
        %5739 = vmatprep.subr.bf16.mxu0 %v3437
        %5740 = vmatpush2.bf16.msra.mxu0 %v3436
        %5741 = vmatprep.subr.bf16.mxu0 %v3423
        %5742 = vmatpush2.bf16.msra.mxu0 %v3422
        %5743 = vmatprep.mubr.bf16.mxu0 %v1225
        %5744 = vmatmul.mubr.bf16.gmra.mxu0 %v1224
        %v5745 = vpop.f32.mrf.mxu0
        %v5746 = vadd.f32 %v5553, %v5745
        %v5747 = vpop.f32.mrf.mxu0
        %v5748 = vadd.f32 %v5555, %v5747
        %v5749 = vpop.f32.mrf.mxu0
        %v5750 = vadd.f32 %v5557, %v5749
        %v5751 = vpop.f32.mrf.mxu0
        %v5752 = vadd.f32 %v5559, %v5751
        %5753 = vmatprep.mubr.bf16.mxu0 %v1229
        %5754 = vmatmul.mubr.bf16.gmra.mxu0 %v1228
        %v5755 = vpop.f32.mrf.mxu0
        %v5756 = vadd.f32 %v5563, %v5755
        %v5757 = vpop.f32.mrf.mxu0
        %v5758 = vadd.f32 %v5565, %v5757
        %v5759 = vpop.f32.mrf.mxu0
        %v5760 = vadd.f32 %v5567, %v5759
        %v5761 = vpop.f32.mrf.mxu0
        %v5762 = vadd.f32 %v5569, %v5761
        %5763 = vmatprep.mubr.bf16.mxu0 %v1233
        %5764 = vmatmul.mubr.bf16.gmra.mxu0 %v1232
        %v5765 = vpop.f32.mrf.mxu0
        %v5766 = vadd.f32 %v5573, %v5765
        %v5767 = vpop.f32.mrf.mxu0
        %v5768 = vadd.f32 %v5575, %v5767
        %v5769 = vpop.f32.mrf.mxu0
        %v5770 = vadd.f32 %v5577, %v5769
        %v5771 = vpop.f32.mrf.mxu0
        %v5772 = vadd.f32 %v5579, %v5771
        %5773 = vmatprep.mubr.bf16.mxu0 %v1237
        %5774 = vmatmul.mubr.bf16.gmra.mxu0 %v1236
        %v5775 = vpop.f32.mrf.mxu0
        %v5776 = vadd.f32 %v5583, %v5775
        %v5777 = vpop.f32.mrf.mxu0
        %v5778 = vadd.f32 %v5585, %v5777
        %v5779 = vpop.f32.mrf.mxu0
        %v5780 = vadd.f32 %v5587, %v5779
        %v5781 = vpop.f32.mrf.mxu0
        %v5782 = vadd.f32 %v5589, %v5781
        %5783 = vmatprep.mubr.bf16.mxu0 %v1241
        %5784 = vmatmul.mubr.bf16.gmra.mxu0 %v1240
        %v5785 = vpop.f32.mrf.mxu0
        %v5786 = vadd.f32 %v5593, %v5785
        %v5787 = vpop.f32.mrf.mxu0
        %v5788 = vadd.f32 %v5595, %v5787
        %v5789 = vpop.f32.mrf.mxu0
        %v5790 = vadd.f32 %v5597, %v5789
        %v5791 = vpop.f32.mrf.mxu0
        %v5792 = vadd.f32 %v5599, %v5791
        %5793 = vmatprep.mubr.bf16.mxu0 %v1245
        %5794 = vmatmul.mubr.bf16.gmra.mxu0 %v1244
        %v5795 = vpop.f32.mrf.mxu0
        %v5796 = vadd.f32 %v5603, %v5795
        %v5797 = vpop.f32.mrf.mxu0
        %v5798 = vadd.f32 %v5605, %v5797
        %v5799 = vpop.f32.mrf.mxu0
        %v5800 = vadd.f32 %v5607, %v5799
        %v5801 = vpop.f32.mrf.mxu0
        %v5802 = vadd.f32 %v5609, %v5801
        %5803 = vmatprep.mubr.bf16.mxu0 %v1249
        %5804 = vmatmul.mubr.bf16.gmra.mxu0 %v1248
        %v5805 = vpop.f32.mrf.mxu0
        %v5806 = vadd.f32 %v5613, %v5805
        %v5807 = vpop.f32.mrf.mxu0
        %v5808 = vadd.f32 %v5615, %v5807
        %v5809 = vpop.f32.mrf.mxu0
        %v5810 = vadd.f32 %v5617, %v5809
        %v5811 = vpop.f32.mrf.mxu0
        %v5812 = vadd.f32 %v5619, %v5811
        %5813 = vmatprep.mubr.bf16.mxu0 %v1253
        %5814 = vmatmul.mubr.bf16.gmra.mxu0 %v1252
        %v5815 = vpop.f32.mrf.mxu0
        %v5816 = vadd.f32 %v5623, %v5815
        %v5817 = vpop.f32.mrf.mxu0
        %v5818 = vadd.f32 %v5625, %v5817
        %v5819 = vpop.f32.mrf.mxu0
        %v5820 = vadd.f32 %v5627, %v5819
        %v5821 = vpop.f32.mrf.mxu0
        %v5822 = vadd.f32 %v5629, %v5821
        %5823 = vmatprep.mubr.bf16.mxu0 %v1257
        %5824 = vmatmul.mubr.bf16.gmra.mxu0 %v1256
        %v5825 = vpop.f32.mrf.mxu0
        %v5826 = vadd.f32 %v5633, %v5825
        %v5827 = vpop.f32.mrf.mxu0
        %v5828 = vadd.f32 %v5635, %v5827
        %v5829 = vpop.f32.mrf.mxu0
        %v5830 = vadd.f32 %v5637, %v5829
        %v5831 = vpop.f32.mrf.mxu0
        %v5832 = vadd.f32 %v5639, %v5831
        %5833 = vmatprep.mubr.bf16.mxu0 %v1261
        %5834 = vmatmul.mubr.bf16.gmra.mxu0 %v1260
        %v5835 = vpop.f32.mrf.mxu0
        %v5836 = vadd.f32 %v5643, %v5835
        %v5837 = vpop.f32.mrf.mxu0
        %v5838 = vadd.f32 %v5645, %v5837
        %v5839 = vpop.f32.mrf.mxu0
        %v5840 = vadd.f32 %v5647, %v5839
        %v5841 = vpop.f32.mrf.mxu0
        %v5842 = vadd.f32 %v5649, %v5841
        %5843 = vmatprep.mubr.bf16.mxu0 %v1265
        %5844 = vmatmul.mubr.bf16.gmra.mxu0 %v1264
        %v5845 = vpop.f32.mrf.mxu0
        %v5846 = vadd.f32 %v5653, %v5845
        %v5847 = vpop.f32.mrf.mxu0
        %v5848 = vadd.f32 %v5655, %v5847
        %v5849 = vpop.f32.mrf.mxu0
        %v5850 = vadd.f32 %v5657, %v5849
        %v5851 = vpop.f32.mrf.mxu0
        %v5852 = vadd.f32 %v5659, %v5851
        %5853 = vmatprep.mubr.bf16.mxu0 %v1269
        %5854 = vmatmul.mubr.bf16.gmra.mxu0 %v1268
        %v5855 = vpop.f32.mrf.mxu0
        %v5856 = vadd.f32 %v5663, %v5855
        %v5857 = vpop.f32.mrf.mxu0
        %v5858 = vadd.f32 %v5665, %v5857
        %v5859 = vpop.f32.mrf.mxu0
        %v5860 = vadd.f32 %v5667, %v5859
        %v5861 = vpop.f32.mrf.mxu0
        %v5862 = vadd.f32 %v5669, %v5861
        %5863 = vmatprep.mubr.bf16.mxu0 %v1273
        %5864 = vmatmul.mubr.bf16.gmra.mxu0 %v1272
        %v5865 = vpop.f32.mrf.mxu0
        %v5866 = vadd.f32 %v5673, %v5865
        %v5867 = vpop.f32.mrf.mxu0
        %v5868 = vadd.f32 %v5675, %v5867
        %v5869 = vpop.f32.mrf.mxu0
        %v5870 = vadd.f32 %v5677, %v5869
        %v5871 = vpop.f32.mrf.mxu0
        %v5872 = vadd.f32 %v5679, %v5871
        %5873 = vmatprep.mubr.bf16.mxu0 %v1277
        %5874 = vmatmul.mubr.bf16.gmra.mxu0 %v1276
        %v5875 = vpop.f32.mrf.mxu0
        %v5876 = vadd.f32 %v5683, %v5875
        %v5877 = vpop.f32.mrf.mxu0
        %v5878 = vadd.f32 %v5685, %v5877
        %v5879 = vpop.f32.mrf.mxu0
        %v5880 = vadd.f32 %v5687, %v5879
        %v5881 = vpop.f32.mrf.mxu0
        %v5882 = vadd.f32 %v5689, %v5881
        %5883 = vmatprep.mubr.bf16.mxu0 %v1281
        %5884 = vmatmul.mubr.bf16.gmra.mxu0 %v1280
        %v5885 = vpop.f32.mrf.mxu0
        %v5886 = vadd.f32 %v5693, %v5885
        %v5887 = vpop.f32.mrf.mxu0
        %v5888 = vadd.f32 %v5695, %v5887
        %v5889 = vpop.f32.mrf.mxu0
        %v5890 = vadd.f32 %v5697, %v5889
        %v5891 = vpop.f32.mrf.mxu0
        %v5892 = vadd.f32 %v5699, %v5891
        %5893 = vmatprep.mubr.bf16.mxu0 %v1285
        %5894 = vmatmul.mubr.bf16.gmra.mxu0 %v1284
        %v5895 = vpop.f32.mrf.mxu0
        %v5896 = vadd.f32 %v5703, %v5895
        %v5897 = vpop.f32.mrf.mxu0
        %v5898 = vadd.f32 %v5705, %v5897
        %v5899 = vpop.f32.mrf.mxu0
        %v5900 = vadd.f32 %v5707, %v5899
        %v5901 = vpop.f32.mrf.mxu0
        %v5902 = vadd.f32 %v5709, %v5901
        %5903 = vdwg.mxu0
        %5904 = vmatprep.subr.bf16.mxu0 %v3187
        %5905 = vmatpush1.bf16.msra.mxu0 %v3186
        %5906 = vmatprep.subr.bf16.mxu0 %v3173
        %5907 = vmatpush1.bf16.msra.mxu0 %v3172
        %5908 = vmatprep.subr.bf16.mxu0 %v3159
        %5909 = vmatpush1.bf16.msra.mxu0 %v3158
        %5910 = vmatprep.subr.bf16.mxu0 %v3145
        %5911 = vmatpush1.bf16.msra.mxu0 %v3144
        %5912 = vmatprep.subr.bf16.mxu0 %v3131
        %5913 = vmatpush1.bf16.msra.mxu0 %v3130
        %5914 = vmatprep.subr.bf16.mxu0 %v3117
        %5915 = vmatpush1.bf16.msra.mxu0 %v3116
        %5916 = vmatprep.subr.bf16.mxu0 %v3103
        %5917 = vmatpush1.bf16.msra.mxu0 %v3102
        %5918 = vmatprep.subr.bf16.mxu0 %v3089
        %5919 = vmatpush1.bf16.msra.mxu0 %v3088
        %5920 = vmatprep.subr.bf16.mxu0 %v3299
        %5921 = vmatpush2.bf16.msra.mxu0 %v3298
        %5922 = vmatprep.subr.bf16.mxu0 %v3285
        %5923 = vmatpush2.bf16.msra.mxu0 %v3284
        %5924 = vmatprep.subr.bf16.mxu0 %v3271
        %5925 = vmatpush2.bf16.msra.mxu0 %v3270
        %5926 = vmatprep.subr.bf16.mxu0 %v3257
        %5927 = vmatpush2.bf16.msra.mxu0 %v3256
        %5928 = vmatprep.subr.bf16.mxu0 %v3243
        %5929 = vmatpush2.bf16.msra.mxu0 %v3242
        %5930 = vmatprep.subr.bf16.mxu0 %v3229
        %5931 = vmatpush2.bf16.msra.mxu0 %v3228
        %5932 = vmatprep.subr.bf16.mxu0 %v3215
        %5933 = vmatpush2.bf16.msra.mxu0 %v3214
        %5934 = vmatprep.subr.bf16.mxu0 %v3201
        %5935 = vmatpush2.bf16.msra.mxu0 %v3200
        %5936 = vmatprep.mubr.bf16.mxu0 %v1223
        %5937 = vmatmul.mubr.bf16.gmra.mxu0 %v1222
        %v5938 = vpop.f32.mrf.mxu0
        %v5939 = vadd.f32 0.0, %v5938
        %v5940 = vpop.f32.mrf.mxu0
        %v5941 = vadd.f32 0.0, %v5940
        %v5942 = vpop.f32.mrf.mxu0
        %v5943 = vadd.f32 0.0, %v5942
        %v5944 = vpop.f32.mrf.mxu0
        %v5945 = vadd.f32 0.0, %v5944
        %5946 = vmatprep.mubr.bf16.mxu0 %v1227
        %5947 = vmatmul.mubr.bf16.gmra.mxu0 %v1226
        %v5948 = vpop.f32.mrf.mxu0
        %v5949 = vadd.f32 0.0, %v5948
        %v5950 = vpop.f32.mrf.mxu0
        %v5951 = vadd.f32 0.0, %v5950
        %v5952 = vpop.f32.mrf.mxu0
        %v5953 = vadd.f32 0.0, %v5952
        %v5954 = vpop.f32.mrf.mxu0
        %v5955 = vadd.f32 0.0, %v5954
        %5956 = vmatprep.mubr.bf16.mxu0 %v1231
        %5957 = vmatmul.mubr.bf16.gmra.mxu0 %v1230
        %v5958 = vpop.f32.mrf.mxu0
        %v5959 = vadd.f32 0.0, %v5958
        %v5960 = vpop.f32.mrf.mxu0
        %v5961 = vadd.f32 0.0, %v5960
        %v5962 = vpop.f32.mrf.mxu0
        %v5963 = vadd.f32 0.0, %v5962
        %v5964 = vpop.f32.mrf.mxu0
        %v5965 = vadd.f32 0.0, %v5964
        %5966 = vmatprep.mubr.bf16.mxu0 %v1235
        %5967 = vmatmul.mubr.bf16.gmra.mxu0 %v1234
        %v5968 = vpop.f32.mrf.mxu0
        %v5969 = vadd.f32 0.0, %v5968
        %v5970 = vpop.f32.mrf.mxu0
        %v5971 = vadd.f32 0.0, %v5970
        %v5972 = vpop.f32.mrf.mxu0
        %v5973 = vadd.f32 0.0, %v5972
        %v5974 = vpop.f32.mrf.mxu0
        %v5975 = vadd.f32 0.0, %v5974
        %5976 = vmatprep.mubr.bf16.mxu0 %v1239
        %5977 = vmatmul.mubr.bf16.gmra.mxu0 %v1238
        %v5978 = vpop.f32.mrf.mxu0
        %v5979 = vadd.f32 0.0, %v5978
        %v5980 = vpop.f32.mrf.mxu0
        %v5981 = vadd.f32 0.0, %v5980
        %v5982 = vpop.f32.mrf.mxu0
        %v5983 = vadd.f32 0.0, %v5982
        %v5984 = vpop.f32.mrf.mxu0
        %v5985 = vadd.f32 0.0, %v5984
        %5986 = vmatprep.mubr.bf16.mxu0 %v1243
        %5987 = vmatmul.mubr.bf16.gmra.mxu0 %v1242
        %v5988 = vpop.f32.mrf.mxu0
        %v5989 = vadd.f32 0.0, %v5988
        %v5990 = vpop.f32.mrf.mxu0
        %v5991 = vadd.f32 0.0, %v5990
        %v5992 = vpop.f32.mrf.mxu0
        %v5993 = vadd.f32 0.0, %v5992
        %v5994 = vpop.f32.mrf.mxu0
        %v5995 = vadd.f32 0.0, %v5994
        %5996 = vmatprep.mubr.bf16.mxu0 %v1247
        %5997 = vmatmul.mubr.bf16.gmra.mxu0 %v1246
        %v5998 = vpop.f32.mrf.mxu0
        %v5999 = vadd.f32 0.0, %v5998
        %v6000 = vpop.f32.mrf.mxu0
        %v6001 = vadd.f32 0.0, %v6000
        %v6002 = vpop.f32.mrf.mxu0
        %v6003 = vadd.f32 0.0, %v6002
        %v6004 = vpop.f32.mrf.mxu0
        %v6005 = vadd.f32 0.0, %v6004
        %6006 = vmatprep.mubr.bf16.mxu0 %v1251
        %6007 = vmatmul.mubr.bf16.gmra.mxu0 %v1250
        %v6008 = vpop.f32.mrf.mxu0
        %v6009 = vadd.f32 0.0, %v6008
        %v6010 = vpop.f32.mrf.mxu0
        %v6011 = vadd.f32 0.0, %v6010
        %v6012 = vpop.f32.mrf.mxu0
        %v6013 = vadd.f32 0.0, %v6012
        %v6014 = vpop.f32.mrf.mxu0
        %v6015 = vadd.f32 0.0, %v6014
        %6016 = vmatprep.mubr.bf16.mxu0 %v1255
        %6017 = vmatmul.mubr.bf16.gmra.mxu0 %v1254
        %v6018 = vpop.f32.mrf.mxu0
        %v6019 = vadd.f32 0.0, %v6018
        %v6020 = vpop.f32.mrf.mxu0
        %v6021 = vadd.f32 0.0, %v6020
        %v6022 = vpop.f32.mrf.mxu0
        %v6023 = vadd.f32 0.0, %v6022
        %v6024 = vpop.f32.mrf.mxu0
        %v6025 = vadd.f32 0.0, %v6024
        %6026 = vmatprep.mubr.bf16.mxu0 %v1259
        %6027 = vmatmul.mubr.bf16.gmra.mxu0 %v1258
        %v6028 = vpop.f32.mrf.mxu0
        %v6029 = vadd.f32 0.0, %v6028
        %v6030 = vpop.f32.mrf.mxu0
        %v6031 = vadd.f32 0.0, %v6030
        %v6032 = vpop.f32.mrf.mxu0
        %v6033 = vadd.f32 0.0, %v6032
        %v6034 = vpop.f32.mrf.mxu0
        %v6035 = vadd.f32 0.0, %v6034
        %6036 = vmatprep.mubr.bf16.mxu0 %v1263
        %6037 = vmatmul.mubr.bf16.gmra.mxu0 %v1262
        %v6038 = vpop.f32.mrf.mxu0
        %v6039 = vadd.f32 0.0, %v6038
        %v6040 = vpop.f32.mrf.mxu0
        %v6041 = vadd.f32 0.0, %v6040
        %v6042 = vpop.f32.mrf.mxu0
        %v6043 = vadd.f32 0.0, %v6042
        %v6044 = vpop.f32.mrf.mxu0
        %v6045 = vadd.f32 0.0, %v6044
        %6046 = vmatprep.mubr.bf16.mxu0 %v1267
        %6047 = vmatmul.mubr.bf16.gmra.mxu0 %v1266
        %v6048 = vpop.f32.mrf.mxu0
        %v6049 = vadd.f32 0.0, %v6048
        %v6050 = vpop.f32.mrf.mxu0
        %v6051 = vadd.f32 0.0, %v6050
        %v6052 = vpop.f32.mrf.mxu0
        %v6053 = vadd.f32 0.0, %v6052
        %v6054 = vpop.f32.mrf.mxu0
        %v6055 = vadd.f32 0.0, %v6054
        %6056 = vmatprep.mubr.bf16.mxu0 %v1271
        %6057 = vmatmul.mubr.bf16.gmra.mxu0 %v1270
        %v6058 = vpop.f32.mrf.mxu0
        %v6059 = vadd.f32 0.0, %v6058
        %v6060 = vpop.f32.mrf.mxu0
        %v6061 = vadd.f32 0.0, %v6060
        %v6062 = vpop.f32.mrf.mxu0
        %v6063 = vadd.f32 0.0, %v6062
        %v6064 = vpop.f32.mrf.mxu0
        %v6065 = vadd.f32 0.0, %v6064
        %6066 = vmatprep.mubr.bf16.mxu0 %v1275
        %6067 = vmatmul.mubr.bf16.gmra.mxu0 %v1274
        %v6068 = vpop.f32.mrf.mxu0
        %v6069 = vadd.f32 0.0, %v6068
        %v6070 = vpop.f32.mrf.mxu0
        %v6071 = vadd.f32 0.0, %v6070
        %v6072 = vpop.f32.mrf.mxu0
        %v6073 = vadd.f32 0.0, %v6072
        %v6074 = vpop.f32.mrf.mxu0
        %v6075 = vadd.f32 0.0, %v6074
        %6076 = vmatprep.mubr.bf16.mxu0 %v1279
        %6077 = vmatmul.mubr.bf16.gmra.mxu0 %v1278
        %v6078 = vpop.f32.mrf.mxu0
        %v6079 = vadd.f32 0.0, %v6078
        %v6080 = vpop.f32.mrf.mxu0
        %v6081 = vadd.f32 0.0, %v6080
        %v6082 = vpop.f32.mrf.mxu0
        %v6083 = vadd.f32 0.0, %v6082
        %v6084 = vpop.f32.mrf.mxu0
        %v6085 = vadd.f32 0.0, %v6084
        %6086 = vmatprep.mubr.bf16.mxu0 %v1283
        %6087 = vmatmul.mubr.bf16.gmra.mxu0 %v1282
        %v6088 = vpop.f32.mrf.mxu0
        %v6089 = vadd.f32 0.0, %v6088
        %v6090 = vpop.f32.mrf.mxu0
        %v6091 = vadd.f32 0.0, %v6090
        %v6092 = vpop.f32.mrf.mxu0
        %v6093 = vadd.f32 0.0, %v6092
        %v6094 = vpop.f32.mrf.mxu0
        %v6095 = vadd.f32 0.0, %v6094
        %6096 = vdwg.mxu0
        %6097 = vmatprep.subr.bf16.mxu0 %v3411
        %6098 = vmatpush1.bf16.msra.mxu0 %v3410
        %6099 = vmatprep.subr.bf16.mxu0 %v3397
        %6100 = vmatpush1.bf16.msra.mxu0 %v3396
        %6101 = vmatprep.subr.bf16.mxu0 %v3383
        %6102 = vmatpush1.bf16.msra.mxu0 %v3382
        %6103 = vmatprep.subr.bf16.mxu0 %v3369
        %6104 = vmatpush1.bf16.msra.mxu0 %v3368
        %6105 = vmatprep.subr.bf16.mxu0 %v3355
        %6106 = vmatpush1.bf16.msra.mxu0 %v3354
        %6107 = vmatprep.subr.bf16.mxu0 %v3341
        %6108 = vmatpush1.bf16.msra.mxu0 %v3340
        %6109 = vmatprep.subr.bf16.mxu0 %v3327
        %6110 = vmatpush1.bf16.msra.mxu0 %v3326
        %6111 = vmatprep.subr.bf16.mxu0 %v3313
        %6112 = vmatpush1.bf16.msra.mxu0 %v3312
        %6113 = vmatprep.subr.bf16.mxu0 %v3523
        %6114 = vmatpush2.bf16.msra.mxu0 %v3522
        %6115 = vmatprep.subr.bf16.mxu0 %v3509
        %6116 = vmatpush2.bf16.msra.mxu0 %v3508
        %6117 = vmatprep.subr.bf16.mxu0 %v3495
        %6118 = vmatpush2.bf16.msra.mxu0 %v3494
        %6119 = vmatprep.subr.bf16.mxu0 %v3481
        %6120 = vmatpush2.bf16.msra.mxu0 %v3480
        %6121 = vmatprep.subr.bf16.mxu0 %v3467
        %6122 = vmatpush2.bf16.msra.mxu0 %v3466
        %6123 = vmatprep.subr.bf16.mxu0 %v3453
        %6124 = vmatpush2.bf16.msra.mxu0 %v3452
        %6125 = vmatprep.subr.bf16.mxu0 %v3439
        %6126 = vmatpush2.bf16.msra.mxu0 %v3438
        %6127 = vmatprep.subr.bf16.mxu0 %v3425
        %6128 = vmatpush2.bf16.msra.mxu0 %v3424
        %6129 = vmatprep.mubr.bf16.mxu0 %v1225
        %6130 = vmatmul.mubr.bf16.gmra.mxu0 %v1224
        %v6131 = vpop.f32.mrf.mxu0
        %v6132 = vadd.f32 %v5939, %v6131
        %v6133 = vpop.f32.mrf.mxu0
        %v6134 = vadd.f32 %v5941, %v6133
        %v6135 = vpop.f32.mrf.mxu0
        %v6136 = vadd.f32 %v5943, %v6135
        %v6137 = vpop.f32.mrf.mxu0
        %v6138 = vadd.f32 %v5945, %v6137
        %6139 = vmatprep.mubr.bf16.mxu0 %v1229
        %6140 = vmatmul.mubr.bf16.gmra.mxu0 %v1228
        %v6141 = vpop.f32.mrf.mxu0
        %v6142 = vadd.f32 %v5949, %v6141
        %v6143 = vpop.f32.mrf.mxu0
        %v6144 = vadd.f32 %v5951, %v6143
        %v6145 = vpop.f32.mrf.mxu0
        %v6146 = vadd.f32 %v5953, %v6145
        %v6147 = vpop.f32.mrf.mxu0
        %v6148 = vadd.f32 %v5955, %v6147
        %6149 = vmatprep.mubr.bf16.mxu0 %v1233
        %6150 = vmatmul.mubr.bf16.gmra.mxu0 %v1232
        %v6151 = vpop.f32.mrf.mxu0
        %v6152 = vadd.f32 %v5959, %v6151
        %v6153 = vpop.f32.mrf.mxu0
        %v6154 = vadd.f32 %v5961, %v6153
        %v6155 = vpop.f32.mrf.mxu0
        %v6156 = vadd.f32 %v5963, %v6155
        %v6157 = vpop.f32.mrf.mxu0
        %v6158 = vadd.f32 %v5965, %v6157
        %6159 = vmatprep.mubr.bf16.mxu0 %v1237
        %6160 = vmatmul.mubr.bf16.gmra.mxu0 %v1236
        %v6161 = vpop.f32.mrf.mxu0
        %v6162 = vadd.f32 %v5969, %v6161
        %v6163 = vpop.f32.mrf.mxu0
        %v6164 = vadd.f32 %v5971, %v6163
        %v6165 = vpop.f32.mrf.mxu0
        %v6166 = vadd.f32 %v5973, %v6165
        %v6167 = vpop.f32.mrf.mxu0
        %v6168 = vadd.f32 %v5975, %v6167
        %6169 = vmatprep.mubr.bf16.mxu0 %v1241
        %6170 = vmatmul.mubr.bf16.gmra.mxu0 %v1240
        %v6171 = vpop.f32.mrf.mxu0
        %v6172 = vadd.f32 %v5979, %v6171
        %v6173 = vpop.f32.mrf.mxu0
        %v6174 = vadd.f32 %v5981, %v6173
        %v6175 = vpop.f32.mrf.mxu0
        %v6176 = vadd.f32 %v5983, %v6175
        %v6177 = vpop.f32.mrf.mxu0
        %v6178 = vadd.f32 %v5985, %v6177
        %6179 = vmatprep.mubr.bf16.mxu0 %v1245
        %6180 = vmatmul.mubr.bf16.gmra.mxu0 %v1244
        %v6181 = vpop.f32.mrf.mxu0
        %v6182 = vadd.f32 %v5989, %v6181
        %v6183 = vpop.f32.mrf.mxu0
        %v6184 = vadd.f32 %v5991, %v6183
        %v6185 = vpop.f32.mrf.mxu0
        %v6186 = vadd.f32 %v5993, %v6185
        %v6187 = vpop.f32.mrf.mxu0
        %v6188 = vadd.f32 %v5995, %v6187
        %6189 = vmatprep.mubr.bf16.mxu0 %v1249
        %6190 = vmatmul.mubr.bf16.gmra.mxu0 %v1248
        %v6191 = vpop.f32.mrf.mxu0
        %v6192 = vadd.f32 %v5999, %v6191
        %v6193 = vpop.f32.mrf.mxu0
        %v6194 = vadd.f32 %v6001, %v6193
        %v6195 = vpop.f32.mrf.mxu0
        %v6196 = vadd.f32 %v6003, %v6195
        %v6197 = vpop.f32.mrf.mxu0
        %v6198 = vadd.f32 %v6005, %v6197
        %6199 = vmatprep.mubr.bf16.mxu0 %v1253
        %6200 = vmatmul.mubr.bf16.gmra.mxu0 %v1252
        %v6201 = vpop.f32.mrf.mxu0
        %v6202 = vadd.f32 %v6009, %v6201
        %v6203 = vpop.f32.mrf.mxu0
        %v6204 = vadd.f32 %v6011, %v6203
        %v6205 = vpop.f32.mrf.mxu0
        %v6206 = vadd.f32 %v6013, %v6205
        %v6207 = vpop.f32.mrf.mxu0
        %v6208 = vadd.f32 %v6015, %v6207
        %6209 = vmatprep.mubr.bf16.mxu0 %v1257
        %6210 = vmatmul.mubr.bf16.gmra.mxu0 %v1256
        %v6211 = vpop.f32.mrf.mxu0
        %v6212 = vadd.f32 %v6019, %v6211
        %v6213 = vpop.f32.mrf.mxu0
        %v6214 = vadd.f32 %v6021, %v6213
        %v6215 = vpop.f32.mrf.mxu0
        %v6216 = vadd.f32 %v6023, %v6215
        %v6217 = vpop.f32.mrf.mxu0
        %v6218 = vadd.f32 %v6025, %v6217
        %6219 = vmatprep.mubr.bf16.mxu0 %v1261
        %6220 = vmatmul.mubr.bf16.gmra.mxu0 %v1260
        %v6221 = vpop.f32.mrf.mxu0
        %v6222 = vadd.f32 %v6029, %v6221
        %v6223 = vpop.f32.mrf.mxu0
        %v6224 = vadd.f32 %v6031, %v6223
        %v6225 = vpop.f32.mrf.mxu0
        %v6226 = vadd.f32 %v6033, %v6225
        %v6227 = vpop.f32.mrf.mxu0
        %v6228 = vadd.f32 %v6035, %v6227
        %6229 = vmatprep.mubr.bf16.mxu0 %v1265
        %6230 = vmatmul.mubr.bf16.gmra.mxu0 %v1264
        %v6231 = vpop.f32.mrf.mxu0
        %v6232 = vadd.f32 %v6039, %v6231
        %v6233 = vpop.f32.mrf.mxu0
        %v6234 = vadd.f32 %v6041, %v6233
        %v6235 = vpop.f32.mrf.mxu0
        %v6236 = vadd.f32 %v6043, %v6235
        %v6237 = vpop.f32.mrf.mxu0
        %v6238 = vadd.f32 %v6045, %v6237
        %6239 = vmatprep.mubr.bf16.mxu0 %v1269
        %6240 = vmatmul.mubr.bf16.gmra.mxu0 %v1268
        %v6241 = vpop.f32.mrf.mxu0
        %v6242 = vadd.f32 %v6049, %v6241
        %v6243 = vpop.f32.mrf.mxu0
        %v6244 = vadd.f32 %v6051, %v6243
        %v6245 = vpop.f32.mrf.mxu0
        %v6246 = vadd.f32 %v6053, %v6245
        %v6247 = vpop.f32.mrf.mxu0
        %v6248 = vadd.f32 %v6055, %v6247
        %6249 = vmatprep.mubr.bf16.mxu0 %v1273
        %6250 = vmatmul.mubr.bf16.gmra.mxu0 %v1272
        %v6251 = vpop.f32.mrf.mxu0
        %v6252 = vadd.f32 %v6059, %v6251
        %v6253 = vpop.f32.mrf.mxu0
        %v6254 = vadd.f32 %v6061, %v6253
        %v6255 = vpop.f32.mrf.mxu0
        %v6256 = vadd.f32 %v6063, %v6255
        %v6257 = vpop.f32.mrf.mxu0
        %v6258 = vadd.f32 %v6065, %v6257
        %6259 = vmatprep.mubr.bf16.mxu0 %v1277
        %6260 = vmatmul.mubr.bf16.gmra.mxu0 %v1276
        %v6261 = vpop.f32.mrf.mxu0
        %v6262 = vadd.f32 %v6069, %v6261
        %v6263 = vpop.f32.mrf.mxu0
        %v6264 = vadd.f32 %v6071, %v6263
        %v6265 = vpop.f32.mrf.mxu0
        %v6266 = vadd.f32 %v6073, %v6265
        %v6267 = vpop.f32.mrf.mxu0
        %v6268 = vadd.f32 %v6075, %v6267
        %6269 = vmatprep.mubr.bf16.mxu0 %v1281
        %6270 = vmatmul.mubr.bf16.gmra.mxu0 %v1280
        %v6271 = vpop.f32.mrf.mxu0
        %v6272 = vadd.f32 %v6079, %v6271
        %v6273 = vpop.f32.mrf.mxu0
        %v6274 = vadd.f32 %v6081, %v6273
        %v6275 = vpop.f32.mrf.mxu0
        %v6276 = vadd.f32 %v6083, %v6275
        %v6277 = vpop.f32.mrf.mxu0
        %v6278 = vadd.f32 %v6085, %v6277
        %6279 = vmatprep.mubr.bf16.mxu0 %v1285
        %6280 = vmatmul.mubr.bf16.gmra.mxu0 %v1284
        %v6281 = vpop.f32.mrf.mxu0
        %v6282 = vadd.f32 %v6089, %v6281
        %v6283 = vpop.f32.mrf.mxu0
        %v6284 = vadd.f32 %v6091, %v6283
        %v6285 = vpop.f32.mrf.mxu0
        %v6286 = vadd.f32 %v6093, %v6285
        %v6287 = vpop.f32.mrf.mxu0
        %v6288 = vadd.f32 %v6095, %v6287
        %6289 = vdwg.mxu0
        %6290 = vmatprep.subr.bf16.mxu0 %v3189
        %6291 = vmatpush1.bf16.msra.mxu0 %v3188
        %6292 = vmatprep.subr.bf16.mxu0 %v3175
        %6293 = vmatpush1.bf16.msra.mxu0 %v3174
        %6294 = vmatprep.subr.bf16.mxu0 %v3161
        %6295 = vmatpush1.bf16.msra.mxu0 %v3160
        %6296 = vmatprep.subr.bf16.mxu0 %v3147
        %6297 = vmatpush1.bf16.msra.mxu0 %v3146
        %6298 = vmatprep.subr.bf16.mxu0 %v3133
        %6299 = vmatpush1.bf16.msra.mxu0 %v3132
        %6300 = vmatprep.subr.bf16.mxu0 %v3119
        %6301 = vmatpush1.bf16.msra.mxu0 %v3118
        %6302 = vmatprep.subr.bf16.mxu0 %v3105
        %6303 = vmatpush1.bf16.msra.mxu0 %v3104
        %6304 = vmatprep.subr.bf16.mxu0 %v3091
        %6305 = vmatpush1.bf16.msra.mxu0 %v3090
        %6306 = vmatprep.subr.bf16.mxu0 %v3301
        %6307 = vmatpush2.bf16.msra.mxu0 %v3300
        %6308 = vmatprep.subr.bf16.mxu0 %v3287
        %6309 = vmatpush2.bf16.msra.mxu0 %v3286
        %6310 = vmatprep.subr.bf16.mxu0 %v3273
        %6311 = vmatpush2.bf16.msra.mxu0 %v3272
        %6312 = vmatprep.subr.bf16.mxu0 %v3259
        %6313 = vmatpush2.bf16.msra.mxu0 %v3258
        %6314 = vmatprep.subr.bf16.mxu0 %v3245
        %6315 = vmatpush2.bf16.msra.mxu0 %v3244
        %6316 = vmatprep.subr.bf16.mxu0 %v3231
        %6317 = vmatpush2.bf16.msra.mxu0 %v3230
        %6318 = vmatprep.subr.bf16.mxu0 %v3217
        %6319 = vmatpush2.bf16.msra.mxu0 %v3216
        %6320 = vmatprep.subr.bf16.mxu0 %v3203
        %6321 = vmatpush2.bf16.msra.mxu0 %v3202
        %6322 = vmatprep.mubr.bf16.mxu0 %v1223
        %6323 = vmatmul.mubr.bf16.gmra.mxu0 %v1222
        %v6324 = vpop.f32.mrf.mxu0
        %v6325 = vadd.f32 0.0, %v6324
        %v6326 = vpop.f32.mrf.mxu0
        %v6327 = vadd.f32 0.0, %v6326
        %v6328 = vpop.f32.mrf.mxu0
        %v6329 = vadd.f32 0.0, %v6328
        %v6330 = vpop.f32.mrf.mxu0
        %v6331 = vadd.f32 0.0, %v6330
        %6332 = vmatprep.mubr.bf16.mxu0 %v1227
        %6333 = vmatmul.mubr.bf16.gmra.mxu0 %v1226
        %v6334 = vpop.f32.mrf.mxu0
        %v6335 = vadd.f32 0.0, %v6334
        %v6336 = vpop.f32.mrf.mxu0
        %v6337 = vadd.f32 0.0, %v6336
        %v6338 = vpop.f32.mrf.mxu0
        %v6339 = vadd.f32 0.0, %v6338
        %v6340 = vpop.f32.mrf.mxu0
        %v6341 = vadd.f32 0.0, %v6340
        %6342 = vmatprep.mubr.bf16.mxu0 %v1231
        %6343 = vmatmul.mubr.bf16.gmra.mxu0 %v1230
        %v6344 = vpop.f32.mrf.mxu0
        %v6345 = vadd.f32 0.0, %v6344
        %v6346 = vpop.f32.mrf.mxu0
        %v6347 = vadd.f32 0.0, %v6346
        %v6348 = vpop.f32.mrf.mxu0
        %v6349 = vadd.f32 0.0, %v6348
        %v6350 = vpop.f32.mrf.mxu0
        %v6351 = vadd.f32 0.0, %v6350
        %6352 = vmatprep.mubr.bf16.mxu0 %v1235
        %6353 = vmatmul.mubr.bf16.gmra.mxu0 %v1234
        %v6354 = vpop.f32.mrf.mxu0
        %v6355 = vadd.f32 0.0, %v6354
        %v6356 = vpop.f32.mrf.mxu0
        %v6357 = vadd.f32 0.0, %v6356
        %v6358 = vpop.f32.mrf.mxu0
        %v6359 = vadd.f32 0.0, %v6358
        %v6360 = vpop.f32.mrf.mxu0
        %v6361 = vadd.f32 0.0, %v6360
        %6362 = vmatprep.mubr.bf16.mxu0 %v1239
        %6363 = vmatmul.mubr.bf16.gmra.mxu0 %v1238
        %v6364 = vpop.f32.mrf.mxu0
        %v6365 = vadd.f32 0.0, %v6364
        %v6366 = vpop.f32.mrf.mxu0
        %v6367 = vadd.f32 0.0, %v6366
        %v6368 = vpop.f32.mrf.mxu0
        %v6369 = vadd.f32 0.0, %v6368
        %v6370 = vpop.f32.mrf.mxu0
        %v6371 = vadd.f32 0.0, %v6370
        %6372 = vmatprep.mubr.bf16.mxu0 %v1243
        %6373 = vmatmul.mubr.bf16.gmra.mxu0 %v1242
        %v6374 = vpop.f32.mrf.mxu0
        %v6375 = vadd.f32 0.0, %v6374
        %v6376 = vpop.f32.mrf.mxu0
        %v6377 = vadd.f32 0.0, %v6376
        %v6378 = vpop.f32.mrf.mxu0
        %v6379 = vadd.f32 0.0, %v6378
        %v6380 = vpop.f32.mrf.mxu0
        %v6381 = vadd.f32 0.0, %v6380
        %6382 = vmatprep.mubr.bf16.mxu0 %v1247
        %6383 = vmatmul.mubr.bf16.gmra.mxu0 %v1246
        %v6384 = vpop.f32.mrf.mxu0
        %v6385 = vadd.f32 0.0, %v6384
        %v6386 = vpop.f32.mrf.mxu0
        %v6387 = vadd.f32 0.0, %v6386
        %v6388 = vpop.f32.mrf.mxu0
        %v6389 = vadd.f32 0.0, %v6388
        %v6390 = vpop.f32.mrf.mxu0
        %v6391 = vadd.f32 0.0, %v6390
        %6392 = vmatprep.mubr.bf16.mxu0 %v1251
        %6393 = vmatmul.mubr.bf16.gmra.mxu0 %v1250
        %v6394 = vpop.f32.mrf.mxu0
        %v6395 = vadd.f32 0.0, %v6394
        %v6396 = vpop.f32.mrf.mxu0
        %v6397 = vadd.f32 0.0, %v6396
        %v6398 = vpop.f32.mrf.mxu0
        %v6399 = vadd.f32 0.0, %v6398
        %v6400 = vpop.f32.mrf.mxu0
        %v6401 = vadd.f32 0.0, %v6400
        %6402 = vmatprep.mubr.bf16.mxu0 %v1255
        %6403 = vmatmul.mubr.bf16.gmra.mxu0 %v1254
        %v6404 = vpop.f32.mrf.mxu0
        %v6405 = vadd.f32 0.0, %v6404
        %v6406 = vpop.f32.mrf.mxu0
        %v6407 = vadd.f32 0.0, %v6406
        %v6408 = vpop.f32.mrf.mxu0
        %v6409 = vadd.f32 0.0, %v6408
        %v6410 = vpop.f32.mrf.mxu0
        %v6411 = vadd.f32 0.0, %v6410
        %6412 = vmatprep.mubr.bf16.mxu0 %v1259
        %6413 = vmatmul.mubr.bf16.gmra.mxu0 %v1258
        %v6414 = vpop.f32.mrf.mxu0
        %v6415 = vadd.f32 0.0, %v6414
        %v6416 = vpop.f32.mrf.mxu0
        %v6417 = vadd.f32 0.0, %v6416
        %v6418 = vpop.f32.mrf.mxu0
        %v6419 = vadd.f32 0.0, %v6418
        %v6420 = vpop.f32.mrf.mxu0
        %v6421 = vadd.f32 0.0, %v6420
        %6422 = vmatprep.mubr.bf16.mxu0 %v1263
        %6423 = vmatmul.mubr.bf16.gmra.mxu0 %v1262
        %v6424 = vpop.f32.mrf.mxu0
        %v6425 = vadd.f32 0.0, %v6424
        %v6426 = vpop.f32.mrf.mxu0
        %v6427 = vadd.f32 0.0, %v6426
        %v6428 = vpop.f32.mrf.mxu0
        %v6429 = vadd.f32 0.0, %v6428
        %v6430 = vpop.f32.mrf.mxu0
        %v6431 = vadd.f32 0.0, %v6430
        %6432 = vmatprep.mubr.bf16.mxu0 %v1267
        %6433 = vmatmul.mubr.bf16.gmra.mxu0 %v1266
        %v6434 = vpop.f32.mrf.mxu0
        %v6435 = vadd.f32 0.0, %v6434
        %v6436 = vpop.f32.mrf.mxu0
        %v6437 = vadd.f32 0.0, %v6436
        %v6438 = vpop.f32.mrf.mxu0
        %v6439 = vadd.f32 0.0, %v6438
        %v6440 = vpop.f32.mrf.mxu0
        %v6441 = vadd.f32 0.0, %v6440
        %6442 = vmatprep.mubr.bf16.mxu0 %v1271
        %6443 = vmatmul.mubr.bf16.gmra.mxu0 %v1270
        %v6444 = vpop.f32.mrf.mxu0
        %v6445 = vadd.f32 0.0, %v6444
        %v6446 = vpop.f32.mrf.mxu0
        %v6447 = vadd.f32 0.0, %v6446
        %v6448 = vpop.f32.mrf.mxu0
        %v6449 = vadd.f32 0.0, %v6448
        %v6450 = vpop.f32.mrf.mxu0
        %v6451 = vadd.f32 0.0, %v6450
        %6452 = vmatprep.mubr.bf16.mxu0 %v1275
        %6453 = vmatmul.mubr.bf16.gmra.mxu0 %v1274
        %v6454 = vpop.f32.mrf.mxu0
        %v6455 = vadd.f32 0.0, %v6454
        %v6456 = vpop.f32.mrf.mxu0
        %v6457 = vadd.f32 0.0, %v6456
        %v6458 = vpop.f32.mrf.mxu0
        %v6459 = vadd.f32 0.0, %v6458
        %v6460 = vpop.f32.mrf.mxu0
        %v6461 = vadd.f32 0.0, %v6460
        %6462 = vmatprep.mubr.bf16.mxu0 %v1279
        %6463 = vmatmul.mubr.bf16.gmra.mxu0 %v1278
        %v6464 = vpop.f32.mrf.mxu0
        %v6465 = vadd.f32 0.0, %v6464
        %v6466 = vpop.f32.mrf.mxu0
        %v6467 = vadd.f32 0.0, %v6466
        %v6468 = vpop.f32.mrf.mxu0
        %v6469 = vadd.f32 0.0, %v6468
        %v6470 = vpop.f32.mrf.mxu0
        %v6471 = vadd.f32 0.0, %v6470
        %6472 = vmatprep.mubr.bf16.mxu0 %v1283
        %6473 = vmatmul.mubr.bf16.gmra.mxu0 %v1282
        %v6474 = vpop.f32.mrf.mxu0
        %v6475 = vadd.f32 0.0, %v6474
        %v6476 = vpop.f32.mrf.mxu0
        %v6477 = vadd.f32 0.0, %v6476
        %v6478 = vpop.f32.mrf.mxu0
        %v6479 = vadd.f32 0.0, %v6478
        %v6480 = vpop.f32.mrf.mxu0
        %v6481 = vadd.f32 0.0, %v6480
        %6482 = vdwg.mxu0
        %6483 = vmatprep.subr.bf16.mxu0 %v3413
        %6484 = vmatpush1.bf16.msra.mxu0 %v3412
        %6485 = vmatprep.subr.bf16.mxu0 %v3399
        %6486 = vmatpush1.bf16.msra.mxu0 %v3398
        %6487 = vmatprep.subr.bf16.mxu0 %v3385
        %6488 = vmatpush1.bf16.msra.mxu0 %v3384
        %6489 = vmatprep.subr.bf16.mxu0 %v3371
        %6490 = vmatpush1.bf16.msra.mxu0 %v3370
        %6491 = vmatprep.subr.bf16.mxu0 %v3357
        %6492 = vmatpush1.bf16.msra.mxu0 %v3356
        %6493 = vmatprep.subr.bf16.mxu0 %v3343
        %6494 = vmatpush1.bf16.msra.mxu0 %v3342
        %6495 = vmatprep.subr.bf16.mxu0 %v3329
        %6496 = vmatpush1.bf16.msra.mxu0 %v3328
        %6497 = vmatprep.subr.bf16.mxu0 %v3315
        %6498 = vmatpush1.bf16.msra.mxu0 %v3314
        %6499 = vmatprep.subr.bf16.mxu0 %v3525
        %6500 = vmatpush2.bf16.msra.mxu0 %v3524
        %6501 = vmatprep.subr.bf16.mxu0 %v3511
        %6502 = vmatpush2.bf16.msra.mxu0 %v3510
        %6503 = vmatprep.subr.bf16.mxu0 %v3497
        %6504 = vmatpush2.bf16.msra.mxu0 %v3496
        %6505 = vmatprep.subr.bf16.mxu0 %v3483
        %6506 = vmatpush2.bf16.msra.mxu0 %v3482
        %6507 = vmatprep.subr.bf16.mxu0 %v3469
        %6508 = vmatpush2.bf16.msra.mxu0 %v3468
        %6509 = vmatprep.subr.bf16.mxu0 %v3455
        %6510 = vmatpush2.bf16.msra.mxu0 %v3454
        %6511 = vmatprep.subr.bf16.mxu0 %v3441
        %6512 = vmatpush2.bf16.msra.mxu0 %v3440
        %6513 = vmatprep.subr.bf16.mxu0 %v3427
        %6514 = vmatpush2.bf16.msra.mxu0 %v3426
        %6515 = vmatprep.mubr.bf16.mxu0 %v1225
        %6516 = vmatmul.mubr.bf16.gmra.mxu0 %v1224
        %v6517 = vpop.f32.mrf.mxu0
        %v6518 = vadd.f32 %v6325, %v6517
        %v6519 = vpop.f32.mrf.mxu0
        %v6520 = vadd.f32 %v6327, %v6519
        %v6521 = vpop.f32.mrf.mxu0
        %v6522 = vadd.f32 %v6329, %v6521
        %v6523 = vpop.f32.mrf.mxu0
        %v6524 = vadd.f32 %v6331, %v6523
        %6525 = vmatprep.mubr.bf16.mxu0 %v1229
        %6526 = vmatmul.mubr.bf16.gmra.mxu0 %v1228
        %v6527 = vpop.f32.mrf.mxu0
        %v6528 = vadd.f32 %v6335, %v6527
        %v6529 = vpop.f32.mrf.mxu0
        %v6530 = vadd.f32 %v6337, %v6529
        %v6531 = vpop.f32.mrf.mxu0
        %v6532 = vadd.f32 %v6339, %v6531
        %v6533 = vpop.f32.mrf.mxu0
        %v6534 = vadd.f32 %v6341, %v6533
        %6535 = vmatprep.mubr.bf16.mxu0 %v1233
        %6536 = vmatmul.mubr.bf16.gmra.mxu0 %v1232
        %v6537 = vpop.f32.mrf.mxu0
        %v6538 = vadd.f32 %v6345, %v6537
        %v6539 = vpop.f32.mrf.mxu0
        %v6540 = vadd.f32 %v6347, %v6539
        %v6541 = vpop.f32.mrf.mxu0
        %v6542 = vadd.f32 %v6349, %v6541
        %v6543 = vpop.f32.mrf.mxu0
        %v6544 = vadd.f32 %v6351, %v6543
        %6545 = vmatprep.mubr.bf16.mxu0 %v1237
        %6546 = vmatmul.mubr.bf16.gmra.mxu0 %v1236
        %v6547 = vpop.f32.mrf.mxu0
        %v6548 = vadd.f32 %v6355, %v6547
        %v6549 = vpop.f32.mrf.mxu0
        %v6550 = vadd.f32 %v6357, %v6549
        %v6551 = vpop.f32.mrf.mxu0
        %v6552 = vadd.f32 %v6359, %v6551
        %v6553 = vpop.f32.mrf.mxu0
        %v6554 = vadd.f32 %v6361, %v6553
        %6555 = vmatprep.mubr.bf16.mxu0 %v1241
        %6556 = vmatmul.mubr.bf16.gmra.mxu0 %v1240
        %v6557 = vpop.f32.mrf.mxu0
        %v6558 = vadd.f32 %v6365, %v6557
        %v6559 = vpop.f32.mrf.mxu0
        %v6560 = vadd.f32 %v6367, %v6559
        %v6561 = vpop.f32.mrf.mxu0
        %v6562 = vadd.f32 %v6369, %v6561
        %v6563 = vpop.f32.mrf.mxu0
        %v6564 = vadd.f32 %v6371, %v6563
        %6565 = vmatprep.mubr.bf16.mxu0 %v1245
        %6566 = vmatmul.mubr.bf16.gmra.mxu0 %v1244
        %v6567 = vpop.f32.mrf.mxu0
        %v6568 = vadd.f32 %v6375, %v6567
        %v6569 = vpop.f32.mrf.mxu0
        %v6570 = vadd.f32 %v6377, %v6569
        %v6571 = vpop.f32.mrf.mxu0
        %v6572 = vadd.f32 %v6379, %v6571
        %v6573 = vpop.f32.mrf.mxu0
        %v6574 = vadd.f32 %v6381, %v6573
        %6575 = vmatprep.mubr.bf16.mxu0 %v1249
        %6576 = vmatmul.mubr.bf16.gmra.mxu0 %v1248
        %v6577 = vpop.f32.mrf.mxu0
        %v6578 = vadd.f32 %v6385, %v6577
        %v6579 = vpop.f32.mrf.mxu0
        %v6580 = vadd.f32 %v6387, %v6579
        %v6581 = vpop.f32.mrf.mxu0
        %v6582 = vadd.f32 %v6389, %v6581
        %v6583 = vpop.f32.mrf.mxu0
        %v6584 = vadd.f32 %v6391, %v6583
        %6585 = vmatprep.mubr.bf16.mxu0 %v1253
        %6586 = vmatmul.mubr.bf16.gmra.mxu0 %v1252
        %v6587 = vpop.f32.mrf.mxu0
        %v6588 = vadd.f32 %v6395, %v6587
        %v6589 = vpop.f32.mrf.mxu0
        %v6590 = vadd.f32 %v6397, %v6589
        %v6591 = vpop.f32.mrf.mxu0
        %v6592 = vadd.f32 %v6399, %v6591
        %v6593 = vpop.f32.mrf.mxu0
        %v6594 = vadd.f32 %v6401, %v6593
        %6595 = vmatprep.mubr.bf16.mxu0 %v1257
        %6596 = vmatmul.mubr.bf16.gmra.mxu0 %v1256
        %v6597 = vpop.f32.mrf.mxu0
        %v6598 = vadd.f32 %v6405, %v6597
        %v6599 = vpop.f32.mrf.mxu0
        %v6600 = vadd.f32 %v6407, %v6599
        %v6601 = vpop.f32.mrf.mxu0
        %v6602 = vadd.f32 %v6409, %v6601
        %v6603 = vpop.f32.mrf.mxu0
        %v6604 = vadd.f32 %v6411, %v6603
        %6605 = vmatprep.mubr.bf16.mxu0 %v1261
        %6606 = vmatmul.mubr.bf16.gmra.mxu0 %v1260
        %v6607 = vpop.f32.mrf.mxu0
        %v6608 = vadd.f32 %v6415, %v6607
        %v6609 = vpop.f32.mrf.mxu0
        %v6610 = vadd.f32 %v6417, %v6609
        %v6611 = vpop.f32.mrf.mxu0
        %v6612 = vadd.f32 %v6419, %v6611
        %v6613 = vpop.f32.mrf.mxu0
        %v6614 = vadd.f32 %v6421, %v6613
        %6615 = vmatprep.mubr.bf16.mxu0 %v1265
        %6616 = vmatmul.mubr.bf16.gmra.mxu0 %v1264
        %v6617 = vpop.f32.mrf.mxu0
        %v6618 = vadd.f32 %v6425, %v6617
        %v6619 = vpop.f32.mrf.mxu0
        %v6620 = vadd.f32 %v6427, %v6619
        %v6621 = vpop.f32.mrf.mxu0
        %v6622 = vadd.f32 %v6429, %v6621
        %v6623 = vpop.f32.mrf.mxu0
        %v6624 = vadd.f32 %v6431, %v6623
        %6625 = vmatprep.mubr.bf16.mxu0 %v1269
        %6626 = vmatmul.mubr.bf16.gmra.mxu0 %v1268
        %v6627 = vpop.f32.mrf.mxu0
        %v6628 = vadd.f32 %v6435, %v6627
        %v6629 = vpop.f32.mrf.mxu0
        %v6630 = vadd.f32 %v6437, %v6629
        %v6631 = vpop.f32.mrf.mxu0
        %v6632 = vadd.f32 %v6439, %v6631
        %v6633 = vpop.f32.mrf.mxu0
        %v6634 = vadd.f32 %v6441, %v6633
        %6635 = vmatprep.mubr.bf16.mxu0 %v1273
        %6636 = vmatmul.mubr.bf16.gmra.mxu0 %v1272
        %v6637 = vpop.f32.mrf.mxu0
        %v6638 = vadd.f32 %v6445, %v6637
        %v6639 = vpop.f32.mrf.mxu0
        %v6640 = vadd.f32 %v6447, %v6639
        %v6641 = vpop.f32.mrf.mxu0
        %v6642 = vadd.f32 %v6449, %v6641
        %v6643 = vpop.f32.mrf.mxu0
        %v6644 = vadd.f32 %v6451, %v6643
        %6645 = vmatprep.mubr.bf16.mxu0 %v1277
        %6646 = vmatmul.mubr.bf16.gmra.mxu0 %v1276
        %v6647 = vpop.f32.mrf.mxu0
        %v6648 = vadd.f32 %v6455, %v6647
        %v6649 = vpop.f32.mrf.mxu0
        %v6650 = vadd.f32 %v6457, %v6649
        %v6651 = vpop.f32.mrf.mxu0
        %v6652 = vadd.f32 %v6459, %v6651
        %v6653 = vpop.f32.mrf.mxu0
        %v6654 = vadd.f32 %v6461, %v6653
        %6655 = vmatprep.mubr.bf16.mxu0 %v1281
        %6656 = vmatmul.mubr.bf16.gmra.mxu0 %v1280
        %v6657 = vpop.f32.mrf.mxu0
        %v6658 = vadd.f32 %v6465, %v6657
        %v6659 = vpop.f32.mrf.mxu0
        %v6660 = vadd.f32 %v6467, %v6659
        %v6661 = vpop.f32.mrf.mxu0
        %v6662 = vadd.f32 %v6469, %v6661
        %v6663 = vpop.f32.mrf.mxu0
        %v6664 = vadd.f32 %v6471, %v6663
        %6665 = vmatprep.mubr.bf16.mxu0 %v1285
        %6666 = vmatmul.mubr.bf16.gmra.mxu0 %v1284
        %v6667 = vpop.f32.mrf.mxu0
        %v6668 = vadd.f32 %v6475, %v6667
        %v6669 = vpop.f32.mrf.mxu0
        %v6670 = vadd.f32 %v6477, %v6669
        %v6671 = vpop.f32.mrf.mxu0
        %v6672 = vadd.f32 %v6479, %v6671
        %v6673 = vpop.f32.mrf.mxu0
        %v6674 = vadd.f32 %v6481, %v6673
        %6675 = vdwg.mxu0
        %v6676 = vld [vmem:[#allocation8] sm:$0xff]
        %v6677 = vld [vmem:[#allocation8 + $0x8] sm:$0xff]
        %v6678 = vld [vmem:[#allocation8 + $0x10] sm:$0xff]
        %v6679 = vld [vmem:[#allocation8 + $0x18] sm:$0xff]
        %v6680 = vld [vmem:[#allocation8 + $0x20] sm:$0xff]
        %v6681 = vld [vmem:[#allocation8 + $0x28] sm:$0xff]
        %v6682 = vld [vmem:[#allocation8 + $0x30] sm:$0xff]
        %v6683 = vld [vmem:[#allocation8 + $0x38] sm:$0xff]
        %v6684 = vld [vmem:[#allocation8 + $0x40] sm:$0xff]
        %v6685 = vld [vmem:[#allocation8 + $0x48] sm:$0xff]
        %v6686 = vld [vmem:[#allocation8 + $0x50] sm:$0xff]
        %v6687 = vld [vmem:[#allocation8 + $0x58] sm:$0xff]
        %v6688 = vld [vmem:[#allocation8 + $0x60] sm:$0xff]
        %v6689 = vld [vmem:[#allocation8 + $0x68] sm:$0xff]
        %v6690 = vld [vmem:[#allocation8 + $0x70] sm:$0xff]
        %v6691 = vld [vmem:[#allocation8 + $0x78] sm:$0xff]
        %v6692 = vld [vmem:[#allocation8 + $0x80] sm:$0xff]
        %v6693 = vld [vmem:[#allocation8 + $0x88] sm:$0xff]
        %v6694 = vld [vmem:[#allocation8 + $0x90] sm:$0xff]
        %v6695 = vld [vmem:[#allocation8 + $0x98] sm:$0xff]
        %v6696 = vld [vmem:[#allocation8 + $0xa0] sm:$0xff]
        %v6697 = vld [vmem:[#allocation8 + $0xa8] sm:$0xff]
        %v6698 = vld [vmem:[#allocation8 + $0xb0] sm:$0xff]
        %v6699 = vld [vmem:[#allocation8 + $0xb8] sm:$0xff]
        %v6700 = vld [vmem:[#allocation8 + $0xc0] sm:$0xff]
        %v6701 = vld [vmem:[#allocation8 + $0xc8] sm:$0xff]
        %v6702 = vld [vmem:[#allocation8 + $0xd0] sm:$0xff]
        %v6703 = vld [vmem:[#allocation8 + $0xd8] sm:$0xff]
        %v6704 = vld [vmem:[#allocation8 + $0xe0] sm:$0xff]
        %v6705 = vld [vmem:[#allocation8 + $0xe8] sm:$0xff]
        %v6706 = vld [vmem:[#allocation8 + $0xf0] sm:$0xff]
        %v6707 = vld [vmem:[#allocation8 + $0xf8] sm:$0xff]
        %v6708 = vld [vmem:[#allocation8 + $0x100] sm:$0xff]
        %v6709 = vld [vmem:[#allocation8 + $0x108] sm:$0xff]
        %v6710 = vld [vmem:[#allocation8 + $0x110] sm:$0xff]
        %v6711 = vld [vmem:[#allocation8 + $0x118] sm:$0xff]
        %v6712 = vld [vmem:[#allocation8 + $0x120] sm:$0xff]
        %v6713 = vld [vmem:[#allocation8 + $0x128] sm:$0xff]
        %v6714 = vld [vmem:[#allocation8 + $0x130] sm:$0xff]
        %v6715 = vld [vmem:[#allocation8 + $0x138] sm:$0xff]
        %v6716 = vld [vmem:[#allocation8 + $0x140] sm:$0xff]
        %v6717 = vld [vmem:[#allocation8 + $0x148] sm:$0xff]
        %v6718 = vld [vmem:[#allocation8 + $0x150] sm:$0xff]
        %v6719 = vld [vmem:[#allocation8 + $0x158] sm:$0xff]
        %v6720 = vld [vmem:[#allocation8 + $0x160] sm:$0xff]
        %v6721 = vld [vmem:[#allocation8 + $0x168] sm:$0xff]
        %v6722 = vld [vmem:[#allocation8 + $0x170] sm:$0xff]
        %v6723 = vld [vmem:[#allocation8 + $0x178] sm:$0xff]
        %v6724 = vld [vmem:[#allocation8 + $0x180] sm:$0xff]
        %v6725 = vld [vmem:[#allocation8 + $0x188] sm:$0xff]
        %v6726 = vld [vmem:[#allocation8 + $0x190] sm:$0xff]
        %v6727 = vld [vmem:[#allocation8 + $0x198] sm:$0xff]
        %v6728 = vld [vmem:[#allocation8 + $0x1a0] sm:$0xff]
        %v6729 = vld [vmem:[#allocation8 + $0x1a8] sm:$0xff]
        %v6730 = vld [vmem:[#allocation8 + $0x1b0] sm:$0xff]
        %v6731 = vld [vmem:[#allocation8 + $0x1b8] sm:$0xff]
        %v6732 = vld [vmem:[#allocation8 + $0x1c0] sm:$0xff]
        %v6733 = vld [vmem:[#allocation8 + $0x1c8] sm:$0xff]
        %v6734 = vld [vmem:[#allocation8 + $0x1d0] sm:$0xff]
        %v6735 = vld [vmem:[#allocation8 + $0x1d8] sm:$0xff]
        %v6736 = vld [vmem:[#allocation8 + $0x1e0] sm:$0xff]
        %v6737 = vld [vmem:[#allocation8 + $0x1e8] sm:$0xff]
        %v6738 = vld [vmem:[#allocation8 + $0x1f0] sm:$0xff]
        %v6739 = vld [vmem:[#allocation8 + $0x1f8] sm:$0xff]
        %v6740 = vld [vmem:[#allocation8 + $0x200] sm:$0xff]
        %v6741 = vld [vmem:[#allocation8 + $0x208] sm:$0xff]
        %v6742 = vld [vmem:[#allocation8 + $0x210] sm:$0xff]
        %v6743 = vld [vmem:[#allocation8 + $0x218] sm:$0xff]
        %v6744 = vld [vmem:[#allocation8 + $0x220] sm:$0xff]
        %v6745 = vld [vmem:[#allocation8 + $0x228] sm:$0xff]
        %v6746 = vld [vmem:[#allocation8 + $0x230] sm:$0xff]
        %v6747 = vld [vmem:[#allocation8 + $0x238] sm:$0xff]
        %v6748 = vld [vmem:[#allocation8 + $0x240] sm:$0xff]
        %v6749 = vld [vmem:[#allocation8 + $0x248] sm:$0xff]
        %v6750 = vld [vmem:[#allocation8 + $0x250] sm:$0xff]
        %v6751 = vld [vmem:[#allocation8 + $0x258] sm:$0xff]
        %v6752 = vld [vmem:[#allocation8 + $0x260] sm:$0xff]
        %v6753 = vld [vmem:[#allocation8 + $0x268] sm:$0xff]
        %v6754 = vld [vmem:[#allocation8 + $0x270] sm:$0xff]
        %v6755 = vld [vmem:[#allocation8 + $0x278] sm:$0xff]
        %v6756 = vld [vmem:[#allocation8 + $0x280] sm:$0xff]
        %v6757 = vld [vmem:[#allocation8 + $0x288] sm:$0xff]
        %v6758 = vld [vmem:[#allocation8 + $0x290] sm:$0xff]
        %v6759 = vld [vmem:[#allocation8 + $0x298] sm:$0xff]
        %v6760 = vld [vmem:[#allocation8 + $0x2a0] sm:$0xff]
        %v6761 = vld [vmem:[#allocation8 + $0x2a8] sm:$0xff]
        %v6762 = vld [vmem:[#allocation8 + $0x2b0] sm:$0xff]
        %v6763 = vld [vmem:[#allocation8 + $0x2b8] sm:$0xff]
        %v6764 = vld [vmem:[#allocation8 + $0x2c0] sm:$0xff]
        %v6765 = vld [vmem:[#allocation8 + $0x2c8] sm:$0xff]
        %v6766 = vld [vmem:[#allocation8 + $0x2d0] sm:$0xff]
        %v6767 = vld [vmem:[#allocation8 + $0x2d8] sm:$0xff]
        %v6768 = vld [vmem:[#allocation8 + $0x2e0] sm:$0xff]
        %v6769 = vld [vmem:[#allocation8 + $0x2e8] sm:$0xff]
        %v6770 = vld [vmem:[#allocation8 + $0x2f0] sm:$0xff]
        %v6771 = vld [vmem:[#allocation8 + $0x2f8] sm:$0xff]
        %v6772 = vld [vmem:[#allocation8 + $0x300] sm:$0xff]
        %v6773 = vld [vmem:[#allocation8 + $0x308] sm:$0xff]
        %v6774 = vld [vmem:[#allocation8 + $0x310] sm:$0xff]
        %v6775 = vld [vmem:[#allocation8 + $0x318] sm:$0xff]
        %v6776 = vld [vmem:[#allocation8 + $0x320] sm:$0xff]
        %v6777 = vld [vmem:[#allocation8 + $0x328] sm:$0xff]
        %v6778 = vld [vmem:[#allocation8 + $0x330] sm:$0xff]
        %v6779 = vld [vmem:[#allocation8 + $0x338] sm:$0xff]
        %v6780 = vld [vmem:[#allocation8 + $0x340] sm:$0xff]
        %v6781 = vld [vmem:[#allocation8 + $0x348] sm:$0xff]
        %v6782 = vld [vmem:[#allocation8 + $0x350] sm:$0xff]
        %v6783 = vld [vmem:[#allocation8 + $0x358] sm:$0xff]
        %v6784 = vld [vmem:[#allocation8 + $0x360] sm:$0xff]
        %v6785 = vld [vmem:[#allocation8 + $0x368] sm:$0xff]
        %v6786 = vld [vmem:[#allocation8 + $0x370] sm:$0xff]
        %v6787 = vld [vmem:[#allocation8 + $0x378] sm:$0xff]
        %v6788 = vld [vmem:[#allocation8 + $0x380] sm:$0xff]
        %v6789 = vld [vmem:[#allocation8 + $0x388] sm:$0xff]
        %v6790 = vld [vmem:[#allocation8 + $0x390] sm:$0xff]
        %v6791 = vld [vmem:[#allocation8 + $0x398] sm:$0xff]
        %v6792 = vld [vmem:[#allocation8 + $0x3a0] sm:$0xff]
        %v6793 = vld [vmem:[#allocation8 + $0x3a8] sm:$0xff]
        %v6794 = vld [vmem:[#allocation8 + $0x3b0] sm:$0xff]
        %v6795 = vld [vmem:[#allocation8 + $0x3b8] sm:$0xff]
        %v6796 = vld [vmem:[#allocation8 + $0x3c0] sm:$0xff]
        %v6797 = vld [vmem:[#allocation8 + $0x3c8] sm:$0xff]
        %v6798 = vld [vmem:[#allocation8 + $0x3d0] sm:$0xff]
        %v6799 = vld [vmem:[#allocation8 + $0x3d8] sm:$0xff]
        %v6800 = vld [vmem:[#allocation8 + $0x3e0] sm:$0xff]
        %v6801 = vld [vmem:[#allocation8 + $0x3e8] sm:$0xff]
        %v6802 = vld [vmem:[#allocation8 + $0x3f0] sm:$0xff]
        %v6803 = vld [vmem:[#allocation8 + $0x3f8] sm:$0xff]
        %v6804 = vld [vmem:[#allocation8 + $0x400] sm:$0xff]
        %v6805 = vld [vmem:[#allocation8 + $0x408] sm:$0xff]
        %v6806 = vld [vmem:[#allocation8 + $0x410] sm:$0xff]
        %v6807 = vld [vmem:[#allocation8 + $0x418] sm:$0xff]
        %v6808 = vld [vmem:[#allocation8 + $0x420] sm:$0xff]
        %v6809 = vld [vmem:[#allocation8 + $0x428] sm:$0xff]
        %v6810 = vld [vmem:[#allocation8 + $0x430] sm:$0xff]
        %v6811 = vld [vmem:[#allocation8 + $0x438] sm:$0xff]
        %v6812 = vld [vmem:[#allocation8 + $0x440] sm:$0xff]
        %v6813 = vld [vmem:[#allocation8 + $0x448] sm:$0xff]
        %v6814 = vld [vmem:[#allocation8 + $0x450] sm:$0xff]
        %v6815 = vld [vmem:[#allocation8 + $0x458] sm:$0xff]
        %v6816 = vld [vmem:[#allocation8 + $0x460] sm:$0xff]
        %v6817 = vld [vmem:[#allocation8 + $0x468] sm:$0xff]
        %v6818 = vld [vmem:[#allocation8 + $0x470] sm:$0xff]
        %v6819 = vld [vmem:[#allocation8 + $0x478] sm:$0xff]
        %v6820 = vld [vmem:[#allocation8 + $0x480] sm:$0xff]
        %v6821 = vld [vmem:[#allocation8 + $0x488] sm:$0xff]
        %v6822 = vld [vmem:[#allocation8 + $0x490] sm:$0xff]
        %v6823 = vld [vmem:[#allocation8 + $0x498] sm:$0xff]
        %v6824 = vld [vmem:[#allocation8 + $0x4a0] sm:$0xff]
        %v6825 = vld [vmem:[#allocation8 + $0x4a8] sm:$0xff]
        %v6826 = vld [vmem:[#allocation8 + $0x4b0] sm:$0xff]
        %v6827 = vld [vmem:[#allocation8 + $0x4b8] sm:$0xff]
        %v6828 = vld [vmem:[#allocation8 + $0x4c0] sm:$0xff]
        %v6829 = vld [vmem:[#allocation8 + $0x4c8] sm:$0xff]
        %v6830 = vld [vmem:[#allocation8 + $0x4d0] sm:$0xff]
        %v6831 = vld [vmem:[#allocation8 + $0x4d8] sm:$0xff]
        %v6832 = vld [vmem:[#allocation8 + $0x4e0] sm:$0xff]
        %v6833 = vld [vmem:[#allocation8 + $0x4e8] sm:$0xff]
        %v6834 = vld [vmem:[#allocation8 + $0x4f0] sm:$0xff]
        %v6835 = vld [vmem:[#allocation8 + $0x4f8] sm:$0xff]
        %v6836 = vld [vmem:[#allocation8 + $0x500] sm:$0xff]
        %v6837 = vld [vmem:[#allocation8 + $0x508] sm:$0xff]
        %v6838 = vld [vmem:[#allocation8 + $0x510] sm:$0xff]
        %v6839 = vld [vmem:[#allocation8 + $0x518] sm:$0xff]
        %v6840 = vld [vmem:[#allocation8 + $0x520] sm:$0xff]
        %v6841 = vld [vmem:[#allocation8 + $0x528] sm:$0xff]
        %v6842 = vld [vmem:[#allocation8 + $0x530] sm:$0xff]
        %v6843 = vld [vmem:[#allocation8 + $0x538] sm:$0xff]
        %v6844 = vld [vmem:[#allocation8 + $0x540] sm:$0xff]
        %v6845 = vld [vmem:[#allocation8 + $0x548] sm:$0xff]
        %v6846 = vld [vmem:[#allocation8 + $0x550] sm:$0xff]
        %v6847 = vld [vmem:[#allocation8 + $0x558] sm:$0xff]
        %v6848 = vld [vmem:[#allocation8 + $0x560] sm:$0xff]
        %v6849 = vld [vmem:[#allocation8 + $0x568] sm:$0xff]
        %v6850 = vld [vmem:[#allocation8 + $0x570] sm:$0xff]
        %v6851 = vld [vmem:[#allocation8 + $0x578] sm:$0xff]
        %v6852 = vld [vmem:[#allocation8 + $0x580] sm:$0xff]
        %v6853 = vld [vmem:[#allocation8 + $0x588] sm:$0xff]
        %v6854 = vld [vmem:[#allocation8 + $0x590] sm:$0xff]
        %v6855 = vld [vmem:[#allocation8 + $0x598] sm:$0xff]
        %v6856 = vld [vmem:[#allocation8 + $0x5a0] sm:$0xff]
        %v6857 = vld [vmem:[#allocation8 + $0x5a8] sm:$0xff]
        %v6858 = vld [vmem:[#allocation8 + $0x5b0] sm:$0xff]
        %v6859 = vld [vmem:[#allocation8 + $0x5b8] sm:$0xff]
        %v6860 = vld [vmem:[#allocation8 + $0x5c0] sm:$0xff]
        %v6861 = vld [vmem:[#allocation8 + $0x5c8] sm:$0xff]
        %v6862 = vld [vmem:[#allocation8 + $0x5d0] sm:$0xff]
        %v6863 = vld [vmem:[#allocation8 + $0x5d8] sm:$0xff]
        %v6864 = vld [vmem:[#allocation8 + $0x5e0] sm:$0xff]
        %v6865 = vld [vmem:[#allocation8 + $0x5e8] sm:$0xff]
        %v6866 = vld [vmem:[#allocation8 + $0x5f0] sm:$0xff]
        %v6867 = vld [vmem:[#allocation8 + $0x5f8] sm:$0xff]
        %v6868 = vmul.f32 %v4202, %v6676
        %v6869 = vmul.f32 %v4204, %v6677
        %v6870 = vmul.f32 %v4588, %v6678
        %v6871 = vmul.f32 %v4590, %v6679
        %v6872 = vmul.f32 %v4974, %v6680
        %v6873 = vmul.f32 %v4976, %v6681
        %v6874 = vmul.f32 %v4206, %v6682
        %v6875 = vmul.f32 %v4208, %v6683
        %v6876 = vmul.f32 %v4592, %v6684
        %v6877 = vmul.f32 %v4594, %v6685
        %v6878 = vmul.f32 %v4978, %v6686
        %v6879 = vmul.f32 %v4980, %v6687
        %v6880 = vmul.f32 %v4212, %v6688
        %v6881 = vmul.f32 %v4214, %v6689
        %v6882 = vmul.f32 %v4598, %v6690
        %v6883 = vmul.f32 %v4600, %v6691
        %v6884 = vmul.f32 %v4984, %v6692
        %v6885 = vmul.f32 %v4986, %v6693
        %v6886 = vmul.f32 %v4216, %v6694
        %v6887 = vmul.f32 %v4218, %v6695
        %v6888 = vmul.f32 %v4602, %v6696
        %v6889 = vmul.f32 %v4604, %v6697
        %v6890 = vmul.f32 %v4988, %v6698
        %v6891 = vmul.f32 %v4990, %v6699
        %v6892 = vmul.f32 %v4222, %v6700
        %v6893 = vmul.f32 %v4224, %v6701
        %v6894 = vmul.f32 %v4608, %v6702
        %v6895 = vmul.f32 %v4610, %v6703
        %v6896 = vmul.f32 %v4994, %v6704
        %v6897 = vmul.f32 %v4996, %v6705
        %v6898 = vmul.f32 %v4226, %v6706
        %v6899 = vmul.f32 %v4228, %v6707
        %v6900 = vmul.f32 %v4612, %v6708
        %v6901 = vmul.f32 %v4614, %v6709
        %v6902 = vmul.f32 %v4998, %v6710
        %v6903 = vmul.f32 %v5000, %v6711
        %v6904 = vmul.f32 %v4232, %v6712
        %v6905 = vmul.f32 %v4234, %v6713
        %v6906 = vmul.f32 %v4618, %v6714
        %v6907 = vmul.f32 %v4620, %v6715
        %v6908 = vmul.f32 %v5004, %v6716
        %v6909 = vmul.f32 %v5006, %v6717
        %v6910 = vmul.f32 %v4236, %v6718
        %v6911 = vmul.f32 %v4238, %v6719
        %v6912 = vmul.f32 %v4622, %v6720
        %v6913 = vmul.f32 %v4624, %v6721
        %v6914 = vmul.f32 %v5008, %v6722
        %v6915 = vmul.f32 %v5010, %v6723
        %v6916 = vmul.f32 %v4242, %v6724
        %v6917 = vmul.f32 %v4244, %v6725
        %v6918 = vmul.f32 %v4628, %v6726
        %v6919 = vmul.f32 %v4630, %v6727
        %v6920 = vmul.f32 %v5014, %v6728
        %v6921 = vmul.f32 %v5016, %v6729
        %v6922 = vmul.f32 %v4246, %v6730
        %v6923 = vmul.f32 %v4248, %v6731
        %v6924 = vmul.f32 %v4632, %v6732
        %v6925 = vmul.f32 %v4634, %v6733
        %v6926 = vmul.f32 %v5018, %v6734
        %v6927 = vmul.f32 %v5020, %v6735
        %v6928 = vmul.f32 %v4252, %v6736
        %v6929 = vmul.f32 %v4254, %v6737
        %v6930 = vmul.f32 %v4638, %v6738
        %v6931 = vmul.f32 %v4640, %v6739
        %v6932 = vmul.f32 %v5024, %v6740
        %v6933 = vmul.f32 %v5026, %v6741
        %v6934 = vmul.f32 %v4256, %v6742
        %v6935 = vmul.f32 %v4258, %v6743
        %v6936 = vmul.f32 %v4642, %v6744
        %v6937 = vmul.f32 %v4644, %v6745
        %v6938 = vmul.f32 %v5028, %v6746
        %v6939 = vmul.f32 %v5030, %v6747
        %v6940 = vmul.f32 %v4262, %v6748
        %v6941 = vmul.f32 %v4264, %v6749
        %v6942 = vmul.f32 %v4648, %v6750
        %v6943 = vmul.f32 %v4650, %v6751
        %v6944 = vmul.f32 %v5034, %v6752
        %v6945 = vmul.f32 %v5036, %v6753
        %v6946 = vmul.f32 %v4266, %v6754
        %v6947 = vmul.f32 %v4268, %v6755
        %v6948 = vmul.f32 %v4652, %v6756
        %v6949 = vmul.f32 %v4654, %v6757
        %v6950 = vmul.f32 %v5038, %v6758
        %v6951 = vmul.f32 %v5040, %v6759
        %v6952 = vmul.f32 %v4272, %v6760
        %v6953 = vmul.f32 %v4274, %v6761
        %v6954 = vmul.f32 %v4658, %v6762
        %v6955 = vmul.f32 %v4660, %v6763
        %v6956 = vmul.f32 %v5044, %v6764
        %v6957 = vmul.f32 %v5046, %v6765
        %v6958 = vmul.f32 %v4276, %v6766
        %v6959 = vmul.f32 %v4278, %v6767
        %v6960 = vmul.f32 %v4662, %v6768
        %v6961 = vmul.f32 %v4664, %v6769
        %v6962 = vmul.f32 %v5048, %v6770
        %v6963 = vmul.f32 %v5050, %v6771
        %v6964 = vmul.f32 %v4282, %v6772
        %v6965 = vmul.f32 %v4284, %v6773
        %v6966 = vmul.f32 %v4668, %v6774
        %v6967 = vmul.f32 %v4670, %v6775
        %v6968 = vmul.f32 %v5054, %v6776
        %v6969 = vmul.f32 %v5056, %v6777
        %v6970 = vmul.f32 %v4286, %v6778
        %v6971 = vmul.f32 %v4288, %v6779
        %v6972 = vmul.f32 %v4672, %v6780
        %v6973 = vmul.f32 %v4674, %v6781
        %v6974 = vmul.f32 %v5058, %v6782
        %v6975 = vmul.f32 %v5060, %v6783
        %v6976 = vmul.f32 %v4292, %v6784
        %v6977 = vmul.f32 %v4294, %v6785
        %v6978 = vmul.f32 %v4678, %v6786
        %v6979 = vmul.f32 %v4680, %v6787
        %v6980 = vmul.f32 %v5064, %v6788
        %v6981 = vmul.f32 %v5066, %v6789
        %v6982 = vmul.f32 %v4296, %v6790
        %v6983 = vmul.f32 %v4298, %v6791
        %v6984 = vmul.f32 %v4682, %v6792
        %v6985 = vmul.f32 %v4684, %v6793
        %v6986 = vmul.f32 %v5068, %v6794
        %v6987 = vmul.f32 %v5070, %v6795
        %v6988 = vmul.f32 %v4302, %v6796
        %v6989 = vmul.f32 %v4304, %v6797
        %v6990 = vmul.f32 %v4688, %v6798
        %v6991 = vmul.f32 %v4690, %v6799
        %v6992 = vmul.f32 %v5074, %v6800
        %v6993 = vmul.f32 %v5076, %v6801
        %v6994 = vmul.f32 %v4306, %v6802
        %v6995 = vmul.f32 %v4308, %v6803
        %v6996 = vmul.f32 %v4692, %v6804
        %v6997 = vmul.f32 %v4694, %v6805
        %v6998 = vmul.f32 %v5078, %v6806
        %v6999 = vmul.f32 %v5080, %v6807
        %v7000 = vmul.f32 %v4312, %v6808
        %v7001 = vmul.f32 %v4314, %v6809
        %v7002 = vmul.f32 %v4698, %v6810
        %v7003 = vmul.f32 %v4700, %v6811
        %v7004 = vmul.f32 %v5084, %v6812
        %v7005 = vmul.f32 %v5086, %v6813
        %v7006 = vmul.f32 %v4316, %v6814
        %v7007 = vmul.f32 %v4318, %v6815
        %v7008 = vmul.f32 %v4702, %v6816
        %v7009 = vmul.f32 %v4704, %v6817
        %v7010 = vmul.f32 %v5088, %v6818
        %v7011 = vmul.f32 %v5090, %v6819
        %v7012 = vmul.f32 %v4322, %v6820
        %v7013 = vmul.f32 %v4324, %v6821
        %v7014 = vmul.f32 %v4708, %v6822
        %v7015 = vmul.f32 %v4710, %v6823
        %v7016 = vmul.f32 %v5094, %v6824
        %v7017 = vmul.f32 %v5096, %v6825
        %v7018 = vmul.f32 %v4326, %v6826
        %v7019 = vmul.f32 %v4328, %v6827
        %v7020 = vmul.f32 %v4712, %v6828
        %v7021 = vmul.f32 %v4714, %v6829
        %v7022 = vmul.f32 %v5098, %v6830
        %v7023 = vmul.f32 %v5100, %v6831
        %v7024 = vmul.f32 %v4332, %v6832
        %v7025 = vmul.f32 %v4334, %v6833
        %v7026 = vmul.f32 %v4718, %v6834
        %v7027 = vmul.f32 %v4720, %v6835
        %v7028 = vmul.f32 %v5104, %v6836
        %v7029 = vmul.f32 %v5106, %v6837
        %v7030 = vmul.f32 %v4336, %v6838
        %v7031 = vmul.f32 %v4338, %v6839
        %v7032 = vmul.f32 %v4722, %v6840
        %v7033 = vmul.f32 %v4724, %v6841
        %v7034 = vmul.f32 %v5108, %v6842
        %v7035 = vmul.f32 %v5110, %v6843
        %v7036 = vmul.f32 %v4342, %v6844
        %v7037 = vmul.f32 %v4344, %v6845
        %v7038 = vmul.f32 %v4728, %v6846
        %v7039 = vmul.f32 %v4730, %v6847
        %v7040 = vmul.f32 %v5114, %v6848
        %v7041 = vmul.f32 %v5116, %v6849
        %v7042 = vmul.f32 %v4346, %v6850
        %v7043 = vmul.f32 %v4348, %v6851
        %v7044 = vmul.f32 %v4732, %v6852
        %v7045 = vmul.f32 %v4734, %v6853
        %v7046 = vmul.f32 %v5118, %v6854
        %v7047 = vmul.f32 %v5120, %v6855
        %v7048 = vmul.f32 %v4352, %v6856
        %v7049 = vmul.f32 %v4354, %v6857
        %v7050 = vmul.f32 %v4738, %v6858
        %v7051 = vmul.f32 %v4740, %v6859
        %v7052 = vmul.f32 %v5124, %v6860
        %v7053 = vmul.f32 %v5126, %v6861
        %v7054 = vmul.f32 %v4356, %v6862
        %v7055 = vmul.f32 %v4358, %v6863
        %v7056 = vmul.f32 %v4742, %v6864
        %v7057 = vmul.f32 %v4744, %v6865
        %v7058 = vmul.f32 %v5128, %v6866
        %v7059 = vmul.f32 %v5130, %v6867
        %v7060 = vld [vmem:[#allocation10] sm:$0xff]
        %v7061 = vld [vmem:[#allocation10 + $0x8] sm:$0xff]
        %v7062 = vld [vmem:[#allocation10 + $0x10] sm:$0xff]
        %v7063 = vld [vmem:[#allocation10 + $0x18] sm:$0xff]
        %v7064 = vld [vmem:[#allocation10 + $0x20] sm:$0xff]
        %v7065 = vld [vmem:[#allocation10 + $0x28] sm:$0xff]
        %v7066 = vld [vmem:[#allocation10 + $0x30] sm:$0xff]
        %v7067 = vld [vmem:[#allocation10 + $0x38] sm:$0xff]
        %v7068 = vld [vmem:[#allocation10 + $0x40] sm:$0xff]
        %v7069 = vld [vmem:[#allocation10 + $0x48] sm:$0xff]
        %v7070 = vld [vmem:[#allocation10 + $0x50] sm:$0xff]
        %v7071 = vld [vmem:[#allocation10 + $0x58] sm:$0xff]
        %v7072 = vld [vmem:[#allocation10 + $0x60] sm:$0xff]
        %v7073 = vld [vmem:[#allocation10 + $0x68] sm:$0xff]
        %v7074 = vld [vmem:[#allocation10 + $0x70] sm:$0xff]
        %v7075 = vld [vmem:[#allocation10 + $0x78] sm:$0xff]
        %v7076 = vld [vmem:[#allocation10 + $0x80] sm:$0xff]
        %v7077 = vld [vmem:[#allocation10 + $0x88] sm:$0xff]
        %v7078 = vld [vmem:[#allocation10 + $0x90] sm:$0xff]
        %v7079 = vld [vmem:[#allocation10 + $0x98] sm:$0xff]
        %v7080 = vld [vmem:[#allocation10 + $0xa0] sm:$0xff]
        %v7081 = vld [vmem:[#allocation10 + $0xa8] sm:$0xff]
        %v7082 = vld [vmem:[#allocation10 + $0xb0] sm:$0xff]
        %v7083 = vld [vmem:[#allocation10 + $0xb8] sm:$0xff]
        %v7084 = vld [vmem:[#allocation10 + $0xc0] sm:$0xff]
        %v7085 = vld [vmem:[#allocation10 + $0xc8] sm:$0xff]
        %v7086 = vld [vmem:[#allocation10 + $0xd0] sm:$0xff]
        %v7087 = vld [vmem:[#allocation10 + $0xd8] sm:$0xff]
        %v7088 = vld [vmem:[#allocation10 + $0xe0] sm:$0xff]
        %v7089 = vld [vmem:[#allocation10 + $0xe8] sm:$0xff]
        %v7090 = vld [vmem:[#allocation10 + $0xf0] sm:$0xff]
        %v7091 = vld [vmem:[#allocation10 + $0xf8] sm:$0xff]
        %v7092 = vld [vmem:[#allocation10 + $0x100] sm:$0xff]
        %v7093 = vld [vmem:[#allocation10 + $0x108] sm:$0xff]
        %v7094 = vld [vmem:[#allocation10 + $0x110] sm:$0xff]
        %v7095 = vld [vmem:[#allocation10 + $0x118] sm:$0xff]
        %v7096 = vld [vmem:[#allocation10 + $0x120] sm:$0xff]
        %v7097 = vld [vmem:[#allocation10 + $0x128] sm:$0xff]
        %v7098 = vld [vmem:[#allocation10 + $0x130] sm:$0xff]
        %v7099 = vld [vmem:[#allocation10 + $0x138] sm:$0xff]
        %v7100 = vld [vmem:[#allocation10 + $0x140] sm:$0xff]
        %v7101 = vld [vmem:[#allocation10 + $0x148] sm:$0xff]
        %v7102 = vld [vmem:[#allocation10 + $0x150] sm:$0xff]
        %v7103 = vld [vmem:[#allocation10 + $0x158] sm:$0xff]
        %v7104 = vld [vmem:[#allocation10 + $0x160] sm:$0xff]
        %v7105 = vld [vmem:[#allocation10 + $0x168] sm:$0xff]
        %v7106 = vld [vmem:[#allocation10 + $0x170] sm:$0xff]
        %v7107 = vld [vmem:[#allocation10 + $0x178] sm:$0xff]
        %v7108 = vld [vmem:[#allocation10 + $0x180] sm:$0xff]
        %v7109 = vld [vmem:[#allocation10 + $0x188] sm:$0xff]
        %v7110 = vld [vmem:[#allocation10 + $0x190] sm:$0xff]
        %v7111 = vld [vmem:[#allocation10 + $0x198] sm:$0xff]
        %v7112 = vld [vmem:[#allocation10 + $0x1a0] sm:$0xff]
        %v7113 = vld [vmem:[#allocation10 + $0x1a8] sm:$0xff]
        %v7114 = vld [vmem:[#allocation10 + $0x1b0] sm:$0xff]
        %v7115 = vld [vmem:[#allocation10 + $0x1b8] sm:$0xff]
        %v7116 = vld [vmem:[#allocation10 + $0x1c0] sm:$0xff]
        %v7117 = vld [vmem:[#allocation10 + $0x1c8] sm:$0xff]
        %v7118 = vld [vmem:[#allocation10 + $0x1d0] sm:$0xff]
        %v7119 = vld [vmem:[#allocation10 + $0x1d8] sm:$0xff]
        %v7120 = vld [vmem:[#allocation10 + $0x1e0] sm:$0xff]
        %v7121 = vld [vmem:[#allocation10 + $0x1e8] sm:$0xff]
        %v7122 = vld [vmem:[#allocation10 + $0x1f0] sm:$0xff]
        %v7123 = vld [vmem:[#allocation10 + $0x1f8] sm:$0xff]
        %v7124 = vld [vmem:[#allocation10 + $0x200] sm:$0xff]
        %v7125 = vld [vmem:[#allocation10 + $0x208] sm:$0xff]
        %v7126 = vld [vmem:[#allocation10 + $0x210] sm:$0xff]
        %v7127 = vld [vmem:[#allocation10 + $0x218] sm:$0xff]
        %v7128 = vld [vmem:[#allocation10 + $0x220] sm:$0xff]
        %v7129 = vld [vmem:[#allocation10 + $0x228] sm:$0xff]
        %v7130 = vld [vmem:[#allocation10 + $0x230] sm:$0xff]
        %v7131 = vld [vmem:[#allocation10 + $0x238] sm:$0xff]
        %v7132 = vld [vmem:[#allocation10 + $0x240] sm:$0xff]
        %v7133 = vld [vmem:[#allocation10 + $0x248] sm:$0xff]
        %v7134 = vld [vmem:[#allocation10 + $0x250] sm:$0xff]
        %v7135 = vld [vmem:[#allocation10 + $0x258] sm:$0xff]
        %v7136 = vld [vmem:[#allocation10 + $0x260] sm:$0xff]
        %v7137 = vld [vmem:[#allocation10 + $0x268] sm:$0xff]
        %v7138 = vld [vmem:[#allocation10 + $0x270] sm:$0xff]
        %v7139 = vld [vmem:[#allocation10 + $0x278] sm:$0xff]
        %v7140 = vld [vmem:[#allocation10 + $0x280] sm:$0xff]
        %v7141 = vld [vmem:[#allocation10 + $0x288] sm:$0xff]
        %v7142 = vld [vmem:[#allocation10 + $0x290] sm:$0xff]
        %v7143 = vld [vmem:[#allocation10 + $0x298] sm:$0xff]
        %v7144 = vld [vmem:[#allocation10 + $0x2a0] sm:$0xff]
        %v7145 = vld [vmem:[#allocation10 + $0x2a8] sm:$0xff]
        %v7146 = vld [vmem:[#allocation10 + $0x2b0] sm:$0xff]
        %v7147 = vld [vmem:[#allocation10 + $0x2b8] sm:$0xff]
        %v7148 = vld [vmem:[#allocation10 + $0x2c0] sm:$0xff]
        %v7149 = vld [vmem:[#allocation10 + $0x2c8] sm:$0xff]
        %v7150 = vld [vmem:[#allocation10 + $0x2d0] sm:$0xff]
        %v7151 = vld [vmem:[#allocation10 + $0x2d8] sm:$0xff]
        %v7152 = vld [vmem:[#allocation10 + $0x2e0] sm:$0xff]
        %v7153 = vld [vmem:[#allocation10 + $0x2e8] sm:$0xff]
        %v7154 = vld [vmem:[#allocation10 + $0x2f0] sm:$0xff]
        %v7155 = vld [vmem:[#allocation10 + $0x2f8] sm:$0xff]
        %v7156 = vld [vmem:[#allocation10 + $0x300] sm:$0xff]
        %v7157 = vld [vmem:[#allocation10 + $0x308] sm:$0xff]
        %v7158 = vld [vmem:[#allocation10 + $0x310] sm:$0xff]
        %v7159 = vld [vmem:[#allocation10 + $0x318] sm:$0xff]
        %v7160 = vld [vmem:[#allocation10 + $0x320] sm:$0xff]
        %v7161 = vld [vmem:[#allocation10 + $0x328] sm:$0xff]
        %v7162 = vld [vmem:[#allocation10 + $0x330] sm:$0xff]
        %v7163 = vld [vmem:[#allocation10 + $0x338] sm:$0xff]
        %v7164 = vld [vmem:[#allocation10 + $0x340] sm:$0xff]
        %v7165 = vld [vmem:[#allocation10 + $0x348] sm:$0xff]
        %v7166 = vld [vmem:[#allocation10 + $0x350] sm:$0xff]
        %v7167 = vld [vmem:[#allocation10 + $0x358] sm:$0xff]
        %v7168 = vld [vmem:[#allocation10 + $0x360] sm:$0xff]
        %v7169 = vld [vmem:[#allocation10 + $0x368] sm:$0xff]
        %v7170 = vld [vmem:[#allocation10 + $0x370] sm:$0xff]
        %v7171 = vld [vmem:[#allocation10 + $0x378] sm:$0xff]
        %v7172 = vld [vmem:[#allocation10 + $0x380] sm:$0xff]
        %v7173 = vld [vmem:[#allocation10 + $0x388] sm:$0xff]
        %v7174 = vld [vmem:[#allocation10 + $0x390] sm:$0xff]
        %v7175 = vld [vmem:[#allocation10 + $0x398] sm:$0xff]
        %v7176 = vld [vmem:[#allocation10 + $0x3a0] sm:$0xff]
        %v7177 = vld [vmem:[#allocation10 + $0x3a8] sm:$0xff]
        %v7178 = vld [vmem:[#allocation10 + $0x3b0] sm:$0xff]
        %v7179 = vld [vmem:[#allocation10 + $0x3b8] sm:$0xff]
        %v7180 = vld [vmem:[#allocation10 + $0x3c0] sm:$0xff]
        %v7181 = vld [vmem:[#allocation10 + $0x3c8] sm:$0xff]
        %v7182 = vld [vmem:[#allocation10 + $0x3d0] sm:$0xff]
        %v7183 = vld [vmem:[#allocation10 + $0x3d8] sm:$0xff]
        %v7184 = vld [vmem:[#allocation10 + $0x3e0] sm:$0xff]
        %v7185 = vld [vmem:[#allocation10 + $0x3e8] sm:$0xff]
        %v7186 = vld [vmem:[#allocation10 + $0x3f0] sm:$0xff]
        %v7187 = vld [vmem:[#allocation10 + $0x3f8] sm:$0xff]
        %v7188 = vld [vmem:[#allocation10 + $0x400] sm:$0xff]
        %v7189 = vld [vmem:[#allocation10 + $0x408] sm:$0xff]
        %v7190 = vld [vmem:[#allocation10 + $0x410] sm:$0xff]
        %v7191 = vld [vmem:[#allocation10 + $0x418] sm:$0xff]
        %v7192 = vld [vmem:[#allocation10 + $0x420] sm:$0xff]
        %v7193 = vld [vmem:[#allocation10 + $0x428] sm:$0xff]
        %v7194 = vld [vmem:[#allocation10 + $0x430] sm:$0xff]
        %v7195 = vld [vmem:[#allocation10 + $0x438] sm:$0xff]
        %v7196 = vld [vmem:[#allocation10 + $0x440] sm:$0xff]
        %v7197 = vld [vmem:[#allocation10 + $0x448] sm:$0xff]
        %v7198 = vld [vmem:[#allocation10 + $0x450] sm:$0xff]
        %v7199 = vld [vmem:[#allocation10 + $0x458] sm:$0xff]
        %v7200 = vld [vmem:[#allocation10 + $0x460] sm:$0xff]
        %v7201 = vld [vmem:[#allocation10 + $0x468] sm:$0xff]
        %v7202 = vld [vmem:[#allocation10 + $0x470] sm:$0xff]
        %v7203 = vld [vmem:[#allocation10 + $0x478] sm:$0xff]
        %v7204 = vld [vmem:[#allocation10 + $0x480] sm:$0xff]
        %v7205 = vld [vmem:[#allocation10 + $0x488] sm:$0xff]
        %v7206 = vld [vmem:[#allocation10 + $0x490] sm:$0xff]
        %v7207 = vld [vmem:[#allocation10 + $0x498] sm:$0xff]
        %v7208 = vld [vmem:[#allocation10 + $0x4a0] sm:$0xff]
        %v7209 = vld [vmem:[#allocation10 + $0x4a8] sm:$0xff]
        %v7210 = vld [vmem:[#allocation10 + $0x4b0] sm:$0xff]
        %v7211 = vld [vmem:[#allocation10 + $0x4b8] sm:$0xff]
        %v7212 = vld [vmem:[#allocation10 + $0x4c0] sm:$0xff]
        %v7213 = vld [vmem:[#allocation10 + $0x4c8] sm:$0xff]
        %v7214 = vld [vmem:[#allocation10 + $0x4d0] sm:$0xff]
        %v7215 = vld [vmem:[#allocation10 + $0x4d8] sm:$0xff]
        %v7216 = vld [vmem:[#allocation10 + $0x4e0] sm:$0xff]
        %v7217 = vld [vmem:[#allocation10 + $0x4e8] sm:$0xff]
        %v7218 = vld [vmem:[#allocation10 + $0x4f0] sm:$0xff]
        %v7219 = vld [vmem:[#allocation10 + $0x4f8] sm:$0xff]
        %v7220 = vld [vmem:[#allocation10 + $0x500] sm:$0xff]
        %v7221 = vld [vmem:[#allocation10 + $0x508] sm:$0xff]
        %v7222 = vld [vmem:[#allocation10 + $0x510] sm:$0xff]
        %v7223 = vld [vmem:[#allocation10 + $0x518] sm:$0xff]
        %v7224 = vld [vmem:[#allocation10 + $0x520] sm:$0xff]
        %v7225 = vld [vmem:[#allocation10 + $0x528] sm:$0xff]
        %v7226 = vld [vmem:[#allocation10 + $0x530] sm:$0xff]
        %v7227 = vld [vmem:[#allocation10 + $0x538] sm:$0xff]
        %v7228 = vld [vmem:[#allocation10 + $0x540] sm:$0xff]
        %v7229 = vld [vmem:[#allocation10 + $0x548] sm:$0xff]
        %v7230 = vld [vmem:[#allocation10 + $0x550] sm:$0xff]
        %v7231 = vld [vmem:[#allocation10 + $0x558] sm:$0xff]
        %v7232 = vld [vmem:[#allocation10 + $0x560] sm:$0xff]
        %v7233 = vld [vmem:[#allocation10 + $0x568] sm:$0xff]
        %v7234 = vld [vmem:[#allocation10 + $0x570] sm:$0xff]
        %v7235 = vld [vmem:[#allocation10 + $0x578] sm:$0xff]
        %v7236 = vld [vmem:[#allocation10 + $0x580] sm:$0xff]
        %v7237 = vld [vmem:[#allocation10 + $0x588] sm:$0xff]
        %v7238 = vld [vmem:[#allocation10 + $0x590] sm:$0xff]
        %v7239 = vld [vmem:[#allocation10 + $0x598] sm:$0xff]
        %v7240 = vld [vmem:[#allocation10 + $0x5a0] sm:$0xff]
        %v7241 = vld [vmem:[#allocation10 + $0x5a8] sm:$0xff]
        %v7242 = vld [vmem:[#allocation10 + $0x5b0] sm:$0xff]
        %v7243 = vld [vmem:[#allocation10 + $0x5b8] sm:$0xff]
        %v7244 = vld [vmem:[#allocation10 + $0x5c0] sm:$0xff]
        %v7245 = vld [vmem:[#allocation10 + $0x5c8] sm:$0xff]
        %v7246 = vld [vmem:[#allocation10 + $0x5d0] sm:$0xff]
        %v7247 = vld [vmem:[#allocation10 + $0x5d8] sm:$0xff]
        %v7248 = vld [vmem:[#allocation10 + $0x5e0] sm:$0xff]
        %v7249 = vld [vmem:[#allocation10 + $0x5e8] sm:$0xff]
        %v7250 = vld [vmem:[#allocation10 + $0x5f0] sm:$0xff]
        %v7251 = vld [vmem:[#allocation10 + $0x5f8] sm:$0xff]
        %v7252 = vmul.f32 %v5746, %v7060
        %v7253 = vmul.f32 %v5748, %v7061
        %v7254 = vmul.f32 %v6132, %v7062
        %v7255 = vmul.f32 %v6134, %v7063
        %v7256 = vmul.f32 %v6518, %v7064
        %v7257 = vmul.f32 %v6520, %v7065
        %v7258 = vmul.f32 %v5750, %v7066
        %v7259 = vmul.f32 %v5752, %v7067
        %v7260 = vmul.f32 %v6136, %v7068
        %v7261 = vmul.f32 %v6138, %v7069
        %v7262 = vmul.f32 %v6522, %v7070
        %v7263 = vmul.f32 %v6524, %v7071
        %v7264 = vmul.f32 %v5756, %v7072
        %v7265 = vmul.f32 %v5758, %v7073
        %v7266 = vmul.f32 %v6142, %v7074
        %v7267 = vmul.f32 %v6144, %v7075
        %v7268 = vmul.f32 %v6528, %v7076
        %v7269 = vmul.f32 %v6530, %v7077
        %v7270 = vmul.f32 %v5760, %v7078
        %v7271 = vmul.f32 %v5762, %v7079
        %v7272 = vmul.f32 %v6146, %v7080
        %v7273 = vmul.f32 %v6148, %v7081
        %v7274 = vmul.f32 %v6532, %v7082
        %v7275 = vmul.f32 %v6534, %v7083
        %v7276 = vmul.f32 %v5766, %v7084
        %v7277 = vmul.f32 %v5768, %v7085
        %v7278 = vmul.f32 %v6152, %v7086
        %v7279 = vmul.f32 %v6154, %v7087
        %v7280 = vmul.f32 %v6538, %v7088
        %v7281 = vmul.f32 %v6540, %v7089
        %v7282 = vmul.f32 %v5770, %v7090
        %v7283 = vmul.f32 %v5772, %v7091
        %v7284 = vmul.f32 %v6156, %v7092
        %v7285 = vmul.f32 %v6158, %v7093
        %v7286 = vmul.f32 %v6542, %v7094
        %v7287 = vmul.f32 %v6544, %v7095
        %v7288 = vmul.f32 %v5776, %v7096
        %v7289 = vmul.f32 %v5778, %v7097
        %v7290 = vmul.f32 %v6162, %v7098
        %v7291 = vmul.f32 %v6164, %v7099
        %v7292 = vmul.f32 %v6548, %v7100
        %v7293 = vmul.f32 %v6550, %v7101
        %v7294 = vmul.f32 %v5780, %v7102
        %v7295 = vmul.f32 %v5782, %v7103
        %v7296 = vmul.f32 %v6166, %v7104
        %v7297 = vmul.f32 %v6168, %v7105
        %v7298 = vmul.f32 %v6552, %v7106
        %v7299 = vmul.f32 %v6554, %v7107
        %v7300 = vmul.f32 %v5786, %v7108
        %v7301 = vmul.f32 %v5788, %v7109
        %v7302 = vmul.f32 %v6172, %v7110
        %v7303 = vmul.f32 %v6174, %v7111
        %v7304 = vmul.f32 %v6558, %v7112
        %v7305 = vmul.f32 %v6560, %v7113
        %v7306 = vmul.f32 %v5790, %v7114
        %v7307 = vmul.f32 %v5792, %v7115
        %v7308 = vmul.f32 %v6176, %v7116
        %v7309 = vmul.f32 %v6178, %v7117
        %v7310 = vmul.f32 %v6562, %v7118
        %v7311 = vmul.f32 %v6564, %v7119
        %v7312 = vmul.f32 %v5796, %v7120
        %v7313 = vmul.f32 %v5798, %v7121
        %v7314 = vmul.f32 %v6182, %v7122
        %v7315 = vmul.f32 %v6184, %v7123
        %v7316 = vmul.f32 %v6568, %v7124
        %v7317 = vmul.f32 %v6570, %v7125
        %v7318 = vmul.f32 %v5800, %v7126
        %v7319 = vmul.f32 %v5802, %v7127
        %v7320 = vmul.f32 %v6186, %v7128
        %v7321 = vmul.f32 %v6188, %v7129
        %v7322 = vmul.f32 %v6572, %v7130
        %v7323 = vmul.f32 %v6574, %v7131
        %v7324 = vmul.f32 %v5806, %v7132
        %v7325 = vmul.f32 %v5808, %v7133
        %v7326 = vmul.f32 %v6192, %v7134
        %v7327 = vmul.f32 %v6194, %v7135
        %v7328 = vmul.f32 %v6578, %v7136
        %v7329 = vmul.f32 %v6580, %v7137
        %v7330 = vmul.f32 %v5810, %v7138
        %v7331 = vmul.f32 %v5812, %v7139
        %v7332 = vmul.f32 %v6196, %v7140
        %v7333 = vmul.f32 %v6198, %v7141
        %v7334 = vmul.f32 %v6582, %v7142
        %v7335 = vmul.f32 %v6584, %v7143
        %v7336 = vmul.f32 %v5816, %v7144
        %v7337 = vmul.f32 %v5818, %v7145
        %v7338 = vmul.f32 %v6202, %v7146
        %v7339 = vmul.f32 %v6204, %v7147
        %v7340 = vmul.f32 %v6588, %v7148
        %v7341 = vmul.f32 %v6590, %v7149
        %v7342 = vmul.f32 %v5820, %v7150
        %v7343 = vmul.f32 %v5822, %v7151
        %v7344 = vmul.f32 %v6206, %v7152
        %v7345 = vmul.f32 %v6208, %v7153
        %v7346 = vmul.f32 %v6592, %v7154
        %v7347 = vmul.f32 %v6594, %v7155
        %v7348 = vmul.f32 %v5826, %v7156
        %v7349 = vmul.f32 %v5828, %v7157
        %v7350 = vmul.f32 %v6212, %v7158
        %v7351 = vmul.f32 %v6214, %v7159
        %v7352 = vmul.f32 %v6598, %v7160
        %v7353 = vmul.f32 %v6600, %v7161
        %v7354 = vmul.f32 %v5830, %v7162
        %v7355 = vmul.f32 %v5832, %v7163
        %v7356 = vmul.f32 %v6216, %v7164
        %v7357 = vmul.f32 %v6218, %v7165
        %v7358 = vmul.f32 %v6602, %v7166
        %v7359 = vmul.f32 %v6604, %v7167
        %v7360 = vmul.f32 %v5836, %v7168
        %v7361 = vmul.f32 %v5838, %v7169
        %v7362 = vmul.f32 %v6222, %v7170
        %v7363 = vmul.f32 %v6224, %v7171
        %v7364 = vmul.f32 %v6608, %v7172
        %v7365 = vmul.f32 %v6610, %v7173
        %v7366 = vmul.f32 %v5840, %v7174
        %v7367 = vmul.f32 %v5842, %v7175
        %v7368 = vmul.f32 %v6226, %v7176
        %v7369 = vmul.f32 %v6228, %v7177
        %v7370 = vmul.f32 %v6612, %v7178
        %v7371 = vmul.f32 %v6614, %v7179
        %v7372 = vmul.f32 %v5846, %v7180
        %v7373 = vmul.f32 %v5848, %v7181
        %v7374 = vmul.f32 %v6232, %v7182
        %v7375 = vmul.f32 %v6234, %v7183
        %v7376 = vmul.f32 %v6618, %v7184
        %v7377 = vmul.f32 %v6620, %v7185
        %v7378 = vmul.f32 %v5850, %v7186
        %v7379 = vmul.f32 %v5852, %v7187
        %v7380 = vmul.f32 %v6236, %v7188
        %v7381 = vmul.f32 %v6238, %v7189
        %v7382 = vmul.f32 %v6622, %v7190
        %v7383 = vmul.f32 %v6624, %v7191
        %v7384 = vmul.f32 %v5856, %v7192
        %v7385 = vmul.f32 %v5858, %v7193
        %v7386 = vmul.f32 %v6242, %v7194
        %v7387 = vmul.f32 %v6244, %v7195
        %v7388 = vmul.f32 %v6628, %v7196
        %v7389 = vmul.f32 %v6630, %v7197
        %v7390 = vmul.f32 %v5860, %v7198
        %v7391 = vmul.f32 %v5862, %v7199
        %v7392 = vmul.f32 %v6246, %v7200
        %v7393 = vmul.f32 %v6248, %v7201
        %v7394 = vmul.f32 %v6632, %v7202
        %v7395 = vmul.f32 %v6634, %v7203
        %v7396 = vmul.f32 %v5866, %v7204
        %v7397 = vmul.f32 %v5868, %v7205
        %v7398 = vmul.f32 %v6252, %v7206
        %v7399 = vmul.f32 %v6254, %v7207
        %v7400 = vmul.f32 %v6638, %v7208
        %v7401 = vmul.f32 %v6640, %v7209
        %v7402 = vmul.f32 %v5870, %v7210
        %v7403 = vmul.f32 %v5872, %v7211
        %v7404 = vmul.f32 %v6256, %v7212
        %v7405 = vmul.f32 %v6258, %v7213
        %v7406 = vmul.f32 %v6642, %v7214
        %v7407 = vmul.f32 %v6644, %v7215
        %v7408 = vmul.f32 %v5876, %v7216
        %v7409 = vmul.f32 %v5878, %v7217
        %v7410 = vmul.f32 %v6262, %v7218
        %v7411 = vmul.f32 %v6264, %v7219
        %v7412 = vmul.f32 %v6648, %v7220
        %v7413 = vmul.f32 %v6650, %v7221
        %v7414 = vmul.f32 %v5880, %v7222
        %v7415 = vmul.f32 %v5882, %v7223
        %v7416 = vmul.f32 %v6266, %v7224
        %v7417 = vmul.f32 %v6268, %v7225
        %v7418 = vmul.f32 %v6652, %v7226
        %v7419 = vmul.f32 %v6654, %v7227
        %v7420 = vmul.f32 %v5886, %v7228
        %v7421 = vmul.f32 %v5888, %v7229
        %v7422 = vmul.f32 %v6272, %v7230
        %v7423 = vmul.f32 %v6274, %v7231
        %v7424 = vmul.f32 %v6658, %v7232
        %v7425 = vmul.f32 %v6660, %v7233
        %v7426 = vmul.f32 %v5890, %v7234
        %v7427 = vmul.f32 %v5892, %v7235
        %v7428 = vmul.f32 %v6276, %v7236
        %v7429 = vmul.f32 %v6278, %v7237
        %v7430 = vmul.f32 %v6662, %v7238
        %v7431 = vmul.f32 %v6664, %v7239
        %v7432 = vmul.f32 %v5896, %v7240
        %v7433 = vmul.f32 %v5898, %v7241
        %v7434 = vmul.f32 %v6282, %v7242
        %v7435 = vmul.f32 %v6284, %v7243
        %v7436 = vmul.f32 %v6668, %v7244
        %v7437 = vmul.f32 %v6670, %v7245
        %v7438 = vmul.f32 %v5900, %v7246
        %v7439 = vmul.f32 %v5902, %v7247
        %v7440 = vmul.f32 %v6286, %v7248
        %v7441 = vmul.f32 %v6288, %v7249
        %v7442 = vmul.f32 %v6672, %v7250
        %v7443 = vmul.f32 %v6674, %v7251
        %v7444 = vadd.f32 %v6868, %v7252
        %v7445 = vadd.f32 %v6869, %v7253
        %v7446 = vadd.f32 %v6870, %v7254
        %v7447 = vadd.f32 %v6871, %v7255
        %v7448 = vadd.f32 %v6872, %v7256
        %v7449 = vadd.f32 %v6873, %v7257
        %v7450 = vadd.f32 %v6874, %v7258
        %v7451 = vadd.f32 %v6875, %v7259
        %v7452 = vadd.f32 %v6876, %v7260
        %v7453 = vadd.f32 %v6877, %v7261
        %v7454 = vadd.f32 %v6878, %v7262
        %v7455 = vadd.f32 %v6879, %v7263
        %v7456 = vadd.f32 %v6880, %v7264
        %v7457 = vadd.f32 %v6881, %v7265
        %v7458 = vadd.f32 %v6882, %v7266
        %v7459 = vadd.f32 %v6883, %v7267
        %v7460 = vadd.f32 %v6884, %v7268
        %v7461 = vadd.f32 %v6885, %v7269
        %v7462 = vadd.f32 %v6886, %v7270
        %v7463 = vadd.f32 %v6887, %v7271
        %v7464 = vadd.f32 %v6888, %v7272
        %v7465 = vadd.f32 %v6889, %v7273
        %v7466 = vadd.f32 %v6890, %v7274
        %v7467 = vadd.f32 %v6891, %v7275
        %v7468 = vadd.f32 %v6892, %v7276
        %v7469 = vadd.f32 %v6893, %v7277
        %v7470 = vadd.f32 %v6894, %v7278
        %v7471 = vadd.f32 %v6895, %v7279
        %v7472 = vadd.f32 %v6896, %v7280
        %v7473 = vadd.f32 %v6897, %v7281
        %v7474 = vadd.f32 %v6898, %v7282
        %v7475 = vadd.f32 %v6899, %v7283
        %v7476 = vadd.f32 %v6900, %v7284
        %v7477 = vadd.f32 %v6901, %v7285
        %v7478 = vadd.f32 %v6902, %v7286
        %v7479 = vadd.f32 %v6903, %v7287
        %v7480 = vadd.f32 %v6904, %v7288
        %v7481 = vadd.f32 %v6905, %v7289
        %v7482 = vadd.f32 %v6906, %v7290
        %v7483 = vadd.f32 %v6907, %v7291
        %v7484 = vadd.f32 %v6908, %v7292
        %v7485 = vadd.f32 %v6909, %v7293
        %v7486 = vadd.f32 %v6910, %v7294
        %v7487 = vadd.f32 %v6911, %v7295
        %v7488 = vadd.f32 %v6912, %v7296
        %v7489 = vadd.f32 %v6913, %v7297
        %v7490 = vadd.f32 %v6914, %v7298
        %v7491 = vadd.f32 %v6915, %v7299
        %v7492 = vadd.f32 %v6916, %v7300
        %v7493 = vadd.f32 %v6917, %v7301
        %v7494 = vadd.f32 %v6918, %v7302
        %v7495 = vadd.f32 %v6919, %v7303
        %v7496 = vadd.f32 %v6920, %v7304
        %v7497 = vadd.f32 %v6921, %v7305
        %v7498 = vadd.f32 %v6922, %v7306
        %v7499 = vadd.f32 %v6923, %v7307
        %v7500 = vadd.f32 %v6924, %v7308
        %v7501 = vadd.f32 %v6925, %v7309
        %v7502 = vadd.f32 %v6926, %v7310
        %v7503 = vadd.f32 %v6927, %v7311
        %v7504 = vadd.f32 %v6928, %v7312
        %v7505 = vadd.f32 %v6929, %v7313
        %v7506 = vadd.f32 %v6930, %v7314
        %v7507 = vadd.f32 %v6931, %v7315
        %v7508 = vadd.f32 %v6932, %v7316
        %v7509 = vadd.f32 %v6933, %v7317
        %v7510 = vadd.f32 %v6934, %v7318
        %v7511 = vadd.f32 %v6935, %v7319
        %v7512 = vadd.f32 %v6936, %v7320
        %v7513 = vadd.f32 %v6937, %v7321
        %v7514 = vadd.f32 %v6938, %v7322
        %v7515 = vadd.f32 %v6939, %v7323
        %v7516 = vadd.f32 %v6940, %v7324
        %v7517 = vadd.f32 %v6941, %v7325
        %v7518 = vadd.f32 %v6942, %v7326
        %v7519 = vadd.f32 %v6943, %v7327
        %v7520 = vadd.f32 %v6944, %v7328
        %v7521 = vadd.f32 %v6945, %v7329
        %v7522 = vadd.f32 %v6946, %v7330
        %v7523 = vadd.f32 %v6947, %v7331
        %v7524 = vadd.f32 %v6948, %v7332
        %v7525 = vadd.f32 %v6949, %v7333
        %v7526 = vadd.f32 %v6950, %v7334
        %v7527 = vadd.f32 %v6951, %v7335
        %v7528 = vadd.f32 %v6952, %v7336
        %v7529 = vadd.f32 %v6953, %v7337
        %v7530 = vadd.f32 %v6954, %v7338
        %v7531 = vadd.f32 %v6955, %v7339
        %v7532 = vadd.f32 %v6956, %v7340
        %v7533 = vadd.f32 %v6957, %v7341
        %v7534 = vadd.f32 %v6958, %v7342
        %v7535 = vadd.f32 %v6959, %v7343
        %v7536 = vadd.f32 %v6960, %v7344
        %v7537 = vadd.f32 %v6961, %v7345
        %v7538 = vadd.f32 %v6962, %v7346
        %v7539 = vadd.f32 %v6963, %v7347
        %v7540 = vadd.f32 %v6964, %v7348
        %v7541 = vadd.f32 %v6965, %v7349
        %v7542 = vadd.f32 %v6966, %v7350
        %v7543 = vadd.f32 %v6967, %v7351
        %v7544 = vadd.f32 %v6968, %v7352
        %v7545 = vadd.f32 %v6969, %v7353
        %v7546 = vadd.f32 %v6970, %v7354
        %v7547 = vadd.f32 %v6971, %v7355
        %v7548 = vadd.f32 %v6972, %v7356
        %v7549 = vadd.f32 %v6973, %v7357
        %v7550 = vadd.f32 %v6974, %v7358
        %v7551 = vadd.f32 %v6975, %v7359
        %v7552 = vadd.f32 %v6976, %v7360
        %v7553 = vadd.f32 %v6977, %v7361
        %v7554 = vadd.f32 %v6978, %v7362
        %v7555 = vadd.f32 %v6979, %v7363
        %v7556 = vadd.f32 %v6980, %v7364
        %v7557 = vadd.f32 %v6981, %v7365
        %v7558 = vadd.f32 %v6982, %v7366
        %v7559 = vadd.f32 %v6983, %v7367
        %v7560 = vadd.f32 %v6984, %v7368
        %v7561 = vadd.f32 %v6985, %v7369
        %v7562 = vadd.f32 %v6986, %v7370
        %v7563 = vadd.f32 %v6987, %v7371
        %v7564 = vadd.f32 %v6988, %v7372
        %v7565 = vadd.f32 %v6989, %v7373
        %v7566 = vadd.f32 %v6990, %v7374
        %v7567 = vadd.f32 %v6991, %v7375
        %v7568 = vadd.f32 %v6992, %v7376
        %v7569 = vadd.f32 %v6993, %v7377
        %v7570 = vadd.f32 %v6994, %v7378
        %v7571 = vadd.f32 %v6995, %v7379
        %v7572 = vadd.f32 %v6996, %v7380
        %v7573 = vadd.f32 %v6997, %v7381
        %v7574 = vadd.f32 %v6998, %v7382
        %v7575 = vadd.f32 %v6999, %v7383
        %v7576 = vadd.f32 %v7000, %v7384
        %v7577 = vadd.f32 %v7001, %v7385
        %v7578 = vadd.f32 %v7002, %v7386
        %v7579 = vadd.f32 %v7003, %v7387
        %v7580 = vadd.f32 %v7004, %v7388
        %v7581 = vadd.f32 %v7005, %v7389
        %v7582 = vadd.f32 %v7006, %v7390
        %v7583 = vadd.f32 %v7007, %v7391
        %v7584 = vadd.f32 %v7008, %v7392
        %v7585 = vadd.f32 %v7009, %v7393
        %v7586 = vadd.f32 %v7010, %v7394
        %v7587 = vadd.f32 %v7011, %v7395
        %v7588 = vadd.f32 %v7012, %v7396
        %v7589 = vadd.f32 %v7013, %v7397
        %v7590 = vadd.f32 %v7014, %v7398
        %v7591 = vadd.f32 %v7015, %v7399
        %v7592 = vadd.f32 %v7016, %v7400
        %v7593 = vadd.f32 %v7017, %v7401
        %v7594 = vadd.f32 %v7018, %v7402
        %v7595 = vadd.f32 %v7019, %v7403
        %v7596 = vadd.f32 %v7020, %v7404
        %v7597 = vadd.f32 %v7021, %v7405
        %v7598 = vadd.f32 %v7022, %v7406
        %v7599 = vadd.f32 %v7023, %v7407
        %v7600 = vadd.f32 %v7024, %v7408
        %v7601 = vadd.f32 %v7025, %v7409
        %v7602 = vadd.f32 %v7026, %v7410
        %v7603 = vadd.f32 %v7027, %v7411
        %v7604 = vadd.f32 %v7028, %v7412
        %v7605 = vadd.f32 %v7029, %v7413
        %v7606 = vadd.f32 %v7030, %v7414
        %v7607 = vadd.f32 %v7031, %v7415
        %v7608 = vadd.f32 %v7032, %v7416
        %v7609 = vadd.f32 %v7033, %v7417
        %v7610 = vadd.f32 %v7034, %v7418
        %v7611 = vadd.f32 %v7035, %v7419
        %v7612 = vadd.f32 %v7036, %v7420
        %v7613 = vadd.f32 %v7037, %v7421
        %v7614 = vadd.f32 %v7038, %v7422
        %v7615 = vadd.f32 %v7039, %v7423
        %v7616 = vadd.f32 %v7040, %v7424
        %v7617 = vadd.f32 %v7041, %v7425
        %v7618 = vadd.f32 %v7042, %v7426
        %v7619 = vadd.f32 %v7043, %v7427
        %v7620 = vadd.f32 %v7044, %v7428
        %v7621 = vadd.f32 %v7045, %v7429
        %v7622 = vadd.f32 %v7046, %v7430
        %v7623 = vadd.f32 %v7047, %v7431
        %v7624 = vadd.f32 %v7048, %v7432
        %v7625 = vadd.f32 %v7049, %v7433
        %v7626 = vadd.f32 %v7050, %v7434
        %v7627 = vadd.f32 %v7051, %v7435
        %v7628 = vadd.f32 %v7052, %v7436
        %v7629 = vadd.f32 %v7053, %v7437
        %v7630 = vadd.f32 %v7054, %v7438
        %v7631 = vadd.f32 %v7055, %v7439
        %v7632 = vadd.f32 %v7056, %v7440
        %v7633 = vadd.f32 %v7057, %v7441
        %v7634 = vadd.f32 %v7058, %v7442
        %v7635 = vadd.f32 %v7059, %v7443
        %7636 = vxpose.xlu0.b32.start [1/16] %v7448, 128
        %7637 = vxpose.xlu0.b32.cont [2/16] %v7454, 128
        %7638 = vxpose.xlu0.b32.cont [3/16] %v7460, 128
        %7639 = vxpose.xlu0.b32.cont [4/16] %v7466, 128
        %7640 = vxpose.xlu0.b32.cont [5/16] %v7472, 128
        %7641 = vxpose.xlu0.b32.cont [6/16] %v7478, 128
        %7642 = vxpose.xlu0.b32.cont [7/16] %v7484, 128
        %7643 = vxpose.xlu0.b32.cont [8/16] %v7490, 128
        %7644 = vxpose.xlu0.b32.cont [9/16] %v7496, 128
        %7645 = vxpose.xlu0.b32.cont [10/16] %v7502, 128
        %7646 = vxpose.xlu0.b32.cont [11/16] %v7508, 128
        %7647 = vxpose.xlu0.b32.cont [12/16] %v7514, 128
        %7648 = vxpose.xlu0.b32.cont [13/16] %v7520, 128
        %7649 = vxpose.xlu0.b32.cont [14/16] %v7526, 128
        %7650 = vxpose.xlu0.b32.cont [15/16] %v7532, 128
        %7651 = vxpose.xlu0.b32.end [16/16] %v7538, 128
        %v7652 = vpop.trf.xlu0
        %v7653 = vpop.trf.xlu0
        %v7654 = vpop.trf.xlu0
        %v7655 = vpop.trf.xlu0
        %v7656 = vpop.trf.xlu0
        %v7657 = vpop.trf.xlu0
        %v7658 = vpop.trf.xlu0
        %v7659 = vpop.trf.xlu0
        %v7660 = vpop.trf.xlu0
        %v7661 = vpop.trf.xlu0
        %v7662 = vpop.trf.xlu0
        %v7663 = vpop.trf.xlu0
        %v7664 = vpop.trf.xlu0
        %v7665 = vpop.trf.xlu0
        %v7666 = vpop.trf.xlu0
        %v7667 = vpop.trf.xlu0
        %7668 = vxpose.xlu0.b32.start [1/16] %v7449, 128
        %7669 = vxpose.xlu0.b32.cont [2/16] %v7455, 128
        %7670 = vxpose.xlu0.b32.cont [3/16] %v7461, 128
        %7671 = vxpose.xlu0.b32.cont [4/16] %v7467, 128
        %7672 = vxpose.xlu0.b32.cont [5/16] %v7473, 128
        %7673 = vxpose.xlu0.b32.cont [6/16] %v7479, 128
        %7674 = vxpose.xlu0.b32.cont [7/16] %v7485, 128
        %7675 = vxpose.xlu0.b32.cont [8/16] %v7491, 128
        %7676 = vxpose.xlu0.b32.cont [9/16] %v7497, 128
        %7677 = vxpose.xlu0.b32.cont [10/16] %v7503, 128
        %7678 = vxpose.xlu0.b32.cont [11/16] %v7509, 128
        %7679 = vxpose.xlu0.b32.cont [12/16] %v7515, 128
        %7680 = vxpose.xlu0.b32.cont [13/16] %v7521, 128
        %7681 = vxpose.xlu0.b32.cont [14/16] %v7527, 128
        %7682 = vxpose.xlu0.b32.cont [15/16] %v7533, 128
        %7683 = vxpose.xlu0.b32.end [16/16] %v7539, 128
        %v7684 = vpop.trf.xlu0
        %v7685 = vpop.trf.xlu0
        %v7686 = vpop.trf.xlu0
        %v7687 = vpop.trf.xlu0
        %v7688 = vpop.trf.xlu0
        %v7689 = vpop.trf.xlu0
        %v7690 = vpop.trf.xlu0
        %v7691 = vpop.trf.xlu0
        %v7692 = vpop.trf.xlu0
        %v7693 = vpop.trf.xlu0
        %v7694 = vpop.trf.xlu0
        %v7695 = vpop.trf.xlu0
        %v7696 = vpop.trf.xlu0
        %v7697 = vpop.trf.xlu0
        %v7698 = vpop.trf.xlu0
        %v7699 = vpop.trf.xlu0
        %7700 = vxpose.xlu0.b32.start [1/16] %v7544, 128
        %7701 = vxpose.xlu0.b32.cont [2/16] %v7550, 128
        %7702 = vxpose.xlu0.b32.cont [3/16] %v7556, 128
        %7703 = vxpose.xlu0.b32.cont [4/16] %v7562, 128
        %7704 = vxpose.xlu0.b32.cont [5/16] %v7568, 128
        %7705 = vxpose.xlu0.b32.cont [6/16] %v7574, 128
        %7706 = vxpose.xlu0.b32.cont [7/16] %v7580, 128
        %7707 = vxpose.xlu0.b32.cont [8/16] %v7586, 128
        %7708 = vxpose.xlu0.b32.cont [9/16] %v7592, 128
        %7709 = vxpose.xlu0.b32.cont [10/16] %v7598, 128
        %7710 = vxpose.xlu0.b32.cont [11/16] %v7604, 128
        %7711 = vxpose.xlu0.b32.cont [12/16] %v7610, 128
        %7712 = vxpose.xlu0.b32.cont [13/16] %v7616, 128
        %7713 = vxpose.xlu0.b32.cont [14/16] %v7622, 128
        %7714 = vxpose.xlu0.b32.cont [15/16] %v7628, 128
        %7715 = vxpose.xlu0.b32.end [16/16] %v7634, 128
        %v7716 = vpop.trf.xlu0
        %v7717 = vpop.trf.xlu0
        %v7718 = vpop.trf.xlu0
        %v7719 = vpop.trf.xlu0
        %v7720 = vpop.trf.xlu0
        %v7721 = vpop.trf.xlu0
        %v7722 = vpop.trf.xlu0
        %v7723 = vpop.trf.xlu0
        %v7724 = vpop.trf.xlu0
        %v7725 = vpop.trf.xlu0
        %v7726 = vpop.trf.xlu0
        %v7727 = vpop.trf.xlu0
        %v7728 = vpop.trf.xlu0
        %v7729 = vpop.trf.xlu0
        %v7730 = vpop.trf.xlu0
        %v7731 = vpop.trf.xlu0
        %7732 = vxpose.xlu0.b32.start [1/16] %v7545, 128
        %7733 = vxpose.xlu0.b32.cont [2/16] %v7551, 128
        %7734 = vxpose.xlu0.b32.cont [3/16] %v7557, 128
        %7735 = vxpose.xlu0.b32.cont [4/16] %v7563, 128
        %7736 = vxpose.xlu0.b32.cont [5/16] %v7569, 128
        %7737 = vxpose.xlu0.b32.cont [6/16] %v7575, 128
        %7738 = vxpose.xlu0.b32.cont [7/16] %v7581, 128
        %7739 = vxpose.xlu0.b32.cont [8/16] %v7587, 128
        %7740 = vxpose.xlu0.b32.cont [9/16] %v7593, 128
        %7741 = vxpose.xlu0.b32.cont [10/16] %v7599, 128
        %7742 = vxpose.xlu0.b32.cont [11/16] %v7605, 128
        %7743 = vxpose.xlu0.b32.cont [12/16] %v7611, 128
        %7744 = vxpose.xlu0.b32.cont [13/16] %v7617, 128
        %7745 = vxpose.xlu0.b32.cont [14/16] %v7623, 128
        %7746 = vxpose.xlu0.b32.cont [15/16] %v7629, 128
        %7747 = vxpose.xlu0.b32.end [16/16] %v7635, 128
        %v7748 = vpop.trf.xlu0
        %v7749 = vpop.trf.xlu0
        %v7750 = vpop.trf.xlu0
        %v7751 = vpop.trf.xlu0
        %v7752 = vpop.trf.xlu0
        %v7753 = vpop.trf.xlu0
        %v7754 = vpop.trf.xlu0
        %v7755 = vpop.trf.xlu0
        %v7756 = vpop.trf.xlu0
        %v7757 = vpop.trf.xlu0
        %v7758 = vpop.trf.xlu0
        %v7759 = vpop.trf.xlu0
        %v7760 = vpop.trf.xlu0
        %v7761 = vpop.trf.xlu0
        %v7762 = vpop.trf.xlu0
        %v7763 = vpop.trf.xlu0
        %v7764 = vpack.c.bf16 %v7653, %v7652
        %v7765 = vpack.c.bf16 %v7717, %v7716
        %v7766 = vpack.c.bf16 %v7655, %v7654
        %v7767 = vpack.c.bf16 %v7719, %v7718
        %v7768 = vpack.c.bf16 %v7657, %v7656
        %v7769 = vpack.c.bf16 %v7721, %v7720
        %v7770 = vpack.c.bf16 %v7659, %v7658
        %v7771 = vpack.c.bf16 %v7723, %v7722
        %v7772 = vpack.c.bf16 %v7661, %v7660
        %v7773 = vpack.c.bf16 %v7725, %v7724
        %v7774 = vpack.c.bf16 %v7663, %v7662
        %v7775 = vpack.c.bf16 %v7727, %v7726
        %v7776 = vpack.c.bf16 %v7665, %v7664
        %v7777 = vpack.c.bf16 %v7729, %v7728
        %v7778 = vpack.c.bf16 %v7667, %v7666
        %v7779 = vpack.c.bf16 %v7731, %v7730
        %v7780 = vpack.c.bf16 %v7685, %v7684
        %v7781 = vpack.c.bf16 %v7749, %v7748
        %v7782 = vpack.c.bf16 %v7687, %v7686
        %v7783 = vpack.c.bf16 %v7751, %v7750
        %v7784 = vpack.c.bf16 %v7689, %v7688
        %v7785 = vpack.c.bf16 %v7753, %v7752
        %v7786 = vpack.c.bf16 %v7691, %v7690
        %v7787 = vpack.c.bf16 %v7755, %v7754
        %v7788 = vpack.c.bf16 %v7693, %v7692
        %v7789 = vpack.c.bf16 %v7757, %v7756
        %v7790 = vpack.c.bf16 %v7695, %v7694
        %v7791 = vpack.c.bf16 %v7759, %v7758
        %v7792 = vpack.c.bf16 %v7697, %v7696
        %v7793 = vpack.c.bf16 %v7761, %v7760
        %v7794 = vpack.c.bf16 %v7699, %v7698
        %v7795 = vpack.c.bf16 %v7763, %v7762
        %v7828 = vunpack.c.l.b16 %v7764
        %v7829 = vunpack.c.l.b16 %v7765
        %v7830 = vunpack.c.h.b16 %v7764
        %v7831 = vunpack.c.h.b16 %v7765
        %v7832 = vunpack.c.l.b16 %v7766
        %v7833 = vunpack.c.l.b16 %v7767
        %v7834 = vunpack.c.h.b16 %v7766
        %v7835 = vunpack.c.h.b16 %v7767
        %v7836 = vunpack.c.l.b16 %v7768
        %v7837 = vunpack.c.l.b16 %v7769
        %v7838 = vunpack.c.h.b16 %v7768
        %v7839 = vunpack.c.h.b16 %v7769
        %v7840 = vunpack.c.l.b16 %v7770
        %v7841 = vunpack.c.l.b16 %v7771
        %v7842 = vunpack.c.h.b16 %v7770
        %v7843 = vunpack.c.h.b16 %v7771
        %v7844 = vunpack.c.l.b16 %v7772
        %v7845 = vunpack.c.l.b16 %v7773
        %v7846 = vunpack.c.h.b16 %v7772
        %v7847 = vunpack.c.h.b16 %v7773
        %v7848 = vunpack.c.l.b16 %v7774
        %v7849 = vunpack.c.l.b16 %v7775
        %v7850 = vunpack.c.h.b16 %v7774
        %v7851 = vunpack.c.h.b16 %v7775
        %v7852 = vunpack.c.l.b16 %v7776
        %v7853 = vunpack.c.l.b16 %v7777
        %v7854 = vunpack.c.h.b16 %v7776
        %v7855 = vunpack.c.h.b16 %v7777
        %v7856 = vunpack.c.l.b16 %v7778
        %v7857 = vunpack.c.l.b16 %v7779
        %v7858 = vunpack.c.h.b16 %v7778
        %v7859 = vunpack.c.h.b16 %v7779
        %v7860 = vunpack.c.l.b16 %v7780
        %v7861 = vunpack.c.l.b16 %v7781
        %v7862 = vunpack.c.h.b16 %v7780
        %v7863 = vunpack.c.h.b16 %v7781
        %v7864 = vunpack.c.l.b16 %v7782
        %v7865 = vunpack.c.l.b16 %v7783
        %v7866 = vunpack.c.h.b16 %v7782
        %v7867 = vunpack.c.h.b16 %v7783
        %v7868 = vunpack.c.l.b16 %v7784
        %v7869 = vunpack.c.l.b16 %v7785
        %v7870 = vunpack.c.h.b16 %v7784
        %v7871 = vunpack.c.h.b16 %v7785
        %v7872 = vunpack.c.l.b16 %v7786
        %v7873 = vunpack.c.l.b16 %v7787
        %v7874 = vunpack.c.h.b16 %v7786
        %v7875 = vunpack.c.h.b16 %v7787
        %v7876 = vunpack.c.l.b16 %v7788
        %v7877 = vunpack.c.l.b16 %v7789
        %v7878 = vunpack.c.h.b16 %v7788
        %v7879 = vunpack.c.h.b16 %v7789
        %v7880 = vunpack.c.l.b16 %v7790
        %v7881 = vunpack.c.l.b16 %v7791
        %v7882 = vunpack.c.h.b16 %v7790
        %v7883 = vunpack.c.h.b16 %v7791
        %v7884 = vunpack.c.l.b16 %v7792
        %v7885 = vunpack.c.l.b16 %v7793
        %v7886 = vunpack.c.h.b16 %v7792
        %v7887 = vunpack.c.h.b16 %v7793
        %v7888 = vunpack.c.l.b16 %v7794
        %v7889 = vunpack.c.l.b16 %v7795
        %v7890 = vunpack.c.h.b16 %v7794
        %v7891 = vunpack.c.h.b16 %v7795
        %v7892 = vpack.c.b16 %v7829, %v7828
        %v7893 = vpack.c.b16 %v7831, %v7830
        %v7894 = vpack.c.b16 %v7833, %v7832
        %v7895 = vpack.c.b16 %v7835, %v7834
        %v7896 = vpack.c.b16 %v7837, %v7836
        %v7897 = vpack.c.b16 %v7839, %v7838
        %v7898 = vpack.c.b16 %v7841, %v7840
        %v7899 = vpack.c.b16 %v7843, %v7842
        %v7900 = vpack.c.b16 %v7845, %v7844
        %v7901 = vpack.c.b16 %v7847, %v7846
        %v7902 = vpack.c.b16 %v7849, %v7848
        %v7903 = vpack.c.b16 %v7851, %v7850
        %v7904 = vpack.c.b16 %v7853, %v7852
        %v7905 = vpack.c.b16 %v7855, %v7854
        %v7906 = vpack.c.b16 %v7857, %v7856
        %v7907 = vpack.c.b16 %v7859, %v7858
        %v7908 = vpack.c.b16 %v7861, %v7860
        %v7909 = vpack.c.b16 %v7863, %v7862
        %v7910 = vpack.c.b16 %v7865, %v7864
        %v7911 = vpack.c.b16 %v7867, %v7866
        %v7912 = vpack.c.b16 %v7869, %v7868
        %v7913 = vpack.c.b16 %v7871, %v7870
        %v7914 = vpack.c.b16 %v7873, %v7872
        %v7915 = vpack.c.b16 %v7875, %v7874
        %v7916 = vpack.c.b16 %v7877, %v7876
        %v7917 = vpack.c.b16 %v7879, %v7878
        %v7918 = vpack.c.b16 %v7881, %v7880
        %v7919 = vpack.c.b16 %v7883, %v7882
        %v7920 = vpack.c.b16 %v7885, %v7884
        %v7921 = vpack.c.b16 %v7887, %v7886
        %v7922 = vpack.c.b16 %v7889, %v7888
        %v7923 = vpack.c.b16 %v7891, %v7890
        %7956 = vst [vmem:[%s408] sm:$0xff] %v7892
        %7957 = vst [vmem:[%s408 + $0x8] sm:$0xff] %v7893
        %7958 = vst [vmem:[%s408 + $0x10] sm:$0xff] %v7894
        %7959 = vst [vmem:[%s408 + $0x18] sm:$0xff] %v7895
        %7960 = vst [vmem:[%s408 + $0x20] sm:$0xff] %v7896
        %7961 = vst [vmem:[%s408 + $0x28] sm:$0xff] %v7897
        %7962 = vst [vmem:[%s408 + $0x30] sm:$0xff] %v7898
        %7963 = vst [vmem:[%s408 + $0x38] sm:$0xff] %v7899
        %7964 = vst [vmem:[%s408 + $0x40] sm:$0xff] %v7900
        %7965 = vst [vmem:[%s408 + $0x48] sm:$0xff] %v7901
        %7966 = vst [vmem:[%s408 + $0x50] sm:$0xff] %v7902
        %7967 = vst [vmem:[%s408 + $0x58] sm:$0xff] %v7903
        %7968 = vst [vmem:[%s408 + $0x60] sm:$0xff] %v7904
        %7969 = vst [vmem:[%s408 + $0x68] sm:$0xff] %v7905
        %7970 = vst [vmem:[%s408 + $0x70] sm:$0xff] %v7906
        %7971 = vst [vmem:[%s408 + $0x78] sm:$0xff] %v7907
        %7972 = vst [vmem:[%s408 + $0x80] sm:$0xff] %v7908
        %7973 = vst [vmem:[%s408 + $0x88] sm:$0xff] %v7909
        %7974 = vst [vmem:[%s408 + $0x90] sm:$0xff] %v7910
        %7975 = vst [vmem:[%s408 + $0x98] sm:$0xff] %v7911
        %7976 = vst [vmem:[%s408 + $0xa0] sm:$0xff] %v7912
        %7977 = vst [vmem:[%s408 + $0xa8] sm:$0xff] %v7913
        %7978 = vst [vmem:[%s408 + $0xb0] sm:$0xff] %v7914
        %7979 = vst [vmem:[%s408 + $0xb8] sm:$0xff] %v7915
        %7980 = vst [vmem:[%s408 + $0xc0] sm:$0xff] %v7916
        %7981 = vst [vmem:[%s408 + $0xc8] sm:$0xff] %v7917
        %7982 = vst [vmem:[%s408 + $0xd0] sm:$0xff] %v7918
        %7983 = vst [vmem:[%s408 + $0xd8] sm:$0xff] %v7919
        %7984 = vst [vmem:[%s408 + $0xe0] sm:$0xff] %v7920
        %7985 = vst [vmem:[%s408 + $0xe8] sm:$0xff] %v7921
        %7986 = vst [vmem:[%s408 + $0xf0] sm:$0xff] %v7922
        %7987 = vst [vmem:[%s408 + $0xf8] sm:$0xff] %v7923
        %7988 = vxpose.xlu0.b32.start [1/16] %v5360, 128
        %7989 = vxpose.xlu0.b32.cont [2/16] %v5364, 128
        %7990 = vxpose.xlu0.b32.cont [3/16] %v5370, 128
        %7991 = vxpose.xlu0.b32.cont [4/16] %v5374, 128
        %7992 = vxpose.xlu0.b32.cont [5/16] %v5380, 128
        %7993 = vxpose.xlu0.b32.cont [6/16] %v5384, 128
        %7994 = vxpose.xlu0.b32.cont [7/16] %v5390, 128
        %7995 = vxpose.xlu0.b32.cont [8/16] %v5394, 128
        %7996 = vxpose.xlu0.b32.cont [9/16] %v5400, 128
        %7997 = vxpose.xlu0.b32.cont [10/16] %v5404, 128
        %7998 = vxpose.xlu0.b32.cont [11/16] %v5410, 128
        %7999 = vxpose.xlu0.b32.cont [12/16] %v5414, 128
        %8000 = vxpose.xlu0.b32.cont [13/16] %v5420, 128
        %8001 = vxpose.xlu0.b32.cont [14/16] %v5424, 128
        %8002 = vxpose.xlu0.b32.cont [15/16] %v5430, 128
        %8003 = vxpose.xlu0.b32.end [16/16] %v5434, 128
        %v8004 = vpop.trf.xlu0
        %v8005 = vpop.trf.xlu0
        %v8006 = vpop.trf.xlu0
        %v8007 = vpop.trf.xlu0
        %v8008 = vpop.trf.xlu0
        %v8009 = vpop.trf.xlu0
        %v8010 = vpop.trf.xlu0
        %v8011 = vpop.trf.xlu0
        %v8012 = vpop.trf.xlu0
        %v8013 = vpop.trf.xlu0
        %v8014 = vpop.trf.xlu0
        %v8015 = vpop.trf.xlu0
        %v8016 = vpop.trf.xlu0
        %v8017 = vpop.trf.xlu0
        %v8018 = vpop.trf.xlu0
        %v8019 = vpop.trf.xlu0
        %8020 = vxpose.xlu0.b32.start [1/16] %v5362, 128
        %8021 = vxpose.xlu0.b32.cont [2/16] %v5366, 128
        %8022 = vxpose.xlu0.b32.cont [3/16] %v5372, 128
        %8023 = vxpose.xlu0.b32.cont [4/16] %v5376, 128
        %8024 = vxpose.xlu0.b32.cont [5/16] %v5382, 128
        %8025 = vxpose.xlu0.b32.cont [6/16] %v5386, 128
        %8026 = vxpose.xlu0.b32.cont [7/16] %v5392, 128
        %8027 = vxpose.xlu0.b32.cont [8/16] %v5396, 128
        %8028 = vxpose.xlu0.b32.cont [9/16] %v5402, 128
        %8029 = vxpose.xlu0.b32.cont [10/16] %v5406, 128
        %8030 = vxpose.xlu0.b32.cont [11/16] %v5412, 128
        %8031 = vxpose.xlu0.b32.cont [12/16] %v5416, 128
        %8032 = vxpose.xlu0.b32.cont [13/16] %v5422, 128
        %8033 = vxpose.xlu0.b32.cont [14/16] %v5426, 128
        %8034 = vxpose.xlu0.b32.cont [15/16] %v5432, 128
        %8035 = vxpose.xlu0.b32.end [16/16] %v5436, 128
        %v8036 = vpop.trf.xlu0
        %v8037 = vpop.trf.xlu0
        %v8038 = vpop.trf.xlu0
        %v8039 = vpop.trf.xlu0
        %v8040 = vpop.trf.xlu0
        %v8041 = vpop.trf.xlu0
        %v8042 = vpop.trf.xlu0
        %v8043 = vpop.trf.xlu0
        %v8044 = vpop.trf.xlu0
        %v8045 = vpop.trf.xlu0
        %v8046 = vpop.trf.xlu0
        %v8047 = vpop.trf.xlu0
        %v8048 = vpop.trf.xlu0
        %v8049 = vpop.trf.xlu0
        %v8050 = vpop.trf.xlu0
        %v8051 = vpop.trf.xlu0
        %8052 = vxpose.xlu0.b32.start [1/16] %v5440, 128
        %8053 = vxpose.xlu0.b32.cont [2/16] %v5444, 128
        %8054 = vxpose.xlu0.b32.cont [3/16] %v5450, 128
        %8055 = vxpose.xlu0.b32.cont [4/16] %v5454, 128
        %8056 = vxpose.xlu0.b32.cont [5/16] %v5460, 128
        %8057 = vxpose.xlu0.b32.cont [6/16] %v5464, 128
        %8058 = vxpose.xlu0.b32.cont [7/16] %v5470, 128
        %8059 = vxpose.xlu0.b32.cont [8/16] %v5474, 128
        %8060 = vxpose.xlu0.b32.cont [9/16] %v5480, 128
        %8061 = vxpose.xlu0.b32.cont [10/16] %v5484, 128
        %8062 = vxpose.xlu0.b32.cont [11/16] %v5490, 128
        %8063 = vxpose.xlu0.b32.cont [12/16] %v5494, 128
        %8064 = vxpose.xlu0.b32.cont [13/16] %v5500, 128
        %8065 = vxpose.xlu0.b32.cont [14/16] %v5504, 128
        %8066 = vxpose.xlu0.b32.cont [15/16] %v5510, 128
        %8067 = vxpose.xlu0.b32.end [16/16] %v5514, 128
        %v8068 = vpop.trf.xlu0
        %v8069 = vpop.trf.xlu0
        %v8070 = vpop.trf.xlu0
        %v8071 = vpop.trf.xlu0
        %v8072 = vpop.trf.xlu0
        %v8073 = vpop.trf.xlu0
        %v8074 = vpop.trf.xlu0
        %v8075 = vpop.trf.xlu0
        %v8076 = vpop.trf.xlu0
        %v8077 = vpop.trf.xlu0
        %v8078 = vpop.trf.xlu0
        %v8079 = vpop.trf.xlu0
        %v8080 = vpop.trf.xlu0
        %v8081 = vpop.trf.xlu0
        %v8082 = vpop.trf.xlu0
        %v8083 = vpop.trf.xlu0
        %8084 = vxpose.xlu0.b32.start [1/16] %v5442, 128
        %8085 = vxpose.xlu0.b32.cont [2/16] %v5446, 128
        %8086 = vxpose.xlu0.b32.cont [3/16] %v5452, 128
        %8087 = vxpose.xlu0.b32.cont [4/16] %v5456, 128
        %8088 = vxpose.xlu0.b32.cont [5/16] %v5462, 128
        %8089 = vxpose.xlu0.b32.cont [6/16] %v5466, 128
        %8090 = vxpose.xlu0.b32.cont [7/16] %v5472, 128
        %8091 = vxpose.xlu0.b32.cont [8/16] %v5476, 128
        %8092 = vxpose.xlu0.b32.cont [9/16] %v5482, 128
        %8093 = vxpose.xlu0.b32.cont [10/16] %v5486, 128
        %8094 = vxpose.xlu0.b32.cont [11/16] %v5492, 128
        %8095 = vxpose.xlu0.b32.cont [12/16] %v5496, 128
        %8096 = vxpose.xlu0.b32.cont [13/16] %v5502, 128
        %8097 = vxpose.xlu0.b32.cont [14/16] %v5506, 128
        %8098 = vxpose.xlu0.b32.cont [15/16] %v5512, 128
        %8099 = vxpose.xlu0.b32.end [16/16] %v5516, 128
        %v8100 = vpop.trf.xlu0
        %v8101 = vpop.trf.xlu0
        %v8102 = vpop.trf.xlu0
        %v8103 = vpop.trf.xlu0
        %v8104 = vpop.trf.xlu0
        %v8105 = vpop.trf.xlu0
        %v8106 = vpop.trf.xlu0
        %v8107 = vpop.trf.xlu0
        %v8108 = vpop.trf.xlu0
        %v8109 = vpop.trf.xlu0
        %v8110 = vpop.trf.xlu0
        %v8111 = vpop.trf.xlu0
        %v8112 = vpop.trf.xlu0
        %v8113 = vpop.trf.xlu0
        %v8114 = vpop.trf.xlu0
        %v8115 = vpop.trf.xlu0
        %v8116 = vpack.c.bf16 %v8005, %v8004
        %v8117 = vpack.c.bf16 %v8069, %v8068
        %v8118 = vpack.c.bf16 %v8007, %v8006
        %v8119 = vpack.c.bf16 %v8071, %v8070
        %v8120 = vpack.c.bf16 %v8009, %v8008
        %v8121 = vpack.c.bf16 %v8073, %v8072
        %v8122 = vpack.c.bf16 %v8011, %v8010
        %v8123 = vpack.c.bf16 %v8075, %v8074
        %v8124 = vpack.c.bf16 %v8013, %v8012
        %v8125 = vpack.c.bf16 %v8077, %v8076
        %v8126 = vpack.c.bf16 %v8015, %v8014
        %v8127 = vpack.c.bf16 %v8079, %v8078
        %v8128 = vpack.c.bf16 %v8017, %v8016
        %v8129 = vpack.c.bf16 %v8081, %v8080
        %v8130 = vpack.c.bf16 %v8019, %v8018
        %v8131 = vpack.c.bf16 %v8083, %v8082
        %v8132 = vpack.c.bf16 %v8037, %v8036
        %v8133 = vpack.c.bf16 %v8101, %v8100
        %v8134 = vpack.c.bf16 %v8039, %v8038
        %v8135 = vpack.c.bf16 %v8103, %v8102
        %v8136 = vpack.c.bf16 %v8041, %v8040
        %v8137 = vpack.c.bf16 %v8105, %v8104
        %v8138 = vpack.c.bf16 %v8043, %v8042
        %v8139 = vpack.c.bf16 %v8107, %v8106
        %v8140 = vpack.c.bf16 %v8045, %v8044
        %v8141 = vpack.c.bf16 %v8109, %v8108
        %v8142 = vpack.c.bf16 %v8047, %v8046
        %v8143 = vpack.c.bf16 %v8111, %v8110
        %v8144 = vpack.c.bf16 %v8049, %v8048
        %v8145 = vpack.c.bf16 %v8113, %v8112
        %v8146 = vpack.c.bf16 %v8051, %v8050
        %v8147 = vpack.c.bf16 %v8115, %v8114
        %v8180 = vunpack.c.l.b16 %v8116
        %v8181 = vunpack.c.l.b16 %v8117
        %v8182 = vunpack.c.h.b16 %v8116
        %v8183 = vunpack.c.h.b16 %v8117
        %v8184 = vunpack.c.l.b16 %v8118
        %v8185 = vunpack.c.l.b16 %v8119
        %v8186 = vunpack.c.h.b16 %v8118
        %v8187 = vunpack.c.h.b16 %v8119
        %v8188 = vunpack.c.l.b16 %v8120
        %v8189 = vunpack.c.l.b16 %v8121
        %v8190 = vunpack.c.h.b16 %v8120
        %v8191 = vunpack.c.h.b16 %v8121
        %v8192 = vunpack.c.l.b16 %v8122
        %v8193 = vunpack.c.l.b16 %v8123
        %v8194 = vunpack.c.h.b16 %v8122
        %v8195 = vunpack.c.h.b16 %v8123
        %v8196 = vunpack.c.l.b16 %v8124
        %v8197 = vunpack.c.l.b16 %v8125
        %v8198 = vunpack.c.h.b16 %v8124
        %v8199 = vunpack.c.h.b16 %v8125
        %v8200 = vunpack.c.l.b16 %v8126
        %v8201 = vunpack.c.l.b16 %v8127
        %v8202 = vunpack.c.h.b16 %v8126
        %v8203 = vunpack.c.h.b16 %v8127
        %v8204 = vunpack.c.l.b16 %v8128
        %v8205 = vunpack.c.l.b16 %v8129
        %v8206 = vunpack.c.h.b16 %v8128
        %v8207 = vunpack.c.h.b16 %v8129
        %v8208 = vunpack.c.l.b16 %v8130
        %v8209 = vunpack.c.l.b16 %v8131
        %v8210 = vunpack.c.h.b16 %v8130
        %v8211 = vunpack.c.h.b16 %v8131
        %v8212 = vunpack.c.l.b16 %v8132
        %v8213 = vunpack.c.l.b16 %v8133
        %v8214 = vunpack.c.h.b16 %v8132
        %v8215 = vunpack.c.h.b16 %v8133
        %v8216 = vunpack.c.l.b16 %v8134
        %v8217 = vunpack.c.l.b16 %v8135
        %v8218 = vunpack.c.h.b16 %v8134
        %v8219 = vunpack.c.h.b16 %v8135
        %v8220 = vunpack.c.l.b16 %v8136
        %v8221 = vunpack.c.l.b16 %v8137
        %v8222 = vunpack.c.h.b16 %v8136
        %v8223 = vunpack.c.h.b16 %v8137
        %v8224 = vunpack.c.l.b16 %v8138
        %v8225 = vunpack.c.l.b16 %v8139
        %v8226 = vunpack.c.h.b16 %v8138
        %v8227 = vunpack.c.h.b16 %v8139
        %v8228 = vunpack.c.l.b16 %v8140
        %v8229 = vunpack.c.l.b16 %v8141
        %v8230 = vunpack.c.h.b16 %v8140
        %v8231 = vunpack.c.h.b16 %v8141
        %v8232 = vunpack.c.l.b16 %v8142
        %v8233 = vunpack.c.l.b16 %v8143
        %v8234 = vunpack.c.h.b16 %v8142
        %v8235 = vunpack.c.h.b16 %v8143
        %v8236 = vunpack.c.l.b16 %v8144
        %v8237 = vunpack.c.l.b16 %v8145
        %v8238 = vunpack.c.h.b16 %v8144
        %v8239 = vunpack.c.h.b16 %v8145
        %v8240 = vunpack.c.l.b16 %v8146
        %v8241 = vunpack.c.l.b16 %v8147
        %v8242 = vunpack.c.h.b16 %v8146
        %v8243 = vunpack.c.h.b16 %v8147
        %v8244 = vpack.c.b16 %v8181, %v8180
        %v8245 = vpack.c.b16 %v8183, %v8182
        %v8246 = vpack.c.b16 %v8185, %v8184
        %v8247 = vpack.c.b16 %v8187, %v8186
        %v8248 = vpack.c.b16 %v8189, %v8188
        %v8249 = vpack.c.b16 %v8191, %v8190
        %v8250 = vpack.c.b16 %v8193, %v8192
        %v8251 = vpack.c.b16 %v8195, %v8194
        %v8252 = vpack.c.b16 %v8197, %v8196
        %v8253 = vpack.c.b16 %v8199, %v8198
        %v8254 = vpack.c.b16 %v8201, %v8200
        %v8255 = vpack.c.b16 %v8203, %v8202
        %v8256 = vpack.c.b16 %v8205, %v8204
        %v8257 = vpack.c.b16 %v8207, %v8206
        %v8258 = vpack.c.b16 %v8209, %v8208
        %v8259 = vpack.c.b16 %v8211, %v8210
        %v8260 = vpack.c.b16 %v8213, %v8212
        %v8261 = vpack.c.b16 %v8215, %v8214
        %v8262 = vpack.c.b16 %v8217, %v8216
        %v8263 = vpack.c.b16 %v8219, %v8218
        %v8264 = vpack.c.b16 %v8221, %v8220
        %v8265 = vpack.c.b16 %v8223, %v8222
        %v8266 = vpack.c.b16 %v8225, %v8224
        %v8267 = vpack.c.b16 %v8227, %v8226
        %v8268 = vpack.c.b16 %v8229, %v8228
        %v8269 = vpack.c.b16 %v8231, %v8230
        %v8270 = vpack.c.b16 %v8233, %v8232
        %v8271 = vpack.c.b16 %v8235, %v8234
        %v8272 = vpack.c.b16 %v8237, %v8236
        %v8273 = vpack.c.b16 %v8239, %v8238
        %v8274 = vpack.c.b16 %v8241, %v8240
        %v8275 = vpack.c.b16 %v8243, %v8242
        %8308 = vst [vmem:[%s415] sm:$0xff] %v8244
        %8309 = vst [vmem:[%s415 + $0x8] sm:$0xff] %v8245
        %8310 = vst [vmem:[%s415 + $0x10] sm:$0xff] %v8246
        %8311 = vst [vmem:[%s415 + $0x18] sm:$0xff] %v8247
        %8312 = vst [vmem:[%s415 + $0x20] sm:$0xff] %v8248
        %8313 = vst [vmem:[%s415 + $0x28] sm:$0xff] %v8249
        %8314 = vst [vmem:[%s415 + $0x30] sm:$0xff] %v8250
        %8315 = vst [vmem:[%s415 + $0x38] sm:$0xff] %v8251
        %8316 = vst [vmem:[%s415 + $0x40] sm:$0xff] %v8252
        %8317 = vst [vmem:[%s415 + $0x48] sm:$0xff] %v8253
        %8318 = vst [vmem:[%s415 + $0x50] sm:$0xff] %v8254
        %8319 = vst [vmem:[%s415 + $0x58] sm:$0xff] %v8255
        %8320 = vst [vmem:[%s415 + $0x60] sm:$0xff] %v8256
        %8321 = vst [vmem:[%s415 + $0x68] sm:$0xff] %v8257
        %8322 = vst [vmem:[%s415 + $0x70] sm:$0xff] %v8258
        %8323 = vst [vmem:[%s415 + $0x78] sm:$0xff] %v8259
        %8324 = vst [vmem:[%s415 + $0x80] sm:$0xff] %v8260
        %8325 = vst [vmem:[%s415 + $0x88] sm:$0xff] %v8261
        %8326 = vst [vmem:[%s415 + $0x90] sm:$0xff] %v8262
        %8327 = vst [vmem:[%s415 + $0x98] sm:$0xff] %v8263
        %8328 = vst [vmem:[%s415 + $0xa0] sm:$0xff] %v8264
        %8329 = vst [vmem:[%s415 + $0xa8] sm:$0xff] %v8265
        %8330 = vst [vmem:[%s415 + $0xb0] sm:$0xff] %v8266
        %8331 = vst [vmem:[%s415 + $0xb8] sm:$0xff] %v8267
        %8332 = vst [vmem:[%s415 + $0xc0] sm:$0xff] %v8268
        %8333 = vst [vmem:[%s415 + $0xc8] sm:$0xff] %v8269
        %8334 = vst [vmem:[%s415 + $0xd0] sm:$0xff] %v8270
        %8335 = vst [vmem:[%s415 + $0xd8] sm:$0xff] %v8271
        %8336 = vst [vmem:[%s415 + $0xe0] sm:$0xff] %v8272
        %8337 = vst [vmem:[%s415 + $0xe8] sm:$0xff] %v8273
        %8338 = vst [vmem:[%s415 + $0xf0] sm:$0xff] %v8274
        %8339 = vst [vmem:[%s415 + $0xf8] sm:$0xff] %v8275
        %v8340 = vpack.c.bf16 %v7450, %v7444
        %v8341 = vpack.c.bf16 %v7462, %v7456
        %v8342 = vpack.c.bf16 %v7474, %v7468
        %v8343 = vpack.c.bf16 %v7486, %v7480
        %v8344 = vpack.c.bf16 %v7498, %v7492
        %v8345 = vpack.c.bf16 %v7510, %v7504
        %v8346 = vpack.c.bf16 %v7522, %v7516
        %v8347 = vpack.c.bf16 %v7534, %v7528
        %v8348 = vpack.c.bf16 %v7546, %v7540
        %v8349 = vpack.c.bf16 %v7558, %v7552
        %v8350 = vpack.c.bf16 %v7570, %v7564
        %v8351 = vpack.c.bf16 %v7582, %v7576
        %v8352 = vpack.c.bf16 %v7594, %v7588
        %v8353 = vpack.c.bf16 %v7606, %v7600
        %v8354 = vpack.c.bf16 %v7618, %v7612
        %v8355 = vpack.c.bf16 %v7630, %v7624
        %v8372 = vunpack.c.l.b16 %v8340
        %v8373 = vunpack.c.h.b16 %v8340
        %v8374 = vunpack.c.l.b16 %v8341
        %v8375 = vunpack.c.h.b16 %v8341
        %v8376 = vunpack.c.l.b16 %v8342
        %v8377 = vunpack.c.h.b16 %v8342
        %v8378 = vunpack.c.l.b16 %v8343
        %v8379 = vunpack.c.h.b16 %v8343
        %v8380 = vunpack.c.l.b16 %v8344
        %v8381 = vunpack.c.h.b16 %v8344
        %v8382 = vunpack.c.l.b16 %v8345
        %v8383 = vunpack.c.h.b16 %v8345
        %v8384 = vunpack.c.l.b16 %v8346
        %v8385 = vunpack.c.h.b16 %v8346
        %v8386 = vunpack.c.l.b16 %v8347
        %v8387 = vunpack.c.h.b16 %v8347
        %v8388 = vunpack.c.l.b16 %v8348
        %v8389 = vunpack.c.h.b16 %v8348
        %v8390 = vunpack.c.l.b16 %v8349
        %v8391 = vunpack.c.h.b16 %v8349
        %v8392 = vunpack.c.l.b16 %v8350
        %v8393 = vunpack.c.h.b16 %v8350
        %v8394 = vunpack.c.l.b16 %v8351
        %v8395 = vunpack.c.h.b16 %v8351
        %v8396 = vunpack.c.l.b16 %v8352
        %v8397 = vunpack.c.h.b16 %v8352
        %v8398 = vunpack.c.l.b16 %v8353
        %v8399 = vunpack.c.h.b16 %v8353
        %v8400 = vunpack.c.l.b16 %v8354
        %v8401 = vunpack.c.h.b16 %v8354
        %v8402 = vunpack.c.l.b16 %v8355
        %v8403 = vunpack.c.h.b16 %v8355
        %v8404 = vpack.c.b16 %v8372, %v8372
        %v8405 = vpack.c.b16 %v8373, %v8373
        %v8406 = vpack.c.b16 %v8374, %v8374
        %v8407 = vpack.c.b16 %v8375, %v8375
        %v8408 = vpack.c.b16 %v8376, %v8376
        %v8409 = vpack.c.b16 %v8377, %v8377
        %v8410 = vpack.c.b16 %v8378, %v8378
        %v8411 = vpack.c.b16 %v8379, %v8379
        %v8412 = vpack.c.b16 %v8380, %v8380
        %v8413 = vpack.c.b16 %v8381, %v8381
        %v8414 = vpack.c.b16 %v8382, %v8382
        %v8415 = vpack.c.b16 %v8383, %v8383
        %v8416 = vpack.c.b16 %v8384, %v8384
        %v8417 = vpack.c.b16 %v8385, %v8385
        %v8418 = vpack.c.b16 %v8386, %v8386
        %v8419 = vpack.c.b16 %v8387, %v8387
        %v8420 = vpack.c.b16 %v8388, %v8388
        %v8421 = vpack.c.b16 %v8389, %v8389
        %v8422 = vpack.c.b16 %v8390, %v8390
        %v8423 = vpack.c.b16 %v8391, %v8391
        %v8424 = vpack.c.b16 %v8392, %v8392
        %v8425 = vpack.c.b16 %v8393, %v8393
        %v8426 = vpack.c.b16 %v8394, %v8394
        %v8427 = vpack.c.b16 %v8395, %v8395
        %v8428 = vpack.c.b16 %v8396, %v8396
        %v8429 = vpack.c.b16 %v8397, %v8397
        %v8430 = vpack.c.b16 %v8398, %v8398
        %v8431 = vpack.c.b16 %v8399, %v8399
        %v8432 = vpack.c.b16 %v8400, %v8400
        %v8433 = vpack.c.b16 %v8401, %v8401
        %v8434 = vpack.c.b16 %v8402, %v8402
        %v8435 = vpack.c.b16 %v8403, %v8403
        %vm8468 = vcmask 519168
        %8469 = vst.msk [vmem:[%s427] sm:$0xf] %vm8468, %v8404
        %8470 = vst.msk [vmem:[%s427 + $0x4] sm:$0xf] %vm8468, %v8405
        %8471 = vst.msk [vmem:[%s427 + $0x8] sm:$0xf] %vm8468, %v8406
        %8472 = vst.msk [vmem:[%s427 + $0xc] sm:$0xf] %vm8468, %v8407
        %8473 = vst.msk [vmem:[%s427 + $0x10] sm:$0xf] %vm8468, %v8408
        %8474 = vst.msk [vmem:[%s427 + $0x14] sm:$0xf] %vm8468, %v8409
        %8475 = vst.msk [vmem:[%s427 + $0x18] sm:$0xf] %vm8468, %v8410
        %8476 = vst.msk [vmem:[%s427 + $0x1c] sm:$0xf] %vm8468, %v8411
        %8477 = vst.msk [vmem:[%s427 + $0x20] sm:$0xf] %vm8468, %v8412
        %8478 = vst.msk [vmem:[%s427 + $0x24] sm:$0xf] %vm8468, %v8413
        %8479 = vst.msk [vmem:[%s427 + $0x28] sm:$0xf] %vm8468, %v8414
        %8480 = vst.msk [vmem:[%s427 + $0x2c] sm:$0xf] %vm8468, %v8415
        %8481 = vst.msk [vmem:[%s427 + $0x30] sm:$0xf] %vm8468, %v8416
        %8482 = vst.msk [vmem:[%s427 + $0x34] sm:$0xf] %vm8468, %v8417
        %8483 = vst.msk [vmem:[%s427 + $0x38] sm:$0xf] %vm8468, %v8418
        %8484 = vst.msk [vmem:[%s427 + $0x3c] sm:$0xf] %vm8468, %v8419
        %8485 = vst.msk [vmem:[%s427 + $0x40] sm:$0xf] %vm8468, %v8420
        %8486 = vst.msk [vmem:[%s427 + $0x44] sm:$0xf] %vm8468, %v8421
        %8487 = vst.msk [vmem:[%s427 + $0x48] sm:$0xf] %vm8468, %v8422
        %8488 = vst.msk [vmem:[%s427 + $0x4c] sm:$0xf] %vm8468, %v8423
        %8489 = vst.msk [vmem:[%s427 + $0x50] sm:$0xf] %vm8468, %v8424
        %8490 = vst.msk [vmem:[%s427 + $0x54] sm:$0xf] %vm8468, %v8425
        %8491 = vst.msk [vmem:[%s427 + $0x58] sm:$0xf] %vm8468, %v8426
        %8492 = vst.msk [vmem:[%s427 + $0x5c] sm:$0xf] %vm8468, %v8427
        %8493 = vst.msk [vmem:[%s427 + $0x60] sm:$0xf] %vm8468, %v8428
        %8494 = vst.msk [vmem:[%s427 + $0x64] sm:$0xf] %vm8468, %v8429
        %8495 = vst.msk [vmem:[%s427 + $0x68] sm:$0xf] %vm8468, %v8430
        %8496 = vst.msk [vmem:[%s427 + $0x6c] sm:$0xf] %vm8468, %v8431
        %8497 = vst.msk [vmem:[%s427 + $0x70] sm:$0xf] %vm8468, %v8432
        %8498 = vst.msk [vmem:[%s427 + $0x74] sm:$0xf] %vm8468, %v8433
        %8499 = vst.msk [vmem:[%s427 + $0x78] sm:$0xf] %vm8468, %v8434
        %8500 = vst.msk [vmem:[%s427 + $0x7c] sm:$0xf] %vm8468, %v8435
        %8501 = vrot.lane.b32.xlu0 %v8404, 64
        %v8502 = vpop.permute.xlu0 %8501
        %8503 = vrot.lane.b32.xlu0 %v8405, 64
        %v8504 = vpop.permute.xlu0 %8503
        %8505 = vrot.lane.b32.xlu0 %v8406, 64
        %v8506 = vpop.permute.xlu0 %8505
        %8507 = vrot.lane.b32.xlu0 %v8407, 64
        %v8508 = vpop.permute.xlu0 %8507
        %8509 = vrot.lane.b32.xlu0 %v8408, 64
        %v8510 = vpop.permute.xlu0 %8509
        %8511 = vrot.lane.b32.xlu0 %v8409, 64
        %v8512 = vpop.permute.xlu0 %8511
        %8513 = vrot.lane.b32.xlu0 %v8410, 64
        %v8514 = vpop.permute.xlu0 %8513
        %8515 = vrot.lane.b32.xlu0 %v8411, 64
        %v8516 = vpop.permute.xlu0 %8515
        %8517 = vrot.lane.b32.xlu0 %v8412, 64
        %v8518 = vpop.permute.xlu0 %8517
        %8519 = vrot.lane.b32.xlu0 %v8413, 64
        %v8520 = vpop.permute.xlu0 %8519
        %8521 = vrot.lane.b32.xlu0 %v8414, 64
        %v8522 = vpop.permute.xlu0 %8521
        %8523 = vrot.lane.b32.xlu0 %v8415, 64
        %v8524 = vpop.permute.xlu0 %8523
        %8525 = vrot.lane.b32.xlu0 %v8416, 64
        %v8526 = vpop.permute.xlu0 %8525
        %8527 = vrot.lane.b32.xlu0 %v8417, 64
        %v8528 = vpop.permute.xlu0 %8527
        %8529 = vrot.lane.b32.xlu0 %v8418, 64
        %v8530 = vpop.permute.xlu0 %8529
        %8531 = vrot.lane.b32.xlu0 %v8419, 64
        %v8532 = vpop.permute.xlu0 %8531
        %8533 = vrot.lane.b32.xlu0 %v8420, 64
        %v8534 = vpop.permute.xlu0 %8533
        %8535 = vrot.lane.b32.xlu0 %v8421, 64
        %v8536 = vpop.permute.xlu0 %8535
        %8537 = vrot.lane.b32.xlu0 %v8422, 64
        %v8538 = vpop.permute.xlu0 %8537
        %8539 = vrot.lane.b32.xlu0 %v8423, 64
        %v8540 = vpop.permute.xlu0 %8539
        %8541 = vrot.lane.b32.xlu0 %v8424, 64
        %v8542 = vpop.permute.xlu0 %8541
        %8543 = vrot.lane.b32.xlu0 %v8425, 64
        %v8544 = vpop.permute.xlu0 %8543
        %8545 = vrot.lane.b32.xlu0 %v8426, 64
        %v8546 = vpop.permute.xlu0 %8545
        %8547 = vrot.lane.b32.xlu0 %v8427, 64
        %v8548 = vpop.permute.xlu0 %8547
        %8549 = vrot.lane.b32.xlu0 %v8428, 64
        %v8550 = vpop.permute.xlu0 %8549
        %8551 = vrot.lane.b32.xlu0 %v8429, 64
        %v8552 = vpop.permute.xlu0 %8551
        %8553 = vrot.lane.b32.xlu0 %v8430, 64
        %v8554 = vpop.permute.xlu0 %8553
        %8555 = vrot.lane.b32.xlu0 %v8431, 64
        %v8556 = vpop.permute.xlu0 %8555
        %8557 = vrot.lane.b32.xlu0 %v8432, 64
        %v8558 = vpop.permute.xlu0 %8557
        %8559 = vrot.lane.b32.xlu0 %v8433, 64
        %v8560 = vpop.permute.xlu0 %8559
        %8561 = vrot.lane.b32.xlu0 %v8434, 64
        %v8562 = vpop.permute.xlu0 %8561
        %8563 = vrot.lane.b32.xlu0 %v8435, 64
        %v8564 = vpop.permute.xlu0 %8563
        %s8597 = scalar_lea.vmem %s427, 128
        %8598 = vst.msk [vmem:[%s8597] sm:$0xf] %vm8468, %v8502
        %8599 = vst.msk [vmem:[%s8597 + $0x4] sm:$0xf] %vm8468, %v8504
        %8600 = vst.msk [vmem:[%s8597 + $0x8] sm:$0xf] %vm8468, %v8506
        %8601 = vst.msk [vmem:[%s8597 + $0xc] sm:$0xf] %vm8468, %v8508
        %8602 = vst.msk [vmem:[%s8597 + $0x10] sm:$0xf] %vm8468, %v8510
        %8603 = vst.msk [vmem:[%s8597 + $0x14] sm:$0xf] %vm8468, %v8512
        %8604 = vst.msk [vmem:[%s8597 + $0x18] sm:$0xf] %vm8468, %v8514
        %8605 = vst.msk [vmem:[%s8597 + $0x1c] sm:$0xf] %vm8468, %v8516
        %8606 = vst.msk [vmem:[%s8597 + $0x20] sm:$0xf] %vm8468, %v8518
        %8607 = vst.msk [vmem:[%s8597 + $0x24] sm:$0xf] %vm8468, %v8520
        %8608 = vst.msk [vmem:[%s8597 + $0x28] sm:$0xf] %vm8468, %v8522
        %8609 = vst.msk [vmem:[%s8597 + $0x2c] sm:$0xf] %vm8468, %v8524
        %8610 = vst.msk [vmem:[%s8597 + $0x30] sm:$0xf] %vm8468, %v8526
        %8611 = vst.msk [vmem:[%s8597 + $0x34] sm:$0xf] %vm8468, %v8528
        %8612 = vst.msk [vmem:[%s8597 + $0x38] sm:$0xf] %vm8468, %v8530
        %8613 = vst.msk [vmem:[%s8597 + $0x3c] sm:$0xf] %vm8468, %v8532
        %8614 = vst.msk [vmem:[%s8597 + $0x40] sm:$0xf] %vm8468, %v8534
        %8615 = vst.msk [vmem:[%s8597 + $0x44] sm:$0xf] %vm8468, %v8536
        %8616 = vst.msk [vmem:[%s8597 + $0x48] sm:$0xf] %vm8468, %v8538
        %8617 = vst.msk [vmem:[%s8597 + $0x4c] sm:$0xf] %vm8468, %v8540
        %8618 = vst.msk [vmem:[%s8597 + $0x50] sm:$0xf] %vm8468, %v8542
        %8619 = vst.msk [vmem:[%s8597 + $0x54] sm:$0xf] %vm8468, %v8544
        %8620 = vst.msk [vmem:[%s8597 + $0x58] sm:$0xf] %vm8468, %v8546
        %8621 = vst.msk [vmem:[%s8597 + $0x5c] sm:$0xf] %vm8468, %v8548
        %8622 = vst.msk [vmem:[%s8597 + $0x60] sm:$0xf] %vm8468, %v8550
        %8623 = vst.msk [vmem:[%s8597 + $0x64] sm:$0xf] %vm8468, %v8552
        %8624 = vst.msk [vmem:[%s8597 + $0x68] sm:$0xf] %vm8468, %v8554
        %8625 = vst.msk [vmem:[%s8597 + $0x6c] sm:$0xf] %vm8468, %v8556
        %8626 = vst.msk [vmem:[%s8597 + $0x70] sm:$0xf] %vm8468, %v8558
        %8627 = vst.msk [vmem:[%s8597 + $0x74] sm:$0xf] %vm8468, %v8560
        %8628 = vst.msk [vmem:[%s8597 + $0x78] sm:$0xf] %vm8468, %v8562
        %8629 = vst.msk [vmem:[%s8597 + $0x7c] sm:$0xf] %vm8468, %v8564
        %v8630 = vpack.c.bf16 %v7451, %v7445
        %v8631 = vpack.c.bf16 %v7463, %v7457
        %v8632 = vpack.c.bf16 %v7475, %v7469
        %v8633 = vpack.c.bf16 %v7487, %v7481
        %v8634 = vpack.c.bf16 %v7499, %v7493
        %v8635 = vpack.c.bf16 %v7511, %v7505
        %v8636 = vpack.c.bf16 %v7523, %v7517
        %v8637 = vpack.c.bf16 %v7535, %v7529
        %v8638 = vpack.c.bf16 %v7547, %v7541
        %v8639 = vpack.c.bf16 %v7559, %v7553
        %v8640 = vpack.c.bf16 %v7571, %v7565
        %v8641 = vpack.c.bf16 %v7583, %v7577
        %v8642 = vpack.c.bf16 %v7595, %v7589
        %v8643 = vpack.c.bf16 %v7607, %v7601
        %v8644 = vpack.c.bf16 %v7619, %v7613
        %v8645 = vpack.c.bf16 %v7631, %v7625
        %v8662 = vunpack.c.l.b16 %v8630
        %v8663 = vunpack.c.h.b16 %v8630
        %v8664 = vunpack.c.l.b16 %v8631
        %v8665 = vunpack.c.h.b16 %v8631
        %v8666 = vunpack.c.l.b16 %v8632
        %v8667 = vunpack.c.h.b16 %v8632
        %v8668 = vunpack.c.l.b16 %v8633
        %v8669 = vunpack.c.h.b16 %v8633
        %v8670 = vunpack.c.l.b16 %v8634
        %v8671 = vunpack.c.h.b16 %v8634
        %v8672 = vunpack.c.l.b16 %v8635
        %v8673 = vunpack.c.h.b16 %v8635
        %v8674 = vunpack.c.l.b16 %v8636
        %v8675 = vunpack.c.h.b16 %v8636
        %v8676 = vunpack.c.l.b16 %v8637
        %v8677 = vunpack.c.h.b16 %v8637
        %v8678 = vunpack.c.l.b16 %v8638
        %v8679 = vunpack.c.h.b16 %v8638
        %v8680 = vunpack.c.l.b16 %v8639
        %v8681 = vunpack.c.h.b16 %v8639
        %v8682 = vunpack.c.l.b16 %v8640
        %v8683 = vunpack.c.h.b16 %v8640
        %v8684 = vunpack.c.l.b16 %v8641
        %v8685 = vunpack.c.h.b16 %v8641
        %v8686 = vunpack.c.l.b16 %v8642
        %v8687 = vunpack.c.h.b16 %v8642
        %v8688 = vunpack.c.l.b16 %v8643
        %v8689 = vunpack.c.h.b16 %v8643
        %v8690 = vunpack.c.l.b16 %v8644
        %v8691 = vunpack.c.h.b16 %v8644
        %v8692 = vunpack.c.l.b16 %v8645
        %v8693 = vunpack.c.h.b16 %v8645
        %v8694 = vpack.c.b16 %v8662, %v8662
        %v8695 = vpack.c.b16 %v8663, %v8663
        %v8696 = vpack.c.b16 %v8664, %v8664
        %v8697 = vpack.c.b16 %v8665, %v8665
        %v8698 = vpack.c.b16 %v8666, %v8666
        %v8699 = vpack.c.b16 %v8667, %v8667
        %v8700 = vpack.c.b16 %v8668, %v8668
        %v8701 = vpack.c.b16 %v8669, %v8669
        %v8702 = vpack.c.b16 %v8670, %v8670
        %v8703 = vpack.c.b16 %v8671, %v8671
        %v8704 = vpack.c.b16 %v8672, %v8672
        %v8705 = vpack.c.b16 %v8673, %v8673
        %v8706 = vpack.c.b16 %v8674, %v8674
        %v8707 = vpack.c.b16 %v8675, %v8675
        %v8708 = vpack.c.b16 %v8676, %v8676
        %v8709 = vpack.c.b16 %v8677, %v8677
        %v8710 = vpack.c.b16 %v8678, %v8678
        %v8711 = vpack.c.b16 %v8679, %v8679
        %v8712 = vpack.c.b16 %v8680, %v8680
        %v8713 = vpack.c.b16 %v8681, %v8681
        %v8714 = vpack.c.b16 %v8682, %v8682
        %v8715 = vpack.c.b16 %v8683, %v8683
        %v8716 = vpack.c.b16 %v8684, %v8684
        %v8717 = vpack.c.b16 %v8685, %v8685
        %v8718 = vpack.c.b16 %v8686, %v8686
        %v8719 = vpack.c.b16 %v8687, %v8687
        %v8720 = vpack.c.b16 %v8688, %v8688
        %v8721 = vpack.c.b16 %v8689, %v8689
        %v8722 = vpack.c.b16 %v8690, %v8690
        %v8723 = vpack.c.b16 %v8691, %v8691
        %v8724 = vpack.c.b16 %v8692, %v8692
        %v8725 = vpack.c.b16 %v8693, %v8693
        %s8758 = scalar_lea.vmem %s427, 256
        %8759 = vst.msk [vmem:[%s8758] sm:$0xf] %vm8468, %v8694
        %8760 = vst.msk [vmem:[%s8758 + $0x4] sm:$0xf] %vm8468, %v8695
        %8761 = vst.msk [vmem:[%s8758 + $0x8] sm:$0xf] %vm8468, %v8696
        %8762 = vst.msk [vmem:[%s8758 + $0xc] sm:$0xf] %vm8468, %v8697
        %8763 = vst.msk [vmem:[%s8758 + $0x10] sm:$0xf] %vm8468, %v8698
        %8764 = vst.msk [vmem:[%s8758 + $0x14] sm:$0xf] %vm8468, %v8699
        %8765 = vst.msk [vmem:[%s8758 + $0x18] sm:$0xf] %vm8468, %v8700
        %8766 = vst.msk [vmem:[%s8758 + $0x1c] sm:$0xf] %vm8468, %v8701
        %8767 = vst.msk [vmem:[%s8758 + $0x20] sm:$0xf] %vm8468, %v8702
        %8768 = vst.msk [vmem:[%s8758 + $0x24] sm:$0xf] %vm8468, %v8703
        %8769 = vst.msk [vmem:[%s8758 + $0x28] sm:$0xf] %vm8468, %v8704
        %8770 = vst.msk [vmem:[%s8758 + $0x2c] sm:$0xf] %vm8468, %v8705
        %8771 = vst.msk [vmem:[%s8758 + $0x30] sm:$0xf] %vm8468, %v8706
        %8772 = vst.msk [vmem:[%s8758 + $0x34] sm:$0xf] %vm8468, %v8707
        %8773 = vst.msk [vmem:[%s8758 + $0x38] sm:$0xf] %vm8468, %v8708
        %8774 = vst.msk [vmem:[%s8758 + $0x3c] sm:$0xf] %vm8468, %v8709
        %8775 = vst.msk [vmem:[%s8758 + $0x40] sm:$0xf] %vm8468, %v8710
        %8776 = vst.msk [vmem:[%s8758 + $0x44] sm:$0xf] %vm8468, %v8711
        %8777 = vst.msk [vmem:[%s8758 + $0x48] sm:$0xf] %vm8468, %v8712
        %8778 = vst.msk [vmem:[%s8758 + $0x4c] sm:$0xf] %vm8468, %v8713
        %8779 = vst.msk [vmem:[%s8758 + $0x50] sm:$0xf] %vm8468, %v8714
        %8780 = vst.msk [vmem:[%s8758 + $0x54] sm:$0xf] %vm8468, %v8715
        %8781 = vst.msk [vmem:[%s8758 + $0x58] sm:$0xf] %vm8468, %v8716
        %8782 = vst.msk [vmem:[%s8758 + $0x5c] sm:$0xf] %vm8468, %v8717
        %8783 = vst.msk [vmem:[%s8758 + $0x60] sm:$0xf] %vm8468, %v8718
        %8784 = vst.msk [vmem:[%s8758 + $0x64] sm:$0xf] %vm8468, %v8719
        %8785 = vst.msk [vmem:[%s8758 + $0x68] sm:$0xf] %vm8468, %v8720
        %8786 = vst.msk [vmem:[%s8758 + $0x6c] sm:$0xf] %vm8468, %v8721
        %8787 = vst.msk [vmem:[%s8758 + $0x70] sm:$0xf] %vm8468, %v8722
        %8788 = vst.msk [vmem:[%s8758 + $0x74] sm:$0xf] %vm8468, %v8723
        %8789 = vst.msk [vmem:[%s8758 + $0x78] sm:$0xf] %vm8468, %v8724
        %8790 = vst.msk [vmem:[%s8758 + $0x7c] sm:$0xf] %vm8468, %v8725
        %8791 = vrot.lane.b32.xlu0 %v8694, 64
        %v8792 = vpop.permute.xlu0 %8791
        %8793 = vrot.lane.b32.xlu0 %v8695, 64
        %v8794 = vpop.permute.xlu0 %8793
        %8795 = vrot.lane.b32.xlu0 %v8696, 64
        %v8796 = vpop.permute.xlu0 %8795
        %8797 = vrot.lane.b32.xlu0 %v8697, 64
        %v8798 = vpop.permute.xlu0 %8797
        %8799 = vrot.lane.b32.xlu0 %v8698, 64
        %v8800 = vpop.permute.xlu0 %8799
        %8801 = vrot.lane.b32.xlu0 %v8699, 64
        %v8802 = vpop.permute.xlu0 %8801
        %8803 = vrot.lane.b32.xlu0 %v8700, 64
        %v8804 = vpop.permute.xlu0 %8803
        %8805 = vrot.lane.b32.xlu0 %v8701, 64
        %v8806 = vpop.permute.xlu0 %8805
        %8807 = vrot.lane.b32.xlu0 %v8702, 64
        %v8808 = vpop.permute.xlu0 %8807
        %8809 = vrot.lane.b32.xlu0 %v8703, 64
        %v8810 = vpop.permute.xlu0 %8809
        %8811 = vrot.lane.b32.xlu0 %v8704, 64
        %v8812 = vpop.permute.xlu0 %8811
        %8813 = vrot.lane.b32.xlu0 %v8705, 64
        %v8814 = vpop.permute.xlu0 %8813
        %8815 = vrot.lane.b32.xlu0 %v8706, 64
        %v8816 = vpop.permute.xlu0 %8815
        %8817 = vrot.lane.b32.xlu0 %v8707, 64
        %v8818 = vpop.permute.xlu0 %8817
        %8819 = vrot.lane.b32.xlu0 %v8708, 64
        %v8820 = vpop.permute.xlu0 %8819
        %8821 = vrot.lane.b32.xlu0 %v8709, 64
        %v8822 = vpop.permute.xlu0 %8821
        %8823 = vrot.lane.b32.xlu0 %v8710, 64
        %v8824 = vpop.permute.xlu0 %8823
        %8825 = vrot.lane.b32.xlu0 %v8711, 64
        %v8826 = vpop.permute.xlu0 %8825
        %8827 = vrot.lane.b32.xlu0 %v8712, 64
        %v8828 = vpop.permute.xlu0 %8827
        %8829 = vrot.lane.b32.xlu0 %v8713, 64
        %v8830 = vpop.permute.xlu0 %8829
        %8831 = vrot.lane.b32.xlu0 %v8714, 64
        %v8832 = vpop.permute.xlu0 %8831
        %8833 = vrot.lane.b32.xlu0 %v8715, 64
        %v8834 = vpop.permute.xlu0 %8833
        %8835 = vrot.lane.b32.xlu0 %v8716, 64
        %v8836 = vpop.permute.xlu0 %8835
        %8837 = vrot.lane.b32.xlu0 %v8717, 64
        %v8838 = vpop.permute.xlu0 %8837
        %8839 = vrot.lane.b32.xlu0 %v8718, 64
        %v8840 = vpop.permute.xlu0 %8839
        %8841 = vrot.lane.b32.xlu0 %v8719, 64
        %v8842 = vpop.permute.xlu0 %8841
        %8843 = vrot.lane.b32.xlu0 %v8720, 64
        %v8844 = vpop.permute.xlu0 %8843
        %8845 = vrot.lane.b32.xlu0 %v8721, 64
        %v8846 = vpop.permute.xlu0 %8845
        %8847 = vrot.lane.b32.xlu0 %v8722, 64
        %v8848 = vpop.permute.xlu0 %8847
        %8849 = vrot.lane.b32.xlu0 %v8723, 64
        %v8850 = vpop.permute.xlu0 %8849
        %8851 = vrot.lane.b32.xlu0 %v8724, 64
        %v8852 = vpop.permute.xlu0 %8851
        %8853 = vrot.lane.b32.xlu0 %v8725, 64
        %v8854 = vpop.permute.xlu0 %8853
        %s8887 = scalar_lea.vmem %s427, 384
        %8888 = vst.msk [vmem:[%s8887] sm:$0xf] %vm8468, %v8792
        %8889 = vst.msk [vmem:[%s8887 + $0x4] sm:$0xf] %vm8468, %v8794
        %8890 = vst.msk [vmem:[%s8887 + $0x8] sm:$0xf] %vm8468, %v8796
        %8891 = vst.msk [vmem:[%s8887 + $0xc] sm:$0xf] %vm8468, %v8798
        %8892 = vst.msk [vmem:[%s8887 + $0x10] sm:$0xf] %vm8468, %v8800
        %8893 = vst.msk [vmem:[%s8887 + $0x14] sm:$0xf] %vm8468, %v8802
        %8894 = vst.msk [vmem:[%s8887 + $0x18] sm:$0xf] %vm8468, %v8804
        %8895 = vst.msk [vmem:[%s8887 + $0x1c] sm:$0xf] %vm8468, %v8806
        %8896 = vst.msk [vmem:[%s8887 + $0x20] sm:$0xf] %vm8468, %v8808
        %8897 = vst.msk [vmem:[%s8887 + $0x24] sm:$0xf] %vm8468, %v8810
        %8898 = vst.msk [vmem:[%s8887 + $0x28] sm:$0xf] %vm8468, %v8812
        %8899 = vst.msk [vmem:[%s8887 + $0x2c] sm:$0xf] %vm8468, %v8814
        %8900 = vst.msk [vmem:[%s8887 + $0x30] sm:$0xf] %vm8468, %v8816
        %8901 = vst.msk [vmem:[%s8887 + $0x34] sm:$0xf] %vm8468, %v8818
        %8902 = vst.msk [vmem:[%s8887 + $0x38] sm:$0xf] %vm8468, %v8820
        %8903 = vst.msk [vmem:[%s8887 + $0x3c] sm:$0xf] %vm8468, %v8822
        %8904 = vst.msk [vmem:[%s8887 + $0x40] sm:$0xf] %vm8468, %v8824
        %8905 = vst.msk [vmem:[%s8887 + $0x44] sm:$0xf] %vm8468, %v8826
        %8906 = vst.msk [vmem:[%s8887 + $0x48] sm:$0xf] %vm8468, %v8828
        %8907 = vst.msk [vmem:[%s8887 + $0x4c] sm:$0xf] %vm8468, %v8830
        %8908 = vst.msk [vmem:[%s8887 + $0x50] sm:$0xf] %vm8468, %v8832
        %8909 = vst.msk [vmem:[%s8887 + $0x54] sm:$0xf] %vm8468, %v8834
        %8910 = vst.msk [vmem:[%s8887 + $0x58] sm:$0xf] %vm8468, %v8836
        %8911 = vst.msk [vmem:[%s8887 + $0x5c] sm:$0xf] %vm8468, %v8838
        %8912 = vst.msk [vmem:[%s8887 + $0x60] sm:$0xf] %vm8468, %v8840
        %8913 = vst.msk [vmem:[%s8887 + $0x64] sm:$0xf] %vm8468, %v8842
        %8914 = vst.msk [vmem:[%s8887 + $0x68] sm:$0xf] %vm8468, %v8844
        %8915 = vst.msk [vmem:[%s8887 + $0x6c] sm:$0xf] %vm8468, %v8846
        %8916 = vst.msk [vmem:[%s8887 + $0x70] sm:$0xf] %vm8468, %v8848
        %8917 = vst.msk [vmem:[%s8887 + $0x74] sm:$0xf] %vm8468, %v8850
        %8918 = vst.msk [vmem:[%s8887 + $0x78] sm:$0xf] %vm8468, %v8852
        %8919 = vst.msk [vmem:[%s8887 + $0x7c] sm:$0xf] %vm8468, %v8854
        %v8920 = vpack.c.bf16 %v7452, %v7446
        %v8921 = vpack.c.bf16 %v7464, %v7458
        %v8922 = vpack.c.bf16 %v7476, %v7470
        %v8923 = vpack.c.bf16 %v7488, %v7482
        %v8924 = vpack.c.bf16 %v7500, %v7494
        %v8925 = vpack.c.bf16 %v7512, %v7506
        %v8926 = vpack.c.bf16 %v7524, %v7518
        %v8927 = vpack.c.bf16 %v7536, %v7530
        %v8928 = vpack.c.bf16 %v7548, %v7542
        %v8929 = vpack.c.bf16 %v7560, %v7554
        %v8930 = vpack.c.bf16 %v7572, %v7566
        %v8931 = vpack.c.bf16 %v7584, %v7578
        %v8932 = vpack.c.bf16 %v7596, %v7590
        %v8933 = vpack.c.bf16 %v7608, %v7602
        %v8934 = vpack.c.bf16 %v7620, %v7614
        %v8935 = vpack.c.bf16 %v7632, %v7626
        %v8952 = vunpack.c.l.b16 %v8920
        %v8953 = vunpack.c.h.b16 %v8920
        %v8954 = vunpack.c.l.b16 %v8921
        %v8955 = vunpack.c.h.b16 %v8921
        %v8956 = vunpack.c.l.b16 %v8922
        %v8957 = vunpack.c.h.b16 %v8922
        %v8958 = vunpack.c.l.b16 %v8923
        %v8959 = vunpack.c.h.b16 %v8923
        %v8960 = vunpack.c.l.b16 %v8924
        %v8961 = vunpack.c.h.b16 %v8924
        %v8962 = vunpack.c.l.b16 %v8925
        %v8963 = vunpack.c.h.b16 %v8925
        %v8964 = vunpack.c.l.b16 %v8926
        %v8965 = vunpack.c.h.b16 %v8926
        %v8966 = vunpack.c.l.b16 %v8927
        %v8967 = vunpack.c.h.b16 %v8927
        %v8968 = vunpack.c.l.b16 %v8928
        %v8969 = vunpack.c.h.b16 %v8928
        %v8970 = vunpack.c.l.b16 %v8929
        %v8971 = vunpack.c.h.b16 %v8929
        %v8972 = vunpack.c.l.b16 %v8930
        %v8973 = vunpack.c.h.b16 %v8930
        %v8974 = vunpack.c.l.b16 %v8931
        %v8975 = vunpack.c.h.b16 %v8931
        %v8976 = vunpack.c.l.b16 %v8932
        %v8977 = vunpack.c.h.b16 %v8932
        %v8978 = vunpack.c.l.b16 %v8933
        %v8979 = vunpack.c.h.b16 %v8933
        %v8980 = vunpack.c.l.b16 %v8934
        %v8981 = vunpack.c.h.b16 %v8934
        %v8982 = vunpack.c.l.b16 %v8935
        %v8983 = vunpack.c.h.b16 %v8935
        %v8984 = vpack.c.b16 %v8952, %v8952
        %v8985 = vpack.c.b16 %v8953, %v8953
        %v8986 = vpack.c.b16 %v8954, %v8954
        %v8987 = vpack.c.b16 %v8955, %v8955
        %v8988 = vpack.c.b16 %v8956, %v8956
        %v8989 = vpack.c.b16 %v8957, %v8957
        %v8990 = vpack.c.b16 %v8958, %v8958
        %v8991 = vpack.c.b16 %v8959, %v8959
        %v8992 = vpack.c.b16 %v8960, %v8960
        %v8993 = vpack.c.b16 %v8961, %v8961
        %v8994 = vpack.c.b16 %v8962, %v8962
        %v8995 = vpack.c.b16 %v8963, %v8963
        %v8996 = vpack.c.b16 %v8964, %v8964
        %v8997 = vpack.c.b16 %v8965, %v8965
        %v8998 = vpack.c.b16 %v8966, %v8966
        %v8999 = vpack.c.b16 %v8967, %v8967
        %v9000 = vpack.c.b16 %v8968, %v8968
        %v9001 = vpack.c.b16 %v8969, %v8969
        %v9002 = vpack.c.b16 %v8970, %v8970
        %v9003 = vpack.c.b16 %v8971, %v8971
        %v9004 = vpack.c.b16 %v8972, %v8972
        %v9005 = vpack.c.b16 %v8973, %v8973
        %v9006 = vpack.c.b16 %v8974, %v8974
        %v9007 = vpack.c.b16 %v8975, %v8975
        %v9008 = vpack.c.b16 %v8976, %v8976
        %v9009 = vpack.c.b16 %v8977, %v8977
        %v9010 = vpack.c.b16 %v8978, %v8978
        %v9011 = vpack.c.b16 %v8979, %v8979
        %v9012 = vpack.c.b16 %v8980, %v8980
        %v9013 = vpack.c.b16 %v8981, %v8981
        %v9014 = vpack.c.b16 %v8982, %v8982
        %v9015 = vpack.c.b16 %v8983, %v8983
        %s9048 = scalar_lea.vmem %s427, 512
        %9049 = vst.msk [vmem:[%s9048] sm:$0xf] %vm8468, %v8984
        %9050 = vst.msk [vmem:[%s9048 + $0x4] sm:$0xf] %vm8468, %v8985
        %9051 = vst.msk [vmem:[%s9048 + $0x8] sm:$0xf] %vm8468, %v8986
        %9052 = vst.msk [vmem:[%s9048 + $0xc] sm:$0xf] %vm8468, %v8987
        %9053 = vst.msk [vmem:[%s9048 + $0x10] sm:$0xf] %vm8468, %v8988
        %9054 = vst.msk [vmem:[%s9048 + $0x14] sm:$0xf] %vm8468, %v8989
        %9055 = vst.msk [vmem:[%s9048 + $0x18] sm:$0xf] %vm8468, %v8990
        %9056 = vst.msk [vmem:[%s9048 + $0x1c] sm:$0xf] %vm8468, %v8991
        %9057 = vst.msk [vmem:[%s9048 + $0x20] sm:$0xf] %vm8468, %v8992
        %9058 = vst.msk [vmem:[%s9048 + $0x24] sm:$0xf] %vm8468, %v8993
        %9059 = vst.msk [vmem:[%s9048 + $0x28] sm:$0xf] %vm8468, %v8994
        %9060 = vst.msk [vmem:[%s9048 + $0x2c] sm:$0xf] %vm8468, %v8995
        %9061 = vst.msk [vmem:[%s9048 + $0x30] sm:$0xf] %vm8468, %v8996
        %9062 = vst.msk [vmem:[%s9048 + $0x34] sm:$0xf] %vm8468, %v8997
        %9063 = vst.msk [vmem:[%s9048 + $0x38] sm:$0xf] %vm8468, %v8998
        %9064 = vst.msk [vmem:[%s9048 + $0x3c] sm:$0xf] %vm8468, %v8999
        %9065 = vst.msk [vmem:[%s9048 + $0x40] sm:$0xf] %vm8468, %v9000
        %9066 = vst.msk [vmem:[%s9048 + $0x44] sm:$0xf] %vm8468, %v9001
        %9067 = vst.msk [vmem:[%s9048 + $0x48] sm:$0xf] %vm8468, %v9002
        %9068 = vst.msk [vmem:[%s9048 + $0x4c] sm:$0xf] %vm8468, %v9003
        %9069 = vst.msk [vmem:[%s9048 + $0x50] sm:$0xf] %vm8468, %v9004
        %9070 = vst.msk [vmem:[%s9048 + $0x54] sm:$0xf] %vm8468, %v9005
        %9071 = vst.msk [vmem:[%s9048 + $0x58] sm:$0xf] %vm8468, %v9006
        %9072 = vst.msk [vmem:[%s9048 + $0x5c] sm:$0xf] %vm8468, %v9007
        %9073 = vst.msk [vmem:[%s9048 + $0x60] sm:$0xf] %vm8468, %v9008
        %9074 = vst.msk [vmem:[%s9048 + $0x64] sm:$0xf] %vm8468, %v9009
        %9075 = vst.msk [vmem:[%s9048 + $0x68] sm:$0xf] %vm8468, %v9010
        %9076 = vst.msk [vmem:[%s9048 + $0x6c] sm:$0xf] %vm8468, %v9011
        %9077 = vst.msk [vmem:[%s9048 + $0x70] sm:$0xf] %vm8468, %v9012
        %9078 = vst.msk [vmem:[%s9048 + $0x74] sm:$0xf] %vm8468, %v9013
        %9079 = vst.msk [vmem:[%s9048 + $0x78] sm:$0xf] %vm8468, %v9014
        %9080 = vst.msk [vmem:[%s9048 + $0x7c] sm:$0xf] %vm8468, %v9015
        %9081 = vrot.lane.b32.xlu0 %v8984, 64
        %v9082 = vpop.permute.xlu0 %9081
        %9083 = vrot.lane.b32.xlu0 %v8985, 64
        %v9084 = vpop.permute.xlu0 %9083
        %9085 = vrot.lane.b32.xlu0 %v8986, 64
        %v9086 = vpop.permute.xlu0 %9085
        %9087 = vrot.lane.b32.xlu0 %v8987, 64
        %v9088 = vpop.permute.xlu0 %9087
        %9089 = vrot.lane.b32.xlu0 %v8988, 64
        %v9090 = vpop.permute.xlu0 %9089
        %9091 = vrot.lane.b32.xlu0 %v8989, 64
        %v9092 = vpop.permute.xlu0 %9091
        %9093 = vrot.lane.b32.xlu0 %v8990, 64
        %v9094 = vpop.permute.xlu0 %9093
        %9095 = vrot.lane.b32.xlu0 %v8991, 64
        %v9096 = vpop.permute.xlu0 %9095
        %9097 = vrot.lane.b32.xlu0 %v8992, 64
        %v9098 = vpop.permute.xlu0 %9097
        %9099 = vrot.lane.b32.xlu0 %v8993, 64
        %v9100 = vpop.permute.xlu0 %9099
        %9101 = vrot.lane.b32.xlu0 %v8994, 64
        %v9102 = vpop.permute.xlu0 %9101
        %9103 = vrot.lane.b32.xlu0 %v8995, 64
        %v9104 = vpop.permute.xlu0 %9103
        %9105 = vrot.lane.b32.xlu0 %v8996, 64
        %v9106 = vpop.permute.xlu0 %9105
        %9107 = vrot.lane.b32.xlu0 %v8997, 64
        %v9108 = vpop.permute.xlu0 %9107
        %9109 = vrot.lane.b32.xlu0 %v8998, 64
        %v9110 = vpop.permute.xlu0 %9109
        %9111 = vrot.lane.b32.xlu0 %v8999, 64
        %v9112 = vpop.permute.xlu0 %9111
        %9113 = vrot.lane.b32.xlu0 %v9000, 64
        %v9114 = vpop.permute.xlu0 %9113
        %9115 = vrot.lane.b32.xlu0 %v9001, 64
        %v9116 = vpop.permute.xlu0 %9115
        %9117 = vrot.lane.b32.xlu0 %v9002, 64
        %v9118 = vpop.permute.xlu0 %9117
        %9119 = vrot.lane.b32.xlu0 %v9003, 64
        %v9120 = vpop.permute.xlu0 %9119
        %9121 = vrot.lane.b32.xlu0 %v9004, 64
        %v9122 = vpop.permute.xlu0 %9121
        %9123 = vrot.lane.b32.xlu0 %v9005, 64
        %v9124 = vpop.permute.xlu0 %9123
        %9125 = vrot.lane.b32.xlu0 %v9006, 64
        %v9126 = vpop.permute.xlu0 %9125
        %9127 = vrot.lane.b32.xlu0 %v9007, 64
        %v9128 = vpop.permute.xlu0 %9127
        %9129 = vrot.lane.b32.xlu0 %v9008, 64
        %v9130 = vpop.permute.xlu0 %9129
        %9131 = vrot.lane.b32.xlu0 %v9009, 64
        %v9132 = vpop.permute.xlu0 %9131
        %9133 = vrot.lane.b32.xlu0 %v9010, 64
        %v9134 = vpop.permute.xlu0 %9133
        %9135 = vrot.lane.b32.xlu0 %v9011, 64
        %v9136 = vpop.permute.xlu0 %9135
        %9137 = vrot.lane.b32.xlu0 %v9012, 64
        %v9138 = vpop.permute.xlu0 %9137
        %9139 = vrot.lane.b32.xlu0 %v9013, 64
        %v9140 = vpop.permute.xlu0 %9139
        %9141 = vrot.lane.b32.xlu0 %v9014, 64
        %v9142 = vpop.permute.xlu0 %9141
        %9143 = vrot.lane.b32.xlu0 %v9015, 64
        %v9144 = vpop.permute.xlu0 %9143
        %s9177 = scalar_lea.vmem %s427, 640
        %9178 = vst.msk [vmem:[%s9177] sm:$0xf] %vm8468, %v9082
        %9179 = vst.msk [vmem:[%s9177 + $0x4] sm:$0xf] %vm8468, %v9084
        %9180 = vst.msk [vmem:[%s9177 + $0x8] sm:$0xf] %vm8468, %v9086
        %9181 = vst.msk [vmem:[%s9177 + $0xc] sm:$0xf] %vm8468, %v9088
        %9182 = vst.msk [vmem:[%s9177 + $0x10] sm:$0xf] %vm8468, %v9090
        %9183 = vst.msk [vmem:[%s9177 + $0x14] sm:$0xf] %vm8468, %v9092
        %9184 = vst.msk [vmem:[%s9177 + $0x18] sm:$0xf] %vm8468, %v9094
        %9185 = vst.msk [vmem:[%s9177 + $0x1c] sm:$0xf] %vm8468, %v9096
        %9186 = vst.msk [vmem:[%s9177 + $0x20] sm:$0xf] %vm8468, %v9098
        %9187 = vst.msk [vmem:[%s9177 + $0x24] sm:$0xf] %vm8468, %v9100
        %9188 = vst.msk [vmem:[%s9177 + $0x28] sm:$0xf] %vm8468, %v9102
        %9189 = vst.msk [vmem:[%s9177 + $0x2c] sm:$0xf] %vm8468, %v9104
        %9190 = vst.msk [vmem:[%s9177 + $0x30] sm:$0xf] %vm8468, %v9106
        %9191 = vst.msk [vmem:[%s9177 + $0x34] sm:$0xf] %vm8468, %v9108
        %9192 = vst.msk [vmem:[%s9177 + $0x38] sm:$0xf] %vm8468, %v9110
        %9193 = vst.msk [vmem:[%s9177 + $0x3c] sm:$0xf] %vm8468, %v9112
        %9194 = vst.msk [vmem:[%s9177 + $0x40] sm:$0xf] %vm8468, %v9114
        %9195 = vst.msk [vmem:[%s9177 + $0x44] sm:$0xf] %vm8468, %v9116
        %9196 = vst.msk [vmem:[%s9177 + $0x48] sm:$0xf] %vm8468, %v9118
        %9197 = vst.msk [vmem:[%s9177 + $0x4c] sm:$0xf] %vm8468, %v9120
        %9198 = vst.msk [vmem:[%s9177 + $0x50] sm:$0xf] %vm8468, %v9122
        %9199 = vst.msk [vmem:[%s9177 + $0x54] sm:$0xf] %vm8468, %v9124
        %9200 = vst.msk [vmem:[%s9177 + $0x58] sm:$0xf] %vm8468, %v9126
        %9201 = vst.msk [vmem:[%s9177 + $0x5c] sm:$0xf] %vm8468, %v9128
        %9202 = vst.msk [vmem:[%s9177 + $0x60] sm:$0xf] %vm8468, %v9130
        %9203 = vst.msk [vmem:[%s9177 + $0x64] sm:$0xf] %vm8468, %v9132
        %9204 = vst.msk [vmem:[%s9177 + $0x68] sm:$0xf] %vm8468, %v9134
        %9205 = vst.msk [vmem:[%s9177 + $0x6c] sm:$0xf] %vm8468, %v9136
        %9206 = vst.msk [vmem:[%s9177 + $0x70] sm:$0xf] %vm8468, %v9138
        %9207 = vst.msk [vmem:[%s9177 + $0x74] sm:$0xf] %vm8468, %v9140
        %9208 = vst.msk [vmem:[%s9177 + $0x78] sm:$0xf] %vm8468, %v9142
        %9209 = vst.msk [vmem:[%s9177 + $0x7c] sm:$0xf] %vm8468, %v9144
        %v9210 = vpack.c.bf16 %v7453, %v7447
        %v9211 = vpack.c.bf16 %v7465, %v7459
        %v9212 = vpack.c.bf16 %v7477, %v7471
        %v9213 = vpack.c.bf16 %v7489, %v7483
        %v9214 = vpack.c.bf16 %v7501, %v7495
        %v9215 = vpack.c.bf16 %v7513, %v7507
        %v9216 = vpack.c.bf16 %v7525, %v7519
        %v9217 = vpack.c.bf16 %v7537, %v7531
        %v9218 = vpack.c.bf16 %v7549, %v7543
        %v9219 = vpack.c.bf16 %v7561, %v7555
        %v9220 = vpack.c.bf16 %v7573, %v7567
        %v9221 = vpack.c.bf16 %v7585, %v7579
        %v9222 = vpack.c.bf16 %v7597, %v7591
        %v9223 = vpack.c.bf16 %v7609, %v7603
        %v9224 = vpack.c.bf16 %v7621, %v7615
        %v9225 = vpack.c.bf16 %v7633, %v7627
        %v9242 = vunpack.c.l.b16 %v9210
        %v9243 = vunpack.c.h.b16 %v9210
        %v9244 = vunpack.c.l.b16 %v9211
        %v9245 = vunpack.c.h.b16 %v9211
        %v9246 = vunpack.c.l.b16 %v9212
        %v9247 = vunpack.c.h.b16 %v9212
        %v9248 = vunpack.c.l.b16 %v9213
        %v9249 = vunpack.c.h.b16 %v9213
        %v9250 = vunpack.c.l.b16 %v9214
        %v9251 = vunpack.c.h.b16 %v9214
        %v9252 = vunpack.c.l.b16 %v9215
        %v9253 = vunpack.c.h.b16 %v9215
        %v9254 = vunpack.c.l.b16 %v9216
        %v9255 = vunpack.c.h.b16 %v9216
        %v9256 = vunpack.c.l.b16 %v9217
        %v9257 = vunpack.c.h.b16 %v9217
        %v9258 = vunpack.c.l.b16 %v9218
        %v9259 = vunpack.c.h.b16 %v9218
        %v9260 = vunpack.c.l.b16 %v9219
        %v9261 = vunpack.c.h.b16 %v9219
        %v9262 = vunpack.c.l.b16 %v9220
        %v9263 = vunpack.c.h.b16 %v9220
        %v9264 = vunpack.c.l.b16 %v9221
        %v9265 = vunpack.c.h.b16 %v9221
        %v9266 = vunpack.c.l.b16 %v9222
        %v9267 = vunpack.c.h.b16 %v9222
        %v9268 = vunpack.c.l.b16 %v9223
        %v9269 = vunpack.c.h.b16 %v9223
        %v9270 = vunpack.c.l.b16 %v9224
        %v9271 = vunpack.c.h.b16 %v9224
        %v9272 = vunpack.c.l.b16 %v9225
        %v9273 = vunpack.c.h.b16 %v9225
        %v9274 = vpack.c.b16 %v9242, %v9242
        %v9275 = vpack.c.b16 %v9243, %v9243
        %v9276 = vpack.c.b16 %v9244, %v9244
        %v9277 = vpack.c.b16 %v9245, %v9245
        %v9278 = vpack.c.b16 %v9246, %v9246
        %v9279 = vpack.c.b16 %v9247, %v9247
        %v9280 = vpack.c.b16 %v9248, %v9248
        %v9281 = vpack.c.b16 %v9249, %v9249
        %v9282 = vpack.c.b16 %v9250, %v9250
        %v9283 = vpack.c.b16 %v9251, %v9251
        %v9284 = vpack.c.b16 %v9252, %v9252
        %v9285 = vpack.c.b16 %v9253, %v9253
        %v9286 = vpack.c.b16 %v9254, %v9254
        %v9287 = vpack.c.b16 %v9255, %v9255
        %v9288 = vpack.c.b16 %v9256, %v9256
        %v9289 = vpack.c.b16 %v9257, %v9257
        %v9290 = vpack.c.b16 %v9258, %v9258
        %v9291 = vpack.c.b16 %v9259, %v9259
        %v9292 = vpack.c.b16 %v9260, %v9260
        %v9293 = vpack.c.b16 %v9261, %v9261
        %v9294 = vpack.c.b16 %v9262, %v9262
        %v9295 = vpack.c.b16 %v9263, %v9263
        %v9296 = vpack.c.b16 %v9264, %v9264
        %v9297 = vpack.c.b16 %v9265, %v9265
        %v9298 = vpack.c.b16 %v9266, %v9266
        %v9299 = vpack.c.b16 %v9267, %v9267
        %v9300 = vpack.c.b16 %v9268, %v9268
        %v9301 = vpack.c.b16 %v9269, %v9269
        %v9302 = vpack.c.b16 %v9270, %v9270
        %v9303 = vpack.c.b16 %v9271, %v9271
        %v9304 = vpack.c.b16 %v9272, %v9272
        %v9305 = vpack.c.b16 %v9273, %v9273
        %s9338 = scalar_lea.vmem %s427, 768
        %9339 = vst.msk [vmem:[%s9338] sm:$0xf] %vm8468, %v9274
        %9340 = vst.msk [vmem:[%s9338 + $0x4] sm:$0xf] %vm8468, %v9275
        %9341 = vst.msk [vmem:[%s9338 + $0x8] sm:$0xf] %vm8468, %v9276
        %9342 = vst.msk [vmem:[%s9338 + $0xc] sm:$0xf] %vm8468, %v9277
        %9343 = vst.msk [vmem:[%s9338 + $0x10] sm:$0xf] %vm8468, %v9278
        %9344 = vst.msk [vmem:[%s9338 + $0x14] sm:$0xf] %vm8468, %v9279
        %9345 = vst.msk [vmem:[%s9338 + $0x18] sm:$0xf] %vm8468, %v9280
        %9346 = vst.msk [vmem:[%s9338 + $0x1c] sm:$0xf] %vm8468, %v9281
        %9347 = vst.msk [vmem:[%s9338 + $0x20] sm:$0xf] %vm8468, %v9282
        %9348 = vst.msk [vmem:[%s9338 + $0x24] sm:$0xf] %vm8468, %v9283
        %9349 = vst.msk [vmem:[%s9338 + $0x28] sm:$0xf] %vm8468, %v9284
        %9350 = vst.msk [vmem:[%s9338 + $0x2c] sm:$0xf] %vm8468, %v9285
        %9351 = vst.msk [vmem:[%s9338 + $0x30] sm:$0xf] %vm8468, %v9286
        %9352 = vst.msk [vmem:[%s9338 + $0x34] sm:$0xf] %vm8468, %v9287
        %9353 = vst.msk [vmem:[%s9338 + $0x38] sm:$0xf] %vm8468, %v9288
        %9354 = vst.msk [vmem:[%s9338 + $0x3c] sm:$0xf] %vm8468, %v9289
        %9355 = vst.msk [vmem:[%s9338 + $0x40] sm:$0xf] %vm8468, %v9290
        %9356 = vst.msk [vmem:[%s9338 + $0x44] sm:$0xf] %vm8468, %v9291
        %9357 = vst.msk [vmem:[%s9338 + $0x48] sm:$0xf] %vm8468, %v9292
        %9358 = vst.msk [vmem:[%s9338 + $0x4c] sm:$0xf] %vm8468, %v9293
        %9359 = vst.msk [vmem:[%s9338 + $0x50] sm:$0xf] %vm8468, %v9294
        %9360 = vst.msk [vmem:[%s9338 + $0x54] sm:$0xf] %vm8468, %v9295
        %9361 = vst.msk [vmem:[%s9338 + $0x58] sm:$0xf] %vm8468, %v9296
        %9362 = vst.msk [vmem:[%s9338 + $0x5c] sm:$0xf] %vm8468, %v9297
        %9363 = vst.msk [vmem:[%s9338 + $0x60] sm:$0xf] %vm8468, %v9298
        %9364 = vst.msk [vmem:[%s9338 + $0x64] sm:$0xf] %vm8468, %v9299
        %9365 = vst.msk [vmem:[%s9338 + $0x68] sm:$0xf] %vm8468, %v9300
        %9366 = vst.msk [vmem:[%s9338 + $0x6c] sm:$0xf] %vm8468, %v9301
        %9367 = vst.msk [vmem:[%s9338 + $0x70] sm:$0xf] %vm8468, %v9302
        %9368 = vst.msk [vmem:[%s9338 + $0x74] sm:$0xf] %vm8468, %v9303
        %9369 = vst.msk [vmem:[%s9338 + $0x78] sm:$0xf] %vm8468, %v9304
        %9370 = vst.msk [vmem:[%s9338 + $0x7c] sm:$0xf] %vm8468, %v9305
        %9371 = vrot.lane.b32.xlu0 %v9274, 64
        %v9372 = vpop.permute.xlu0 %9371
        %9373 = vrot.lane.b32.xlu0 %v9275, 64
        %v9374 = vpop.permute.xlu0 %9373
        %9375 = vrot.lane.b32.xlu0 %v9276, 64
        %v9376 = vpop.permute.xlu0 %9375
        %9377 = vrot.lane.b32.xlu0 %v9277, 64
        %v9378 = vpop.permute.xlu0 %9377
        %9379 = vrot.lane.b32.xlu0 %v9278, 64
        %v9380 = vpop.permute.xlu0 %9379
        %9381 = vrot.lane.b32.xlu0 %v9279, 64
        %v9382 = vpop.permute.xlu0 %9381
        %9383 = vrot.lane.b32.xlu0 %v9280, 64
        %v9384 = vpop.permute.xlu0 %9383
        %9385 = vrot.lane.b32.xlu0 %v9281, 64
        %v9386 = vpop.permute.xlu0 %9385
        %9387 = vrot.lane.b32.xlu0 %v9282, 64
        %v9388 = vpop.permute.xlu0 %9387
        %9389 = vrot.lane.b32.xlu0 %v9283, 64
        %v9390 = vpop.permute.xlu0 %9389
        %9391 = vrot.lane.b32.xlu0 %v9284, 64
        %v9392 = vpop.permute.xlu0 %9391
        %9393 = vrot.lane.b32.xlu0 %v9285, 64
        %v9394 = vpop.permute.xlu0 %9393
        %9395 = vrot.lane.b32.xlu0 %v9286, 64
        %v9396 = vpop.permute.xlu0 %9395
        %9397 = vrot.lane.b32.xlu0 %v9287, 64
        %v9398 = vpop.permute.xlu0 %9397
        %9399 = vrot.lane.b32.xlu0 %v9288, 64
        %v9400 = vpop.permute.xlu0 %9399
        %9401 = vrot.lane.b32.xlu0 %v9289, 64
        %v9402 = vpop.permute.xlu0 %9401
        %9403 = vrot.lane.b32.xlu0 %v9290, 64
        %v9404 = vpop.permute.xlu0 %9403
        %9405 = vrot.lane.b32.xlu0 %v9291, 64
        %v9406 = vpop.permute.xlu0 %9405
        %9407 = vrot.lane.b32.xlu0 %v9292, 64
        %v9408 = vpop.permute.xlu0 %9407
        %9409 = vrot.lane.b32.xlu0 %v9293, 64
        %v9410 = vpop.permute.xlu0 %9409
        %9411 = vrot.lane.b32.xlu0 %v9294, 64
        %v9412 = vpop.permute.xlu0 %9411
        %9413 = vrot.lane.b32.xlu0 %v9295, 64
        %v9414 = vpop.permute.xlu0 %9413
        %9415 = vrot.lane.b32.xlu0 %v9296, 64
        %v9416 = vpop.permute.xlu0 %9415
        %9417 = vrot.lane.b32.xlu0 %v9297, 64
        %v9418 = vpop.permute.xlu0 %9417
        %9419 = vrot.lane.b32.xlu0 %v9298, 64
        %v9420 = vpop.permute.xlu0 %9419
        %9421 = vrot.lane.b32.xlu0 %v9299, 64
        %v9422 = vpop.permute.xlu0 %9421
        %9423 = vrot.lane.b32.xlu0 %v9300, 64
        %v9424 = vpop.permute.xlu0 %9423
        %9425 = vrot.lane.b32.xlu0 %v9301, 64
        %v9426 = vpop.permute.xlu0 %9425
        %9427 = vrot.lane.b32.xlu0 %v9302, 64
        %v9428 = vpop.permute.xlu0 %9427
        %9429 = vrot.lane.b32.xlu0 %v9303, 64
        %v9430 = vpop.permute.xlu0 %9429
        %9431 = vrot.lane.b32.xlu0 %v9304, 64
        %v9432 = vpop.permute.xlu0 %9431
        %9433 = vrot.lane.b32.xlu0 %v9305, 64
        %v9434 = vpop.permute.xlu0 %9433
        %s9467 = scalar_lea.vmem %s427, 896
        %9468 = vst.msk [vmem:[%s9467] sm:$0xf] %vm8468, %v9372
        %9469 = vst.msk [vmem:[%s9467 + $0x4] sm:$0xf] %vm8468, %v9374
        %9470 = vst.msk [vmem:[%s9467 + $0x8] sm:$0xf] %vm8468, %v9376
        %9471 = vst.msk [vmem:[%s9467 + $0xc] sm:$0xf] %vm8468, %v9378
        %9472 = vst.msk [vmem:[%s9467 + $0x10] sm:$0xf] %vm8468, %v9380
        %9473 = vst.msk [vmem:[%s9467 + $0x14] sm:$0xf] %vm8468, %v9382
        %9474 = vst.msk [vmem:[%s9467 + $0x18] sm:$0xf] %vm8468, %v9384
        %9475 = vst.msk [vmem:[%s9467 + $0x1c] sm:$0xf] %vm8468, %v9386
        %9476 = vst.msk [vmem:[%s9467 + $0x20] sm:$0xf] %vm8468, %v9388
        %9477 = vst.msk [vmem:[%s9467 + $0x24] sm:$0xf] %vm8468, %v9390
        %9478 = vst.msk [vmem:[%s9467 + $0x28] sm:$0xf] %vm8468, %v9392
        %9479 = vst.msk [vmem:[%s9467 + $0x2c] sm:$0xf] %vm8468, %v9394
        %9480 = vst.msk [vmem:[%s9467 + $0x30] sm:$0xf] %vm8468, %v9396
        %9481 = vst.msk [vmem:[%s9467 + $0x34] sm:$0xf] %vm8468, %v9398
        %9482 = vst.msk [vmem:[%s9467 + $0x38] sm:$0xf] %vm8468, %v9400
        %9483 = vst.msk [vmem:[%s9467 + $0x3c] sm:$0xf] %vm8468, %v9402
        %9484 = vst.msk [vmem:[%s9467 + $0x40] sm:$0xf] %vm8468, %v9404
        %9485 = vst.msk [vmem:[%s9467 + $0x44] sm:$0xf] %vm8468, %v9406
        %9486 = vst.msk [vmem:[%s9467 + $0x48] sm:$0xf] %vm8468, %v9408
        %9487 = vst.msk [vmem:[%s9467 + $0x4c] sm:$0xf] %vm8468, %v9410
        %9488 = vst.msk [vmem:[%s9467 + $0x50] sm:$0xf] %vm8468, %v9412
        %9489 = vst.msk [vmem:[%s9467 + $0x54] sm:$0xf] %vm8468, %v9414
        %9490 = vst.msk [vmem:[%s9467 + $0x58] sm:$0xf] %vm8468, %v9416
        %9491 = vst.msk [vmem:[%s9467 + $0x5c] sm:$0xf] %vm8468, %v9418
        %9492 = vst.msk [vmem:[%s9467 + $0x60] sm:$0xf] %vm8468, %v9420
        %9493 = vst.msk [vmem:[%s9467 + $0x64] sm:$0xf] %vm8468, %v9422
        %9494 = vst.msk [vmem:[%s9467 + $0x68] sm:$0xf] %vm8468, %v9424
        %9495 = vst.msk [vmem:[%s9467 + $0x6c] sm:$0xf] %vm8468, %v9426
        %9496 = vst.msk [vmem:[%s9467 + $0x70] sm:$0xf] %vm8468, %v9428
        %9497 = vst.msk [vmem:[%s9467 + $0x74] sm:$0xf] %vm8468, %v9430
        %9498 = vst.msk [vmem:[%s9467 + $0x78] sm:$0xf] %vm8468, %v9432
        %9499 = vst.msk [vmem:[%s9467 + $0x7c] sm:$0xf] %vm8468, %v9434
        %s9500 = smul.u32 32, %s34
        %p9501 = scmp.lt.s32.totalorder %s35, 1
        %s9502 = scalar_select %p9501, %s35, 1
        %p9503 = scmp.lt.s32.totalorder %s9500, 31
        %s9504 = scalar_select %p9503, %s9500, 31
        %s9505 = smul.addr %s9502, 256
        %s9506 = sadd.s32 %s9504, %s9505
        %s9507 = smul.addr %s9506, 4
        %s9508 = scalar_lea.vmem %s5, %s9507
        %s9509 = sand.u32 %s202, 1
        %s9510 = scalar_lea.sflag [#allocation4], %s9509
        %s9511 = sand.u32 %s202, 1
        %s9512 = smul.addr %s9511, 256
        %s9513 = scalar_lea.vmem [#allocation11], %s9512
        %s9514 = sand.u32 %s230, 1
        %s9515 = scalar_lea.sflag [#allocation13], %s9514
        %s9516 = sand.u32 %s230, 1
        %s9517 = smul.addr %s9516, 256
        %s9518 = scalar_lea.vmem [#allocation12], %s9517
        // Predicated region
        $region61: #{tpu_custom_call.1} parent=39 // pred_check
          %p9519 = pneg %p184
        $region62: #{tpu_custom_call.1} parent=39 // pred_check_branch
          %9521 = sbr.rel (%p9519) target = $region64
        $region63: #{tpu_custom_call.1} parent=39 // pred_region
          %s9522 = smul.u32 32, %s34
        $region64: #{tpu_custom_call.1} parent=39 // pred_fallthru
          _
        // Predicated region
        $region65: #{tpu_custom_call.1} parent=39 // pred_check
          %p9523 = pneg %p212
        $region66: #{tpu_custom_call.1} parent=39 // pred_check_branch
          %9525 = sbr.rel (%p9523) target = $region68
        $region67: #{tpu_custom_call.1} parent=39 // pred_region
          %s9526 = smul.u32 2, %s34
          %s9528 = ssub.s32 4096, 4096
          %9529 = vsyncadd %s9510, %s9528
          %s9530 = smul.addr %s35, 64
          %s9531 = sadd.s32 %s9526, %s9530
          %s9532 = smul.addr %s9531, 64
          %s9533 = scalar_lea.hbm %s6, %s9532
          %s9534 = sshll.u32 %s9513, 4
          %s9535 = int_to_ptr.vmem [resolvable:$true] %s9534
          %9540 = dma.vmem_to_hbm [thread:$0]  %s9535, 4096, %s9533, %s9510, 128, 128, 8
        $region68: #{tpu_custom_call.1} parent=39 // pred_fallthru
          _
        // Predicated region
        $region69: #{tpu_custom_call.1} parent=39 // pred_check
          %p9541 = pneg %p240
        $region70: #{tpu_custom_call.1} parent=39 // pred_check_branch
          %9543 = sbr.rel (%p9541) target = $region72
        $region71: #{tpu_custom_call.1} parent=39 // pred_region
          %s9544 = smul.u32 2, %s34
          %s9546 = ssub.s32 4096, 4096
          %9547 = vsyncadd %s9515, %s9546
          %s9548 = smul.addr %s35, 64
          %s9549 = sadd.s32 %s9544, %s9548
          %s9550 = smul.addr %s9549, 64
          %s9551 = scalar_lea.hbm %s7, %s9550
          %s9552 = sshll.u32 %s9518, 4
          %s9553 = int_to_ptr.vmem [resolvable:$true] %s9552
          %9558 = dma.vmem_to_hbm [thread:$0]  %s9553, 4096, %s9551, %s9515, 128, 128, 8
        $region72: #{tpu_custom_call.1} parent=39 // pred_fallthru
          _
      $region40: #{tpu_custom_call.1} parent=5 // pred_fallthru
        _
      %p9559 = scmp.le.s32.totalorder 2, %s25
      // Predicated region
      $region73: #{tpu_custom_call.1} parent=5 // pred_check
        %p9560 = pneg %p9559
      $region74: #{tpu_custom_call.1} parent=5 // pred_check_branch
        %9562 = sbr.rel (%p9560) target = $region76
      $region75: #{tpu_custom_call.1} parent=5 // pred_region
        %s9563 = ssub.s32 %s25, 2
        // Predicated region
        $region77: #{tpu_custom_call.1} parent=75 // pred_check
          %p9564 = pneg %p190
        $region78: #{tpu_custom_call.1} parent=75 // pred_check_branch
          %9566 = sbr.rel (%p9564) target = $region80
        $region79: #{tpu_custom_call.1} parent=75 // pred_region
          %s9567 = smul.u32 32, %s36
          %p9568 = scmp.lt.s32.totalorder %s37, 1
          %s9569 = scalar_select %p9568, %s37, 1
          %p9570 = scmp.lt.s32.totalorder %s9567, 31
          %s9571 = scalar_select %p9570, %s9567, 31
          %s9572 = smul.addr %s9569, 256
          %s9573 = sadd.s32 %s9571, %s9572
          %s9574 = smul.addr %s9573, 4
          %s9575 = scalar_lea.vmem %s5, %s9574
        $region80: #{tpu_custom_call.1} parent=75 // pred_fallthru
          _
        // Predicated region
        $region81: #{tpu_custom_call.1} parent=75 // pred_check
          %p9576 = pneg %p218
        $region82: #{tpu_custom_call.1} parent=75 // pred_check_branch
          %9578 = sbr.rel (%p9576) target = $region84
        $region83: #{tpu_custom_call.1} parent=75 // pred_region
          %s9579 = sand.u32 %s203, 1
          %s9580 = scalar_lea.sflag [#allocation4], %s9579
          %s9581 = sand.u32 %s203, 1
          %s9582 = smul.addr %s9581, 256
          %s9583 = scalar_lea.vmem [#allocation11], %s9582
          %9584 = dma.done %s9580, 4096
        $region84: #{tpu_custom_call.1} parent=75 // pred_fallthru
          _
        // Predicated region
        $region85: #{tpu_custom_call.1} parent=75 // pred_check
          %p9585 = pneg %p246
        $region86: #{tpu_custom_call.1} parent=75 // pred_check_branch
          %9587 = sbr.rel (%p9585) target = $region88
        $region87: #{tpu_custom_call.1} parent=75 // pred_region
          %s9588 = sand.u32 %s231, 1
          %s9589 = scalar_lea.sflag [#allocation13], %s9588
          %s9590 = sand.u32 %s231, 1
          %s9591 = smul.addr %s9590, 256
          %s9592 = scalar_lea.vmem [#allocation12], %s9591
          %9593 = dma.done %s9589, 4096
        $region88: #{tpu_custom_call.1} parent=75 // pred_fallthru
          _
      $region76: #{tpu_custom_call.1} parent=5 // pred_fallthru
        _
    $region6: #{tpu_custom_call.1} parent=1 // loop_footer
      %s29 = sadd.s32 1, %s25
    $region7: #{tpu_custom_call.1} parent=1 // loop_footer_branch
      %24 = sbr.rel target = $region3
    $region8: #{tpu_custom_call.1} parent=1 // loop_exit
      _
    %9594 = vsyncpa [#allocation3], 1
    %s9595 = scalar_lea.sflag [#allocation3], 1
    %9596 = vsyncpa %s9595, 1
    %9597 = vsyncpa [#allocation6], 1
    %9598 = vsyncpa [#allocation9], 1
    %9599 = vsyncpa [#allocation4], 1
    %s9600 = scalar_lea.sflag [#allocation4], 1
    %9601 = vsyncpa %s9600, 1
    %9602 = vsyncpa [#allocation13], 1
    %s9603 = scalar_lea.sflag [#allocation13], 1
    %9604 = vsyncpa %s9603, 1

</llo_original>
